<compile_context>
chip_gen: v7x
topology: tpu7x:2x2x1
jax: 0.10.0
libtpu: 0.0.40
codegen_flags: <defaults>
</compile_context>

<pallas_src>
import functools

import numpy as np
import jax
import jax.numpy as jnp
from jax import lax
from jax.experimental import pallas as pl
from jax.experimental.pallas import tpu as pltpu

# ---------------- model hyper-parameters (small, consistent with the module) ----
D_TIME = 16          # d_time
D_FEATURE = 8        # d_feature
D_MODEL = 32         # d_model
D_INNER = 64         # d_inner
D_K = 16             # d_k
D_V = 16             # d_v
N_HEAD = 4           # n_head
N_GROUPS = 2         # n_groups
N_GROUP_INNER = 1    # n_group_inner_layers
INPUT_WITH_MASK = True
DIAG_MASK = True
ACTUAL_D_FEATURE = D_FEATURE * 2 if INPUT_WITH_MASK else D_FEATURE
# dropout = 0 -> nn.Dropout is the identity; not lowered.
# param_sharing_between_group = False -> distinct weights per group.

# ---------------- packed-weight slab layout --------------------------------------
# wslab: one 64-lane slab holding all 2*N_GROUPS encoder layers back to back.
_R_WQ = 0          # rows  0: 32, lanes 0:64  Wq (1/sqrt(d_k) folded in)
_R_WK = 32         # rows 32: 64, lanes 0:64  Wk
_R_WV = 64         # rows 64: 96, lanes 0:64  Wv
_R_WO = 96         # rows 96:160, lanes 0:32  Wo  (H*d_v, d_model)
_R_FFW1 = 160      # rows 160:192, lanes 0:64 ff_w1
_R_FFW2 = 192      # rows 192:256, lanes 0:32 ff_w2
_R_LN1 = 256       # row 256: lanes 0:32 ln1_gamma | 32:64 ln1_beta
_R_FFB1 = 257      # row 257: lanes 0:64 ff_b1
_R_FFB2 = 258      # row 258: lanes 0:32 ff_b2   | 32:64 ln2_gamma
_R_LN2B = 259      # row 259: lanes 0:32 ln2_beta
ROWS_PER_LAYER = 264   # padded to a multiple of 8

# mslab (64, 64): embeddings / pos tables / reduce_dim / weight_combine
#   rows  0:16, lanes  0:32  emb1_W (in=[X|mask]=16, out=32)
#   rows  0:16, lanes 32:64  pos_table + emb1_bias
#   rows 16:32, lanes  0:32  emb2_W
#   rows 16:32, lanes 32:64  pos_table + emb2_bias
#   rows 32:64, lanes  0: 8  reduce_dim_z  W (32,8)
#   rows 32:64, lanes  8:16  reduce_dim_beta W (32,8)
#   rows 32:48, lanes 16:24  weight_combine W (attention part, 16x8)
#   rows 32:40, lanes 24:32  reduce_dim_gamma W (8,8)
#   rows 40:48, lanes 24:32  weight_combine W (mask part, 8x8)
#   row  48   : lanes 32:40 rz_b | 40:48 rb_b | 48:56 rg_b | 56:64 wc_b


# ---------------- in-kernel helpers ----------------------------------------------
def _layer_norm(x, g, b, eps):
    mu = jnp.mean(x, axis=-1, keepdims=True)
    var = jnp.mean((x - mu) ** 2, axis=-1, keepdims=True)
    return (x - mu) * lax.rsqrt(var + eps) * g + b


def _encoder_stack(h, wref, bases, *, B, T, D, d_inner, d_k, d_v, n_head,
                   n_inner, diag_mask, want_attn):
    """Runs the whole stack of EncoderLayers on h (B*T, D), resident in vregs/VMEM.

    wref: packed weight-slab ref; `bases` are the static row offsets of the layers.
    Returns (h, attn_mean) where attn_mean is the head-mean attention of the LAST
    layer application (only when want_attn=True), shape (B, T, T).
    """
    rows = lax.broadcasted_iota(jnp.int32, (B, T, T), 1)
    cols = lax.broadcasted_iota(jnp.int32, (B, T, T), 2)
    diag = rows == cols
    attn_mean = None
    n_groups = len(bases)

    for gi, base in enumerate(bases):
        # static carve-outs of the packed slab (no reshapes; natural 2-D rectangles)
        wq = wref[base + _R_WQ:base + _R_WQ + D, :]                      # (D, H*dk)
        wk = wref[base + _R_WK:base + _R_WK + D, :]
        wv = wref[base + _R_WV:base + _R_WV + D, :]
        wo = wref[base + _R_WO:base + _R_WO + n_head * d_v, 0:D]        # (H*dv, D)
        ffw1 = wref[base + _R_FFW1:base + _R_FFW1 + D, :]               # (D, d_inner)
        ffw2 = wref[base + _R_FFW2:base + _R_FFW2 + d_inner, 0:D]       # (d_inner, D)
        ln1_g = wref[base + _R_LN1:base + _R_LN1 + 1, 0:D]
        ln1_b = wref[base + _R_LN1:base + _R_LN1 + 1, D:2 * D]
        ff_b1 = wref[base + _R_FFB1:base + _R_FFB1 + 1, :]
        ff_b2 = wref[base + _R_FFB2:base + _R_FFB2 + 1, 0:D]
        ln2_g = wref[base + _R_FFB2:base + _R_FFB2 + 1, D:2 * D]
        ln2_b = wref[base + _R_LN2B:base + _R_LN2B + 1, 0:D]

        for r in range(n_inner):
            last = want_attn and (gi == n_groups - 1) and (r == n_inner - 1)

            # Pre-LN for attention (nn.LayerNorm default eps=1e-5)
            xn = _layer_norm(h, ln1_g, ln1_b, 1e-5)

            # fused q/k/v projections: one (D -> H*dk) matmul each
            q_all = jnp.dot(xn, wq, preferred_element_type=jnp.float32)  # (B*T, 64)
            k_all = jnp.dot(xn, wk, preferred_element_type=jnp.float32)
            v_all = jnp.dot(xn, wv, preferred_element_type=jnp.float32)

            o_parts = []
            attn_acc = jnp.zeros((B, T, T), jnp.float32) if last else None
            for hd in range(n_head):
                q = q_all[:, hd * d_k:(hd + 1) * d_k].reshape(B, T, d_k)
                k = k_all[:, hd * d_k:(hd + 1) * d_k].reshape(B, T, d_k)
                v = v_all[:, hd * d_v:(hd + 1) * d_v].reshape(B, T, d_v)

                s = jnp.einsum("btd,bsd->bts", q, k,
                               preferred_element_type=jnp.float32)       # (B, T, T)
                if diag_mask:
                    s = jnp.where(diag, -1e9, s)     # masked_fill(eye==1, -1e9)
                mx = jnp.max(s, axis=-1, keepdims=True)
                e = jnp.exp(s - mx)
                attn = e * pl.reciprocal(jnp.sum(e, axis=-1, keepdims=True),
                                         approx=True)                    # softmax(-1)
                if last:
                    attn_acc = attn_acc + attn

                o = jnp.einsum("bts,bsd->btd", attn, v,
                               preferred_element_type=jnp.float32).reshape(B * T, d_v)
                o_parts.append(o)

            # concat(heads) @ W_o as ONE (B*T,64)@(64,32) matmul
            o_all = jnp.concatenate(o_parts, axis=-1)                    # (B*T, H*dv)
            attn_out = jnp.dot(o_all, wo, preferred_element_type=jnp.float32)

            res1 = h + attn_out                                          # dropout p=0

            # PositionWiseFeedForward: pre-LN (eps=1e-6) -> w1 -> relu -> w2 -> res
            yn = _layer_norm(res1, ln2_g, ln2_b, 1e-6)
            hid = jnp.maximum(
                jnp.dot(yn, ffw1, preferred_element_type=jnp.float32) + ff_b1, 0.0)
            h = res1 + jnp.dot(hid, ffw2, preferred_element_type=jnp.float32) + ff_b2

            if last:
                attn_mean = attn_acc * (1.0 / float(n_head))
    return h, attn_mean


# ---------------- single fused Pallas kernel --------------------------------------
def _saits_kernel(data_ref, mslab_ref, wslab_ref, xc_ref, loss_ref, *,
                  B, T, F, D, d_inner, d_k, d_v, n_head, n_groups, n_inner,
                  diag_mask):
    BT = B * T
    data = data_ref[...]                              # (B*T, 4F) = [X|m|Xh|ind]
    x = data[:, 0:F]
    m = data[:, F:2 * F]
    xh = data[:, 2 * F:3 * F]
    ind = data[:, 3 * F:4 * F]

    stack = functools.partial(_encoder_stack, B=B, T=T, D=D, d_inner=d_inner,
                              d_k=d_k, d_v=d_v, n_head=n_head, n_inner=n_inner,
                              diag_mask=diag_mask)

    # ---------------- first DMSA block ----------------
    # embedding_1 on cat([X, masks]) == data[:, :2F] @ W1 (single matmul)
    emb1_w = mslab_ref[0:2 * F, 0:D]
    pos1 = mslab_ref[0:T, D:2 * D]                    # pos table with emb1 bias folded
    h = jnp.dot(data[:, 0:2 * F], emb1_w, preferred_element_type=jnp.float32)
    h = (h.reshape(B, T, D) + pos1[None, :, :]).reshape(BT, D)   # PositionalEncoding

    bases1 = [li * ROWS_PER_LAYER for li in range(n_groups)]
    h, _ = stack(h, wslab_ref, bases1, want_attn=False)

    rz_w = mslab_ref[32:64, 0:F]
    rz_b = mslab_ref[48:49, 32:40]
    xt1 = jnp.dot(h, rz_w, preferred_element_type=jnp.float32) + rz_b    # X_tilde_1

    # ---------------- second DMSA block ----------------
    xprime = m * x + (1.0 - m) * xt1                  # X_prime, stays in VMEM/vregs
    emb2_wx = mslab_ref[2 * F:3 * F, 0:D]
    emb2_wm = mslab_ref[3 * F:4 * F, 0:D]
    pos2 = mslab_ref[T:2 * T, D:2 * D]                # pos table with emb2 bias folded
    h2 = (jnp.dot(xprime, emb2_wx, preferred_element_type=jnp.float32)
          + jnp.dot(m, emb2_wm, preferred_element_type=jnp.float32))
    h2 = (h2.reshape(B, T, D) + pos2[None, :, :]).reshape(BT, D)

    bases2 = [(n_groups + li) * ROWS_PER_LAYER for li in range(n_groups)]
    h2, attn_mean = stack(h2, wslab_ref, bases2, want_attn=True)

    # X_tilde_2 = reduce_dim_gamma(relu(reduce_dim_beta(h2)))
    rb_w = mslab_ref[32:64, 8:16]
    rb_b = mslab_ref[48:49, 40:48]
    rg_w = mslab_ref[32:40, 24:32]
    rg_b = mslab_ref[48:49, 48:56]
    hid = jnp.maximum(
        jnp.dot(h2, rb_w, preferred_element_type=jnp.float32) + rb_b, 0.0)
    xt2 = jnp.dot(hid, rg_w, preferred_element_type=jnp.float32) + rg_b

    # combining weights: sigmoid(cat([masks, attn_mean]) @ Wc + bc)
    # attn_mean: head-mean of the last layer's attention, (B, T, T) -> (B*T, T)
    wc_wa = mslab_ref[32:48, 16:24]
    wc_wm = mslab_ref[40:48, 24:32]
    wc_b = mslab_ref[48:49, 56:64]
    attn_flat = attn_mean.reshape(BT, T)
    cw = jax.nn.sigmoid(
        jnp.dot(m, wc_wm, preferred_element_type=jnp.float32)
        + jnp.dot(attn_flat, wc_wa, preferred_element_type=jnp.float32)
        + wc_b)

    xt3 = (1.0 - cw) * xt2 + cw * xt1                 # X_tilde_3
    xc_ref[...] = m * x + (1.0 - m) * xt3             # X_c (imputed data)

    # ---- fused masked-MAE losses:  sum(|p - t| * mask) / (sum(mask) + 1e-9) ----
    den_m = jnp.sum(m) + 1e-9
    rec1 = jnp.sum(jnp.abs(xt1 - x) * m) / den_m
    rec2 = jnp.sum(jnp.abs(xt2 - x) * m) / den_m
    rec3 = jnp.sum(jnp.abs(xt3 - x) * m) / den_m
    imp = jnp.sum(jnp.abs(xt3 - xh) * ind) / (jnp.sum(ind) + 1e-9)
    loss_ref[...] = jnp.concatenate(
        [jnp.reshape(v, (1, 1)) for v in (rec1, rec2, rec3, imp)], axis=1)


# ---------------- pallas_call wrapper ----------------------------------------------
def _full_spec(shape):
    zeros = (0,) * len(shape)
    return pl.BlockSpec(tuple(shape), lambda i, _z=zeros: _z)


def _saits_pallas(data, mslab, wslab, B, T):
    kern = functools.partial(
        _saits_kernel, B=B, T=T, F=D_FEATURE, D=D_MODEL, d_inner=D_INNER,
        d_k=D_K, d_v=D_V, n_head=N_HEAD, n_groups=N_GROUPS,
        n_inner=N_GROUP_INNER, diag_mask=DIAG_MASK)
    return pl.pallas_call(
        kern,
        out_shape=(jax.ShapeDtypeStruct((B * T, D_FEATURE), jnp.float32),
                   jax.ShapeDtypeStruct((1, 4), jnp.float32)),
        grid=(1,),
        in_specs=[_full_spec(data.shape), _full_spec(mslab.shape),
                  _full_spec(wslab.shape)],
        out_specs=(_full_spec((B * T, D_FEATURE)), _full_spec((1, 4))),
        compiler_params=pltpu.CompilerParams(dimension_semantics=("arbitrary",)),
    )(data, mslab, wslab)


# ---------------- parameters (packed into two slabs) --------------------------------
def _sinusoid_table(n_position, d_hid):
    pos = np.arange(n_position)[:, None].astype(np.float64)
    hid = np.arange(d_hid)[None, :]
    angle = pos / np.power(10000.0, 2.0 * (hid // 2) / d_hid)
    table = np.zeros((n_position, d_hid), dtype=np.float64)
    table[:, 0::2] = np.sin(angle[:, 0::2])
    table[:, 1::2] = np.cos(angle[:, 1::2])
    return jnp.asarray(table, jnp.float32)


def init_params(key):
    keys = iter(jax.random.split(key, 512))

    def mat(din, dout):
        return (jax.random.normal(next(keys), (din, dout), jnp.float32)
                * (1.0 / np.sqrt(din))).astype(jnp.float32)

    def vec(d):
        return (jax.random.normal(next(keys), (d,), jnp.float32) * 0.01
                ).astype(jnp.float32)

    # ---- per-layer weights (q/k/v/o have bias=False; 1/sqrt(d_k) folded into wq) ----
    def layer_params():
        return dict(
            wq=(mat(D_MODEL, N_HEAD * D_K) * (1.0 / np.sqrt(D_K))).astype(jnp.float32),
            wk=mat(D_MODEL, N_HEAD * D_K),
            wv=mat(D_MODEL, N_HEAD * D_V),
            wo=mat(N_HEAD * D_V, D_MODEL),
            ff_w1=mat(D_MODEL, D_INNER), ff_b1=vec(D_INNER),
            ff_w2=mat(D_INNER, D_MODEL), ff_b2=vec(D_MODEL),
            ln1_g=jnp.ones((D_MODEL,), jnp.float32),
            ln1_b=jnp.zeros((D_MODEL,), jnp.float32),
            ln2_g=jnp.ones((D_MODEL,), jnp.float32),
            ln2_b=jnp.zeros((D_MODEL,), jnp.float32),
        )

    # block1 layers first, then block2 layers
    layers = [layer_params() for _ in range(2 * N_GROUPS)]

    wslab = jnp.zeros((2 * N_GROUPS * ROWS_PER_LAYER, 2 * D_MODEL), jnp.float32)
    for li, lp in enumerate(layers):
        b = li * ROWS_PER_LAYER
        wslab = wslab.at[b + _R_WQ:b + _R_WQ + D_MODEL, :].set(lp["wq"])
        wslab = wslab.at[b + _R_WK:b + _R_WK + D_MODEL, :].set(lp["wk"])
        wslab = wslab.at[b + _R_WV:b + _R_WV + D_MODEL, :].set(lp["wv"])
        wslab = wslab.at[b + _R_WO:b + _R_WO + N_HEAD * D_V, 0:D_MODEL].set(lp["wo"])
        wslab = wslab.at[b + _R_FFW1:b + _R_FFW1 + D_MODEL, :].set(lp["ff_w1"])
        wslab = wslab.at[b + _R_FFW2:b + _R_FFW2 + D_INNER, 0:D_MODEL].set(lp["ff_w2"])
        wslab = wslab.at[b + _R_LN1, 0:D_MODEL].set(lp["ln1_g"])
        wslab = wslab.at[b + _R_LN1, D_MODEL:].set(lp["ln1_b"])
        wslab = wslab.at[b + _R_FFB1, :].set(lp["ff_b1"])
        wslab = wslab.at[b + _R_FFB2, 0:D_MODEL].set(lp["ff_b2"])
        wslab = wslab.at[b + _R_FFB2, D_MODEL:].set(lp["ln2_g"])
        wslab = wslab.at[b + _R_LN2B, 0:D_MODEL].set(lp["ln2_b"])

    # ---- tail / embedding / positional params ----
    pos_table = _sinusoid_table(D_TIME, D_MODEL)
    emb1_w, emb1_b = mat(ACTUAL_D_FEATURE, D_MODEL), vec(D_MODEL)
    emb2_w, emb2_b = mat(ACTUAL_D_FEATURE, D_MODEL), vec(D_MODEL)
    rz_w, rz_b = mat(D_MODEL, D_FEATURE), vec(D_FEATURE)
    rb_w, rb_b = mat(D_MODEL, D_FEATURE), vec(D_FEATURE)
    rg_w, rg_b = mat(D_FEATURE, D_FEATURE), vec(D_FEATURE)
    wc_w, wc_b = mat(D_FEATURE + D_TIME, D_FEATURE), vec(D_FEATURE)

    mslab = jnp.zeros((64, 64), jnp.float32)
    mslab = mslab.at[0:ACTUAL_D_FEATURE, 0:D_MODEL].set(emb1_w)
    mslab = mslab.at[0:D_TIME, D_MODEL:].set(pos_table + emb1_b[None, :])
    mslab = mslab.at[ACTUAL_D_FEATURE:2 * ACTUAL_D_FEATURE, 0:D_MODEL].set(emb2_w)
    mslab = mslab.at[D_TIME:2 * D_TIME, D_MODEL:].set(pos_table + emb2_b[None, :])
    mslab = mslab.at[32:64, 0:8].set(rz_w)
    mslab = mslab.at[32:64, 8:16].set(rb_w)
    mslab = mslab.at[32:48, 16:24].set(wc_w[D_FEATURE:])          # attention part
    mslab = mslab.at[32:40, 24:32].set(rg_w)
    mslab = mslab.at[40:48, 24:32].set(wc_w[:D_FEATURE])          # mask part
    mslab = mslab.at[48, 32:40].set(rz_b)
    mslab = mslab.at[48, 40:48].set(rb_b)
    mslab = mslab.at[48, 48:56].set(rg_b)
    mslab = mslab.at[48, 56:64].set(wc_b)

    return {"wslab": wslab, "mslab": mslab}


# ---------------- SAITS forward ----------------------------------------------------
def saits_forward(params, X, missing_mask, X_holdout, indicating_mask):
    B, T, F = X.shape
    # lane-pack the four (B*T, F) tensors into one (B*T, 4F) kernel input
    data = jnp.concatenate(
        [X.reshape(B * T, F), missing_mask.reshape(B * T, F),
         X_holdout.reshape(B * T, F), indicating_mask.reshape(B * T, F)], axis=1)

    # TODO(synk): the B==1 / H==1 torch .squeeze() special-cases of the attention
    # averaging are not reproduced (B>1 and H>1 here, so the path taken is identical).
    xc2, losses = _saits_pallas(data, params["mslab"], params["wslab"], B, T)

    rec1, rec2, rec3, imp = losses[0, 0], losses[0, 1], losses[0, 2], losses[0, 3]
    reconstruction_loss = (rec1 + rec2 + rec3) / 3.0

    return {
        "imputed_data": xc2.reshape(B, T, F),
        "reconstruction_loss": reconstruction_loss,
        "imputation_loss": imp,
        "reconstruction_MAE": rec3,
        "imputation_MAE": imp,
    }


# ---------------- main --------------------------------------------------------------
if __name__ == "__main__":
    B = 2
    key = jax.random.PRNGKey(0)
    kp, kx, km, ki = jax.random.split(key, 4)

    params = init_params(kp)

    X_intact = jax.random.normal(kx, (B, D_TIME, D_FEATURE), jnp.float32)
    missing_mask = (jax.random.uniform(km, (B, D_TIME, D_FEATURE)) < 0.8).astype(jnp.float32)
    indicating_mask = ((jax.random.uniform(ki, (B, D_TIME, D_FEATURE)) < 0.2)
                       .astype(jnp.float32) * missing_mask)
    X = X_intact * missing_mask          # missing points filled with 0
    X_holdout = X_intact

    fwd = jax.jit(saits_forward)
    out = fwd(params, X, missing_mask, X_holdout, indicating_mask)
    jax.block_until_ready(out)

    assert out["imputed_data"].shape == (B, D_TIME, D_FEATURE)
    assert np.isfinite(float(out["reconstruction_loss"]))
    assert np.isfinite(float(out["imputation_MAE"]))
    print("KERNEL_OK")
</pallas_src>

<mosaic_0001>
module attributes {stable_mosaic.version = 11 : i64} {
  func.func @_saits_kernel(%arg0: i32, %arg1: memref<32x32xf32, #tpu.memory_space<vmem>>, %arg2: memref<64x64xf32, #tpu.memory_space<vmem>>, %arg3: memref<1056x64xf32, #tpu.memory_space<vmem>>, %arg4: memref<32x8xf32, #tpu.memory_space<vmem>>, %arg5: memref<1x4xf32, #tpu.memory_space<vmem>>) attributes {dimension_semantics = [#tpu.dimension_semantics<arbitrary>], iteration_bounds = array<i64: 1>, scalar_prefetch = 0 : i64, scratch_operands = 0 : i64, tpu.core_type = #tpu.core_type<tc>, window_params = [{pipeline_mode = #tpu.pipeline_mode<synchronous>, transform_indices = @transform_0, window_bounds = array<i64: 32, 32>}, {pipeline_mode = #tpu.pipeline_mode<synchronous>, transform_indices = @transform_1, window_bounds = array<i64: 64, 64>}, {pipeline_mode = #tpu.pipeline_mode<synchronous>, transform_indices = @transform_2, window_bounds = array<i64: 1056, 64>}, {pipeline_mode = #tpu.pipeline_mode<synchronous>, transform_indices = @transform_3, window_bounds = array<i64: 32, 8>}, {pipeline_mode = #tpu.pipeline_mode<synchronous>, transform_indices = @transform_4, window_bounds = array<i64: 1, 4>}]} {
    %c0 = arith.constant 0 : index
    %c0_0 = arith.constant 0 : index
    %0 = vector.load %arg1[%c0, %c0_0] : memref<32x32xf32, #tpu.memory_space<vmem>>, vector<32x32xf32>
    %1 = vector.extract_strided_slice %0 {offsets = [0, 0], sizes = [32, 8], strides = [1, 1]} : vector<32x32xf32> to vector<32x8xf32>
    %2 = vector.extract_strided_slice %0 {offsets = [0, 8], sizes = [32, 8], strides = [1, 1]} : vector<32x32xf32> to vector<32x8xf32>
    %3 = vector.extract_strided_slice %0 {offsets = [0, 16], sizes = [32, 8], strides = [1, 1]} : vector<32x32xf32> to vector<32x8xf32>
    %4 = vector.extract_strided_slice %0 {offsets = [0, 24], sizes = [32, 8], strides = [1, 1]} : vector<32x32xf32> to vector<32x8xf32>
    %c0_1 = arith.constant 0 : index
    %c0_2 = arith.constant 0 : index
    %5 = vector.load %arg2[%c0_1, %c0_2] : memref<64x64xf32, #tpu.memory_space<vmem>>, vector<16x32xf32>
    %c0_3 = arith.constant 0 : index
    %c32 = arith.constant 32 : index
    %6 = vector.load %arg2[%c0_3, %c32] : memref<64x64xf32, #tpu.memory_space<vmem>>, vector<16x32xf32>
    %7 = vector.extract_strided_slice %0 {offsets = [0, 0], sizes = [32, 16], strides = [1, 1]} : vector<32x32xf32> to vector<32x16xf32>
    %cst = arith.constant dense<0.000000e+00> : vector<32x32xf32>
    %8 = tpu.matmul %7, %5, %cst {dimension_numbers = #tpu.dot_dimension_numbers<[1], [0], [0], [1], [0, 0, 1, 1], [], []>} : vector<32x16xf32>, vector<16x32xf32>, vector<32x32xf32> -> vector<32x32xf32>
    %9 = vector.shape_cast %8 : vector<32x32xf32> to vector<2x16x32xf32>
    %10 = vector.shape_cast %6 : vector<16x32xf32> to vector<1x16x32xf32>
    %11 = vector.broadcast %10 : vector<1x16x32xf32> to vector<2x16x32xf32>
    %12 = arith.addf %9, %11 : vector<2x16x32xf32>
    %13 = vector.shape_cast %12 : vector<2x16x32xf32> to vector<32x32xf32>
    %14 = tpu.iota {dimensions = array<i32: 1>} : vector<2x16x16xi32>
    %15 = tpu.iota {dimensions = array<i32: 2>} : vector<2x16x16xi32>
    %16 = arith.cmpi eq, %14, %15 : vector<2x16x16xi32>
    %c0_4 = arith.constant 0 : index
    %c0_5 = arith.constant 0 : index
    %17 = vector.load %arg3[%c0_4, %c0_5] : memref<1056x64xf32, #tpu.memory_space<vmem>>, vector<32x64xf32>
    %c32_6 = arith.constant 32 : index
    %c0_7 = arith.constant 0 : index
    %18 = vector.load %arg3[%c32_6, %c0_7] : memref<1056x64xf32, #tpu.memory_space<vmem>>, vector<32x64xf32>
    %c64 = arith.constant 64 : index
    %c0_8 = arith.constant 0 : index
    %19 = vector.load %arg3[%c64, %c0_8] : memref<1056x64xf32, #tpu.memory_space<vmem>>, vector<32x64xf32>
    %c96 = arith.constant 96 : index
    %c0_9 = arith.constant 0 : index
    %20 = vector.load %arg3[%c96, %c0_9] : memref<1056x64xf32, #tpu.memory_space<vmem>>, vector<64x32xf32>
    %c160 = arith.constant 160 : index
    %c0_10 = arith.constant 0 : index
    %21 = vector.load %arg3[%c160, %c0_10] : memref<1056x64xf32, #tpu.memory_space<vmem>>, vector<32x64xf32>
    %c192 = arith.constant 192 : index
    %c0_11 = arith.constant 0 : index
    %22 = vector.load %arg3[%c192, %c0_11] : memref<1056x64xf32, #tpu.memory_space<vmem>>, vector<64x32xf32>
    %c256 = arith.constant 256 : index
    %c0_12 = arith.constant 0 : index
    %23 = vector.load %arg3[%c256, %c0_12] : memref<1056x64xf32, #tpu.memory_space<vmem>>, vector<1x32xf32>
    %c256_13 = arith.constant 256 : index
    %c32_14 = arith.constant 32 : index
    %24 = vector.load %arg3[%c256_13, %c32_14] : memref<1056x64xf32, #tpu.memory_space<vmem>>, vector<1x32xf32>
    %c257 = arith.constant 257 : index
    %c0_15 = arith.constant 0 : index
    %25 = vector.load %arg3[%c257, %c0_15] : memref<1056x64xf32, #tpu.memory_space<vmem>>, vector<1x64xf32>
    %c258 = arith.constant 258 : index
    %c0_16 = arith.constant 0 : index
    %26 = vector.load %arg3[%c258, %c0_16] : memref<1056x64xf32, #tpu.memory_space<vmem>>, vector<1x32xf32>
    %c258_17 = arith.constant 258 : index
    %c32_18 = arith.constant 32 : index
    %27 = vector.load %arg3[%c258_17, %c32_18] : memref<1056x64xf32, #tpu.memory_space<vmem>>, vector<1x32xf32>
    %c259 = arith.constant 259 : index
    %c0_19 = arith.constant 0 : index
    %28 = vector.load %arg3[%c259, %c0_19] : memref<1056x64xf32, #tpu.memory_space<vmem>>, vector<1x32xf32>
    %cst_20 = arith.constant dense<0.000000e+00> : vector<32xf32>
    %29 = vector.multi_reduction <add>, %13, %cst_20 [1] : vector<32x32xf32> to vector<32xf32>
    %30 = vector.shape_cast %29 : vector<32xf32> to vector<32x1xf32>
    %cst_21 = arith.constant 3.200000e+01 : f32
    %31 = vector.broadcast %cst_21 : f32 to vector<32x1xf32>
    %32 = arith.divf %30, %31 : vector<32x1xf32>
    %33 = vector.broadcast %32 : vector<32x1xf32> to vector<32x32xf32>
    %34 = arith.subf %13, %33 : vector<32x32xf32>
    %35 = arith.mulf %34, %34 : vector<32x32xf32>
    %cst_22 = arith.constant dense<0.000000e+00> : vector<32xf32>
    %36 = vector.multi_reduction <add>, %35, %cst_22 [1] : vector<32x32xf32> to vector<32xf32>
    %37 = vector.shape_cast %36 : vector<32xf32> to vector<32x1xf32>
    %cst_23 = arith.constant 3.200000e+01 : f32
    %38 = vector.broadcast %cst_23 : f32 to vector<32x1xf32>
    %39 = arith.divf %37, %38 : vector<32x1xf32>
    %40 = vector.broadcast %32 : vector<32x1xf32> to vector<32x32xf32>
    %41 = arith.subf %13, %40 : vector<32x32xf32>
    %cst_24 = arith.constant 9.99999974E-6 : f32
    %42 = vector.broadcast %cst_24 : f32 to vector<32x1xf32>
    %43 = arith.addf %39, %42 : vector<32x1xf32>
    %44 = math.rsqrt %43 : vector<32x1xf32>
    %45 = vector.broadcast %44 : vector<32x1xf32> to vector<32x32xf32>
    %46 = arith.mulf %41, %45 : vector<32x32xf32>
    %47 = vector.broadcast %23 : vector<1x32xf32> to vector<32x32xf32>
    %48 = arith.mulf %46, %47 : vector<32x32xf32>
    %49 = vector.broadcast %24 : vector<1x32xf32> to vector<32x32xf32>
    %50 = arith.addf %48, %49 : vector<32x32xf32>
    %cst_25 = arith.constant dense<0.000000e+00> : vector<32x64xf32>
    %51 = tpu.matmul %50, %17, %cst_25 {dimension_numbers = #tpu.dot_dimension_numbers<[1], [0], [0], [1], [0, 0, 1, 1], [], []>} : vector<32x32xf32>, vector<32x64xf32>, vector<32x64xf32> -> vector<32x64xf32>
    %cst_26 = arith.constant dense<0.000000e+00> : vector<32x64xf32>
    %52 = tpu.matmul %50, %18, %cst_26 {dimension_numbers = #tpu.dot_dimension_numbers<[1], [0], [0], [1], [0, 0, 1, 1], [], []>} : vector<32x32xf32>, vector<32x64xf32>, vector<32x64xf32> -> vector<32x64xf32>
    %cst_27 = arith.constant dense<0.000000e+00> : vector<32x64xf32>
    %53 = tpu.matmul %50, %19, %cst_27 {dimension_numbers = #tpu.dot_dimension_numbers<[1], [0], [0], [1], [0, 0, 1, 1], [], []>} : vector<32x32xf32>, vector<32x64xf32>, vector<32x64xf32> -> vector<32x64xf32>
    %54 = vector.extract_strided_slice %51 {offsets = [0, 0], sizes = [32, 16], strides = [1, 1]} : vector<32x64xf32> to vector<32x16xf32>
    %55 = vector.shape_cast %54 : vector<32x16xf32> to vector<2x16x16xf32>
    %56 = vector.extract_strided_slice %52 {offsets = [0, 0], sizes = [32, 16], strides = [1, 1]} : vector<32x64xf32> to vector<32x16xf32>
    %57 = vector.shape_cast %56 : vector<32x16xf32> to vector<2x16x16xf32>
    %58 = vector.extract_strided_slice %53 {offsets = [0, 0], sizes = [32, 16], strides = [1, 1]} : vector<32x64xf32> to vector<32x16xf32>
    %59 = vector.shape_cast %58 : vector<32x16xf32> to vector<2x16x16xf32>
    "tpu.trace_start"() <{level = 10 : i32, message = "btd,bsd->bts"}> : () -> ()
    %cst_28 = arith.constant dense<0.000000e+00> : vector<2x16x16xf32>
    %60 = tpu.matmul %55, %57, %cst_28 {dimension_numbers = #tpu.dot_dimension_numbers<[2], [2], [1], [1], [0, 0, 0, 1, 1, 1], [0], [0]>} : vector<2x16x16xf32>, vector<2x16x16xf32>, vector<2x16x16xf32> -> vector<2x16x16xf32>
    %cst_29 = arith.constant -1.000000e+09 : f32
    "tpu.trace_stop"() : () -> ()
    %61 = vector.broadcast %cst_29 : f32 to vector<2x16x16xf32>
    %62 = arith.select %16, %61, %60 : vector<2x16x16xi1>, vector<2x16x16xf32>
    %cst_30 = arith.constant dense<0xFF800000> : vector<2x16xf32>
    %63 = vector.multi_reduction <maximumf>, %62, %cst_30 [2] : vector<2x16x16xf32> to vector<2x16xf32>
    %64 = vector.shape_cast %63 : vector<2x16xf32> to vector<2x16x1xf32>
    %65 = vector.broadcast %64 : vector<2x16x1xf32> to vector<2x16x16xf32>
    %66 = arith.subf %62, %65 : vector<2x16x16xf32>
    %67 = math.exp %66 : vector<2x16x16xf32>
    %cst_31 = arith.constant dense<0.000000e+00> : vector<2x16xf32>
    %68 = vector.multi_reduction <add>, %67, %cst_31 [2] : vector<2x16x16xf32> to vector<2x16xf32>
    %69 = vector.shape_cast %68 : vector<2x16xf32> to vector<2x16x1xf32>
    %70 = tpu.reciprocal %69 {approx = true} : vector<2x16x1xf32> -> vector<2x16x1xf32>
    %71 = vector.broadcast %70 : vector<2x16x1xf32> to vector<2x16x16xf32>
    %72 = arith.mulf %67, %71 : vector<2x16x16xf32>
    "tpu.trace_start"() <{level = 10 : i32, message = "bts,bsd->btd"}> : () -> ()
    %cst_32 = arith.constant dense<0.000000e+00> : vector<2x16x16xf32>
    %73 = tpu.matmul %72, %59, %cst_32 {dimension_numbers = #tpu.dot_dimension_numbers<[2], [1], [1], [2], [0, 0, 0, 1, 1, 2], [0], [0]>} : vector<2x16x16xf32>, vector<2x16x16xf32>, vector<2x16x16xf32> -> vector<2x16x16xf32>
    "tpu.trace_stop"() : () -> ()
    %74 = vector.shape_cast %73 : vector<2x16x16xf32> to vector<32x16xf32>
    %75 = vector.extract_strided_slice %51 {offsets = [0, 16], sizes = [32, 16], strides = [1, 1]} : vector<32x64xf32> to vector<32x16xf32>
    %76 = vector.shape_cast %75 : vector<32x16xf32> to vector<2x16x16xf32>
    %77 = vector.extract_strided_slice %52 {offsets = [0, 16], sizes = [32, 16], strides = [1, 1]} : vector<32x64xf32> to vector<32x16xf32>
    %78 = vector.shape_cast %77 : vector<32x16xf32> to vector<2x16x16xf32>
    %79 = vector.extract_strided_slice %53 {offsets = [0, 16], sizes = [32, 16], strides = [1, 1]} : vector<32x64xf32> to vector<32x16xf32>
    %80 = vector.shape_cast %79 : vector<32x16xf32> to vector<2x16x16xf32>
    "tpu.trace_start"() <{level = 10 : i32, message = "btd,bsd->bts"}> : () -> ()
    %cst_33 = arith.constant dense<0.000000e+00> : vector<2x16x16xf32>
    %81 = tpu.matmul %76, %78, %cst_33 {dimension_numbers = #tpu.dot_dimension_numbers<[2], [2], [1], [1], [0, 0, 0, 1, 1, 1], [0], [0]>} : vector<2x16x16xf32>, vector<2x16x16xf32>, vector<2x16x16xf32> -> vector<2x16x16xf32>
    %cst_34 = arith.constant -1.000000e+09 : f32
    "tpu.trace_stop"() : () -> ()
    %82 = vector.broadcast %cst_34 : f32 to vector<2x16x16xf32>
    %83 = arith.select %16, %82, %81 : vector<2x16x16xi1>, vector<2x16x16xf32>
    %cst_35 = arith.constant dense<0xFF800000> : vector<2x16xf32>
    %84 = vector.multi_reduction <maximumf>, %83, %cst_35 [2] : vector<2x16x16xf32> to vector<2x16xf32>
    %85 = vector.shape_cast %84 : vector<2x16xf32> to vector<2x16x1xf32>
    %86 = vector.broadcast %85 : vector<2x16x1xf32> to vector<2x16x16xf32>
    %87 = arith.subf %83, %86 : vector<2x16x16xf32>
    %88 = math.exp %87 : vector<2x16x16xf32>
    %cst_36 = arith.constant dense<0.000000e+00> : vector<2x16xf32>
    %89 = vector.multi_reduction <add>, %88, %cst_36 [2] : vector<2x16x16xf32> to vector<2x16xf32>
    %90 = vector.shape_cast %89 : vector<2x16xf32> to vector<2x16x1xf32>
    %91 = tpu.reciprocal %90 {approx = true} : vector<2x16x1xf32> -> vector<2x16x1xf32>
    %92 = vector.broadcast %91 : vector<2x16x1xf32> to vector<2x16x16xf32>
    %93 = arith.mulf %88, %92 : vector<2x16x16xf32>
    "tpu.trace_start"() <{level = 10 : i32, message = "bts,bsd->btd"}> : () -> ()
    %cst_37 = arith.constant dense<0.000000e+00> : vector<2x16x16xf32>
    %94 = tpu.matmul %93, %80, %cst_37 {dimension_numbers = #tpu.dot_dimension_numbers<[2], [1], [1], [2], [0, 0, 0, 1, 1, 2], [0], [0]>} : vector<2x16x16xf32>, vector<2x16x16xf32>, vector<2x16x16xf32> -> vector<2x16x16xf32>
    "tpu.trace_stop"() : () -> ()
    %95 = vector.shape_cast %94 : vector<2x16x16xf32> to vector<32x16xf32>
    %96 = vector.extract_strided_slice %51 {offsets = [0, 32], sizes = [32, 16], strides = [1, 1]} : vector<32x64xf32> to vector<32x16xf32>
    %97 = vector.shape_cast %96 : vector<32x16xf32> to vector<2x16x16xf32>
    %98 = vector.extract_strided_slice %52 {offsets = [0, 32], sizes = [32, 16], strides = [1, 1]} : vector<32x64xf32> to vector<32x16xf32>
    %99 = vector.shape_cast %98 : vector<32x16xf32> to vector<2x16x16xf32>
    %100 = vector.extract_strided_slice %53 {offsets = [0, 32], sizes = [32, 16], strides = [1, 1]} : vector<32x64xf32> to vector<32x16xf32>
    %101 = vector.shape_cast %100 : vector<32x16xf32> to vector<2x16x16xf32>
    "tpu.trace_start"() <{level = 10 : i32, message = "btd,bsd->bts"}> : () -> ()
    %cst_38 = arith.constant dense<0.000000e+00> : vector<2x16x16xf32>
    %102 = tpu.matmul %97, %99, %cst_38 {dimension_numbers = #tpu.dot_dimension_numbers<[2], [2], [1], [1], [0, 0, 0, 1, 1, 1], [0], [0]>} : vector<2x16x16xf32>, vector<2x16x16xf32>, vector<2x16x16xf32> -> vector<2x16x16xf32>
    %cst_39 = arith.constant -1.000000e+09 : f32
    "tpu.trace_stop"() : () -> ()
    %103 = vector.broadcast %cst_39 : f32 to vector<2x16x16xf32>
    %104 = arith.select %16, %103, %102 : vector<2x16x16xi1>, vector<2x16x16xf32>
    %cst_40 = arith.constant dense<0xFF800000> : vector<2x16xf32>
    %105 = vector.multi_reduction <maximumf>, %104, %cst_40 [2] : vector<2x16x16xf32> to vector<2x16xf32>
    %106 = vector.shape_cast %105 : vector<2x16xf32> to vector<2x16x1xf32>
    %107 = vector.broadcast %106 : vector<2x16x1xf32> to vector<2x16x16xf32>
    %108 = arith.subf %104, %107 : vector<2x16x16xf32>
    %109 = math.exp %108 : vector<2x16x16xf32>
    %cst_41 = arith.constant dense<0.000000e+00> : vector<2x16xf32>
    %110 = vector.multi_reduction <add>, %109, %cst_41 [2] : vector<2x16x16xf32> to vector<2x16xf32>
    %111 = vector.shape_cast %110 : vector<2x16xf32> to vector<2x16x1xf32>
    %112 = tpu.reciprocal %111 {approx = true} : vector<2x16x1xf32> -> vector<2x16x1xf32>
    %113 = vector.broadcast %112 : vector<2x16x1xf32> to vector<2x16x16xf32>
    %114 = arith.mulf %109, %113 : vector<2x16x16xf32>
    "tpu.trace_start"() <{level = 10 : i32, message = "bts,bsd->btd"}> : () -> ()
    %cst_42 = arith.constant dense<0.000000e+00> : vector<2x16x16xf32>
    %115 = tpu.matmul %114, %101, %cst_42 {dimension_numbers = #tpu.dot_dimension_numbers<[2], [1], [1], [2], [0, 0, 0, 1, 1, 2], [0], [0]>} : vector<2x16x16xf32>, vector<2x16x16xf32>, vector<2x16x16xf32> -> vector<2x16x16xf32>
    "tpu.trace_stop"() : () -> ()
    %116 = vector.shape_cast %115 : vector<2x16x16xf32> to vector<32x16xf32>
    %117 = vector.extract_strided_slice %51 {offsets = [0, 48], sizes = [32, 16], strides = [1, 1]} : vector<32x64xf32> to vector<32x16xf32>
    %118 = vector.shape_cast %117 : vector<32x16xf32> to vector<2x16x16xf32>
    %119 = vector.extract_strided_slice %52 {offsets = [0, 48], sizes = [32, 16], strides = [1, 1]} : vector<32x64xf32> to vector<32x16xf32>
    %120 = vector.shape_cast %119 : vector<32x16xf32> to vector<2x16x16xf32>
    %121 = vector.extract_strided_slice %53 {offsets = [0, 48], sizes = [32, 16], strides = [1, 1]} : vector<32x64xf32> to vector<32x16xf32>
    %122 = vector.shape_cast %121 : vector<32x16xf32> to vector<2x16x16xf32>
    "tpu.trace_start"() <{level = 10 : i32, message = "btd,bsd->bts"}> : () -> ()
    %cst_43 = arith.constant dense<0.000000e+00> : vector<2x16x16xf32>
    %123 = tpu.matmul %118, %120, %cst_43 {dimension_numbers = #tpu.dot_dimension_numbers<[2], [2], [1], [1], [0, 0, 0, 1, 1, 1], [0], [0]>} : vector<2x16x16xf32>, vector<2x16x16xf32>, vector<2x16x16xf32> -> vector<2x16x16xf32>
    %cst_44 = arith.constant -1.000000e+09 : f32
    "tpu.trace_stop"() : () -> ()
    %124 = vector.broadcast %cst_44 : f32 to vector<2x16x16xf32>
    %125 = arith.select %16, %124, %123 : vector<2x16x16xi1>, vector<2x16x16xf32>
    %cst_45 = arith.constant dense<0xFF800000> : vector<2x16xf32>
    %126 = vector.multi_reduction <maximumf>, %125, %cst_45 [2] : vector<2x16x16xf32> to vector<2x16xf32>
    %127 = vector.shape_cast %126 : vector<2x16xf32> to vector<2x16x1xf32>
    %128 = vector.broadcast %127 : vector<2x16x1xf32> to vector<2x16x16xf32>
    %129 = arith.subf %125, %128 : vector<2x16x16xf32>
    %130 = math.exp %129 : vector<2x16x16xf32>
    %cst_46 = arith.constant dense<0.000000e+00> : vector<2x16xf32>
    %131 = vector.multi_reduction <add>, %130, %cst_46 [2] : vector<2x16x16xf32> to vector<2x16xf32>
    %132 = vector.shape_cast %131 : vector<2x16xf32> to vector<2x16x1xf32>
    %133 = tpu.reciprocal %132 {approx = true} : vector<2x16x1xf32> -> vector<2x16x1xf32>
    %134 = vector.broadcast %133 : vector<2x16x1xf32> to vector<2x16x16xf32>
    %135 = arith.mulf %130, %134 : vector<2x16x16xf32>
    "tpu.trace_start"() <{level = 10 : i32, message = "bts,bsd->btd"}> : () -> ()
    %cst_47 = arith.constant dense<0.000000e+00> : vector<2x16x16xf32>
    %136 = tpu.matmul %135, %122, %cst_47 {dimension_numbers = #tpu.dot_dimension_numbers<[2], [1], [1], [2], [0, 0, 0, 1, 1, 2], [0], [0]>} : vector<2x16x16xf32>, vector<2x16x16xf32>, vector<2x16x16xf32> -> vector<2x16x16xf32>
    "tpu.trace_stop"() : () -> ()
    %137 = vector.shape_cast %136 : vector<2x16x16xf32> to vector<32x16xf32>
    %138 = tpu.concatenate %74, %95, %116, %137 in 1 : vector<32x16xf32>, vector<32x16xf32>, vector<32x16xf32>, vector<32x16xf32> -> vector<32x64xf32>
    %cst_48 = arith.constant dense<0.000000e+00> : vector<32x32xf32>
    %139 = tpu.matmul %138, %20, %cst_48 {dimension_numbers = #tpu.dot_dimension_numbers<[1], [0], [0], [1], [0, 0, 1, 1], [], []>} : vector<32x64xf32>, vector<64x32xf32>, vector<32x32xf32> -> vector<32x32xf32>
    %140 = arith.addf %13, %139 : vector<32x32xf32>
    %cst_49 = arith.constant dense<0.000000e+00> : vector<32xf32>
    %141 = vector.multi_reduction <add>, %140, %cst_49 [1] : vector<32x32xf32> to vector<32xf32>
    %142 = vector.shape_cast %141 : vector<32xf32> to vector<32x1xf32>
    %cst_50 = arith.constant 3.200000e+01 : f32
    %143 = vector.broadcast %cst_50 : f32 to vector<32x1xf32>
    %144 = arith.divf %142, %143 : vector<32x1xf32>
    %145 = vector.broadcast %144 : vector<32x1xf32> to vector<32x32xf32>
    %146 = arith.subf %140, %145 : vector<32x32xf32>
    %147 = arith.mulf %146, %146 : vector<32x32xf32>
    %cst_51 = arith.constant dense<0.000000e+00> : vector<32xf32>
    %148 = vector.multi_reduction <add>, %147, %cst_51 [1] : vector<32x32xf32> to vector<32xf32>
    %149 = vector.shape_cast %148 : vector<32xf32> to vector<32x1xf32>
    %cst_52 = arith.constant 3.200000e+01 : f32
    %150 = vector.broadcast %cst_52 : f32 to vector<32x1xf32>
    %151 = arith.divf %149, %150 : vector<32x1xf32>
    %152 = vector.broadcast %144 : vector<32x1xf32> to vector<32x32xf32>
    %153 = arith.subf %140, %152 : vector<32x32xf32>
    %cst_53 = arith.constant 9.99999997E-7 : f32
    %154 = vector.broadcast %cst_53 : f32 to vector<32x1xf32>
    %155 = arith.addf %151, %154 : vector<32x1xf32>
    %156 = math.rsqrt %155 : vector<32x1xf32>
    %157 = vector.broadcast %156 : vector<32x1xf32> to vector<32x32xf32>
    %158 = arith.mulf %153, %157 : vector<32x32xf32>
    %159 = vector.broadcast %27 : vector<1x32xf32> to vector<32x32xf32>
    %160 = arith.mulf %158, %159 : vector<32x32xf32>
    %161 = vector.broadcast %28 : vector<1x32xf32> to vector<32x32xf32>
    %162 = arith.addf %160, %161 : vector<32x32xf32>
    %cst_54 = arith.constant dense<0.000000e+00> : vector<32x64xf32>
    %163 = tpu.matmul %162, %21, %cst_54 {dimension_numbers = #tpu.dot_dimension_numbers<[1], [0], [0], [1], [0, 0, 1, 1], [], []>} : vector<32x32xf32>, vector<32x64xf32>, vector<32x64xf32> -> vector<32x64xf32>
    %164 = vector.broadcast %25 : vector<1x64xf32> to vector<32x64xf32>
    %165 = arith.addf %163, %164 : vector<32x64xf32>
    %cst_55 = arith.constant 0.000000e+00 : f32
    %166 = vector.broadcast %cst_55 : f32 to vector<32x64xf32>
    %167 = arith.maximumf %165, %166 : vector<32x64xf32>
    %cst_56 = arith.constant dense<0.000000e+00> : vector<32x32xf32>
    %168 = tpu.matmul %167, %22, %cst_56 {dimension_numbers = #tpu.dot_dimension_numbers<[1], [0], [0], [1], [0, 0, 1, 1], [], []>} : vector<32x64xf32>, vector<64x32xf32>, vector<32x32xf32> -> vector<32x32xf32>
    %169 = arith.addf %140, %168 : vector<32x32xf32>
    %170 = vector.broadcast %26 : vector<1x32xf32> to vector<32x32xf32>
    %171 = arith.addf %169, %170 : vector<32x32xf32>
    %c264 = arith.constant 264 : index
    %c0_57 = arith.constant 0 : index
    %172 = vector.load %arg3[%c264, %c0_57] : memref<1056x64xf32, #tpu.memory_space<vmem>>, vector<32x64xf32>
    %c296 = arith.constant 296 : index
    %c0_58 = arith.constant 0 : index
    %173 = vector.load %arg3[%c296, %c0_58] : memref<1056x64xf32, #tpu.memory_space<vmem>>, vector<32x64xf32>
    %c328 = arith.constant 328 : index
    %c0_59 = arith.constant 0 : index
    %174 = vector.load %arg3[%c328, %c0_59] : memref<1056x64xf32, #tpu.memory_space<vmem>>, vector<32x64xf32>
    %c360 = arith.constant 360 : index
    %c0_60 = arith.constant 0 : index
    %175 = vector.load %arg3[%c360, %c0_60] : memref<1056x64xf32, #tpu.memory_space<vmem>>, vector<64x32xf32>
    %c424 = arith.constant 424 : index
    %c0_61 = arith.constant 0 : index
    %176 = vector.load %arg3[%c424, %c0_61] : memref<1056x64xf32, #tpu.memory_space<vmem>>, vector<32x64xf32>
    %c456 = arith.constant 456 : index
    %c0_62 = arith.constant 0 : index
    %177 = vector.load %arg3[%c456, %c0_62] : memref<1056x64xf32, #tpu.memory_space<vmem>>, vector<64x32xf32>
    %c520 = arith.constant 520 : index
    %c0_63 = arith.constant 0 : index
    %178 = vector.load %arg3[%c520, %c0_63] : memref<1056x64xf32, #tpu.memory_space<vmem>>, vector<1x32xf32>
    %c520_64 = arith.constant 520 : index
    %c32_65 = arith.constant 32 : index
    %179 = vector.load %arg3[%c520_64, %c32_65] : memref<1056x64xf32, #tpu.memory_space<vmem>>, vector<1x32xf32>
    %c521 = arith.constant 521 : index
    %c0_66 = arith.constant 0 : index
    %180 = vector.load %arg3[%c521, %c0_66] : memref<1056x64xf32, #tpu.memory_space<vmem>>, vector<1x64xf32>
    %c522 = arith.constant 522 : index
    %c0_67 = arith.constant 0 : index
    %181 = vector.load %arg3[%c522, %c0_67] : memref<1056x64xf32, #tpu.memory_space<vmem>>, vector<1x32xf32>
    %c522_68 = arith.constant 522 : index
    %c32_69 = arith.constant 32 : index
    %182 = vector.load %arg3[%c522_68, %c32_69] : memref<1056x64xf32, #tpu.memory_space<vmem>>, vector<1x32xf32>
    %c523 = arith.constant 523 : index
    %c0_70 = arith.constant 0 : index
    %183 = vector.load %arg3[%c523, %c0_70] : memref<1056x64xf32, #tpu.memory_space<vmem>>, vector<1x32xf32>
    %cst_71 = arith.constant dense<0.000000e+00> : vector<32xf32>
    %184 = vector.multi_reduction <add>, %171, %cst_71 [1] : vector<32x32xf32> to vector<32xf32>
    %185 = vector.shape_cast %184 : vector<32xf32> to vector<32x1xf32>
    %cst_72 = arith.constant 3.200000e+01 : f32
    %186 = vector.broadcast %cst_72 : f32 to vector<32x1xf32>
    %187 = arith.divf %185, %186 : vector<32x1xf32>
    %188 = vector.broadcast %187 : vector<32x1xf32> to vector<32x32xf32>
    %189 = arith.subf %171, %188 : vector<32x32xf32>
    %190 = arith.mulf %189, %189 : vector<32x32xf32>
    %cst_73 = arith.constant dense<0.000000e+00> : vector<32xf32>
    %191 = vector.multi_reduction <add>, %190, %cst_73 [1] : vector<32x32xf32> to vector<32xf32>
    %192 = vector.shape_cast %191 : vector<32xf32> to vector<32x1xf32>
    %cst_74 = arith.constant 3.200000e+01 : f32
    %193 = vector.broadcast %cst_74 : f32 to vector<32x1xf32>
    %194 = arith.divf %192, %193 : vector<32x1xf32>
    %195 = vector.broadcast %187 : vector<32x1xf32> to vector<32x32xf32>
    %196 = arith.subf %171, %195 : vector<32x32xf32>
    %cst_75 = arith.constant 9.99999974E-6 : f32
    %197 = vector.broadcast %cst_75 : f32 to vector<32x1xf32>
    %198 = arith.addf %194, %197 : vector<32x1xf32>
    %199 = math.rsqrt %198 : vector<32x1xf32>
    %200 = vector.broadcast %199 : vector<32x1xf32> to vector<32x32xf32>
    %201 = arith.mulf %196, %200 : vector<32x32xf32>
    %202 = vector.broadcast %178 : vector<1x32xf32> to vector<32x32xf32>
    %203 = arith.mulf %201, %202 : vector<32x32xf32>
    %204 = vector.broadcast %179 : vector<1x32xf32> to vector<32x32xf32>
    %205 = arith.addf %203, %204 : vector<32x32xf32>
    %cst_76 = arith.constant dense<0.000000e+00> : vector<32x64xf32>
    %206 = tpu.matmul %205, %172, %cst_76 {dimension_numbers = #tpu.dot_dimension_numbers<[1], [0], [0], [1], [0, 0, 1, 1], [], []>} : vector<32x32xf32>, vector<32x64xf32>, vector<32x64xf32> -> vector<32x64xf32>
    %cst_77 = arith.constant dense<0.000000e+00> : vector<32x64xf32>
    %207 = tpu.matmul %205, %173, %cst_77 {dimension_numbers = #tpu.dot_dimension_numbers<[1], [0], [0], [1], [0, 0, 1, 1], [], []>} : vector<32x32xf32>, vector<32x64xf32>, vector<32x64xf32> -> vector<32x64xf32>
    %cst_78 = arith.constant dense<0.000000e+00> : vector<32x64xf32>
    %208 = tpu.matmul %205, %174, %cst_78 {dimension_numbers = #tpu.dot_dimension_numbers<[1], [0], [0], [1], [0, 0, 1, 1], [], []>} : vector<32x32xf32>, vector<32x64xf32>, vector<32x64xf32> -> vector<32x64xf32>
    %209 = vector.extract_strided_slice %206 {offsets = [0, 0], sizes = [32, 16], strides = [1, 1]} : vector<32x64xf32> to vector<32x16xf32>
    %210 = vector.shape_cast %209 : vector<32x16xf32> to vector<2x16x16xf32>
    %211 = vector.extract_strided_slice %207 {offsets = [0, 0], sizes = [32, 16], strides = [1, 1]} : vector<32x64xf32> to vector<32x16xf32>
    %212 = vector.shape_cast %211 : vector<32x16xf32> to vector<2x16x16xf32>
    %213 = vector.extract_strided_slice %208 {offsets = [0, 0], sizes = [32, 16], strides = [1, 1]} : vector<32x64xf32> to vector<32x16xf32>
    %214 = vector.shape_cast %213 : vector<32x16xf32> to vector<2x16x16xf32>
    "tpu.trace_start"() <{level = 10 : i32, message = "btd,bsd->bts"}> : () -> ()
    %cst_79 = arith.constant dense<0.000000e+00> : vector<2x16x16xf32>
    %215 = tpu.matmul %210, %212, %cst_79 {dimension_numbers = #tpu.dot_dimension_numbers<[2], [2], [1], [1], [0, 0, 0, 1, 1, 1], [0], [0]>} : vector<2x16x16xf32>, vector<2x16x16xf32>, vector<2x16x16xf32> -> vector<2x16x16xf32>
    %cst_80 = arith.constant -1.000000e+09 : f32
    "tpu.trace_stop"() : () -> ()
    %216 = vector.broadcast %cst_80 : f32 to vector<2x16x16xf32>
    %217 = arith.select %16, %216, %215 : vector<2x16x16xi1>, vector<2x16x16xf32>
    %cst_81 = arith.constant dense<0xFF800000> : vector<2x16xf32>
    %218 = vector.multi_reduction <maximumf>, %217, %cst_81 [2] : vector<2x16x16xf32> to vector<2x16xf32>
    %219 = vector.shape_cast %218 : vector<2x16xf32> to vector<2x16x1xf32>
    %220 = vector.broadcast %219 : vector<2x16x1xf32> to vector<2x16x16xf32>
    %221 = arith.subf %217, %220 : vector<2x16x16xf32>
    %222 = math.exp %221 : vector<2x16x16xf32>
    %cst_82 = arith.constant dense<0.000000e+00> : vector<2x16xf32>
    %223 = vector.multi_reduction <add>, %222, %cst_82 [2] : vector<2x16x16xf32> to vector<2x16xf32>
    %224 = vector.shape_cast %223 : vector<2x16xf32> to vector<2x16x1xf32>
    %225 = tpu.reciprocal %224 {approx = true} : vector<2x16x1xf32> -> vector<2x16x1xf32>
    %226 = vector.broadcast %225 : vector<2x16x1xf32> to vector<2x16x16xf32>
    %227 = arith.mulf %222, %226 : vector<2x16x16xf32>
    "tpu.trace_start"() <{level = 10 : i32, message = "bts,bsd->btd"}> : () -> ()
    %cst_83 = arith.constant dense<0.000000e+00> : vector<2x16x16xf32>
    %228 = tpu.matmul %227, %214, %cst_83 {dimension_numbers = #tpu.dot_dimension_numbers<[2], [1], [1], [2], [0, 0, 0, 1, 1, 2], [0], [0]>} : vector<2x16x16xf32>, vector<2x16x16xf32>, vector<2x16x16xf32> -> vector<2x16x16xf32>
    "tpu.trace_stop"() : () -> ()
    %229 = vector.shape_cast %228 : vector<2x16x16xf32> to vector<32x16xf32>
    %230 = vector.extract_strided_slice %206 {offsets = [0, 16], sizes = [32, 16], strides = [1, 1]} : vector<32x64xf32> to vector<32x16xf32>
    %231 = vector.shape_cast %230 : vector<32x16xf32> to vector<2x16x16xf32>
    %232 = vector.extract_strided_slice %207 {offsets = [0, 16], sizes = [32, 16], strides = [1, 1]} : vector<32x64xf32> to vector<32x16xf32>
    %233 = vector.shape_cast %232 : vector<32x16xf32> to vector<2x16x16xf32>
    %234 = vector.extract_strided_slice %208 {offsets = [0, 16], sizes = [32, 16], strides = [1, 1]} : vector<32x64xf32> to vector<32x16xf32>
    %235 = vector.shape_cast %234 : vector<32x16xf32> to vector<2x16x16xf32>
    "tpu.trace_start"() <{level = 10 : i32, message = "btd,bsd->bts"}> : () -> ()
    %cst_84 = arith.constant dense<0.000000e+00> : vector<2x16x16xf32>
    %236 = tpu.matmul %231, %233, %cst_84 {dimension_numbers = #tpu.dot_dimension_numbers<[2], [2], [1], [1], [0, 0, 0, 1, 1, 1], [0], [0]>} : vector<2x16x16xf32>, vector<2x16x16xf32>, vector<2x16x16xf32> -> vector<2x16x16xf32>
    %cst_85 = arith.constant -1.000000e+09 : f32
    "tpu.trace_stop"() : () -> ()
    %237 = vector.broadcast %cst_85 : f32 to vector<2x16x16xf32>
    %238 = arith.select %16, %237, %236 : vector<2x16x16xi1>, vector<2x16x16xf32>
    %cst_86 = arith.constant dense<0xFF800000> : vector<2x16xf32>
    %239 = vector.multi_reduction <maximumf>, %238, %cst_86 [2] : vector<2x16x16xf32> to vector<2x16xf32>
    %240 = vector.shape_cast %239 : vector<2x16xf32> to vector<2x16x1xf32>
    %241 = vector.broadcast %240 : vector<2x16x1xf32> to vector<2x16x16xf32>
    %242 = arith.subf %238, %241 : vector<2x16x16xf32>
    %243 = math.exp %242 : vector<2x16x16xf32>
    %cst_87 = arith.constant dense<0.000000e+00> : vector<2x16xf32>
    %244 = vector.multi_reduction <add>, %243, %cst_87 [2] : vector<2x16x16xf32> to vector<2x16xf32>
    %245 = vector.shape_cast %244 : vector<2x16xf32> to vector<2x16x1xf32>
    %246 = tpu.reciprocal %245 {approx = true} : vector<2x16x1xf32> -> vector<2x16x1xf32>
    %247 = vector.broadcast %246 : vector<2x16x1xf32> to vector<2x16x16xf32>
    %248 = arith.mulf %243, %247 : vector<2x16x16xf32>
    "tpu.trace_start"() <{level = 10 : i32, message = "bts,bsd->btd"}> : () -> ()
    %cst_88 = arith.constant dense<0.000000e+00> : vector<2x16x16xf32>
    %249 = tpu.matmul %248, %235, %cst_88 {dimension_numbers = #tpu.dot_dimension_numbers<[2], [1], [1], [2], [0, 0, 0, 1, 1, 2], [0], [0]>} : vector<2x16x16xf32>, vector<2x16x16xf32>, vector<2x16x16xf32> -> vector<2x16x16xf32>
    "tpu.trace_stop"() : () -> ()
    %250 = vector.shape_cast %249 : vector<2x16x16xf32> to vector<32x16xf32>
    %251 = vector.extract_strided_slice %206 {offsets = [0, 32], sizes = [32, 16], strides = [1, 1]} : vector<32x64xf32> to vector<32x16xf32>
    %252 = vector.shape_cast %251 : vector<32x16xf32> to vector<2x16x16xf32>
    %253 = vector.extract_strided_slice %207 {offsets = [0, 32], sizes = [32, 16], strides = [1, 1]} : vector<32x64xf32> to vector<32x16xf32>
    %254 = vector.shape_cast %253 : vector<32x16xf32> to vector<2x16x16xf32>
    %255 = vector.extract_strided_slice %208 {offsets = [0, 32], sizes = [32, 16], strides = [1, 1]} : vector<32x64xf32> to vector<32x16xf32>
    %256 = vector.shape_cast %255 : vector<32x16xf32> to vector<2x16x16xf32>
    "tpu.trace_start"() <{level = 10 : i32, message = "btd,bsd->bts"}> : () -> ()
    %cst_89 = arith.constant dense<0.000000e+00> : vector<2x16x16xf32>
    %257 = tpu.matmul %252, %254, %cst_89 {dimension_numbers = #tpu.dot_dimension_numbers<[2], [2], [1], [1], [0, 0, 0, 1, 1, 1], [0], [0]>} : vector<2x16x16xf32>, vector<2x16x16xf32>, vector<2x16x16xf32> -> vector<2x16x16xf32>
    %cst_90 = arith.constant -1.000000e+09 : f32
    "tpu.trace_stop"() : () -> ()
    %258 = vector.broadcast %cst_90 : f32 to vector<2x16x16xf32>
    %259 = arith.select %16, %258, %257 : vector<2x16x16xi1>, vector<2x16x16xf32>
    %cst_91 = arith.constant dense<0xFF800000> : vector<2x16xf32>
    %260 = vector.multi_reduction <maximumf>, %259, %cst_91 [2] : vector<2x16x16xf32> to vector<2x16xf32>
    %261 = vector.shape_cast %260 : vector<2x16xf32> to vector<2x16x1xf32>
    %262 = vector.broadcast %261 : vector<2x16x1xf32> to vector<2x16x16xf32>
    %263 = arith.subf %259, %262 : vector<2x16x16xf32>
    %264 = math.exp %263 : vector<2x16x16xf32>
    %cst_92 = arith.constant dense<0.000000e+00> : vector<2x16xf32>
    %265 = vector.multi_reduction <add>, %264, %cst_92 [2] : vector<2x16x16xf32> to vector<2x16xf32>
    %266 = vector.shape_cast %265 : vector<2x16xf32> to vector<2x16x1xf32>
    %267 = tpu.reciprocal %266 {approx = true} : vector<2x16x1xf32> -> vector<2x16x1xf32>
    %268 = vector.broadcast %267 : vector<2x16x1xf32> to vector<2x16x16xf32>
    %269 = arith.mulf %264, %268 : vector<2x16x16xf32>
    "tpu.trace_start"() <{level = 10 : i32, message = "bts,bsd->btd"}> : () -> ()
    %cst_93 = arith.constant dense<0.000000e+00> : vector<2x16x16xf32>
    %270 = tpu.matmul %269, %256, %cst_93 {dimension_numbers = #tpu.dot_dimension_numbers<[2], [1], [1], [2], [0, 0, 0, 1, 1, 2], [0], [0]>} : vector<2x16x16xf32>, vector<2x16x16xf32>, vector<2x16x16xf32> -> vector<2x16x16xf32>
    "tpu.trace_stop"() : () -> ()
    %271 = vector.shape_cast %270 : vector<2x16x16xf32> to vector<32x16xf32>
    %272 = vector.extract_strided_slice %206 {offsets = [0, 48], sizes = [32, 16], strides = [1, 1]} : vector<32x64xf32> to vector<32x16xf32>
    %273 = vector.shape_cast %272 : vector<32x16xf32> to vector<2x16x16xf32>
    %274 = vector.extract_strided_slice %207 {offsets = [0, 48], sizes = [32, 16], strides = [1, 1]} : vector<32x64xf32> to vector<32x16xf32>
    %275 = vector.shape_cast %274 : vector<32x16xf32> to vector<2x16x16xf32>
    %276 = vector.extract_strided_slice %208 {offsets = [0, 48], sizes = [32, 16], strides = [1, 1]} : vector<32x64xf32> to vector<32x16xf32>
    %277 = vector.shape_cast %276 : vector<32x16xf32> to vector<2x16x16xf32>
    "tpu.trace_start"() <{level = 10 : i32, message = "btd,bsd->bts"}> : () -> ()
    %cst_94 = arith.constant dense<0.000000e+00> : vector<2x16x16xf32>
    %278 = tpu.matmul %273, %275, %cst_94 {dimension_numbers = #tpu.dot_dimension_numbers<[2], [2], [1], [1], [0, 0, 0, 1, 1, 1], [0], [0]>} : vector<2x16x16xf32>, vector<2x16x16xf32>, vector<2x16x16xf32> -> vector<2x16x16xf32>
    %cst_95 = arith.constant -1.000000e+09 : f32
    "tpu.trace_stop"() : () -> ()
    %279 = vector.broadcast %cst_95 : f32 to vector<2x16x16xf32>
    %280 = arith.select %16, %279, %278 : vector<2x16x16xi1>, vector<2x16x16xf32>
    %cst_96 = arith.constant dense<0xFF800000> : vector<2x16xf32>
    %281 = vector.multi_reduction <maximumf>, %280, %cst_96 [2] : vector<2x16x16xf32> to vector<2x16xf32>
    %282 = vector.shape_cast %281 : vector<2x16xf32> to vector<2x16x1xf32>
    %283 = vector.broadcast %282 : vector<2x16x1xf32> to vector<2x16x16xf32>
    %284 = arith.subf %280, %283 : vector<2x16x16xf32>
    %285 = math.exp %284 : vector<2x16x16xf32>
    %cst_97 = arith.constant dense<0.000000e+00> : vector<2x16xf32>
    %286 = vector.multi_reduction <add>, %285, %cst_97 [2] : vector<2x16x16xf32> to vector<2x16xf32>
    %287 = vector.shape_cast %286 : vector<2x16xf32> to vector<2x16x1xf32>
    %288 = tpu.reciprocal %287 {approx = true} : vector<2x16x1xf32> -> vector<2x16x1xf32>
    %289 = vector.broadcast %288 : vector<2x16x1xf32> to vector<2x16x16xf32>
    %290 = arith.mulf %285, %289 : vector<2x16x16xf32>
    "tpu.trace_start"() <{level = 10 : i32, message = "bts,bsd->btd"}> : () -> ()
    %cst_98 = arith.constant dense<0.000000e+00> : vector<2x16x16xf32>
    %291 = tpu.matmul %290, %277, %cst_98 {dimension_numbers = #tpu.dot_dimension_numbers<[2], [1], [1], [2], [0, 0, 0, 1, 1, 2], [0], [0]>} : vector<2x16x16xf32>, vector<2x16x16xf32>, vector<2x16x16xf32> -> vector<2x16x16xf32>
    "tpu.trace_stop"() : () -> ()
    %292 = vector.shape_cast %291 : vector<2x16x16xf32> to vector<32x16xf32>
    %293 = tpu.concatenate %229, %250, %271, %292 in 1 : vector<32x16xf32>, vector<32x16xf32>, vector<32x16xf32>, vector<32x16xf32> -> vector<32x64xf32>
    %cst_99 = arith.constant dense<0.000000e+00> : vector<32x32xf32>
    %294 = tpu.matmul %293, %175, %cst_99 {dimension_numbers = #tpu.dot_dimension_numbers<[1], [0], [0], [1], [0, 0, 1, 1], [], []>} : vector<32x64xf32>, vector<64x32xf32>, vector<32x32xf32> -> vector<32x32xf32>
    %295 = arith.addf %171, %294 : vector<32x32xf32>
    %cst_100 = arith.constant dense<0.000000e+00> : vector<32xf32>
    %296 = vector.multi_reduction <add>, %295, %cst_100 [1] : vector<32x32xf32> to vector<32xf32>
    %297 = vector.shape_cast %296 : vector<32xf32> to vector<32x1xf32>
    %cst_101 = arith.constant 3.200000e+01 : f32
    %298 = vector.broadcast %cst_101 : f32 to vector<32x1xf32>
    %299 = arith.divf %297, %298 : vector<32x1xf32>
    %300 = vector.broadcast %299 : vector<32x1xf32> to vector<32x32xf32>
    %301 = arith.subf %295, %300 : vector<32x32xf32>
    %302 = arith.mulf %301, %301 : vector<32x32xf32>
    %cst_102 = arith.constant dense<0.000000e+00> : vector<32xf32>
    %303 = vector.multi_reduction <add>, %302, %cst_102 [1] : vector<32x32xf32> to vector<32xf32>
    %304 = vector.shape_cast %303 : vector<32xf32> to vector<32x1xf32>
    %cst_103 = arith.constant 3.200000e+01 : f32
    %305 = vector.broadcast %cst_103 : f32 to vector<32x1xf32>
    %306 = arith.divf %304, %305 : vector<32x1xf32>
    %307 = vector.broadcast %299 : vector<32x1xf32> to vector<32x32xf32>
    %308 = arith.subf %295, %307 : vector<32x32xf32>
    %cst_104 = arith.constant 9.99999997E-7 : f32
    %309 = vector.broadcast %cst_104 : f32 to vector<32x1xf32>
    %310 = arith.addf %306, %309 : vector<32x1xf32>
    %311 = math.rsqrt %310 : vector<32x1xf32>
    %312 = vector.broadcast %311 : vector<32x1xf32> to vector<32x32xf32>
    %313 = arith.mulf %308, %312 : vector<32x32xf32>
    %314 = vector.broadcast %182 : vector<1x32xf32> to vector<32x32xf32>
    %315 = arith.mulf %313, %314 : vector<32x32xf32>
    %316 = vector.broadcast %183 : vector<1x32xf32> to vector<32x32xf32>
    %317 = arith.addf %315, %316 : vector<32x32xf32>
    %cst_105 = arith.constant dense<0.000000e+00> : vector<32x64xf32>
    %318 = tpu.matmul %317, %176, %cst_105 {dimension_numbers = #tpu.dot_dimension_numbers<[1], [0], [0], [1], [0, 0, 1, 1], [], []>} : vector<32x32xf32>, vector<32x64xf32>, vector<32x64xf32> -> vector<32x64xf32>
    %319 = vector.broadcast %180 : vector<1x64xf32> to vector<32x64xf32>
    %320 = arith.addf %318, %319 : vector<32x64xf32>
    %cst_106 = arith.constant 0.000000e+00 : f32
    %321 = vector.broadcast %cst_106 : f32 to vector<32x64xf32>
    %322 = arith.maximumf %320, %321 : vector<32x64xf32>
    %cst_107 = arith.constant dense<0.000000e+00> : vector<32x32xf32>
    %323 = tpu.matmul %322, %177, %cst_107 {dimension_numbers = #tpu.dot_dimension_numbers<[1], [0], [0], [1], [0, 0, 1, 1], [], []>} : vector<32x64xf32>, vector<64x32xf32>, vector<32x32xf32> -> vector<32x32xf32>
    %324 = arith.addf %295, %323 : vector<32x32xf32>
    %325 = vector.broadcast %181 : vector<1x32xf32> to vector<32x32xf32>
    %326 = arith.addf %324, %325 : vector<32x32xf32>
    %c32_108 = arith.constant 32 : index
    %c0_109 = arith.constant 0 : index
    %327 = vector.load %arg2[%c32_108, %c0_109] : memref<64x64xf32, #tpu.memory_space<vmem>>, vector<32x8xf32>
    %c48 = arith.constant 48 : index
    %c32_110 = arith.constant 32 : index
    %328 = vector.load %arg2[%c48, %c32_110] : memref<64x64xf32, #tpu.memory_space<vmem>>, vector<1x8xf32>
    %cst_111 = arith.constant dense<0.000000e+00> : vector<32x8xf32>
    %329 = tpu.matmul %326, %327, %cst_111 {dimension_numbers = #tpu.dot_dimension_numbers<[1], [0], [0], [1], [0, 0, 1, 1], [], []>} : vector<32x32xf32>, vector<32x8xf32>, vector<32x8xf32> -> vector<32x8xf32>
    %330 = vector.broadcast %328 : vector<1x8xf32> to vector<32x8xf32>
    %331 = arith.addf %329, %330 : vector<32x8xf32>
    %332 = arith.mulf %2, %1 : vector<32x8xf32>
    %cst_112 = arith.constant 1.000000e+00 : f32
    %333 = vector.broadcast %cst_112 : f32 to vector<32x8xf32>
    %334 = arith.subf %333, %2 : vector<32x8xf32>
    %335 = arith.mulf %334, %331 : vector<32x8xf32>
    %336 = arith.addf %332, %335 : vector<32x8xf32>
    %c16 = arith.constant 16 : index
    %c0_113 = arith.constant 0 : index
    %337 = vector.load %arg2[%c16, %c0_113] : memref<64x64xf32, #tpu.memory_space<vmem>>, vector<8x32xf32>
    %c24 = arith.constant 24 : index
    %c0_114 = arith.constant 0 : index
    %338 = vector.load %arg2[%c24, %c0_114] : memref<64x64xf32, #tpu.memory_space<vmem>>, vector<8x32xf32>
    %c16_115 = arith.constant 16 : index
    %c32_116 = arith.constant 32 : index
    %339 = vector.load %arg2[%c16_115, %c32_116] : memref<64x64xf32, #tpu.memory_space<vmem>>, vector<16x32xf32>
    %cst_117 = arith.constant dense<0.000000e+00> : vector<32x32xf32>
    %340 = tpu.matmul %336, %337, %cst_117 {dimension_numbers = #tpu.dot_dimension_numbers<[1], [0], [0], [1], [0, 0, 1, 1], [], []>} : vector<32x8xf32>, vector<8x32xf32>, vector<32x32xf32> -> vector<32x32xf32>
    %cst_118 = arith.constant dense<0.000000e+00> : vector<32x32xf32>
    %341 = tpu.matmul %2, %338, %cst_118 {dimension_numbers = #tpu.dot_dimension_numbers<[1], [0], [0], [1], [0, 0, 1, 1], [], []>} : vector<32x8xf32>, vector<8x32xf32>, vector<32x32xf32> -> vector<32x32xf32>
    %342 = arith.addf %340, %341 : vector<32x32xf32>
    %343 = vector.shape_cast %342 : vector<32x32xf32> to vector<2x16x32xf32>
    %344 = vector.shape_cast %339 : vector<16x32xf32> to vector<1x16x32xf32>
    %345 = vector.broadcast %344 : vector<1x16x32xf32> to vector<2x16x32xf32>
    %346 = arith.addf %343, %345 : vector<2x16x32xf32>
    %347 = vector.shape_cast %346 : vector<2x16x32xf32> to vector<32x32xf32>
    %348 = tpu.iota {dimensions = array<i32: 1>} : vector<2x16x16xi32>
    %349 = tpu.iota {dimensions = array<i32: 2>} : vector<2x16x16xi32>
    %350 = arith.cmpi eq, %348, %349 : vector<2x16x16xi32>
    %c528 = arith.constant 528 : index
    %c0_119 = arith.constant 0 : index
    %351 = vector.load %arg3[%c528, %c0_119] : memref<1056x64xf32, #tpu.memory_space<vmem>>, vector<32x64xf32>
    %c560 = arith.constant 560 : index
    %c0_120 = arith.constant 0 : index
    %352 = vector.load %arg3[%c560, %c0_120] : memref<1056x64xf32, #tpu.memory_space<vmem>>, vector<32x64xf32>
    %c592 = arith.constant 592 : index
    %c0_121 = arith.constant 0 : index
    %353 = vector.load %arg3[%c592, %c0_121] : memref<1056x64xf32, #tpu.memory_space<vmem>>, vector<32x64xf32>
    %c624 = arith.constant 624 : index
    %c0_122 = arith.constant 0 : index
    %354 = vector.load %arg3[%c624, %c0_122] : memref<1056x64xf32, #tpu.memory_space<vmem>>, vector<64x32xf32>
    %c688 = arith.constant 688 : index
    %c0_123 = arith.constant 0 : index
    %355 = vector.load %arg3[%c688, %c0_123] : memref<1056x64xf32, #tpu.memory_space<vmem>>, vector<32x64xf32>
    %c720 = arith.constant 720 : index
    %c0_124 = arith.constant 0 : index
    %356 = vector.load %arg3[%c720, %c0_124] : memref<1056x64xf32, #tpu.memory_space<vmem>>, vector<64x32xf32>
    %c784 = arith.constant 784 : index
    %c0_125 = arith.constant 0 : index
    %357 = vector.load %arg3[%c784, %c0_125] : memref<1056x64xf32, #tpu.memory_space<vmem>>, vector<1x32xf32>
    %c784_126 = arith.constant 784 : index
    %c32_127 = arith.constant 32 : index
    %358 = vector.load %arg3[%c784_126, %c32_127] : memref<1056x64xf32, #tpu.memory_space<vmem>>, vector<1x32xf32>
    %c785 = arith.constant 785 : index
    %c0_128 = arith.constant 0 : index
    %359 = vector.load %arg3[%c785, %c0_128] : memref<1056x64xf32, #tpu.memory_space<vmem>>, vector<1x64xf32>
    %c786 = arith.constant 786 : index
    %c0_129 = arith.constant 0 : index
    %360 = vector.load %arg3[%c786, %c0_129] : memref<1056x64xf32, #tpu.memory_space<vmem>>, vector<1x32xf32>
    %c786_130 = arith.constant 786 : index
    %c32_131 = arith.constant 32 : index
    %361 = vector.load %arg3[%c786_130, %c32_131] : memref<1056x64xf32, #tpu.memory_space<vmem>>, vector<1x32xf32>
    %c787 = arith.constant 787 : index
    %c0_132 = arith.constant 0 : index
    %362 = vector.load %arg3[%c787, %c0_132] : memref<1056x64xf32, #tpu.memory_space<vmem>>, vector<1x32xf32>
    %cst_133 = arith.constant dense<0.000000e+00> : vector<32xf32>
    %363 = vector.multi_reduction <add>, %347, %cst_133 [1] : vector<32x32xf32> to vector<32xf32>
    %364 = vector.shape_cast %363 : vector<32xf32> to vector<32x1xf32>
    %cst_134 = arith.constant 3.200000e+01 : f32
    %365 = vector.broadcast %cst_134 : f32 to vector<32x1xf32>
    %366 = arith.divf %364, %365 : vector<32x1xf32>
    %367 = vector.broadcast %366 : vector<32x1xf32> to vector<32x32xf32>
    %368 = arith.subf %347, %367 : vector<32x32xf32>
    %369 = arith.mulf %368, %368 : vector<32x32xf32>
    %cst_135 = arith.constant dense<0.000000e+00> : vector<32xf32>
    %370 = vector.multi_reduction <add>, %369, %cst_135 [1] : vector<32x32xf32> to vector<32xf32>
    %371 = vector.shape_cast %370 : vector<32xf32> to vector<32x1xf32>
    %cst_136 = arith.constant 3.200000e+01 : f32
    %372 = vector.broadcast %cst_136 : f32 to vector<32x1xf32>
    %373 = arith.divf %371, %372 : vector<32x1xf32>
    %374 = vector.broadcast %366 : vector<32x1xf32> to vector<32x32xf32>
    %375 = arith.subf %347, %374 : vector<32x32xf32>
    %cst_137 = arith.constant 9.99999974E-6 : f32
    %376 = vector.broadcast %cst_137 : f32 to vector<32x1xf32>
    %377 = arith.addf %373, %376 : vector<32x1xf32>
    %378 = math.rsqrt %377 : vector<32x1xf32>
    %379 = vector.broadcast %378 : vector<32x1xf32> to vector<32x32xf32>
    %380 = arith.mulf %375, %379 : vector<32x32xf32>
    %381 = vector.broadcast %357 : vector<1x32xf32> to vector<32x32xf32>
    %382 = arith.mulf %380, %381 : vector<32x32xf32>
    %383 = vector.broadcast %358 : vector<1x32xf32> to vector<32x32xf32>
    %384 = arith.addf %382, %383 : vector<32x32xf32>
    %cst_138 = arith.constant dense<0.000000e+00> : vector<32x64xf32>
    %385 = tpu.matmul %384, %351, %cst_138 {dimension_numbers = #tpu.dot_dimension_numbers<[1], [0], [0], [1], [0, 0, 1, 1], [], []>} : vector<32x32xf32>, vector<32x64xf32>, vector<32x64xf32> -> vector<32x64xf32>
    %cst_139 = arith.constant dense<0.000000e+00> : vector<32x64xf32>
    %386 = tpu.matmul %384, %352, %cst_139 {dimension_numbers = #tpu.dot_dimension_numbers<[1], [0], [0], [1], [0, 0, 1, 1], [], []>} : vector<32x32xf32>, vector<32x64xf32>, vector<32x64xf32> -> vector<32x64xf32>
    %cst_140 = arith.constant dense<0.000000e+00> : vector<32x64xf32>
    %387 = tpu.matmul %384, %353, %cst_140 {dimension_numbers = #tpu.dot_dimension_numbers<[1], [0], [0], [1], [0, 0, 1, 1], [], []>} : vector<32x32xf32>, vector<32x64xf32>, vector<32x64xf32> -> vector<32x64xf32>
    %388 = vector.extract_strided_slice %385 {offsets = [0, 0], sizes = [32, 16], strides = [1, 1]} : vector<32x64xf32> to vector<32x16xf32>
    %389 = vector.shape_cast %388 : vector<32x16xf32> to vector<2x16x16xf32>
    %390 = vector.extract_strided_slice %386 {offsets = [0, 0], sizes = [32, 16], strides = [1, 1]} : vector<32x64xf32> to vector<32x16xf32>
    %391 = vector.shape_cast %390 : vector<32x16xf32> to vector<2x16x16xf32>
    %392 = vector.extract_strided_slice %387 {offsets = [0, 0], sizes = [32, 16], strides = [1, 1]} : vector<32x64xf32> to vector<32x16xf32>
    %393 = vector.shape_cast %392 : vector<32x16xf32> to vector<2x16x16xf32>
    "tpu.trace_start"() <{level = 10 : i32, message = "btd,bsd->bts"}> : () -> ()
    %cst_141 = arith.constant dense<0.000000e+00> : vector<2x16x16xf32>
    %394 = tpu.matmul %389, %391, %cst_141 {dimension_numbers = #tpu.dot_dimension_numbers<[2], [2], [1], [1], [0, 0, 0, 1, 1, 1], [0], [0]>} : vector<2x16x16xf32>, vector<2x16x16xf32>, vector<2x16x16xf32> -> vector<2x16x16xf32>
    %cst_142 = arith.constant -1.000000e+09 : f32
    "tpu.trace_stop"() : () -> ()
    %395 = vector.broadcast %cst_142 : f32 to vector<2x16x16xf32>
    %396 = arith.select %350, %395, %394 : vector<2x16x16xi1>, vector<2x16x16xf32>
    %cst_143 = arith.constant dense<0xFF800000> : vector<2x16xf32>
    %397 = vector.multi_reduction <maximumf>, %396, %cst_143 [2] : vector<2x16x16xf32> to vector<2x16xf32>
    %398 = vector.shape_cast %397 : vector<2x16xf32> to vector<2x16x1xf32>
    %399 = vector.broadcast %398 : vector<2x16x1xf32> to vector<2x16x16xf32>
    %400 = arith.subf %396, %399 : vector<2x16x16xf32>
    %401 = math.exp %400 : vector<2x16x16xf32>
    %cst_144 = arith.constant dense<0.000000e+00> : vector<2x16xf32>
    %402 = vector.multi_reduction <add>, %401, %cst_144 [2] : vector<2x16x16xf32> to vector<2x16xf32>
    %403 = vector.shape_cast %402 : vector<2x16xf32> to vector<2x16x1xf32>
    %404 = tpu.reciprocal %403 {approx = true} : vector<2x16x1xf32> -> vector<2x16x1xf32>
    %405 = vector.broadcast %404 : vector<2x16x1xf32> to vector<2x16x16xf32>
    %406 = arith.mulf %401, %405 : vector<2x16x16xf32>
    "tpu.trace_start"() <{level = 10 : i32, message = "bts,bsd->btd"}> : () -> ()
    %cst_145 = arith.constant dense<0.000000e+00> : vector<2x16x16xf32>
    %407 = tpu.matmul %406, %393, %cst_145 {dimension_numbers = #tpu.dot_dimension_numbers<[2], [1], [1], [2], [0, 0, 0, 1, 1, 2], [0], [0]>} : vector<2x16x16xf32>, vector<2x16x16xf32>, vector<2x16x16xf32> -> vector<2x16x16xf32>
    "tpu.trace_stop"() : () -> ()
    %408 = vector.shape_cast %407 : vector<2x16x16xf32> to vector<32x16xf32>
    %409 = vector.extract_strided_slice %385 {offsets = [0, 16], sizes = [32, 16], strides = [1, 1]} : vector<32x64xf32> to vector<32x16xf32>
    %410 = vector.shape_cast %409 : vector<32x16xf32> to vector<2x16x16xf32>
    %411 = vector.extract_strided_slice %386 {offsets = [0, 16], sizes = [32, 16], strides = [1, 1]} : vector<32x64xf32> to vector<32x16xf32>
    %412 = vector.shape_cast %411 : vector<32x16xf32> to vector<2x16x16xf32>
    %413 = vector.extract_strided_slice %387 {offsets = [0, 16], sizes = [32, 16], strides = [1, 1]} : vector<32x64xf32> to vector<32x16xf32>
    %414 = vector.shape_cast %413 : vector<32x16xf32> to vector<2x16x16xf32>
    "tpu.trace_start"() <{level = 10 : i32, message = "btd,bsd->bts"}> : () -> ()
    %cst_146 = arith.constant dense<0.000000e+00> : vector<2x16x16xf32>
    %415 = tpu.matmul %410, %412, %cst_146 {dimension_numbers = #tpu.dot_dimension_numbers<[2], [2], [1], [1], [0, 0, 0, 1, 1, 1], [0], [0]>} : vector<2x16x16xf32>, vector<2x16x16xf32>, vector<2x16x16xf32> -> vector<2x16x16xf32>
    %cst_147 = arith.constant -1.000000e+09 : f32
    "tpu.trace_stop"() : () -> ()
    %416 = vector.broadcast %cst_147 : f32 to vector<2x16x16xf32>
    %417 = arith.select %350, %416, %415 : vector<2x16x16xi1>, vector<2x16x16xf32>
    %cst_148 = arith.constant dense<0xFF800000> : vector<2x16xf32>
    %418 = vector.multi_reduction <maximumf>, %417, %cst_148 [2] : vector<2x16x16xf32> to vector<2x16xf32>
    %419 = vector.shape_cast %418 : vector<2x16xf32> to vector<2x16x1xf32>
    %420 = vector.broadcast %419 : vector<2x16x1xf32> to vector<2x16x16xf32>
    %421 = arith.subf %417, %420 : vector<2x16x16xf32>
    %422 = math.exp %421 : vector<2x16x16xf32>
    %cst_149 = arith.constant dense<0.000000e+00> : vector<2x16xf32>
    %423 = vector.multi_reduction <add>, %422, %cst_149 [2] : vector<2x16x16xf32> to vector<2x16xf32>
    %424 = vector.shape_cast %423 : vector<2x16xf32> to vector<2x16x1xf32>
    %425 = tpu.reciprocal %424 {approx = true} : vector<2x16x1xf32> -> vector<2x16x1xf32>
    %426 = vector.broadcast %425 : vector<2x16x1xf32> to vector<2x16x16xf32>
    %427 = arith.mulf %422, %426 : vector<2x16x16xf32>
    "tpu.trace_start"() <{level = 10 : i32, message = "bts,bsd->btd"}> : () -> ()
    %cst_150 = arith.constant dense<0.000000e+00> : vector<2x16x16xf32>
    %428 = tpu.matmul %427, %414, %cst_150 {dimension_numbers = #tpu.dot_dimension_numbers<[2], [1], [1], [2], [0, 0, 0, 1, 1, 2], [0], [0]>} : vector<2x16x16xf32>, vector<2x16x16xf32>, vector<2x16x16xf32> -> vector<2x16x16xf32>
    "tpu.trace_stop"() : () -> ()
    %429 = vector.shape_cast %428 : vector<2x16x16xf32> to vector<32x16xf32>
    %430 = vector.extract_strided_slice %385 {offsets = [0, 32], sizes = [32, 16], strides = [1, 1]} : vector<32x64xf32> to vector<32x16xf32>
    %431 = vector.shape_cast %430 : vector<32x16xf32> to vector<2x16x16xf32>
    %432 = vector.extract_strided_slice %386 {offsets = [0, 32], sizes = [32, 16], strides = [1, 1]} : vector<32x64xf32> to vector<32x16xf32>
    %433 = vector.shape_cast %432 : vector<32x16xf32> to vector<2x16x16xf32>
    %434 = vector.extract_strided_slice %387 {offsets = [0, 32], sizes = [32, 16], strides = [1, 1]} : vector<32x64xf32> to vector<32x16xf32>
    %435 = vector.shape_cast %434 : vector<32x16xf32> to vector<2x16x16xf32>
    "tpu.trace_start"() <{level = 10 : i32, message = "btd,bsd->bts"}> : () -> ()
    %cst_151 = arith.constant dense<0.000000e+00> : vector<2x16x16xf32>
    %436 = tpu.matmul %431, %433, %cst_151 {dimension_numbers = #tpu.dot_dimension_numbers<[2], [2], [1], [1], [0, 0, 0, 1, 1, 1], [0], [0]>} : vector<2x16x16xf32>, vector<2x16x16xf32>, vector<2x16x16xf32> -> vector<2x16x16xf32>
    %cst_152 = arith.constant -1.000000e+09 : f32
    "tpu.trace_stop"() : () -> ()
    %437 = vector.broadcast %cst_152 : f32 to vector<2x16x16xf32>
    %438 = arith.select %350, %437, %436 : vector<2x16x16xi1>, vector<2x16x16xf32>
    %cst_153 = arith.constant dense<0xFF800000> : vector<2x16xf32>
    %439 = vector.multi_reduction <maximumf>, %438, %cst_153 [2] : vector<2x16x16xf32> to vector<2x16xf32>
    %440 = vector.shape_cast %439 : vector<2x16xf32> to vector<2x16x1xf32>
    %441 = vector.broadcast %440 : vector<2x16x1xf32> to vector<2x16x16xf32>
    %442 = arith.subf %438, %441 : vector<2x16x16xf32>
    %443 = math.exp %442 : vector<2x16x16xf32>
    %cst_154 = arith.constant dense<0.000000e+00> : vector<2x16xf32>
    %444 = vector.multi_reduction <add>, %443, %cst_154 [2] : vector<2x16x16xf32> to vector<2x16xf32>
    %445 = vector.shape_cast %444 : vector<2x16xf32> to vector<2x16x1xf32>
    %446 = tpu.reciprocal %445 {approx = true} : vector<2x16x1xf32> -> vector<2x16x1xf32>
    %447 = vector.broadcast %446 : vector<2x16x1xf32> to vector<2x16x16xf32>
    %448 = arith.mulf %443, %447 : vector<2x16x16xf32>
    "tpu.trace_start"() <{level = 10 : i32, message = "bts,bsd->btd"}> : () -> ()
    %cst_155 = arith.constant dense<0.000000e+00> : vector<2x16x16xf32>
    %449 = tpu.matmul %448, %435, %cst_155 {dimension_numbers = #tpu.dot_dimension_numbers<[2], [1], [1], [2], [0, 0, 0, 1, 1, 2], [0], [0]>} : vector<2x16x16xf32>, vector<2x16x16xf32>, vector<2x16x16xf32> -> vector<2x16x16xf32>
    "tpu.trace_stop"() : () -> ()
    %450 = vector.shape_cast %449 : vector<2x16x16xf32> to vector<32x16xf32>
    %451 = vector.extract_strided_slice %385 {offsets = [0, 48], sizes = [32, 16], strides = [1, 1]} : vector<32x64xf32> to vector<32x16xf32>
    %452 = vector.shape_cast %451 : vector<32x16xf32> to vector<2x16x16xf32>
    %453 = vector.extract_strided_slice %386 {offsets = [0, 48], sizes = [32, 16], strides = [1, 1]} : vector<32x64xf32> to vector<32x16xf32>
    %454 = vector.shape_cast %453 : vector<32x16xf32> to vector<2x16x16xf32>
    %455 = vector.extract_strided_slice %387 {offsets = [0, 48], sizes = [32, 16], strides = [1, 1]} : vector<32x64xf32> to vector<32x16xf32>
    %456 = vector.shape_cast %455 : vector<32x16xf32> to vector<2x16x16xf32>
    "tpu.trace_start"() <{level = 10 : i32, message = "btd,bsd->bts"}> : () -> ()
    %cst_156 = arith.constant dense<0.000000e+00> : vector<2x16x16xf32>
    %457 = tpu.matmul %452, %454, %cst_156 {dimension_numbers = #tpu.dot_dimension_numbers<[2], [2], [1], [1], [0, 0, 0, 1, 1, 1], [0], [0]>} : vector<2x16x16xf32>, vector<2x16x16xf32>, vector<2x16x16xf32> -> vector<2x16x16xf32>
    %cst_157 = arith.constant -1.000000e+09 : f32
    "tpu.trace_stop"() : () -> ()
    %458 = vector.broadcast %cst_157 : f32 to vector<2x16x16xf32>
    %459 = arith.select %350, %458, %457 : vector<2x16x16xi1>, vector<2x16x16xf32>
    %cst_158 = arith.constant dense<0xFF800000> : vector<2x16xf32>
    %460 = vector.multi_reduction <maximumf>, %459, %cst_158 [2] : vector<2x16x16xf32> to vector<2x16xf32>
    %461 = vector.shape_cast %460 : vector<2x16xf32> to vector<2x16x1xf32>
    %462 = vector.broadcast %461 : vector<2x16x1xf32> to vector<2x16x16xf32>
    %463 = arith.subf %459, %462 : vector<2x16x16xf32>
    %464 = math.exp %463 : vector<2x16x16xf32>
    %cst_159 = arith.constant dense<0.000000e+00> : vector<2x16xf32>
    %465 = vector.multi_reduction <add>, %464, %cst_159 [2] : vector<2x16x16xf32> to vector<2x16xf32>
    %466 = vector.shape_cast %465 : vector<2x16xf32> to vector<2x16x1xf32>
    %467 = tpu.reciprocal %466 {approx = true} : vector<2x16x1xf32> -> vector<2x16x1xf32>
    %468 = vector.broadcast %467 : vector<2x16x1xf32> to vector<2x16x16xf32>
    %469 = arith.mulf %464, %468 : vector<2x16x16xf32>
    "tpu.trace_start"() <{level = 10 : i32, message = "bts,bsd->btd"}> : () -> ()
    %cst_160 = arith.constant dense<0.000000e+00> : vector<2x16x16xf32>
    %470 = tpu.matmul %469, %456, %cst_160 {dimension_numbers = #tpu.dot_dimension_numbers<[2], [1], [1], [2], [0, 0, 0, 1, 1, 2], [0], [0]>} : vector<2x16x16xf32>, vector<2x16x16xf32>, vector<2x16x16xf32> -> vector<2x16x16xf32>
    "tpu.trace_stop"() : () -> ()
    %471 = vector.shape_cast %470 : vector<2x16x16xf32> to vector<32x16xf32>
    %472 = tpu.concatenate %408, %429, %450, %471 in 1 : vector<32x16xf32>, vector<32x16xf32>, vector<32x16xf32>, vector<32x16xf32> -> vector<32x64xf32>
    %cst_161 = arith.constant dense<0.000000e+00> : vector<32x32xf32>
    %473 = tpu.matmul %472, %354, %cst_161 {dimension_numbers = #tpu.dot_dimension_numbers<[1], [0], [0], [1], [0, 0, 1, 1], [], []>} : vector<32x64xf32>, vector<64x32xf32>, vector<32x32xf32> -> vector<32x32xf32>
    %474 = arith.addf %347, %473 : vector<32x32xf32>
    %cst_162 = arith.constant dense<0.000000e+00> : vector<32xf32>
    %475 = vector.multi_reduction <add>, %474, %cst_162 [1] : vector<32x32xf32> to vector<32xf32>
    %476 = vector.shape_cast %475 : vector<32xf32> to vector<32x1xf32>
    %cst_163 = arith.constant 3.200000e+01 : f32
    %477 = vector.broadcast %cst_163 : f32 to vector<32x1xf32>
    %478 = arith.divf %476, %477 : vector<32x1xf32>
    %479 = vector.broadcast %478 : vector<32x1xf32> to vector<32x32xf32>
    %480 = arith.subf %474, %479 : vector<32x32xf32>
    %481 = arith.mulf %480, %480 : vector<32x32xf32>
    %cst_164 = arith.constant dense<0.000000e+00> : vector<32xf32>
    %482 = vector.multi_reduction <add>, %481, %cst_164 [1] : vector<32x32xf32> to vector<32xf32>
    %483 = vector.shape_cast %482 : vector<32xf32> to vector<32x1xf32>
    %cst_165 = arith.constant 3.200000e+01 : f32
    %484 = vector.broadcast %cst_165 : f32 to vector<32x1xf32>
    %485 = arith.divf %483, %484 : vector<32x1xf32>
    %486 = vector.broadcast %478 : vector<32x1xf32> to vector<32x32xf32>
    %487 = arith.subf %474, %486 : vector<32x32xf32>
    %cst_166 = arith.constant 9.99999997E-7 : f32
    %488 = vector.broadcast %cst_166 : f32 to vector<32x1xf32>
    %489 = arith.addf %485, %488 : vector<32x1xf32>
    %490 = math.rsqrt %489 : vector<32x1xf32>
    %491 = vector.broadcast %490 : vector<32x1xf32> to vector<32x32xf32>
    %492 = arith.mulf %487, %491 : vector<32x32xf32>
    %493 = vector.broadcast %361 : vector<1x32xf32> to vector<32x32xf32>
    %494 = arith.mulf %492, %493 : vector<32x32xf32>
    %495 = vector.broadcast %362 : vector<1x32xf32> to vector<32x32xf32>
    %496 = arith.addf %494, %495 : vector<32x32xf32>
    %cst_167 = arith.constant dense<0.000000e+00> : vector<32x64xf32>
    %497 = tpu.matmul %496, %355, %cst_167 {dimension_numbers = #tpu.dot_dimension_numbers<[1], [0], [0], [1], [0, 0, 1, 1], [], []>} : vector<32x32xf32>, vector<32x64xf32>, vector<32x64xf32> -> vector<32x64xf32>
    %498 = vector.broadcast %359 : vector<1x64xf32> to vector<32x64xf32>
    %499 = arith.addf %497, %498 : vector<32x64xf32>
    %cst_168 = arith.constant 0.000000e+00 : f32
    %500 = vector.broadcast %cst_168 : f32 to vector<32x64xf32>
    %501 = arith.maximumf %499, %500 : vector<32x64xf32>
    %cst_169 = arith.constant dense<0.000000e+00> : vector<32x32xf32>
    %502 = tpu.matmul %501, %356, %cst_169 {dimension_numbers = #tpu.dot_dimension_numbers<[1], [0], [0], [1], [0, 0, 1, 1], [], []>} : vector<32x64xf32>, vector<64x32xf32>, vector<32x32xf32> -> vector<32x32xf32>
    %503 = arith.addf %474, %502 : vector<32x32xf32>
    %504 = vector.broadcast %360 : vector<1x32xf32> to vector<32x32xf32>
    %505 = arith.addf %503, %504 : vector<32x32xf32>
    %c792 = arith.constant 792 : index
    %c0_170 = arith.constant 0 : index
    %506 = vector.load %arg3[%c792, %c0_170] : memref<1056x64xf32, #tpu.memory_space<vmem>>, vector<32x64xf32>
    %c824 = arith.constant 824 : index
    %c0_171 = arith.constant 0 : index
    %507 = vector.load %arg3[%c824, %c0_171] : memref<1056x64xf32, #tpu.memory_space<vmem>>, vector<32x64xf32>
    %c856 = arith.constant 856 : index
    %c0_172 = arith.constant 0 : index
    %508 = vector.load %arg3[%c856, %c0_172] : memref<1056x64xf32, #tpu.memory_space<vmem>>, vector<32x64xf32>
    %c888 = arith.constant 888 : index
    %c0_173 = arith.constant 0 : index
    %509 = vector.load %arg3[%c888, %c0_173] : memref<1056x64xf32, #tpu.memory_space<vmem>>, vector<64x32xf32>
    %c952 = arith.constant 952 : index
    %c0_174 = arith.constant 0 : index
    %510 = vector.load %arg3[%c952, %c0_174] : memref<1056x64xf32, #tpu.memory_space<vmem>>, vector<32x64xf32>
    %c984 = arith.constant 984 : index
    %c0_175 = arith.constant 0 : index
    %511 = vector.load %arg3[%c984, %c0_175] : memref<1056x64xf32, #tpu.memory_space<vmem>>, vector<64x32xf32>
    %c1048 = arith.constant 1048 : index
    %c0_176 = arith.constant 0 : index
    %512 = vector.load %arg3[%c1048, %c0_176] : memref<1056x64xf32, #tpu.memory_space<vmem>>, vector<1x32xf32>
    %c1048_177 = arith.constant 1048 : index
    %c32_178 = arith.constant 32 : index
    %513 = vector.load %arg3[%c1048_177, %c32_178] : memref<1056x64xf32, #tpu.memory_space<vmem>>, vector<1x32xf32>
    %c1049 = arith.constant 1049 : index
    %c0_179 = arith.constant 0 : index
    %514 = vector.load %arg3[%c1049, %c0_179] : memref<1056x64xf32, #tpu.memory_space<vmem>>, vector<1x64xf32>
    %c1050 = arith.constant 1050 : index
    %c0_180 = arith.constant 0 : index
    %515 = vector.load %arg3[%c1050, %c0_180] : memref<1056x64xf32, #tpu.memory_space<vmem>>, vector<1x32xf32>
    %c1050_181 = arith.constant 1050 : index
    %c32_182 = arith.constant 32 : index
    %516 = vector.load %arg3[%c1050_181, %c32_182] : memref<1056x64xf32, #tpu.memory_space<vmem>>, vector<1x32xf32>
    %c1051 = arith.constant 1051 : index
    %c0_183 = arith.constant 0 : index
    %517 = vector.load %arg3[%c1051, %c0_183] : memref<1056x64xf32, #tpu.memory_space<vmem>>, vector<1x32xf32>
    %cst_184 = arith.constant dense<0.000000e+00> : vector<32xf32>
    %518 = vector.multi_reduction <add>, %505, %cst_184 [1] : vector<32x32xf32> to vector<32xf32>
    %519 = vector.shape_cast %518 : vector<32xf32> to vector<32x1xf32>
    %cst_185 = arith.constant 3.200000e+01 : f32
    %520 = vector.broadcast %cst_185 : f32 to vector<32x1xf32>
    %521 = arith.divf %519, %520 : vector<32x1xf32>
    %522 = vector.broadcast %521 : vector<32x1xf32> to vector<32x32xf32>
    %523 = arith.subf %505, %522 : vector<32x32xf32>
    %524 = arith.mulf %523, %523 : vector<32x32xf32>
    %cst_186 = arith.constant dense<0.000000e+00> : vector<32xf32>
    %525 = vector.multi_reduction <add>, %524, %cst_186 [1] : vector<32x32xf32> to vector<32xf32>
    %526 = vector.shape_cast %525 : vector<32xf32> to vector<32x1xf32>
    %cst_187 = arith.constant 3.200000e+01 : f32
    %527 = vector.broadcast %cst_187 : f32 to vector<32x1xf32>
    %528 = arith.divf %526, %527 : vector<32x1xf32>
    %529 = vector.broadcast %521 : vector<32x1xf32> to vector<32x32xf32>
    %530 = arith.subf %505, %529 : vector<32x32xf32>
    %cst_188 = arith.constant 9.99999974E-6 : f32
    %531 = vector.broadcast %cst_188 : f32 to vector<32x1xf32>
    %532 = arith.addf %528, %531 : vector<32x1xf32>
    %533 = math.rsqrt %532 : vector<32x1xf32>
    %534 = vector.broadcast %533 : vector<32x1xf32> to vector<32x32xf32>
    %535 = arith.mulf %530, %534 : vector<32x32xf32>
    %536 = vector.broadcast %512 : vector<1x32xf32> to vector<32x32xf32>
    %537 = arith.mulf %535, %536 : vector<32x32xf32>
    %538 = vector.broadcast %513 : vector<1x32xf32> to vector<32x32xf32>
    %539 = arith.addf %537, %538 : vector<32x32xf32>
    %cst_189 = arith.constant dense<0.000000e+00> : vector<32x64xf32>
    %540 = tpu.matmul %539, %506, %cst_189 {dimension_numbers = #tpu.dot_dimension_numbers<[1], [0], [0], [1], [0, 0, 1, 1], [], []>} : vector<32x32xf32>, vector<32x64xf32>, vector<32x64xf32> -> vector<32x64xf32>
    %cst_190 = arith.constant dense<0.000000e+00> : vector<32x64xf32>
    %541 = tpu.matmul %539, %507, %cst_190 {dimension_numbers = #tpu.dot_dimension_numbers<[1], [0], [0], [1], [0, 0, 1, 1], [], []>} : vector<32x32xf32>, vector<32x64xf32>, vector<32x64xf32> -> vector<32x64xf32>
    %cst_191 = arith.constant dense<0.000000e+00> : vector<32x64xf32>
    %542 = tpu.matmul %539, %508, %cst_191 {dimension_numbers = #tpu.dot_dimension_numbers<[1], [0], [0], [1], [0, 0, 1, 1], [], []>} : vector<32x32xf32>, vector<32x64xf32>, vector<32x64xf32> -> vector<32x64xf32>
    %cst_192 = arith.constant 0.000000e+00 : f32
    %543 = vector.broadcast %cst_192 : f32 to vector<2x16x16xf32>
    %544 = vector.extract_strided_slice %540 {offsets = [0, 0], sizes = [32, 16], strides = [1, 1]} : vector<32x64xf32> to vector<32x16xf32>
    %545 = vector.shape_cast %544 : vector<32x16xf32> to vector<2x16x16xf32>
    %546 = vector.extract_strided_slice %541 {offsets = [0, 0], sizes = [32, 16], strides = [1, 1]} : vector<32x64xf32> to vector<32x16xf32>
    %547 = vector.shape_cast %546 : vector<32x16xf32> to vector<2x16x16xf32>
    %548 = vector.extract_strided_slice %542 {offsets = [0, 0], sizes = [32, 16], strides = [1, 1]} : vector<32x64xf32> to vector<32x16xf32>
    %549 = vector.shape_cast %548 : vector<32x16xf32> to vector<2x16x16xf32>
    "tpu.trace_start"() <{level = 10 : i32, message = "btd,bsd->bts"}> : () -> ()
    %cst_193 = arith.constant dense<0.000000e+00> : vector<2x16x16xf32>
    %550 = tpu.matmul %545, %547, %cst_193 {dimension_numbers = #tpu.dot_dimension_numbers<[2], [2], [1], [1], [0, 0, 0, 1, 1, 1], [0], [0]>} : vector<2x16x16xf32>, vector<2x16x16xf32>, vector<2x16x16xf32> -> vector<2x16x16xf32>
    %cst_194 = arith.constant -1.000000e+09 : f32
    "tpu.trace_stop"() : () -> ()
    %551 = vector.broadcast %cst_194 : f32 to vector<2x16x16xf32>
    %552 = arith.select %350, %551, %550 : vector<2x16x16xi1>, vector<2x16x16xf32>
    %cst_195 = arith.constant dense<0xFF800000> : vector<2x16xf32>
    %553 = vector.multi_reduction <maximumf>, %552, %cst_195 [2] : vector<2x16x16xf32> to vector<2x16xf32>
    %554 = vector.shape_cast %553 : vector<2x16xf32> to vector<2x16x1xf32>
    %555 = vector.broadcast %554 : vector<2x16x1xf32> to vector<2x16x16xf32>
    %556 = arith.subf %552, %555 : vector<2x16x16xf32>
    %557 = math.exp %556 : vector<2x16x16xf32>
    %cst_196 = arith.constant dense<0.000000e+00> : vector<2x16xf32>
    %558 = vector.multi_reduction <add>, %557, %cst_196 [2] : vector<2x16x16xf32> to vector<2x16xf32>
    %559 = vector.shape_cast %558 : vector<2x16xf32> to vector<2x16x1xf32>
    %560 = tpu.reciprocal %559 {approx = true} : vector<2x16x1xf32> -> vector<2x16x1xf32>
    %561 = vector.broadcast %560 : vector<2x16x1xf32> to vector<2x16x16xf32>
    %562 = arith.mulf %557, %561 : vector<2x16x16xf32>
    %563 = arith.addf %543, %562 : vector<2x16x16xf32>
    "tpu.trace_start"() <{level = 10 : i32, message = "bts,bsd->btd"}> : () -> ()
    %cst_197 = arith.constant dense<0.000000e+00> : vector<2x16x16xf32>
    %564 = tpu.matmul %562, %549, %cst_197 {dimension_numbers = #tpu.dot_dimension_numbers<[2], [1], [1], [2], [0, 0, 0, 1, 1, 2], [0], [0]>} : vector<2x16x16xf32>, vector<2x16x16xf32>, vector<2x16x16xf32> -> vector<2x16x16xf32>
    "tpu.trace_stop"() : () -> ()
    %565 = vector.shape_cast %564 : vector<2x16x16xf32> to vector<32x16xf32>
    %566 = vector.extract_strided_slice %540 {offsets = [0, 16], sizes = [32, 16], strides = [1, 1]} : vector<32x64xf32> to vector<32x16xf32>
    %567 = vector.shape_cast %566 : vector<32x16xf32> to vector<2x16x16xf32>
    %568 = vector.extract_strided_slice %541 {offsets = [0, 16], sizes = [32, 16], strides = [1, 1]} : vector<32x64xf32> to vector<32x16xf32>
    %569 = vector.shape_cast %568 : vector<32x16xf32> to vector<2x16x16xf32>
    %570 = vector.extract_strided_slice %542 {offsets = [0, 16], sizes = [32, 16], strides = [1, 1]} : vector<32x64xf32> to vector<32x16xf32>
    %571 = vector.shape_cast %570 : vector<32x16xf32> to vector<2x16x16xf32>
    "tpu.trace_start"() <{level = 10 : i32, message = "btd,bsd->bts"}> : () -> ()
    %cst_198 = arith.constant dense<0.000000e+00> : vector<2x16x16xf32>
    %572 = tpu.matmul %567, %569, %cst_198 {dimension_numbers = #tpu.dot_dimension_numbers<[2], [2], [1], [1], [0, 0, 0, 1, 1, 1], [0], [0]>} : vector<2x16x16xf32>, vector<2x16x16xf32>, vector<2x16x16xf32> -> vector<2x16x16xf32>
    %cst_199 = arith.constant -1.000000e+09 : f32
    "tpu.trace_stop"() : () -> ()
    %573 = vector.broadcast %cst_199 : f32 to vector<2x16x16xf32>
    %574 = arith.select %350, %573, %572 : vector<2x16x16xi1>, vector<2x16x16xf32>
    %cst_200 = arith.constant dense<0xFF800000> : vector<2x16xf32>
    %575 = vector.multi_reduction <maximumf>, %574, %cst_200 [2] : vector<2x16x16xf32> to vector<2x16xf32>
    %576 = vector.shape_cast %575 : vector<2x16xf32> to vector<2x16x1xf32>
    %577 = vector.broadcast %576 : vector<2x16x1xf32> to vector<2x16x16xf32>
    %578 = arith.subf %574, %577 : vector<2x16x16xf32>
    %579 = math.exp %578 : vector<2x16x16xf32>
    %cst_201 = arith.constant dense<0.000000e+00> : vector<2x16xf32>
    %580 = vector.multi_reduction <add>, %579, %cst_201 [2] : vector<2x16x16xf32> to vector<2x16xf32>
    %581 = vector.shape_cast %580 : vector<2x16xf32> to vector<2x16x1xf32>
    %582 = tpu.reciprocal %581 {approx = true} : vector<2x16x1xf32> -> vector<2x16x1xf32>
    %583 = vector.broadcast %582 : vector<2x16x1xf32> to vector<2x16x16xf32>
    %584 = arith.mulf %579, %583 : vector<2x16x16xf32>
    %585 = arith.addf %563, %584 : vector<2x16x16xf32>
    "tpu.trace_start"() <{level = 10 : i32, message = "bts,bsd->btd"}> : () -> ()
    %cst_202 = arith.constant dense<0.000000e+00> : vector<2x16x16xf32>
    %586 = tpu.matmul %584, %571, %cst_202 {dimension_numbers = #tpu.dot_dimension_numbers<[2], [1], [1], [2], [0, 0, 0, 1, 1, 2], [0], [0]>} : vector<2x16x16xf32>, vector<2x16x16xf32>, vector<2x16x16xf32> -> vector<2x16x16xf32>
    "tpu.trace_stop"() : () -> ()
    %587 = vector.shape_cast %586 : vector<2x16x16xf32> to vector<32x16xf32>
    %588 = vector.extract_strided_slice %540 {offsets = [0, 32], sizes = [32, 16], strides = [1, 1]} : vector<32x64xf32> to vector<32x16xf32>
    %589 = vector.shape_cast %588 : vector<32x16xf32> to vector<2x16x16xf32>
    %590 = vector.extract_strided_slice %541 {offsets = [0, 32], sizes = [32, 16], strides = [1, 1]} : vector<32x64xf32> to vector<32x16xf32>
    %591 = vector.shape_cast %590 : vector<32x16xf32> to vector<2x16x16xf32>
    %592 = vector.extract_strided_slice %542 {offsets = [0, 32], sizes = [32, 16], strides = [1, 1]} : vector<32x64xf32> to vector<32x16xf32>
    %593 = vector.shape_cast %592 : vector<32x16xf32> to vector<2x16x16xf32>
    "tpu.trace_start"() <{level = 10 : i32, message = "btd,bsd->bts"}> : () -> ()
    %cst_203 = arith.constant dense<0.000000e+00> : vector<2x16x16xf32>
    %594 = tpu.matmul %589, %591, %cst_203 {dimension_numbers = #tpu.dot_dimension_numbers<[2], [2], [1], [1], [0, 0, 0, 1, 1, 1], [0], [0]>} : vector<2x16x16xf32>, vector<2x16x16xf32>, vector<2x16x16xf32> -> vector<2x16x16xf32>
    %cst_204 = arith.constant -1.000000e+09 : f32
    "tpu.trace_stop"() : () -> ()
    %595 = vector.broadcast %cst_204 : f32 to vector<2x16x16xf32>
    %596 = arith.select %350, %595, %594 : vector<2x16x16xi1>, vector<2x16x16xf32>
    %cst_205 = arith.constant dense<0xFF800000> : vector<2x16xf32>
    %597 = vector.multi_reduction <maximumf>, %596, %cst_205 [2] : vector<2x16x16xf32> to vector<2x16xf32>
    %598 = vector.shape_cast %597 : vector<2x16xf32> to vector<2x16x1xf32>
    %599 = vector.broadcast %598 : vector<2x16x1xf32> to vector<2x16x16xf32>
    %600 = arith.subf %596, %599 : vector<2x16x16xf32>
    %601 = math.exp %600 : vector<2x16x16xf32>
    %cst_206 = arith.constant dense<0.000000e+00> : vector<2x16xf32>
    %602 = vector.multi_reduction <add>, %601, %cst_206 [2] : vector<2x16x16xf32> to vector<2x16xf32>
    %603 = vector.shape_cast %602 : vector<2x16xf32> to vector<2x16x1xf32>
    %604 = tpu.reciprocal %603 {approx = true} : vector<2x16x1xf32> -> vector<2x16x1xf32>
    %605 = vector.broadcast %604 : vector<2x16x1xf32> to vector<2x16x16xf32>
    %606 = arith.mulf %601, %605 : vector<2x16x16xf32>
    %607 = arith.addf %585, %606 : vector<2x16x16xf32>
    "tpu.trace_start"() <{level = 10 : i32, message = "bts,bsd->btd"}> : () -> ()
    %cst_207 = arith.constant dense<0.000000e+00> : vector<2x16x16xf32>
    %608 = tpu.matmul %606, %593, %cst_207 {dimension_numbers = #tpu.dot_dimension_numbers<[2], [1], [1], [2], [0, 0, 0, 1, 1, 2], [0], [0]>} : vector<2x16x16xf32>, vector<2x16x16xf32>, vector<2x16x16xf32> -> vector<2x16x16xf32>
    "tpu.trace_stop"() : () -> ()
    %609 = vector.shape_cast %608 : vector<2x16x16xf32> to vector<32x16xf32>
    %610 = vector.extract_strided_slice %540 {offsets = [0, 48], sizes = [32, 16], strides = [1, 1]} : vector<32x64xf32> to vector<32x16xf32>
    %611 = vector.shape_cast %610 : vector<32x16xf32> to vector<2x16x16xf32>
    %612 = vector.extract_strided_slice %541 {offsets = [0, 48], sizes = [32, 16], strides = [1, 1]} : vector<32x64xf32> to vector<32x16xf32>
    %613 = vector.shape_cast %612 : vector<32x16xf32> to vector<2x16x16xf32>
    %614 = vector.extract_strided_slice %542 {offsets = [0, 48], sizes = [32, 16], strides = [1, 1]} : vector<32x64xf32> to vector<32x16xf32>
    %615 = vector.shape_cast %614 : vector<32x16xf32> to vector<2x16x16xf32>
    "tpu.trace_start"() <{level = 10 : i32, message = "btd,bsd->bts"}> : () -> ()
    %cst_208 = arith.constant dense<0.000000e+00> : vector<2x16x16xf32>
    %616 = tpu.matmul %611, %613, %cst_208 {dimension_numbers = #tpu.dot_dimension_numbers<[2], [2], [1], [1], [0, 0, 0, 1, 1, 1], [0], [0]>} : vector<2x16x16xf32>, vector<2x16x16xf32>, vector<2x16x16xf32> -> vector<2x16x16xf32>
    %cst_209 = arith.constant -1.000000e+09 : f32
    "tpu.trace_stop"() : () -> ()
    %617 = vector.broadcast %cst_209 : f32 to vector<2x16x16xf32>
    %618 = arith.select %350, %617, %616 : vector<2x16x16xi1>, vector<2x16x16xf32>
    %cst_210 = arith.constant dense<0xFF800000> : vector<2x16xf32>
    %619 = vector.multi_reduction <maximumf>, %618, %cst_210 [2] : vector<2x16x16xf32> to vector<2x16xf32>
    %620 = vector.shape_cast %619 : vector<2x16xf32> to vector<2x16x1xf32>
    %621 = vector.broadcast %620 : vector<2x16x1xf32> to vector<2x16x16xf32>
    %622 = arith.subf %618, %621 : vector<2x16x16xf32>
    %623 = math.exp %622 : vector<2x16x16xf32>
    %cst_211 = arith.constant dense<0.000000e+00> : vector<2x16xf32>
    %624 = vector.multi_reduction <add>, %623, %cst_211 [2] : vector<2x16x16xf32> to vector<2x16xf32>
    %625 = vector.shape_cast %624 : vector<2x16xf32> to vector<2x16x1xf32>
    %626 = tpu.reciprocal %625 {approx = true} : vector<2x16x1xf32> -> vector<2x16x1xf32>
    %627 = vector.broadcast %626 : vector<2x16x1xf32> to vector<2x16x16xf32>
    %628 = arith.mulf %623, %627 : vector<2x16x16xf32>
    %629 = arith.addf %607, %628 : vector<2x16x16xf32>
    "tpu.trace_start"() <{level = 10 : i32, message = "bts,bsd->btd"}> : () -> ()
    %cst_212 = arith.constant dense<0.000000e+00> : vector<2x16x16xf32>
    %630 = tpu.matmul %628, %615, %cst_212 {dimension_numbers = #tpu.dot_dimension_numbers<[2], [1], [1], [2], [0, 0, 0, 1, 1, 2], [0], [0]>} : vector<2x16x16xf32>, vector<2x16x16xf32>, vector<2x16x16xf32> -> vector<2x16x16xf32>
    "tpu.trace_stop"() : () -> ()
    %631 = vector.shape_cast %630 : vector<2x16x16xf32> to vector<32x16xf32>
    %632 = tpu.concatenate %565, %587, %609, %631 in 1 : vector<32x16xf32>, vector<32x16xf32>, vector<32x16xf32>, vector<32x16xf32> -> vector<32x64xf32>
    %cst_213 = arith.constant dense<0.000000e+00> : vector<32x32xf32>
    %633 = tpu.matmul %632, %509, %cst_213 {dimension_numbers = #tpu.dot_dimension_numbers<[1], [0], [0], [1], [0, 0, 1, 1], [], []>} : vector<32x64xf32>, vector<64x32xf32>, vector<32x32xf32> -> vector<32x32xf32>
    %634 = arith.addf %505, %633 : vector<32x32xf32>
    %cst_214 = arith.constant dense<0.000000e+00> : vector<32xf32>
    %635 = vector.multi_reduction <add>, %634, %cst_214 [1] : vector<32x32xf32> to vector<32xf32>
    %636 = vector.shape_cast %635 : vector<32xf32> to vector<32x1xf32>
    %cst_215 = arith.constant 3.200000e+01 : f32
    %637 = vector.broadcast %cst_215 : f32 to vector<32x1xf32>
    %638 = arith.divf %636, %637 : vector<32x1xf32>
    %639 = vector.broadcast %638 : vector<32x1xf32> to vector<32x32xf32>
    %640 = arith.subf %634, %639 : vector<32x32xf32>
    %641 = arith.mulf %640, %640 : vector<32x32xf32>
    %cst_216 = arith.constant dense<0.000000e+00> : vector<32xf32>
    %642 = vector.multi_reduction <add>, %641, %cst_216 [1] : vector<32x32xf32> to vector<32xf32>
    %643 = vector.shape_cast %642 : vector<32xf32> to vector<32x1xf32>
    %cst_217 = arith.constant 3.200000e+01 : f32
    %644 = vector.broadcast %cst_217 : f32 to vector<32x1xf32>
    %645 = arith.divf %643, %644 : vector<32x1xf32>
    %646 = vector.broadcast %638 : vector<32x1xf32> to vector<32x32xf32>
    %647 = arith.subf %634, %646 : vector<32x32xf32>
    %cst_218 = arith.constant 9.99999997E-7 : f32
    %648 = vector.broadcast %cst_218 : f32 to vector<32x1xf32>
    %649 = arith.addf %645, %648 : vector<32x1xf32>
    %650 = math.rsqrt %649 : vector<32x1xf32>
    %651 = vector.broadcast %650 : vector<32x1xf32> to vector<32x32xf32>
    %652 = arith.mulf %647, %651 : vector<32x32xf32>
    %653 = vector.broadcast %516 : vector<1x32xf32> to vector<32x32xf32>
    %654 = arith.mulf %652, %653 : vector<32x32xf32>
    %655 = vector.broadcast %517 : vector<1x32xf32> to vector<32x32xf32>
    %656 = arith.addf %654, %655 : vector<32x32xf32>
    %cst_219 = arith.constant dense<0.000000e+00> : vector<32x64xf32>
    %657 = tpu.matmul %656, %510, %cst_219 {dimension_numbers = #tpu.dot_dimension_numbers<[1], [0], [0], [1], [0, 0, 1, 1], [], []>} : vector<32x32xf32>, vector<32x64xf32>, vector<32x64xf32> -> vector<32x64xf32>
    %658 = vector.broadcast %514 : vector<1x64xf32> to vector<32x64xf32>
    %659 = arith.addf %657, %658 : vector<32x64xf32>
    %cst_220 = arith.constant 0.000000e+00 : f32
    %660 = vector.broadcast %cst_220 : f32 to vector<32x64xf32>
    %661 = arith.maximumf %659, %660 : vector<32x64xf32>
    %cst_221 = arith.constant dense<0.000000e+00> : vector<32x32xf32>
    %662 = tpu.matmul %661, %511, %cst_221 {dimension_numbers = #tpu.dot_dimension_numbers<[1], [0], [0], [1], [0, 0, 1, 1], [], []>} : vector<32x64xf32>, vector<64x32xf32>, vector<32x32xf32> -> vector<32x32xf32>
    %663 = arith.addf %634, %662 : vector<32x32xf32>
    %664 = vector.broadcast %515 : vector<1x32xf32> to vector<32x32xf32>
    %665 = arith.addf %663, %664 : vector<32x32xf32>
    %cst_222 = arith.constant 2.500000e-01 : f32
    %666 = vector.broadcast %cst_222 : f32 to vector<2x16x16xf32>
    %667 = arith.mulf %629, %666 : vector<2x16x16xf32>
    %c32_223 = arith.constant 32 : index
    %c8 = arith.constant 8 : index
    %668 = vector.load %arg2[%c32_223, %c8] : memref<64x64xf32, #tpu.memory_space<vmem>>, vector<32x8xf32>
    %c48_224 = arith.constant 48 : index
    %c40 = arith.constant 40 : index
    %669 = vector.load %arg2[%c48_224, %c40] : memref<64x64xf32, #tpu.memory_space<vmem>>, vector<1x8xf32>
    %c32_225 = arith.constant 32 : index
    %c24_226 = arith.constant 24 : index
    %670 = vector.load %arg2[%c32_225, %c24_226] : memref<64x64xf32, #tpu.memory_space<vmem>>, vector<8x8xf32>
    %c48_227 = arith.constant 48 : index
    %c48_228 = arith.constant 48 : index
    %671 = vector.load %arg2[%c48_227, %c48_228] : memref<64x64xf32, #tpu.memory_space<vmem>>, vector<1x8xf32>
    %cst_229 = arith.constant dense<0.000000e+00> : vector<32x8xf32>
    %672 = tpu.matmul %665, %668, %cst_229 {dimension_numbers = #tpu.dot_dimension_numbers<[1], [0], [0], [1], [0, 0, 1, 1], [], []>} : vector<32x32xf32>, vector<32x8xf32>, vector<32x8xf32> -> vector<32x8xf32>
    %673 = vector.broadcast %669 : vector<1x8xf32> to vector<32x8xf32>
    %674 = arith.addf %672, %673 : vector<32x8xf32>
    %cst_230 = arith.constant 0.000000e+00 : f32
    %675 = vector.broadcast %cst_230 : f32 to vector<32x8xf32>
    %676 = arith.maximumf %674, %675 : vector<32x8xf32>
    %cst_231 = arith.constant dense<0.000000e+00> : vector<32x8xf32>
    %677 = tpu.matmul %676, %670, %cst_231 {dimension_numbers = #tpu.dot_dimension_numbers<[1], [0], [0], [1], [0, 0, 1, 1], [], []>} : vector<32x8xf32>, vector<8x8xf32>, vector<32x8xf32> -> vector<32x8xf32>
    %678 = vector.broadcast %671 : vector<1x8xf32> to vector<32x8xf32>
    %679 = arith.addf %677, %678 : vector<32x8xf32>
    %c32_232 = arith.constant 32 : index
    %c16_233 = arith.constant 16 : index
    %680 = vector.load %arg2[%c32_232, %c16_233] : memref<64x64xf32, #tpu.memory_space<vmem>>, vector<16x8xf32>
    %c40_234 = arith.constant 40 : index
    %c24_235 = arith.constant 24 : index
    %681 = vector.load %arg2[%c40_234, %c24_235] : memref<64x64xf32, #tpu.memory_space<vmem>>, vector<8x8xf32>
    %c48_236 = arith.constant 48 : index
    %c56 = arith.constant 56 : index
    %682 = vector.load %arg2[%c48_236, %c56] : memref<64x64xf32, #tpu.memory_space<vmem>>, vector<1x8xf32>
    %683 = vector.shape_cast %667 : vector<2x16x16xf32> to vector<32x16xf32>
    %cst_237 = arith.constant dense<0.000000e+00> : vector<32x8xf32>
    %684 = tpu.matmul %2, %681, %cst_237 {dimension_numbers = #tpu.dot_dimension_numbers<[1], [0], [0], [1], [0, 0, 1, 1], [], []>} : vector<32x8xf32>, vector<8x8xf32>, vector<32x8xf32> -> vector<32x8xf32>
    %cst_238 = arith.constant dense<0.000000e+00> : vector<32x8xf32>
    %685 = tpu.matmul %683, %680, %cst_238 {dimension_numbers = #tpu.dot_dimension_numbers<[1], [0], [0], [1], [0, 0, 1, 1], [], []>} : vector<32x16xf32>, vector<16x8xf32>, vector<32x8xf32> -> vector<32x8xf32>
    %686 = arith.addf %684, %685 : vector<32x8xf32>
    %687 = vector.broadcast %682 : vector<1x8xf32> to vector<32x8xf32>
    %688 = arith.addf %686, %687 : vector<32x8xf32>
    %689 = arith.negf %688 : vector<32x8xf32>
    %690 = math.exp %689 : vector<32x8xf32>
    %cst_239 = arith.constant 1.000000e+00 : f32
    %691 = vector.broadcast %cst_239 : f32 to vector<32x8xf32>
    %692 = arith.addf %691, %690 : vector<32x8xf32>
    %693 = arith.divf %691, %692 : vector<32x8xf32>
    %cst_240 = arith.constant 1.000000e+00 : f32
    %694 = vector.broadcast %cst_240 : f32 to vector<32x8xf32>
    %695 = arith.subf %694, %693 : vector<32x8xf32>
    %696 = arith.mulf %695, %679 : vector<32x8xf32>
    %697 = arith.mulf %693, %331 : vector<32x8xf32>
    %698 = arith.addf %696, %697 : vector<32x8xf32>
    %699 = arith.mulf %2, %1 : vector<32x8xf32>
    %cst_241 = arith.constant 1.000000e+00 : f32
    %700 = vector.broadcast %cst_241 : f32 to vector<32x8xf32>
    %701 = arith.subf %700, %2 : vector<32x8xf32>
    %702 = arith.mulf %701, %698 : vector<32x8xf32>
    %703 = arith.addf %699, %702 : vector<32x8xf32>
    %c0_242 = arith.constant 0 : index
    %c0_243 = arith.constant 0 : index
    %704 = vector.load %arg4[%c0_242, %c0_243] : memref<32x8xf32, #tpu.memory_space<vmem>>, vector<32x8xf32>
    tpu.vector_store %arg4[%c0_242, %c0_243], %703 {strides = array<i32>} : memref<32x8xf32, #tpu.memory_space<vmem>>, vector<32x8xf32>,
    %705 = vector.shape_cast %2 : vector<32x8xf32> to vector<1x32x8xf32>
    %cst_244 = arith.constant dense<0.000000e+00> : vector<1xf32>
    %706 = vector.multi_reduction <add>, %705, %cst_244 [1, 2] : vector<1x32x8xf32> to vector<1xf32>
    %707 = vector.shape_cast %706 : vector<1xf32> to vector<1x1x1xf32>
    %708 = vector.extract %707[0, 0, 0] : f32 from vector<1x1x1xf32>
    %cst_245 = arith.constant 9.99999971E-10 : f32
    %709 = arith.addf %708, %cst_245 : f32
    %710 = arith.subf %331, %1 : vector<32x8xf32>
    %711 = math.absf %710 : vector<32x8xf32>
    %712 = arith.mulf %711, %2 : vector<32x8xf32>
    %713 = vector.shape_cast %712 : vector<32x8xf32> to vector<1x32x8xf32>
    %cst_246 = arith.constant dense<0.000000e+00> : vector<1xf32>
    %714 = vector.multi_reduction <add>, %713, %cst_246 [1, 2] : vector<1x32x8xf32> to vector<1xf32>
    %715 = vector.shape_cast %714 : vector<1xf32> to vector<1x1x1xf32>
    %716 = vector.extract %715[0, 0, 0] : f32 from vector<1x1x1xf32>
    %717 = arith.divf %716, %709 : f32
    %718 = arith.subf %679, %1 : vector<32x8xf32>
    %719 = math.absf %718 : vector<32x8xf32>
    %720 = arith.mulf %719, %2 : vector<32x8xf32>
    %721 = vector.shape_cast %720 : vector<32x8xf32> to vector<1x32x8xf32>
    %cst_247 = arith.constant dense<0.000000e+00> : vector<1xf32>
    %722 = vector.multi_reduction <add>, %721, %cst_247 [1, 2] : vector<1x32x8xf32> to vector<1xf32>
    %723 = vector.shape_cast %722 : vector<1xf32> to vector<1x1x1xf32>
    %724 = vector.extract %723[0, 0, 0] : f32 from vector<1x1x1xf32>
    %725 = arith.divf %724, %709 : f32
    %726 = arith.subf %698, %1 : vector<32x8xf32>
    %727 = math.absf %726 : vector<32x8xf32>
    %728 = arith.mulf %727, %2 : vector<32x8xf32>
    %729 = vector.shape_cast %728 : vector<32x8xf32> to vector<1x32x8xf32>
    %cst_248 = arith.constant dense<0.000000e+00> : vector<1xf32>
    %730 = vector.multi_reduction <add>, %729, %cst_248 [1, 2] : vector<1x32x8xf32> to vector<1xf32>
    %731 = vector.shape_cast %730 : vector<1xf32> to vector<1x1x1xf32>
    %732 = vector.extract %731[0, 0, 0] : f32 from vector<1x1x1xf32>
    %733 = arith.divf %732, %709 : f32
    %734 = arith.subf %698, %3 : vector<32x8xf32>
    %735 = math.absf %734 : vector<32x8xf32>
    %736 = arith.mulf %735, %4 : vector<32x8xf32>
    %737 = vector.shape_cast %736 : vector<32x8xf32> to vector<1x32x8xf32>
    %cst_249 = arith.constant dense<0.000000e+00> : vector<1xf32>
    %738 = vector.multi_reduction <add>, %737, %cst_249 [1, 2] : vector<1x32x8xf32> to vector<1xf32>
    %739 = vector.shape_cast %738 : vector<1xf32> to vector<1x1x1xf32>
    %740 = vector.extract %739[0, 0, 0] : f32 from vector<1x1x1xf32>
    %741 = vector.shape_cast %4 : vector<32x8xf32> to vector<1x32x8xf32>
    %cst_250 = arith.constant dense<0.000000e+00> : vector<1xf32>
    %742 = vector.multi_reduction <add>, %741, %cst_250 [1, 2] : vector<1x32x8xf32> to vector<1xf32>
    %743 = vector.shape_cast %742 : vector<1xf32> to vector<1x1x1xf32>
    %744 = vector.extract %743[0, 0, 0] : f32 from vector<1x1x1xf32>
    %cst_251 = arith.constant 9.99999971E-10 : f32
    %745 = arith.addf %744, %cst_251 : f32
    %746 = arith.divf %740, %745 : f32
    %747 = vector.broadcast %717 : f32 to vector<1x1xf32>
    %748 = vector.broadcast %725 : f32 to vector<1x1xf32>
    %749 = vector.broadcast %733 : f32 to vector<1x1xf32>
    %750 = vector.broadcast %746 : f32 to vector<1x1xf32>
    %751 = tpu.concatenate %747, %748, %749, %750 in 1 : vector<1x1xf32>, vector<1x1xf32>, vector<1x1xf32>, vector<1x1xf32> -> vector<1x4xf32>
    %c0_252 = arith.constant 0 : index
    %c0_253 = arith.constant 0 : index
    %752 = vector.load %arg5[%c0_252, %c0_253] : memref<1x4xf32, #tpu.memory_space<vmem>>, vector<1x4xf32>
    tpu.vector_store %arg5[%c0_252, %c0_253], %751 {strides = array<i32>} : memref<1x4xf32, #tpu.memory_space<vmem>>, vector<1x4xf32>,
    return
  }
  func.func @transform_0(%arg0: i32) -> (i32, i32) {
    %c0_i32 = arith.constant 0 : i32
    %c0_i32_0 = arith.constant 0 : i32
    %c0_i32_1 = arith.constant 0 : i32
    return %c0_i32, %c0_i32_0 : i32, i32
  }
  func.func @transform_1(%arg0: i32) -> (i32, i32) {
    %c0_i32 = arith.constant 0 : i32
    %c0_i32_0 = arith.constant 0 : i32
    %c0_i32_1 = arith.constant 0 : i32
    return %c0_i32, %c0_i32_0 : i32, i32
  }
  func.func @transform_2(%arg0: i32) -> (i32, i32) {
    %c0_i32 = arith.constant 0 : i32
    %c0_i32_0 = arith.constant 0 : i32
    %c0_i32_1 = arith.constant 0 : i32
    return %c0_i32, %c0_i32_0 : i32, i32
  }
  func.func @transform_3(%arg0: i32) -> (i32, i32) {
    %c0_i32 = arith.constant 0 : i32
    %c0_i32_0 = arith.constant 0 : i32
    %c0_i32_1 = arith.constant 0 : i32
    return %c0_i32, %c0_i32_0 : i32, i32
  }
  func.func @transform_4(%arg0: i32) -> (i32, i32) {
    %c0_i32 = arith.constant 0 : i32
    %c0_i32_0 = arith.constant 0 : i32
    %c0_i32_1 = arith.constant 0 : i32
    return %c0_i32, %c0_i32_0 : i32, i32
  }
}

</mosaic_0001>

<llo_original>
// kernel: saits_forward.1
$region0: #{saits_forward.1}
  #allocation0 [shape = 'u32[]', space=smem, size = 0x4, offset = 0x4, fixed_abs, tag = 'smem constant byte address 0x4 - core index']
  #allocation1 [shape = 'u32[144,128]{1,0:T(1,128)}', space=vmem, size = 0x12000, scoped, tag = 'internal scratch']
  %s0 = inlined_call_operand.vmem [shape: f32[32,32], index: 0, kind: input, shape index: {}]
  %s1 = inlined_call_operand.vmem [shape: f32[64,64], index: 1, kind: input, shape index: {}]
  %s2 = inlined_call_operand.vmem [shape: f32[1056,64], index: 2, kind: input, shape index: {}]
  %s3 = inlined_call_operand.vmem [shape: f32[32,8], index: 3, kind: output, shape index: {0}]
  %s4 = inlined_call_operand.vmem [shape: f32[1,4], index: 4, kind: output, shape index: {1}]
  %5 = xla_tuple %s3, %s4
  %s6 = sld [smem:[#allocation0]]
  $region30: #{saits_forward.1} parent=0
    _
  %s8 = ssub.s32 1, %s6
  %s9 = scalar_select 0, %s8, %s6
  // Predicated region
  $region2: #{saits_forward.1} parent=0 // pred_check
    _
  $region3: #{saits_forward.1} parent=0 // pred_check_branch
    %11 = sbr.rel (0) target = $region5
  $region4: #{saits_forward.1} parent=0 // pred_region
    _
  $region5: #{saits_forward.1} parent=0 // pred_fallthru
    _
  // Predicated region
  $region6: #{saits_forward.1} parent=0 // pred_check
    _
  $region7: #{saits_forward.1} parent=0 // pred_check_branch
    %13 = sbr.rel (0) target = $region9
  $region8: #{saits_forward.1} parent=0 // pred_region
    _
  $region9: #{saits_forward.1} parent=0 // pred_fallthru
    _
  // Predicated region
  $region10: #{saits_forward.1} parent=0 // pred_check
    _
  $region11: #{saits_forward.1} parent=0 // pred_check_branch
    %15 = sbr.rel (0) target = $region13
  $region12: #{saits_forward.1} parent=0 // pred_region
    _
  $region13: #{saits_forward.1} parent=0 // pred_fallthru
    _
  %v16 = vld [vmem:[%s0] sm:$0xff]
  %v17 = vld [vmem:[%s0 + $0x8] sm:$0xff]
  %v18 = vld [vmem:[%s0 + $0x10] sm:$0xff]
  %v19 = vld [vmem:[%s0 + $0x18] sm:$0xff]
  %v20 = vld [vmem:[%s1] sm:$0xff]
  %v21 = vld [vmem:[%s1 + $0x8] sm:$0xff]
  %vm22 = vcmask 130048
  %v24 = vsel %vm22, %v16, 0
  %v27 = vsel %vm22, %v17, 0
  %v30 = vsel %vm22, %v18, 0
  %v33 = vsel %vm22, %v19, 0
  %35 = vmatprep.subr.mxu0 0.0
  %36 = vmatpush1.msra.mxu0 %v20
  %37 = vmatprep.subr.mxu0 0.0
  %38 = vmatpush1.msra.mxu0 %v21
  %39 = vmatprep.subr.mxu0 0.0
  %40 = vmatpush1.msra.mxu0 0.0
  %41 = vmatprep.subr.mxu0 0.0
  %42 = vmatpush1.msra.mxu0 0.0
  %43 = vmatprep.subr.mxu0 0.0
  %44 = vmatpush1.msra.mxu0 0.0
  %45 = vmatprep.subr.mxu0 0.0
  %46 = vmatpush1.msra.mxu0 0.0
  %47 = vmatprep.subr.mxu0 0.0
  %48 = vmatpush1.msra.mxu0 0.0
  %49 = vmatprep.subr.mxu0 0.0
  %50 = vmatpush1.msra.mxu0 0.0
  %51 = vmatprep.subr.mxu0 0.0
  %52 = vmatpush1.msra.mxu0 0.0
  %53 = vmatprep.subr.mxu0 0.0
  %54 = vmatpush1.msra.mxu0 0.0
  %55 = vmatprep.subr.mxu0 0.0
  %56 = vmatpush1.msra.mxu0 0.0
  %57 = vmatprep.subr.mxu0 0.0
  %58 = vmatpush1.msra.mxu0 0.0
  %59 = vmatprep.subr.mxu0 0.0
  %60 = vmatpush1.msra.mxu0 0.0
  %61 = vmatprep.subr.mxu0 0.0
  %62 = vmatpush1.msra.mxu0 0.0
  %63 = vmatprep.subr.mxu0 0.0
  %64 = vmatpush1.msra.mxu0 0.0
  %65 = vmatprep.subr.mxu0 0.0
  %66 = vmatpush1.msra.mxu0 0.0
  %67 = vmatprep.subr.mxu0 0.0
  %68 = vmatpush1.msra.mxu0 0.0
  %69 = vmatprep.subr.mxu0 0.0
  %70 = vmatpush1.msra.mxu0 0.0
  %71 = vmatprep.subr.mxu0 0.0
  %72 = vmatpush1.msra.mxu0 0.0
  %73 = vmatprep.subr.mxu0 0.0
  %74 = vmatpush1.msra.mxu0 0.0
  %75 = vmatprep.subr.mxu0 0.0
  %76 = vmatpush1.msra.mxu0 0.0
  %77 = vmatprep.subr.mxu0 0.0
  %78 = vmatpush1.msra.mxu0 0.0
  %79 = vmatprep.subr.mxu0 0.0
  %80 = vmatpush1.msra.mxu0 0.0
  %81 = vmatprep.subr.mxu0 0.0
  %82 = vmatpush1.msra.mxu0 0.0
  %83 = vmatprep.subr.mxu0 0.0
  %84 = vmatpush1.msra.mxu0 0.0
  %85 = vmatprep.subr.mxu0 0.0
  %86 = vmatpush1.msra.mxu0 0.0
  %87 = vmatprep.subr.mxu0 0.0
  %88 = vmatpush1.msra.mxu0 0.0
  %89 = vmatprep.subr.mxu0 0.0
  %90 = vmatpush1.msra.mxu0 0.0
  %91 = vmatprep.subr.mxu0 0.0
  %92 = vmatpush1.msra.mxu0 0.0
  %93 = vmatprep.subr.mxu0 0.0
  %94 = vmatpush1.msra.mxu0 0.0
  %95 = vmatprep.subr.mxu0 0.0
  %96 = vmatpush1.msra.mxu0 0.0
  %97 = vmatprep.subr.mxu0 0.0
  %98 = vmatpush1.msra.mxu0 0.0
  %99 = vmatprep.mubr.f32.mxu0 0.0
  %100 = vmatmul.mubr.f32.gmra.mrb[0].mxu0 %v24
  %v101 = vpop.f32.mrb[0].mxu0
  %v102 = vadd.f32 0.0, %v101
  %v103 = vpop.f32.mrb[0].mxu0
  %104 = vmatprep.mubr.f32.mxu0 0.0
  %105 = vmatmul.mubr.f32.gmra.mrb[0].mxu0 %v27
  %v106 = vpop.f32.mrb[0].mxu0
  %v107 = vadd.f32 0.0, %v106
  %v108 = vpop.f32.mrb[0].mxu0
  %109 = vmatprep.mubr.f32.mxu0 0.0
  %110 = vmatmul.mubr.f32.gmra.mrb[0].mxu0 %v30
  %v111 = vpop.f32.mrb[0].mxu0
  %v112 = vadd.f32 0.0, %v111
  %v113 = vpop.f32.mrb[0].mxu0
  %114 = vmatprep.mubr.f32.mxu0 0.0
  %115 = vmatmul.mubr.f32.gmra.mrb[0].mxu0 %v33
  %v116 = vpop.f32.mrb[0].mxu0
  %v117 = vadd.f32 0.0, %v116
  %v118 = vpop.f32.mrb[0].mxu0
  %119 = vdwg.mxu0
  %122 = vrot.lane.b32.xlu0 %v20, 96
  %v123 = vpop.permute.xlu0 %122
  %124 = vrot.lane.b32.xlu0 %v21, 96
  %v125 = vpop.permute.xlu0 %124
  %v128 = vadd.f32 %v102, %v123
  %v129 = vadd.f32 %v107, %v125
  %v130 = vadd.f32 %v112, %v123
  %v131 = vadd.f32 %v117, %v125
  %v132 = vlaneseq
  %v133 = vshrl.u32 %v132, 7
  %v134 = vadd.s32 %v133, 8
  %v135 = vlaneseq
  %v136 = vand.u32 %v135, 127
  %vm137 = vcmp.eq.s32.totalorder %v133, %v136
  %vm138 = vcmp.eq.s32.totalorder %v134, %v136
  %v139 = vld [vmem:[%s2] sm:$0xff]
  %v140 = vld [vmem:[%s2 + $0x8] sm:$0xff]
  %v141 = vld [vmem:[%s2 + $0x10] sm:$0xff]
  %v142 = vld [vmem:[%s2 + $0x18] sm:$0xff]
  %v143 = vld [vmem:[%s2 + $0x20] sm:$0xff]
  %v144 = vld [vmem:[%s2 + $0x28] sm:$0xff]
  %v145 = vld [vmem:[%s2 + $0x30] sm:$0xff]
  %v146 = vld [vmem:[%s2 + $0x38] sm:$0xff]
  %v147 = vld [vmem:[%s2 + $0x40] sm:$0xff]
  %v148 = vld [vmem:[%s2 + $0x48] sm:$0xff]
  %v149 = vld [vmem:[%s2 + $0x50] sm:$0xff]
  %v150 = vld [vmem:[%s2 + $0x58] sm:$0xff]
  %v151 = vld [vmem:[%s2 + $0x60] sm:$0xff]
  %v152 = vld [vmem:[%s2 + $0x68] sm:$0xff]
  %v153 = vld [vmem:[%s2 + $0x70] sm:$0xff]
  %v154 = vld [vmem:[%s2 + $0x78] sm:$0xff]
  %v155 = vld [vmem:[%s2 + $0x80] sm:$0xff]
  %v156 = vld [vmem:[%s2 + $0x88] sm:$0xff]
  %v157 = vld [vmem:[%s2 + $0x90] sm:$0xff]
  %v158 = vld [vmem:[%s2 + $0x98] sm:$0xff]
  %v159 = vld [vmem:[%s2 + $0xa0] sm:$0xff]
  %v160 = vld [vmem:[%s2 + $0xa8] sm:$0xff]
  %v161 = vld [vmem:[%s2 + $0xb0] sm:$0xff]
  %v162 = vld [vmem:[%s2 + $0xb8] sm:$0xff]
  %v163 = vld [vmem:[%s2 + $0xc0] sm:$0xff]
  %v164 = vld [vmem:[%s2 + $0xc8] sm:$0xff]
  %v165 = vld [vmem:[%s2 + $0xd0] sm:$0xff]
  %v166 = vld [vmem:[%s2 + $0xd8] sm:$0xff]
  %v167 = vld [vmem:[%s2 + $0xe0] sm:$0xff]
  %v168 = vld [vmem:[%s2 + $0xe8] sm:$0xff]
  %v169 = vld [vmem:[%s2 + $0xf0] sm:$0xff]
  %v170 = vld [vmem:[%s2 + $0xf8] sm:$0xff]
  %v171 = vld [vmem:[%s2 + $0x100] sm:$0x1]
  %v172 = vld [vmem:[%s2 + $0x101] sm:$0x1]
  %v173 = vld [vmem:[%s2 + $0x102] sm:$0x1]
  %v174 = vld [vmem:[%s2 + $0x103] sm:$0x1]
  %vm175 = vcmask 261120
  %v176 = vsel %vm175, %v128, 0.0
  %177 = vadd.xlane.f32.xlu0 %v176
  %v178 = vpop.xlane.xlu0 %177
  %v179 = vsel %vm175, %v129, 0.0
  %180 = vadd.xlane.f32.xlu0 %v179
  %v181 = vpop.xlane.xlu0 %180
  %v182 = vsel %vm175, %v130, 0.0
  %183 = vadd.xlane.f32.xlu0 %v182
  %v184 = vpop.xlane.xlu0 %183
  %v185 = vsel %vm175, %v131, 0.0
  %186 = vadd.xlane.f32.xlu0 %v185
  %v187 = vpop.xlane.xlu0 %186
  %v188 = vrcp.pop 32.0
  %v189 = vmul.f32 %v178, %v188
  %v190 = vmul.f32 %v181, %v188
  %v191 = vmul.f32 %v184, %v188
  %v192 = vmul.f32 %v187, %v188
  %v193 = vsub.f32 %v128, %v189
  %v194 = vsub.f32 %v129, %v190
  %v195 = vsub.f32 %v130, %v191
  %v196 = vsub.f32 %v131, %v192
  %v197 = vmul.f32 %v193, %v193
  %v198 = vmul.f32 %v194, %v194
  %v199 = vmul.f32 %v195, %v195
  %v200 = vmul.f32 %v196, %v196
  %v201 = vsel %vm175, %v197, 0.0
  %202 = vadd.xlane.f32.xlu0 %v201
  %v203 = vpop.xlane.xlu0 %202
  %v204 = vsel %vm175, %v198, 0.0
  %205 = vadd.xlane.f32.xlu0 %v204
  %v206 = vpop.xlane.xlu0 %205
  %v207 = vsel %vm175, %v199, 0.0
  %208 = vadd.xlane.f32.xlu0 %v207
  %v209 = vpop.xlane.xlu0 %208
  %v210 = vsel %vm175, %v200, 0.0
  %211 = vadd.xlane.f32.xlu0 %v210
  %v212 = vpop.xlane.xlu0 %211
  %v213 = vmul.f32 %v203, %v188
  %v214 = vmul.f32 %v206, %v188
  %v215 = vmul.f32 %v209, %v188
  %v216 = vmul.f32 %v212, %v188
  %v217 = vadd.f32 %v213, 1e-05
  %v218 = vadd.f32 %v214, 1e-05
  %v219 = vadd.f32 %v215, 1e-05
  %v220 = vadd.f32 %v216, 1e-05
  %v221 = vrsqrt.pop %v217
  %v222 = vrsqrt.pop %v218
  %v223 = vrsqrt.pop %v219
  %v224 = vrsqrt.pop %v220
  %v225 = vmul.f32 %v193, %v221
  %v226 = vmul.f32 %v194, %v222
  %v227 = vmul.f32 %v195, %v223
  %v228 = vmul.f32 %v196, %v224
  %v229 = vlaneseq
  %v230 = vshrl.u32 %v229, 7
  %v231 = vsub.s32 0, %v230
  %v232 = vrot.slane %v171, %v231
  %v233 = vmul.f32 %v225, %v232
  %v234 = vmul.f32 %v226, %v232
  %v235 = vmul.f32 %v227, %v232
  %v236 = vmul.f32 %v228, %v232
  %238 = vrot.lane.b32.xlu0 %v232, 96
  %v239 = vpop.permute.xlu0 %238
  %v241 = vadd.f32 %v233, %v239
  %v242 = vadd.f32 %v234, %v239
  %v243 = vadd.f32 %v235, %v239
  %v244 = vadd.f32 %v236, %v239
  %v246 = vsel %vm175, %v241, 0
  %v249 = vsel %vm175, %v242, 0
  %v252 = vsel %vm175, %v243, 0
  %v255 = vsel %vm175, %v244, 0
  %257 = vmatprep.subr.mxu0 0.0
  %258 = vmatpush1.msra.mxu0 %v139
  %259 = vmatprep.subr.mxu0 0.0
  %260 = vmatpush1.msra.mxu0 %v140
  %261 = vmatprep.subr.mxu0 0.0
  %262 = vmatpush1.msra.mxu0 %v141
  %263 = vmatprep.subr.mxu0 0.0
  %264 = vmatpush1.msra.mxu0 %v142
  %265 = vmatprep.subr.mxu0 0.0
  %266 = vmatpush1.msra.mxu0 0.0
  %267 = vmatprep.subr.mxu0 0.0
  %268 = vmatpush1.msra.mxu0 0.0
  %269 = vmatprep.subr.mxu0 0.0
  %270 = vmatpush1.msra.mxu0 0.0
  %271 = vmatprep.subr.mxu0 0.0
  %272 = vmatpush1.msra.mxu0 0.0
  %273 = vmatprep.subr.mxu0 0.0
  %274 = vmatpush1.msra.mxu0 0.0
  %275 = vmatprep.subr.mxu0 0.0
  %276 = vmatpush1.msra.mxu0 0.0
  %277 = vmatprep.subr.mxu0 0.0
  %278 = vmatpush1.msra.mxu0 0.0
  %279 = vmatprep.subr.mxu0 0.0
  %280 = vmatpush1.msra.mxu0 0.0
  %281 = vmatprep.subr.mxu0 0.0
  %282 = vmatpush1.msra.mxu0 0.0
  %283 = vmatprep.subr.mxu0 0.0
  %284 = vmatpush1.msra.mxu0 0.0
  %285 = vmatprep.subr.mxu0 0.0
  %286 = vmatpush1.msra.mxu0 0.0
  %287 = vmatprep.subr.mxu0 0.0
  %288 = vmatpush1.msra.mxu0 0.0
  %289 = vmatprep.subr.mxu0 0.0
  %290 = vmatpush1.msra.mxu0 0.0
  %291 = vmatprep.subr.mxu0 0.0
  %292 = vmatpush1.msra.mxu0 0.0
  %293 = vmatprep.subr.mxu0 0.0
  %294 = vmatpush1.msra.mxu0 0.0
  %295 = vmatprep.subr.mxu0 0.0
  %296 = vmatpush1.msra.mxu0 0.0
  %297 = vmatprep.subr.mxu0 0.0
  %298 = vmatpush1.msra.mxu0 0.0
  %299 = vmatprep.subr.mxu0 0.0
  %300 = vmatpush1.msra.mxu0 0.0
  %301 = vmatprep.subr.mxu0 0.0
  %302 = vmatpush1.msra.mxu0 0.0
  %303 = vmatprep.subr.mxu0 0.0
  %304 = vmatpush1.msra.mxu0 0.0
  %305 = vmatprep.subr.mxu0 0.0
  %306 = vmatpush1.msra.mxu0 0.0
  %307 = vmatprep.subr.mxu0 0.0
  %308 = vmatpush1.msra.mxu0 0.0
  %309 = vmatprep.subr.mxu0 0.0
  %310 = vmatpush1.msra.mxu0 0.0
  %311 = vmatprep.subr.mxu0 0.0
  %312 = vmatpush1.msra.mxu0 0.0
  %313 = vmatprep.subr.mxu0 0.0
  %314 = vmatpush1.msra.mxu0 0.0
  %315 = vmatprep.subr.mxu0 0.0
  %316 = vmatpush1.msra.mxu0 0.0
  %317 = vmatprep.subr.mxu0 0.0
  %318 = vmatpush1.msra.mxu0 0.0
  %319 = vmatprep.subr.mxu0 0.0
  %320 = vmatpush1.msra.mxu0 0.0
  %321 = vmatprep.mubr.f32.mxu0 0.0
  %322 = vmatmul.mubr.f32.gmra.mrb[0].mxu0 %v246
  %v323 = vpop.f32.mrb[0].mxu0
  %v324 = vadd.f32 0.0, %v323
  %v325 = vpop.f32.mrb[0].mxu0
  %326 = vmatprep.mubr.f32.mxu0 0.0
  %327 = vmatmul.mubr.f32.gmra.mrb[0].mxu0 %v249
  %v328 = vpop.f32.mrb[0].mxu0
  %v329 = vadd.f32 0.0, %v328
  %v330 = vpop.f32.mrb[0].mxu0
  %331 = vmatprep.mubr.f32.mxu0 0.0
  %332 = vmatmul.mubr.f32.gmra.mrb[0].mxu0 %v252
  %v333 = vpop.f32.mrb[0].mxu0
  %v334 = vadd.f32 0.0, %v333
  %v335 = vpop.f32.mrb[0].mxu0
  %336 = vmatprep.mubr.f32.mxu0 0.0
  %337 = vmatmul.mubr.f32.gmra.mrb[0].mxu0 %v255
  %v338 = vpop.f32.mrb[0].mxu0
  %v339 = vadd.f32 0.0, %v338
  %v340 = vpop.f32.mrb[0].mxu0
  %341 = vdwg.mxu0
  %342 = vmatprep.subr.mxu0 0.0
  %343 = vmatpush1.msra.mxu0 %v143
  %344 = vmatprep.subr.mxu0 0.0
  %345 = vmatpush1.msra.mxu0 %v144
  %346 = vmatprep.subr.mxu0 0.0
  %347 = vmatpush1.msra.mxu0 %v145
  %348 = vmatprep.subr.mxu0 0.0
  %349 = vmatpush1.msra.mxu0 %v146
  %350 = vmatprep.subr.mxu0 0.0
  %351 = vmatpush1.msra.mxu0 0.0
  %352 = vmatprep.subr.mxu0 0.0
  %353 = vmatpush1.msra.mxu0 0.0
  %354 = vmatprep.subr.mxu0 0.0
  %355 = vmatpush1.msra.mxu0 0.0
  %356 = vmatprep.subr.mxu0 0.0
  %357 = vmatpush1.msra.mxu0 0.0
  %358 = vmatprep.subr.mxu0 0.0
  %359 = vmatpush1.msra.mxu0 0.0
  %360 = vmatprep.subr.mxu0 0.0
  %361 = vmatpush1.msra.mxu0 0.0
  %362 = vmatprep.subr.mxu0 0.0
  %363 = vmatpush1.msra.mxu0 0.0
  %364 = vmatprep.subr.mxu0 0.0
  %365 = vmatpush1.msra.mxu0 0.0
  %366 = vmatprep.subr.mxu0 0.0
  %367 = vmatpush1.msra.mxu0 0.0
  %368 = vmatprep.subr.mxu0 0.0
  %369 = vmatpush1.msra.mxu0 0.0
  %370 = vmatprep.subr.mxu0 0.0
  %371 = vmatpush1.msra.mxu0 0.0
  %372 = vmatprep.subr.mxu0 0.0
  %373 = vmatpush1.msra.mxu0 0.0
  %374 = vmatprep.subr.mxu0 0.0
  %375 = vmatpush1.msra.mxu0 0.0
  %376 = vmatprep.subr.mxu0 0.0
  %377 = vmatpush1.msra.mxu0 0.0
  %378 = vmatprep.subr.mxu0 0.0
  %379 = vmatpush1.msra.mxu0 0.0
  %380 = vmatprep.subr.mxu0 0.0
  %381 = vmatpush1.msra.mxu0 0.0
  %382 = vmatprep.subr.mxu0 0.0
  %383 = vmatpush1.msra.mxu0 0.0
  %384 = vmatprep.subr.mxu0 0.0
  %385 = vmatpush1.msra.mxu0 0.0
  %386 = vmatprep.subr.mxu0 0.0
  %387 = vmatpush1.msra.mxu0 0.0
  %388 = vmatprep.subr.mxu0 0.0
  %389 = vmatpush1.msra.mxu0 0.0
  %390 = vmatprep.subr.mxu0 0.0
  %391 = vmatpush1.msra.mxu0 0.0
  %392 = vmatprep.subr.mxu0 0.0
  %393 = vmatpush1.msra.mxu0 0.0
  %394 = vmatprep.subr.mxu0 0.0
  %395 = vmatpush1.msra.mxu0 0.0
  %396 = vmatprep.subr.mxu0 0.0
  %397 = vmatpush1.msra.mxu0 0.0
  %398 = vmatprep.subr.mxu0 0.0
  %399 = vmatpush1.msra.mxu0 0.0
  %400 = vmatprep.subr.mxu0 0.0
  %401 = vmatpush1.msra.mxu0 0.0
  %402 = vmatprep.subr.mxu0 0.0
  %403 = vmatpush1.msra.mxu0 0.0
  %404 = vmatprep.subr.mxu0 0.0
  %405 = vmatpush1.msra.mxu0 0.0
  %406 = vmatprep.mubr.f32.mxu0 0.0
  %407 = vmatmul.mubr.f32.gmra.mrb[0].mxu0 %v246
  %v408 = vpop.f32.mrb[0].mxu0
  %v409 = vadd.f32 0.0, %v408
  %v410 = vpop.f32.mrb[0].mxu0
  %411 = vmatprep.mubr.f32.mxu0 0.0
  %412 = vmatmul.mubr.f32.gmra.mrb[0].mxu0 %v249
  %v413 = vpop.f32.mrb[0].mxu0
  %v414 = vadd.f32 0.0, %v413
  %v415 = vpop.f32.mrb[0].mxu0
  %416 = vmatprep.mubr.f32.mxu0 0.0
  %417 = vmatmul.mubr.f32.gmra.mrb[0].mxu0 %v252
  %v418 = vpop.f32.mrb[0].mxu0
  %v419 = vadd.f32 0.0, %v418
  %v420 = vpop.f32.mrb[0].mxu0
  %421 = vmatprep.mubr.f32.mxu0 0.0
  %422 = vmatmul.mubr.f32.gmra.mrb[0].mxu0 %v255
  %v423 = vpop.f32.mrb[0].mxu0
  %v424 = vadd.f32 0.0, %v423
  %v425 = vpop.f32.mrb[0].mxu0
  %426 = vdwg.mxu0
  %427 = vmatprep.subr.mxu0 0.0
  %428 = vmatpush1.msra.mxu0 %v147
  %429 = vmatprep.subr.mxu0 0.0
  %430 = vmatpush1.msra.mxu0 %v148
  %431 = vmatprep.subr.mxu0 0.0
  %432 = vmatpush1.msra.mxu0 %v149
  %433 = vmatprep.subr.mxu0 0.0
  %434 = vmatpush1.msra.mxu0 %v150
  %435 = vmatprep.subr.mxu0 0.0
  %436 = vmatpush1.msra.mxu0 0.0
  %437 = vmatprep.subr.mxu0 0.0
  %438 = vmatpush1.msra.mxu0 0.0
  %439 = vmatprep.subr.mxu0 0.0
  %440 = vmatpush1.msra.mxu0 0.0
  %441 = vmatprep.subr.mxu0 0.0
  %442 = vmatpush1.msra.mxu0 0.0
  %443 = vmatprep.subr.mxu0 0.0
  %444 = vmatpush1.msra.mxu0 0.0
  %445 = vmatprep.subr.mxu0 0.0
  %446 = vmatpush1.msra.mxu0 0.0
  %447 = vmatprep.subr.mxu0 0.0
  %448 = vmatpush1.msra.mxu0 0.0
  %449 = vmatprep.subr.mxu0 0.0
  %450 = vmatpush1.msra.mxu0 0.0
  %451 = vmatprep.subr.mxu0 0.0
  %452 = vmatpush1.msra.mxu0 0.0
  %453 = vmatprep.subr.mxu0 0.0
  %454 = vmatpush1.msra.mxu0 0.0
  %455 = vmatprep.subr.mxu0 0.0
  %456 = vmatpush1.msra.mxu0 0.0
  %457 = vmatprep.subr.mxu0 0.0
  %458 = vmatpush1.msra.mxu0 0.0
  %459 = vmatprep.subr.mxu0 0.0
  %460 = vmatpush1.msra.mxu0 0.0
  %461 = vmatprep.subr.mxu0 0.0
  %462 = vmatpush1.msra.mxu0 0.0
  %463 = vmatprep.subr.mxu0 0.0
  %464 = vmatpush1.msra.mxu0 0.0
  %465 = vmatprep.subr.mxu0 0.0
  %466 = vmatpush1.msra.mxu0 0.0
  %467 = vmatprep.subr.mxu0 0.0
  %468 = vmatpush1.msra.mxu0 0.0
  %469 = vmatprep.subr.mxu0 0.0
  %470 = vmatpush1.msra.mxu0 0.0
  %471 = vmatprep.subr.mxu0 0.0
  %472 = vmatpush1.msra.mxu0 0.0
  %473 = vmatprep.subr.mxu0 0.0
  %474 = vmatpush1.msra.mxu0 0.0
  %475 = vmatprep.subr.mxu0 0.0
  %476 = vmatpush1.msra.mxu0 0.0
  %477 = vmatprep.subr.mxu0 0.0
  %478 = vmatpush1.msra.mxu0 0.0
  %479 = vmatprep.subr.mxu0 0.0
  %480 = vmatpush1.msra.mxu0 0.0
  %481 = vmatprep.subr.mxu0 0.0
  %482 = vmatpush1.msra.mxu0 0.0
  %483 = vmatprep.subr.mxu0 0.0
  %484 = vmatpush1.msra.mxu0 0.0
  %485 = vmatprep.subr.mxu0 0.0
  %486 = vmatpush1.msra.mxu0 0.0
  %487 = vmatprep.subr.mxu0 0.0
  %488 = vmatpush1.msra.mxu0 0.0
  %489 = vmatprep.subr.mxu0 0.0
  %490 = vmatpush1.msra.mxu0 0.0
  %491 = vmatprep.mubr.f32.mxu0 0.0
  %492 = vmatmul.mubr.f32.gmra.mrb[0].mxu0 %v246
  %v493 = vpop.f32.mrb[0].mxu0
  %v494 = vadd.f32 0.0, %v493
  %v495 = vpop.f32.mrb[0].mxu0
  %496 = vmatprep.mubr.f32.mxu0 0.0
  %497 = vmatmul.mubr.f32.gmra.mrb[0].mxu0 %v249
  %v498 = vpop.f32.mrb[0].mxu0
  %v499 = vadd.f32 0.0, %v498
  %v500 = vpop.f32.mrb[0].mxu0
  %501 = vmatprep.mubr.f32.mxu0 0.0
  %502 = vmatmul.mubr.f32.gmra.mrb[0].mxu0 %v252
  %v503 = vpop.f32.mrb[0].mxu0
  %v504 = vadd.f32 0.0, %v503
  %v505 = vpop.f32.mrb[0].mxu0
  %506 = vmatprep.mubr.f32.mxu0 0.0
  %507 = vmatmul.mubr.f32.gmra.mrb[0].mxu0 %v255
  %v508 = vpop.f32.mrb[0].mxu0
  %v509 = vadd.f32 0.0, %v508
  %v510 = vpop.f32.mrb[0].mxu0
  %511 = vdwg.mxu0
  %v513 = vsel %vm22, %v324, 0
  %v516 = vsel %vm22, %v329, 0
  %v519 = vsel %vm22, %v409, 0
  %v522 = vsel %vm22, %v414, 0
  %524 = vmatprep.subr.mxu0 0.0
  %525 = vmatpush1.xpose.msra.mxu0 %v519
  %526 = vmatprep.subr.mxu0 0.0
  %527 = vmatpush1.xpose.msra.mxu0 %v522
  %528 = vmatprep.subr.mxu0 0.0
  %529 = vmatpush1.xpose.msra.mxu0 0.0
  %530 = vmatprep.subr.mxu0 0.0
  %531 = vmatpush1.xpose.msra.mxu0 0.0
  %532 = vmatprep.subr.mxu0 0.0
  %533 = vmatpush1.xpose.msra.mxu0 0.0
  %534 = vmatprep.subr.mxu0 0.0
  %535 = vmatpush1.xpose.msra.mxu0 0.0
  %536 = vmatprep.subr.mxu0 0.0
  %537 = vmatpush1.xpose.msra.mxu0 0.0
  %538 = vmatprep.subr.mxu0 0.0
  %539 = vmatpush1.xpose.msra.mxu0 0.0
  %540 = vmatprep.subr.mxu0 0.0
  %541 = vmatpush1.xpose.msra.mxu0 0.0
  %542 = vmatprep.subr.mxu0 0.0
  %543 = vmatpush1.xpose.msra.mxu0 0.0
  %544 = vmatprep.subr.mxu0 0.0
  %545 = vmatpush1.xpose.msra.mxu0 0.0
  %546 = vmatprep.subr.mxu0 0.0
  %547 = vmatpush1.xpose.msra.mxu0 0.0
  %548 = vmatprep.subr.mxu0 0.0
  %549 = vmatpush1.xpose.msra.mxu0 0.0
  %550 = vmatprep.subr.mxu0 0.0
  %551 = vmatpush1.xpose.msra.mxu0 0.0
  %552 = vmatprep.subr.mxu0 0.0
  %553 = vmatpush1.xpose.msra.mxu0 0.0
  %554 = vmatprep.subr.mxu0 0.0
  %555 = vmatpush1.xpose.msra.mxu0 0.0
  %556 = vmatprep.subr.mxu0 0.0
  %557 = vmatpush1.xpose.msra.mxu0 0.0
  %558 = vmatprep.subr.mxu0 0.0
  %559 = vmatpush1.xpose.msra.mxu0 0.0
  %560 = vmatprep.subr.mxu0 0.0
  %561 = vmatpush1.xpose.msra.mxu0 0.0
  %562 = vmatprep.subr.mxu0 0.0
  %563 = vmatpush1.xpose.msra.mxu0 0.0
  %564 = vmatprep.subr.mxu0 0.0
  %565 = vmatpush1.xpose.msra.mxu0 0.0
  %566 = vmatprep.subr.mxu0 0.0
  %567 = vmatpush1.xpose.msra.mxu0 0.0
  %568 = vmatprep.subr.mxu0 0.0
  %569 = vmatpush1.xpose.msra.mxu0 0.0
  %570 = vmatprep.subr.mxu0 0.0
  %571 = vmatpush1.xpose.msra.mxu0 0.0
  %572 = vmatprep.subr.mxu0 0.0
  %573 = vmatpush1.xpose.msra.mxu0 0.0
  %574 = vmatprep.subr.mxu0 0.0
  %575 = vmatpush1.xpose.msra.mxu0 0.0
  %576 = vmatprep.subr.mxu0 0.0
  %577 = vmatpush1.xpose.msra.mxu0 0.0
  %578 = vmatprep.subr.mxu0 0.0
  %579 = vmatpush1.xpose.msra.mxu0 0.0
  %580 = vmatprep.subr.mxu0 0.0
  %581 = vmatpush1.xpose.msra.mxu0 0.0
  %582 = vmatprep.subr.mxu0 0.0
  %583 = vmatpush1.xpose.msra.mxu0 0.0
  %584 = vmatprep.subr.mxu0 0.0
  %585 = vmatpush1.xpose.msra.mxu0 0.0
  %586 = vmatprep.subr.mxu0 0.0
  %587 = vmatpush1.xpose.msra.mxu0 0.0
  %588 = vmatprep.mubr.f32.mxu0 0.0
  %589 = vmatmul.mubr.f32.gmra.mrb[0].mxu0 %v513
  %v590 = vpop.f32.mrb[0].mxu0
  %v591 = vadd.f32 0.0, %v590
  %v592 = vpop.f32.mrb[0].mxu0
  %593 = vmatprep.mubr.f32.mxu0 0.0
  %594 = vmatmul.mubr.f32.gmra.mrb[0].mxu0 %v516
  %v595 = vpop.f32.mrb[0].mxu0
  %v596 = vadd.f32 0.0, %v595
  %v597 = vpop.f32.mrb[0].mxu0
  %598 = vdwg.mxu0
  %v600 = vsel %vm22, %v334, 0
  %v603 = vsel %vm22, %v339, 0
  %v606 = vsel %vm22, %v419, 0
  %v609 = vsel %vm22, %v424, 0
  %611 = vmatprep.subr.mxu0 0.0
  %612 = vmatpush1.xpose.msra.mxu0 %v606
  %613 = vmatprep.subr.mxu0 0.0
  %614 = vmatpush1.xpose.msra.mxu0 %v609
  %615 = vmatprep.subr.mxu0 0.0
  %616 = vmatpush1.xpose.msra.mxu0 0.0
  %617 = vmatprep.subr.mxu0 0.0
  %618 = vmatpush1.xpose.msra.mxu0 0.0
  %619 = vmatprep.subr.mxu0 0.0
  %620 = vmatpush1.xpose.msra.mxu0 0.0
  %621 = vmatprep.subr.mxu0 0.0
  %622 = vmatpush1.xpose.msra.mxu0 0.0
  %623 = vmatprep.subr.mxu0 0.0
  %624 = vmatpush1.xpose.msra.mxu0 0.0
  %625 = vmatprep.subr.mxu0 0.0
  %626 = vmatpush1.xpose.msra.mxu0 0.0
  %627 = vmatprep.subr.mxu0 0.0
  %628 = vmatpush1.xpose.msra.mxu0 0.0
  %629 = vmatprep.subr.mxu0 0.0
  %630 = vmatpush1.xpose.msra.mxu0 0.0
  %631 = vmatprep.subr.mxu0 0.0
  %632 = vmatpush1.xpose.msra.mxu0 0.0
  %633 = vmatprep.subr.mxu0 0.0
  %634 = vmatpush1.xpose.msra.mxu0 0.0
  %635 = vmatprep.subr.mxu0 0.0
  %636 = vmatpush1.xpose.msra.mxu0 0.0
  %637 = vmatprep.subr.mxu0 0.0
  %638 = vmatpush1.xpose.msra.mxu0 0.0
  %639 = vmatprep.subr.mxu0 0.0
  %640 = vmatpush1.xpose.msra.mxu0 0.0
  %641 = vmatprep.subr.mxu0 0.0
  %642 = vmatpush1.xpose.msra.mxu0 0.0
  %643 = vmatprep.subr.mxu0 0.0
  %644 = vmatpush1.xpose.msra.mxu0 0.0
  %645 = vmatprep.subr.mxu0 0.0
  %646 = vmatpush1.xpose.msra.mxu0 0.0
  %647 = vmatprep.subr.mxu0 0.0
  %648 = vmatpush1.xpose.msra.mxu0 0.0
  %649 = vmatprep.subr.mxu0 0.0
  %650 = vmatpush1.xpose.msra.mxu0 0.0
  %651 = vmatprep.subr.mxu0 0.0
  %652 = vmatpush1.xpose.msra.mxu0 0.0
  %653 = vmatprep.subr.mxu0 0.0
  %654 = vmatpush1.xpose.msra.mxu0 0.0
  %655 = vmatprep.subr.mxu0 0.0
  %656 = vmatpush1.xpose.msra.mxu0 0.0
  %657 = vmatprep.subr.mxu0 0.0
  %658 = vmatpush1.xpose.msra.mxu0 0.0
  %659 = vmatprep.subr.mxu0 0.0
  %660 = vmatpush1.xpose.msra.mxu0 0.0
  %661 = vmatprep.subr.mxu0 0.0
  %662 = vmatpush1.xpose.msra.mxu0 0.0
  %663 = vmatprep.subr.mxu0 0.0
  %664 = vmatpush1.xpose.msra.mxu0 0.0
  %665 = vmatprep.subr.mxu0 0.0
  %666 = vmatpush1.xpose.msra.mxu0 0.0
  %667 = vmatprep.subr.mxu0 0.0
  %668 = vmatpush1.xpose.msra.mxu0 0.0
  %669 = vmatprep.subr.mxu0 0.0
  %670 = vmatpush1.xpose.msra.mxu0 0.0
  %671 = vmatprep.subr.mxu0 0.0
  %672 = vmatpush1.xpose.msra.mxu0 0.0
  %673 = vmatprep.subr.mxu0 0.0
  %674 = vmatpush1.xpose.msra.mxu0 0.0
  %675 = vmatprep.mubr.f32.mxu0 0.0
  %676 = vmatmul.mubr.f32.gmra.mrb[0].mxu0 %v600
  %v677 = vpop.f32.mrb[0].mxu0
  %v678 = vadd.f32 0.0, %v677
  %v679 = vpop.f32.mrb[0].mxu0
  %680 = vmatprep.mubr.f32.mxu0 0.0
  %681 = vmatmul.mubr.f32.gmra.mrb[0].mxu0 %v603
  %v682 = vpop.f32.mrb[0].mxu0
  %v683 = vadd.f32 0.0, %v682
  %v684 = vpop.f32.mrb[0].mxu0
  %685 = vdwg.mxu0
  %v686 = vsel %vm137, -1e+09, %v591
  %v687 = vsel %vm138, -1e+09, %v596
  %v688 = vsel %vm137, -1e+09, %v678
  %v689 = vsel %vm138, -1e+09, %v683
  %v690 = vsel %vm22, %v686, -inf
  %691 = vmax.xlane.f32.xlu0 %v690
  %v692 = vpop.xlane.xlu0 %691
  %v693 = vsel %vm22, %v687, -inf
  %694 = vmax.xlane.f32.xlu0 %v693
  %v695 = vpop.xlane.xlu0 %694
  %v696 = vsel %vm22, %v688, -inf
  %697 = vmax.xlane.f32.xlu0 %v696
  %v698 = vpop.xlane.xlu0 %697
  %v699 = vsel %vm22, %v689, -inf
  %700 = vmax.xlane.f32.xlu0 %v699
  %v701 = vpop.xlane.xlu0 %700
  %v702 = vsub.f32 %v686, %v692
  %v703 = vsub.f32 %v687, %v695
  %v704 = vsub.f32 %v688, %v698
  %v705 = vsub.f32 %v689, %v701
  %v706 = vmul.f32 %v702, 1.442695
  %v707 = vpow.pop %v706
  %v708 = vmul.f32 %v703, 1.442695
  %v709 = vpow.pop %v708
  %v710 = vmul.f32 %v704, 1.442695
  %v711 = vpow.pop %v710
  %v712 = vmul.f32 %v705, 1.442695
  %v713 = vpow.pop %v712
  %v714 = vsel %vm22, %v707, 0.0
  %715 = vadd.xlane.f32.xlu0 %v714
  %v716 = vpop.xlane.xlu0 %715
  %v717 = vsel %vm22, %v709, 0.0
  %718 = vadd.xlane.f32.xlu0 %v717
  %v719 = vpop.xlane.xlu0 %718
  %v720 = vsel %vm22, %v711, 0.0
  %721 = vadd.xlane.f32.xlu0 %v720
  %v722 = vpop.xlane.xlu0 %721
  %v723 = vsel %vm22, %v713, 0.0
  %724 = vadd.xlane.f32.xlu0 %v723
  %v725 = vpop.xlane.xlu0 %724
  %v726 = vrcp.pop %v716
  %v727 = vrcp.pop %v719
  %v728 = vrcp.pop %v722
  %v729 = vrcp.pop %v725
  %v730 = vmul.f32 %v707, %v726
  %v731 = vmul.f32 %v709, %v727
  %v732 = vmul.f32 %v711, %v728
  %v733 = vmul.f32 %v713, %v729
  %v735 = vsel %vm22, %v730, 0
  %v738 = vsel %vm22, %v731, 0
  %740 = vmatprep.subr.mxu0 0.0
  %741 = vmatpush1.msra.mxu0 %v494
  %742 = vmatprep.subr.mxu0 0.0
  %743 = vmatpush1.msra.mxu0 %v499
  %744 = vmatprep.subr.mxu0 0.0
  %745 = vmatpush1.msra.mxu0 0.0
  %746 = vmatprep.subr.mxu0 0.0
  %747 = vmatpush1.msra.mxu0 0.0
  %748 = vmatprep.subr.mxu0 0.0
  %749 = vmatpush1.msra.mxu0 0.0
  %750 = vmatprep.subr.mxu0 0.0
  %751 = vmatpush1.msra.mxu0 0.0
  %752 = vmatprep.subr.mxu0 0.0
  %753 = vmatpush1.msra.mxu0 0.0
  %754 = vmatprep.subr.mxu0 0.0
  %755 = vmatpush1.msra.mxu0 0.0
  %756 = vmatprep.subr.mxu0 0.0
  %757 = vmatpush1.msra.mxu0 0.0
  %758 = vmatprep.subr.mxu0 0.0
  %759 = vmatpush1.msra.mxu0 0.0
  %760 = vmatprep.subr.mxu0 0.0
  %761 = vmatpush1.msra.mxu0 0.0
  %762 = vmatprep.subr.mxu0 0.0
  %763 = vmatpush1.msra.mxu0 0.0
  %764 = vmatprep.subr.mxu0 0.0
  %765 = vmatpush1.msra.mxu0 0.0
  %766 = vmatprep.subr.mxu0 0.0
  %767 = vmatpush1.msra.mxu0 0.0
  %768 = vmatprep.subr.mxu0 0.0
  %769 = vmatpush1.msra.mxu0 0.0
  %770 = vmatprep.subr.mxu0 0.0
  %771 = vmatpush1.msra.mxu0 0.0
  %772 = vmatprep.subr.mxu0 0.0
  %773 = vmatpush1.msra.mxu0 0.0
  %774 = vmatprep.subr.mxu0 0.0
  %775 = vmatpush1.msra.mxu0 0.0
  %776 = vmatprep.subr.mxu0 0.0
  %777 = vmatpush1.msra.mxu0 0.0
  %778 = vmatprep.subr.mxu0 0.0
  %779 = vmatpush1.msra.mxu0 0.0
  %780 = vmatprep.subr.mxu0 0.0
  %781 = vmatpush1.msra.mxu0 0.0
  %782 = vmatprep.subr.mxu0 0.0
  %783 = vmatpush1.msra.mxu0 0.0
  %784 = vmatprep.subr.mxu0 0.0
  %785 = vmatpush1.msra.mxu0 0.0
  %786 = vmatprep.subr.mxu0 0.0
  %787 = vmatpush1.msra.mxu0 0.0
  %788 = vmatprep.subr.mxu0 0.0
  %789 = vmatpush1.msra.mxu0 0.0
  %790 = vmatprep.subr.mxu0 0.0
  %791 = vmatpush1.msra.mxu0 0.0
  %792 = vmatprep.subr.mxu0 0.0
  %793 = vmatpush1.msra.mxu0 0.0
  %794 = vmatprep.subr.mxu0 0.0
  %795 = vmatpush1.msra.mxu0 0.0
  %796 = vmatprep.subr.mxu0 0.0
  %797 = vmatpush1.msra.mxu0 0.0
  %798 = vmatprep.subr.mxu0 0.0
  %799 = vmatpush1.msra.mxu0 0.0
  %800 = vmatprep.subr.mxu0 0.0
  %801 = vmatpush1.msra.mxu0 0.0
  %802 = vmatprep.subr.mxu0 0.0
  %803 = vmatpush1.msra.mxu0 0.0
  %804 = vmatprep.mubr.f32.mxu0 0.0
  %805 = vmatmul.mubr.f32.gmra.mrb[0].mxu0 %v735
  %v806 = vpop.f32.mrb[0].mxu0
  %v807 = vadd.f32 0.0, %v806
  %v808 = vpop.f32.mrb[0].mxu0
  %809 = vmatprep.mubr.f32.mxu0 0.0
  %810 = vmatmul.mubr.f32.gmra.mrb[0].mxu0 %v738
  %v811 = vpop.f32.mrb[0].mxu0
  %v812 = vadd.f32 0.0, %v811
  %v813 = vpop.f32.mrb[0].mxu0
  %814 = vdwg.mxu0
  %v816 = vsel %vm22, %v732, 0
  %v819 = vsel %vm22, %v733, 0
  %821 = vmatprep.subr.mxu0 0.0
  %822 = vmatpush1.msra.mxu0 %v504
  %823 = vmatprep.subr.mxu0 0.0
  %824 = vmatpush1.msra.mxu0 %v509
  %825 = vmatprep.subr.mxu0 0.0
  %826 = vmatpush1.msra.mxu0 0.0
  %827 = vmatprep.subr.mxu0 0.0
  %828 = vmatpush1.msra.mxu0 0.0
  %829 = vmatprep.subr.mxu0 0.0
  %830 = vmatpush1.msra.mxu0 0.0
  %831 = vmatprep.subr.mxu0 0.0
  %832 = vmatpush1.msra.mxu0 0.0
  %833 = vmatprep.subr.mxu0 0.0
  %834 = vmatpush1.msra.mxu0 0.0
  %835 = vmatprep.subr.mxu0 0.0
  %836 = vmatpush1.msra.mxu0 0.0
  %837 = vmatprep.subr.mxu0 0.0
  %838 = vmatpush1.msra.mxu0 0.0
  %839 = vmatprep.subr.mxu0 0.0
  %840 = vmatpush1.msra.mxu0 0.0
  %841 = vmatprep.subr.mxu0 0.0
  %842 = vmatpush1.msra.mxu0 0.0
  %843 = vmatprep.subr.mxu0 0.0
  %844 = vmatpush1.msra.mxu0 0.0
  %845 = vmatprep.subr.mxu0 0.0
  %846 = vmatpush1.msra.mxu0 0.0
  %847 = vmatprep.subr.mxu0 0.0
  %848 = vmatpush1.msra.mxu0 0.0
  %849 = vmatprep.subr.mxu0 0.0
  %850 = vmatpush1.msra.mxu0 0.0
  %851 = vmatprep.subr.mxu0 0.0
  %852 = vmatpush1.msra.mxu0 0.0
  %853 = vmatprep.subr.mxu0 0.0
  %854 = vmatpush1.msra.mxu0 0.0
  %855 = vmatprep.subr.mxu0 0.0
  %856 = vmatpush1.msra.mxu0 0.0
  %857 = vmatprep.subr.mxu0 0.0
  %858 = vmatpush1.msra.mxu0 0.0
  %859 = vmatprep.subr.mxu0 0.0
  %860 = vmatpush1.msra.mxu0 0.0
  %861 = vmatprep.subr.mxu0 0.0
  %862 = vmatpush1.msra.mxu0 0.0
  %863 = vmatprep.subr.mxu0 0.0
  %864 = vmatpush1.msra.mxu0 0.0
  %865 = vmatprep.subr.mxu0 0.0
  %866 = vmatpush1.msra.mxu0 0.0
  %867 = vmatprep.subr.mxu0 0.0
  %868 = vmatpush1.msra.mxu0 0.0
  %869 = vmatprep.subr.mxu0 0.0
  %870 = vmatpush1.msra.mxu0 0.0
  %871 = vmatprep.subr.mxu0 0.0
  %872 = vmatpush1.msra.mxu0 0.0
  %873 = vmatprep.subr.mxu0 0.0
  %874 = vmatpush1.msra.mxu0 0.0
  %875 = vmatprep.subr.mxu0 0.0
  %876 = vmatpush1.msra.mxu0 0.0
  %877 = vmatprep.subr.mxu0 0.0
  %878 = vmatpush1.msra.mxu0 0.0
  %879 = vmatprep.subr.mxu0 0.0
  %880 = vmatpush1.msra.mxu0 0.0
  %881 = vmatprep.subr.mxu0 0.0
  %882 = vmatpush1.msra.mxu0 0.0
  %883 = vmatprep.subr.mxu0 0.0
  %884 = vmatpush1.msra.mxu0 0.0
  %885 = vmatprep.mubr.f32.mxu0 0.0
  %886 = vmatmul.mubr.f32.gmra.mrb[0].mxu0 %v816
  %v887 = vpop.f32.mrb[0].mxu0
  %v888 = vadd.f32 0.0, %v887
  %v889 = vpop.f32.mrb[0].mxu0
  %890 = vmatprep.mubr.f32.mxu0 0.0
  %891 = vmatmul.mubr.f32.gmra.mrb[0].mxu0 %v819
  %v892 = vpop.f32.mrb[0].mxu0
  %v893 = vadd.f32 0.0, %v892
  %v894 = vpop.f32.mrb[0].mxu0
  %895 = vdwg.mxu0
  %896 = vrot.lane.b32.xlu0 %v324, 112
  %v897 = vpop.permute.xlu0 %896
  %898 = vrot.lane.b32.xlu0 %v329, 112
  %v899 = vpop.permute.xlu0 %898
  %900 = vrot.lane.b32.xlu0 %v409, 112
  %v901 = vpop.permute.xlu0 %900
  %902 = vrot.lane.b32.xlu0 %v414, 112
  %v903 = vpop.permute.xlu0 %902
  %v904 = vsel %vm22, %v897, 0
  %v906 = vsel %vm22, %v899, 0
  %v908 = vsel %vm22, %v901, 0
  %v910 = vsel %vm22, %v903, 0
  %912 = vmatprep.subr.mxu0 0.0
  %913 = vmatpush1.xpose.msra.mxu0 %v908
  %914 = vmatprep.subr.mxu0 0.0
  %915 = vmatpush1.xpose.msra.mxu0 %v910
  %916 = vmatprep.subr.mxu0 0.0
  %917 = vmatpush1.xpose.msra.mxu0 0.0
  %918 = vmatprep.subr.mxu0 0.0
  %919 = vmatpush1.xpose.msra.mxu0 0.0
  %920 = vmatprep.subr.mxu0 0.0
  %921 = vmatpush1.xpose.msra.mxu0 0.0
  %922 = vmatprep.subr.mxu0 0.0
  %923 = vmatpush1.xpose.msra.mxu0 0.0
  %924 = vmatprep.subr.mxu0 0.0
  %925 = vmatpush1.xpose.msra.mxu0 0.0
  %926 = vmatprep.subr.mxu0 0.0
  %927 = vmatpush1.xpose.msra.mxu0 0.0
  %928 = vmatprep.subr.mxu0 0.0
  %929 = vmatpush1.xpose.msra.mxu0 0.0
  %930 = vmatprep.subr.mxu0 0.0
  %931 = vmatpush1.xpose.msra.mxu0 0.0
  %932 = vmatprep.subr.mxu0 0.0
  %933 = vmatpush1.xpose.msra.mxu0 0.0
  %934 = vmatprep.subr.mxu0 0.0
  %935 = vmatpush1.xpose.msra.mxu0 0.0
  %936 = vmatprep.subr.mxu0 0.0
  %937 = vmatpush1.xpose.msra.mxu0 0.0
  %938 = vmatprep.subr.mxu0 0.0
  %939 = vmatpush1.xpose.msra.mxu0 0.0
  %940 = vmatprep.subr.mxu0 0.0
  %941 = vmatpush1.xpose.msra.mxu0 0.0
  %942 = vmatprep.subr.mxu0 0.0
  %943 = vmatpush1.xpose.msra.mxu0 0.0
  %944 = vmatprep.subr.mxu0 0.0
  %945 = vmatpush1.xpose.msra.mxu0 0.0
  %946 = vmatprep.subr.mxu0 0.0
  %947 = vmatpush1.xpose.msra.mxu0 0.0
  %948 = vmatprep.subr.mxu0 0.0
  %949 = vmatpush1.xpose.msra.mxu0 0.0
  %950 = vmatprep.subr.mxu0 0.0
  %951 = vmatpush1.xpose.msra.mxu0 0.0
  %952 = vmatprep.subr.mxu0 0.0
  %953 = vmatpush1.xpose.msra.mxu0 0.0
  %954 = vmatprep.subr.mxu0 0.0
  %955 = vmatpush1.xpose.msra.mxu0 0.0
  %956 = vmatprep.subr.mxu0 0.0
  %957 = vmatpush1.xpose.msra.mxu0 0.0
  %958 = vmatprep.subr.mxu0 0.0
  %959 = vmatpush1.xpose.msra.mxu0 0.0
  %960 = vmatprep.subr.mxu0 0.0
  %961 = vmatpush1.xpose.msra.mxu0 0.0
  %962 = vmatprep.subr.mxu0 0.0
  %963 = vmatpush1.xpose.msra.mxu0 0.0
  %964 = vmatprep.subr.mxu0 0.0
  %965 = vmatpush1.xpose.msra.mxu0 0.0
  %966 = vmatprep.subr.mxu0 0.0
  %967 = vmatpush1.xpose.msra.mxu0 0.0
  %968 = vmatprep.subr.mxu0 0.0
  %969 = vmatpush1.xpose.msra.mxu0 0.0
  %970 = vmatprep.subr.mxu0 0.0
  %971 = vmatpush1.xpose.msra.mxu0 0.0
  %972 = vmatprep.subr.mxu0 0.0
  %973 = vmatpush1.xpose.msra.mxu0 0.0
  %974 = vmatprep.subr.mxu0 0.0
  %975 = vmatpush1.xpose.msra.mxu0 0.0
  %976 = vmatprep.mubr.f32.mxu0 0.0
  %977 = vmatmul.mubr.f32.gmra.mrb[0].mxu0 %v904
  %v978 = vpop.f32.mrb[0].mxu0
  %v979 = vadd.f32 0.0, %v978
  %v980 = vpop.f32.mrb[0].mxu0
  %981 = vmatprep.mubr.f32.mxu0 0.0
  %982 = vmatmul.mubr.f32.gmra.mrb[0].mxu0 %v906
  %v983 = vpop.f32.mrb[0].mxu0
  %v984 = vadd.f32 0.0, %v983
  %v985 = vpop.f32.mrb[0].mxu0
  %986 = vdwg.mxu0
  %987 = vrot.lane.b32.xlu0 %v334, 112
  %v988 = vpop.permute.xlu0 %987
  %989 = vrot.lane.b32.xlu0 %v339, 112
  %v990 = vpop.permute.xlu0 %989
  %991 = vrot.lane.b32.xlu0 %v419, 112
  %v992 = vpop.permute.xlu0 %991
  %993 = vrot.lane.b32.xlu0 %v424, 112
  %v994 = vpop.permute.xlu0 %993
  %v995 = vsel %vm22, %v988, 0
  %v997 = vsel %vm22, %v990, 0
  %v999 = vsel %vm22, %v992, 0
  %v1001 = vsel %vm22, %v994, 0
  %1003 = vmatprep.subr.mxu0 0.0
  %1004 = vmatpush1.xpose.msra.mxu0 %v999
  %1005 = vmatprep.subr.mxu0 0.0
  %1006 = vmatpush1.xpose.msra.mxu0 %v1001
  %1007 = vmatprep.subr.mxu0 0.0
  %1008 = vmatpush1.xpose.msra.mxu0 0.0
  %1009 = vmatprep.subr.mxu0 0.0
  %1010 = vmatpush1.xpose.msra.mxu0 0.0
  %1011 = vmatprep.subr.mxu0 0.0
  %1012 = vmatpush1.xpose.msra.mxu0 0.0
  %1013 = vmatprep.subr.mxu0 0.0
  %1014 = vmatpush1.xpose.msra.mxu0 0.0
  %1015 = vmatprep.subr.mxu0 0.0
  %1016 = vmatpush1.xpose.msra.mxu0 0.0
  %1017 = vmatprep.subr.mxu0 0.0
  %1018 = vmatpush1.xpose.msra.mxu0 0.0
  %1019 = vmatprep.subr.mxu0 0.0
  %1020 = vmatpush1.xpose.msra.mxu0 0.0
  %1021 = vmatprep.subr.mxu0 0.0
  %1022 = vmatpush1.xpose.msra.mxu0 0.0
  %1023 = vmatprep.subr.mxu0 0.0
  %1024 = vmatpush1.xpose.msra.mxu0 0.0
  %1025 = vmatprep.subr.mxu0 0.0
  %1026 = vmatpush1.xpose.msra.mxu0 0.0
  %1027 = vmatprep.subr.mxu0 0.0
  %1028 = vmatpush1.xpose.msra.mxu0 0.0
  %1029 = vmatprep.subr.mxu0 0.0
  %1030 = vmatpush1.xpose.msra.mxu0 0.0
  %1031 = vmatprep.subr.mxu0 0.0
  %1032 = vmatpush1.xpose.msra.mxu0 0.0
  %1033 = vmatprep.subr.mxu0 0.0
  %1034 = vmatpush1.xpose.msra.mxu0 0.0
  %1035 = vmatprep.subr.mxu0 0.0
  %1036 = vmatpush1.xpose.msra.mxu0 0.0
  %1037 = vmatprep.subr.mxu0 0.0
  %1038 = vmatpush1.xpose.msra.mxu0 0.0
  %1039 = vmatprep.subr.mxu0 0.0
  %1040 = vmatpush1.xpose.msra.mxu0 0.0
  %1041 = vmatprep.subr.mxu0 0.0
  %1042 = vmatpush1.xpose.msra.mxu0 0.0
  %1043 = vmatprep.subr.mxu0 0.0
  %1044 = vmatpush1.xpose.msra.mxu0 0.0
  %1045 = vmatprep.subr.mxu0 0.0
  %1046 = vmatpush1.xpose.msra.mxu0 0.0
  %1047 = vmatprep.subr.mxu0 0.0
  %1048 = vmatpush1.xpose.msra.mxu0 0.0
  %1049 = vmatprep.subr.mxu0 0.0
  %1050 = vmatpush1.xpose.msra.mxu0 0.0
  %1051 = vmatprep.subr.mxu0 0.0
  %1052 = vmatpush1.xpose.msra.mxu0 0.0
  %1053 = vmatprep.subr.mxu0 0.0
  %1054 = vmatpush1.xpose.msra.mxu0 0.0
  %1055 = vmatprep.subr.mxu0 0.0
  %1056 = vmatpush1.xpose.msra.mxu0 0.0
  %1057 = vmatprep.subr.mxu0 0.0
  %1058 = vmatpush1.xpose.msra.mxu0 0.0
  %1059 = vmatprep.subr.mxu0 0.0
  %1060 = vmatpush1.xpose.msra.mxu0 0.0
  %1061 = vmatprep.subr.mxu0 0.0
  %1062 = vmatpush1.xpose.msra.mxu0 0.0
  %1063 = vmatprep.subr.mxu0 0.0
  %1064 = vmatpush1.xpose.msra.mxu0 0.0
  %1065 = vmatprep.subr.mxu0 0.0
  %1066 = vmatpush1.xpose.msra.mxu0 0.0
  %1067 = vmatprep.mubr.f32.mxu0 0.0
  %1068 = vmatmul.mubr.f32.gmra.mrb[0].mxu0 %v995
  %v1069 = vpop.f32.mrb[0].mxu0
  %v1070 = vadd.f32 0.0, %v1069
  %v1071 = vpop.f32.mrb[0].mxu0
  %1072 = vmatprep.mubr.f32.mxu0 0.0
  %1073 = vmatmul.mubr.f32.gmra.mrb[0].mxu0 %v997
  %v1074 = vpop.f32.mrb[0].mxu0
  %v1075 = vadd.f32 0.0, %v1074
  %v1076 = vpop.f32.mrb[0].mxu0
  %1077 = vdwg.mxu0
  %v1078 = vsel %vm137, -1e+09, %v979
  %v1079 = vsel %vm138, -1e+09, %v984
  %v1080 = vsel %vm137, -1e+09, %v1070
  %v1081 = vsel %vm138, -1e+09, %v1075
  %v1082 = vsel %vm22, %v1078, -inf
  %1083 = vmax.xlane.f32.xlu0 %v1082
  %v1084 = vpop.xlane.xlu0 %1083
  %v1085 = vsel %vm22, %v1079, -inf
  %1086 = vmax.xlane.f32.xlu0 %v1085
  %v1087 = vpop.xlane.xlu0 %1086
  %v1088 = vsel %vm22, %v1080, -inf
  %1089 = vmax.xlane.f32.xlu0 %v1088
  %v1090 = vpop.xlane.xlu0 %1089
  %v1091 = vsel %vm22, %v1081, -inf
  %1092 = vmax.xlane.f32.xlu0 %v1091
  %v1093 = vpop.xlane.xlu0 %1092
  %v1094 = vsub.f32 %v1078, %v1084
  %v1095 = vsub.f32 %v1079, %v1087
  %v1096 = vsub.f32 %v1080, %v1090
  %v1097 = vsub.f32 %v1081, %v1093
  %v1098 = vmul.f32 %v1094, 1.442695
  %v1099 = vpow.pop %v1098
  %v1100 = vmul.f32 %v1095, 1.442695
  %v1101 = vpow.pop %v1100
  %v1102 = vmul.f32 %v1096, 1.442695
  %v1103 = vpow.pop %v1102
  %v1104 = vmul.f32 %v1097, 1.442695
  %v1105 = vpow.pop %v1104
  %v1106 = vsel %vm22, %v1099, 0.0
  %1107 = vadd.xlane.f32.xlu0 %v1106
  %v1108 = vpop.xlane.xlu0 %1107
  %v1109 = vsel %vm22, %v1101, 0.0
  %1110 = vadd.xlane.f32.xlu0 %v1109
  %v1111 = vpop.xlane.xlu0 %1110
  %v1112 = vsel %vm22, %v1103, 0.0
  %1113 = vadd.xlane.f32.xlu0 %v1112
  %v1114 = vpop.xlane.xlu0 %1113
  %v1115 = vsel %vm22, %v1105, 0.0
  %1116 = vadd.xlane.f32.xlu0 %v1115
  %v1117 = vpop.xlane.xlu0 %1116
  %v1118 = vrcp.pop %v1108
  %v1119 = vrcp.pop %v1111
  %v1120 = vrcp.pop %v1114
  %v1121 = vrcp.pop %v1117
  %v1122 = vmul.f32 %v1099, %v1118
  %v1123 = vmul.f32 %v1101, %v1119
  %v1124 = vmul.f32 %v1103, %v1120
  %v1125 = vmul.f32 %v1105, %v1121
  %1128 = vrot.lane.b32.xlu0 %v494, 112
  %v1129 = vpop.permute.xlu0 %1128
  %1130 = vrot.lane.b32.xlu0 %v499, 112
  %v1131 = vpop.permute.xlu0 %1130
  %v1135 = vsel %vm22, %v1122, 0
  %v1138 = vsel %vm22, %v1123, 0
  %1140 = vmatprep.subr.mxu0 0.0
  %1141 = vmatpush1.msra.mxu0 %v1129
  %1142 = vmatprep.subr.mxu0 0.0
  %1143 = vmatpush1.msra.mxu0 %v1131
  %1144 = vmatprep.subr.mxu0 0.0
  %1145 = vmatpush1.msra.mxu0 0.0
  %1146 = vmatprep.subr.mxu0 0.0
  %1147 = vmatpush1.msra.mxu0 0.0
  %1148 = vmatprep.subr.mxu0 0.0
  %1149 = vmatpush1.msra.mxu0 0.0
  %1150 = vmatprep.subr.mxu0 0.0
  %1151 = vmatpush1.msra.mxu0 0.0
  %1152 = vmatprep.subr.mxu0 0.0
  %1153 = vmatpush1.msra.mxu0 0.0
  %1154 = vmatprep.subr.mxu0 0.0
  %1155 = vmatpush1.msra.mxu0 0.0
  %1156 = vmatprep.subr.mxu0 0.0
  %1157 = vmatpush1.msra.mxu0 0.0
  %1158 = vmatprep.subr.mxu0 0.0
  %1159 = vmatpush1.msra.mxu0 0.0
  %1160 = vmatprep.subr.mxu0 0.0
  %1161 = vmatpush1.msra.mxu0 0.0
  %1162 = vmatprep.subr.mxu0 0.0
  %1163 = vmatpush1.msra.mxu0 0.0
  %1164 = vmatprep.subr.mxu0 0.0
  %1165 = vmatpush1.msra.mxu0 0.0
  %1166 = vmatprep.subr.mxu0 0.0
  %1167 = vmatpush1.msra.mxu0 0.0
  %1168 = vmatprep.subr.mxu0 0.0
  %1169 = vmatpush1.msra.mxu0 0.0
  %1170 = vmatprep.subr.mxu0 0.0
  %1171 = vmatpush1.msra.mxu0 0.0
  %1172 = vmatprep.subr.mxu0 0.0
  %1173 = vmatpush1.msra.mxu0 0.0
  %1174 = vmatprep.subr.mxu0 0.0
  %1175 = vmatpush1.msra.mxu0 0.0
  %1176 = vmatprep.subr.mxu0 0.0
  %1177 = vmatpush1.msra.mxu0 0.0
  %1178 = vmatprep.subr.mxu0 0.0
  %1179 = vmatpush1.msra.mxu0 0.0
  %1180 = vmatprep.subr.mxu0 0.0
  %1181 = vmatpush1.msra.mxu0 0.0
  %1182 = vmatprep.subr.mxu0 0.0
  %1183 = vmatpush1.msra.mxu0 0.0
  %1184 = vmatprep.subr.mxu0 0.0
  %1185 = vmatpush1.msra.mxu0 0.0
  %1186 = vmatprep.subr.mxu0 0.0
  %1187 = vmatpush1.msra.mxu0 0.0
  %1188 = vmatprep.subr.mxu0 0.0
  %1189 = vmatpush1.msra.mxu0 0.0
  %1190 = vmatprep.subr.mxu0 0.0
  %1191 = vmatpush1.msra.mxu0 0.0
  %1192 = vmatprep.subr.mxu0 0.0
  %1193 = vmatpush1.msra.mxu0 0.0
  %1194 = vmatprep.subr.mxu0 0.0
  %1195 = vmatpush1.msra.mxu0 0.0
  %1196 = vmatprep.subr.mxu0 0.0
  %1197 = vmatpush1.msra.mxu0 0.0
  %1198 = vmatprep.subr.mxu0 0.0
  %1199 = vmatpush1.msra.mxu0 0.0
  %1200 = vmatprep.subr.mxu0 0.0
  %1201 = vmatpush1.msra.mxu0 0.0
  %1202 = vmatprep.subr.mxu0 0.0
  %1203 = vmatpush1.msra.mxu0 0.0
  %1204 = vmatprep.mubr.f32.mxu0 0.0
  %1205 = vmatmul.mubr.f32.gmra.mrb[0].mxu0 %v1135
  %v1206 = vpop.f32.mrb[0].mxu0
  %v1207 = vadd.f32 0.0, %v1206
  %v1208 = vpop.f32.mrb[0].mxu0
  %1209 = vmatprep.mubr.f32.mxu0 0.0
  %1210 = vmatmul.mubr.f32.gmra.mrb[0].mxu0 %v1138
  %v1211 = vpop.f32.mrb[0].mxu0
  %v1212 = vadd.f32 0.0, %v1211
  %v1213 = vpop.f32.mrb[0].mxu0
  %1214 = vdwg.mxu0
  %1217 = vrot.lane.b32.xlu0 %v504, 112
  %v1218 = vpop.permute.xlu0 %1217
  %1219 = vrot.lane.b32.xlu0 %v509, 112
  %v1220 = vpop.permute.xlu0 %1219
  %v1224 = vsel %vm22, %v1124, 0
  %v1227 = vsel %vm22, %v1125, 0
  %1229 = vmatprep.subr.mxu0 0.0
  %1230 = vmatpush1.msra.mxu0 %v1218
  %1231 = vmatprep.subr.mxu0 0.0
  %1232 = vmatpush1.msra.mxu0 %v1220
  %1233 = vmatprep.subr.mxu0 0.0
  %1234 = vmatpush1.msra.mxu0 0.0
  %1235 = vmatprep.subr.mxu0 0.0
  %1236 = vmatpush1.msra.mxu0 0.0
  %1237 = vmatprep.subr.mxu0 0.0
  %1238 = vmatpush1.msra.mxu0 0.0
  %1239 = vmatprep.subr.mxu0 0.0
  %1240 = vmatpush1.msra.mxu0 0.0
  %1241 = vmatprep.subr.mxu0 0.0
  %1242 = vmatpush1.msra.mxu0 0.0
  %1243 = vmatprep.subr.mxu0 0.0
  %1244 = vmatpush1.msra.mxu0 0.0
  %1245 = vmatprep.subr.mxu0 0.0
  %1246 = vmatpush1.msra.mxu0 0.0
  %1247 = vmatprep.subr.mxu0 0.0
  %1248 = vmatpush1.msra.mxu0 0.0
  %1249 = vmatprep.subr.mxu0 0.0
  %1250 = vmatpush1.msra.mxu0 0.0
  %1251 = vmatprep.subr.mxu0 0.0
  %1252 = vmatpush1.msra.mxu0 0.0
  %1253 = vmatprep.subr.mxu0 0.0
  %1254 = vmatpush1.msra.mxu0 0.0
  %1255 = vmatprep.subr.mxu0 0.0
  %1256 = vmatpush1.msra.mxu0 0.0
  %1257 = vmatprep.subr.mxu0 0.0
  %1258 = vmatpush1.msra.mxu0 0.0
  %1259 = vmatprep.subr.mxu0 0.0
  %1260 = vmatpush1.msra.mxu0 0.0
  %1261 = vmatprep.subr.mxu0 0.0
  %1262 = vmatpush1.msra.mxu0 0.0
  %1263 = vmatprep.subr.mxu0 0.0
  %1264 = vmatpush1.msra.mxu0 0.0
  %1265 = vmatprep.subr.mxu0 0.0
  %1266 = vmatpush1.msra.mxu0 0.0
  %1267 = vmatprep.subr.mxu0 0.0
  %1268 = vmatpush1.msra.mxu0 0.0
  %1269 = vmatprep.subr.mxu0 0.0
  %1270 = vmatpush1.msra.mxu0 0.0
  %1271 = vmatprep.subr.mxu0 0.0
  %1272 = vmatpush1.msra.mxu0 0.0
  %1273 = vmatprep.subr.mxu0 0.0
  %1274 = vmatpush1.msra.mxu0 0.0
  %1275 = vmatprep.subr.mxu0 0.0
  %1276 = vmatpush1.msra.mxu0 0.0
  %1277 = vmatprep.subr.mxu0 0.0
  %1278 = vmatpush1.msra.mxu0 0.0
  %1279 = vmatprep.subr.mxu0 0.0
  %1280 = vmatpush1.msra.mxu0 0.0
  %1281 = vmatprep.subr.mxu0 0.0
  %1282 = vmatpush1.msra.mxu0 0.0
  %1283 = vmatprep.subr.mxu0 0.0
  %1284 = vmatpush1.msra.mxu0 0.0
  %1285 = vmatprep.subr.mxu0 0.0
  %1286 = vmatpush1.msra.mxu0 0.0
  %1287 = vmatprep.subr.mxu0 0.0
  %1288 = vmatpush1.msra.mxu0 0.0
  %1289 = vmatprep.subr.mxu0 0.0
  %1290 = vmatpush1.msra.mxu0 0.0
  %1291 = vmatprep.subr.mxu0 0.0
  %1292 = vmatpush1.msra.mxu0 0.0
  %1293 = vmatprep.mubr.f32.mxu0 0.0
  %1294 = vmatmul.mubr.f32.gmra.mrb[0].mxu0 %v1224
  %v1295 = vpop.f32.mrb[0].mxu0
  %v1296 = vadd.f32 0.0, %v1295
  %v1297 = vpop.f32.mrb[0].mxu0
  %1298 = vmatprep.mubr.f32.mxu0 0.0
  %1299 = vmatmul.mubr.f32.gmra.mrb[0].mxu0 %v1227
  %v1300 = vpop.f32.mrb[0].mxu0
  %v1301 = vadd.f32 0.0, %v1300
  %v1302 = vpop.f32.mrb[0].mxu0
  %1303 = vdwg.mxu0
  %1304 = vrot.lane.b32.xlu0 %v324, 96
  %v1305 = vpop.permute.xlu0 %1304
  %1306 = vrot.lane.b32.xlu0 %v329, 96
  %v1307 = vpop.permute.xlu0 %1306
  %1308 = vrot.lane.b32.xlu0 %v409, 96
  %v1309 = vpop.permute.xlu0 %1308
  %1310 = vrot.lane.b32.xlu0 %v414, 96
  %v1311 = vpop.permute.xlu0 %1310
  %v1312 = vsel %vm22, %v1305, 0
  %v1314 = vsel %vm22, %v1307, 0
  %v1316 = vsel %vm22, %v1309, 0
  %v1318 = vsel %vm22, %v1311, 0
  %1320 = vmatprep.subr.mxu0 0.0
  %1321 = vmatpush1.xpose.msra.mxu0 %v1316
  %1322 = vmatprep.subr.mxu0 0.0
  %1323 = vmatpush1.xpose.msra.mxu0 %v1318
  %1324 = vmatprep.subr.mxu0 0.0
  %1325 = vmatpush1.xpose.msra.mxu0 0.0
  %1326 = vmatprep.subr.mxu0 0.0
  %1327 = vmatpush1.xpose.msra.mxu0 0.0
  %1328 = vmatprep.subr.mxu0 0.0
  %1329 = vmatpush1.xpose.msra.mxu0 0.0
  %1330 = vmatprep.subr.mxu0 0.0
  %1331 = vmatpush1.xpose.msra.mxu0 0.0
  %1332 = vmatprep.subr.mxu0 0.0
  %1333 = vmatpush1.xpose.msra.mxu0 0.0
  %1334 = vmatprep.subr.mxu0 0.0
  %1335 = vmatpush1.xpose.msra.mxu0 0.0
  %1336 = vmatprep.subr.mxu0 0.0
  %1337 = vmatpush1.xpose.msra.mxu0 0.0
  %1338 = vmatprep.subr.mxu0 0.0
  %1339 = vmatpush1.xpose.msra.mxu0 0.0
  %1340 = vmatprep.subr.mxu0 0.0
  %1341 = vmatpush1.xpose.msra.mxu0 0.0
  %1342 = vmatprep.subr.mxu0 0.0
  %1343 = vmatpush1.xpose.msra.mxu0 0.0
  %1344 = vmatprep.subr.mxu0 0.0
  %1345 = vmatpush1.xpose.msra.mxu0 0.0
  %1346 = vmatprep.subr.mxu0 0.0
  %1347 = vmatpush1.xpose.msra.mxu0 0.0
  %1348 = vmatprep.subr.mxu0 0.0
  %1349 = vmatpush1.xpose.msra.mxu0 0.0
  %1350 = vmatprep.subr.mxu0 0.0
  %1351 = vmatpush1.xpose.msra.mxu0 0.0
  %1352 = vmatprep.subr.mxu0 0.0
  %1353 = vmatpush1.xpose.msra.mxu0 0.0
  %1354 = vmatprep.subr.mxu0 0.0
  %1355 = vmatpush1.xpose.msra.mxu0 0.0
  %1356 = vmatprep.subr.mxu0 0.0
  %1357 = vmatpush1.xpose.msra.mxu0 0.0
  %1358 = vmatprep.subr.mxu0 0.0
  %1359 = vmatpush1.xpose.msra.mxu0 0.0
  %1360 = vmatprep.subr.mxu0 0.0
  %1361 = vmatpush1.xpose.msra.mxu0 0.0
  %1362 = vmatprep.subr.mxu0 0.0
  %1363 = vmatpush1.xpose.msra.mxu0 0.0
  %1364 = vmatprep.subr.mxu0 0.0
  %1365 = vmatpush1.xpose.msra.mxu0 0.0
  %1366 = vmatprep.subr.mxu0 0.0
  %1367 = vmatpush1.xpose.msra.mxu0 0.0
  %1368 = vmatprep.subr.mxu0 0.0
  %1369 = vmatpush1.xpose.msra.mxu0 0.0
  %1370 = vmatprep.subr.mxu0 0.0
  %1371 = vmatpush1.xpose.msra.mxu0 0.0
  %1372 = vmatprep.subr.mxu0 0.0
  %1373 = vmatpush1.xpose.msra.mxu0 0.0
  %1374 = vmatprep.subr.mxu0 0.0
  %1375 = vmatpush1.xpose.msra.mxu0 0.0
  %1376 = vmatprep.subr.mxu0 0.0
  %1377 = vmatpush1.xpose.msra.mxu0 0.0
  %1378 = vmatprep.subr.mxu0 0.0
  %1379 = vmatpush1.xpose.msra.mxu0 0.0
  %1380 = vmatprep.subr.mxu0 0.0
  %1381 = vmatpush1.xpose.msra.mxu0 0.0
  %1382 = vmatprep.subr.mxu0 0.0
  %1383 = vmatpush1.xpose.msra.mxu0 0.0
  %1384 = vmatprep.mubr.f32.mxu0 0.0
  %1385 = vmatmul.mubr.f32.gmra.mrb[0].mxu0 %v1312
  %v1386 = vpop.f32.mrb[0].mxu0
  %v1387 = vadd.f32 0.0, %v1386
  %v1388 = vpop.f32.mrb[0].mxu0
  %1389 = vmatprep.mubr.f32.mxu0 0.0
  %1390 = vmatmul.mubr.f32.gmra.mrb[0].mxu0 %v1314
  %v1391 = vpop.f32.mrb[0].mxu0
  %v1392 = vadd.f32 0.0, %v1391
  %v1393 = vpop.f32.mrb[0].mxu0
  %1394 = vdwg.mxu0
  %1395 = vrot.lane.b32.xlu0 %v334, 96
  %v1396 = vpop.permute.xlu0 %1395
  %1397 = vrot.lane.b32.xlu0 %v339, 96
  %v1398 = vpop.permute.xlu0 %1397
  %1399 = vrot.lane.b32.xlu0 %v419, 96
  %v1400 = vpop.permute.xlu0 %1399
  %1401 = vrot.lane.b32.xlu0 %v424, 96
  %v1402 = vpop.permute.xlu0 %1401
  %v1403 = vsel %vm22, %v1396, 0
  %v1405 = vsel %vm22, %v1398, 0
  %v1407 = vsel %vm22, %v1400, 0
  %v1409 = vsel %vm22, %v1402, 0
  %1411 = vmatprep.subr.mxu0 0.0
  %1412 = vmatpush1.xpose.msra.mxu0 %v1407
  %1413 = vmatprep.subr.mxu0 0.0
  %1414 = vmatpush1.xpose.msra.mxu0 %v1409
  %1415 = vmatprep.subr.mxu0 0.0
  %1416 = vmatpush1.xpose.msra.mxu0 0.0
  %1417 = vmatprep.subr.mxu0 0.0
  %1418 = vmatpush1.xpose.msra.mxu0 0.0
  %1419 = vmatprep.subr.mxu0 0.0
  %1420 = vmatpush1.xpose.msra.mxu0 0.0
  %1421 = vmatprep.subr.mxu0 0.0
  %1422 = vmatpush1.xpose.msra.mxu0 0.0
  %1423 = vmatprep.subr.mxu0 0.0
  %1424 = vmatpush1.xpose.msra.mxu0 0.0
  %1425 = vmatprep.subr.mxu0 0.0
  %1426 = vmatpush1.xpose.msra.mxu0 0.0
  %1427 = vmatprep.subr.mxu0 0.0
  %1428 = vmatpush1.xpose.msra.mxu0 0.0
  %1429 = vmatprep.subr.mxu0 0.0
  %1430 = vmatpush1.xpose.msra.mxu0 0.0
  %1431 = vmatprep.subr.mxu0 0.0
  %1432 = vmatpush1.xpose.msra.mxu0 0.0
  %1433 = vmatprep.subr.mxu0 0.0
  %1434 = vmatpush1.xpose.msra.mxu0 0.0
  %1435 = vmatprep.subr.mxu0 0.0
  %1436 = vmatpush1.xpose.msra.mxu0 0.0
  %1437 = vmatprep.subr.mxu0 0.0
  %1438 = vmatpush1.xpose.msra.mxu0 0.0
  %1439 = vmatprep.subr.mxu0 0.0
  %1440 = vmatpush1.xpose.msra.mxu0 0.0
  %1441 = vmatprep.subr.mxu0 0.0
  %1442 = vmatpush1.xpose.msra.mxu0 0.0
  %1443 = vmatprep.subr.mxu0 0.0
  %1444 = vmatpush1.xpose.msra.mxu0 0.0
  %1445 = vmatprep.subr.mxu0 0.0
  %1446 = vmatpush1.xpose.msra.mxu0 0.0
  %1447 = vmatprep.subr.mxu0 0.0
  %1448 = vmatpush1.xpose.msra.mxu0 0.0
  %1449 = vmatprep.subr.mxu0 0.0
  %1450 = vmatpush1.xpose.msra.mxu0 0.0
  %1451 = vmatprep.subr.mxu0 0.0
  %1452 = vmatpush1.xpose.msra.mxu0 0.0
  %1453 = vmatprep.subr.mxu0 0.0
  %1454 = vmatpush1.xpose.msra.mxu0 0.0
  %1455 = vmatprep.subr.mxu0 0.0
  %1456 = vmatpush1.xpose.msra.mxu0 0.0
  %1457 = vmatprep.subr.mxu0 0.0
  %1458 = vmatpush1.xpose.msra.mxu0 0.0
  %1459 = vmatprep.subr.mxu0 0.0
  %1460 = vmatpush1.xpose.msra.mxu0 0.0
  %1461 = vmatprep.subr.mxu0 0.0
  %1462 = vmatpush1.xpose.msra.mxu0 0.0
  %1463 = vmatprep.subr.mxu0 0.0
  %1464 = vmatpush1.xpose.msra.mxu0 0.0
  %1465 = vmatprep.subr.mxu0 0.0
  %1466 = vmatpush1.xpose.msra.mxu0 0.0
  %1467 = vmatprep.subr.mxu0 0.0
  %1468 = vmatpush1.xpose.msra.mxu0 0.0
  %1469 = vmatprep.subr.mxu0 0.0
  %1470 = vmatpush1.xpose.msra.mxu0 0.0
  %1471 = vmatprep.subr.mxu0 0.0
  %1472 = vmatpush1.xpose.msra.mxu0 0.0
  %1473 = vmatprep.subr.mxu0 0.0
  %1474 = vmatpush1.xpose.msra.mxu0 0.0
  %1475 = vmatprep.mubr.f32.mxu0 0.0
  %1476 = vmatmul.mubr.f32.gmra.mrb[0].mxu0 %v1403
  %v1477 = vpop.f32.mrb[0].mxu0
  %v1478 = vadd.f32 0.0, %v1477
  %v1479 = vpop.f32.mrb[0].mxu0
  %1480 = vmatprep.mubr.f32.mxu0 0.0
  %1481 = vmatmul.mubr.f32.gmra.mrb[0].mxu0 %v1405
  %v1482 = vpop.f32.mrb[0].mxu0
  %v1483 = vadd.f32 0.0, %v1482
  %v1484 = vpop.f32.mrb[0].mxu0
  %1485 = vdwg.mxu0
  %v1486 = vsel %vm137, -1e+09, %v1387
  %v1487 = vsel %vm138, -1e+09, %v1392
  %v1488 = vsel %vm137, -1e+09, %v1478
  %v1489 = vsel %vm138, -1e+09, %v1483
  %v1490 = vsel %vm22, %v1486, -inf
  %1491 = vmax.xlane.f32.xlu0 %v1490
  %v1492 = vpop.xlane.xlu0 %1491
  %v1493 = vsel %vm22, %v1487, -inf
  %1494 = vmax.xlane.f32.xlu0 %v1493
  %v1495 = vpop.xlane.xlu0 %1494
  %v1496 = vsel %vm22, %v1488, -inf
  %1497 = vmax.xlane.f32.xlu0 %v1496
  %v1498 = vpop.xlane.xlu0 %1497
  %v1499 = vsel %vm22, %v1489, -inf
  %1500 = vmax.xlane.f32.xlu0 %v1499
  %v1501 = vpop.xlane.xlu0 %1500
  %v1502 = vsub.f32 %v1486, %v1492
  %v1503 = vsub.f32 %v1487, %v1495
  %v1504 = vsub.f32 %v1488, %v1498
  %v1505 = vsub.f32 %v1489, %v1501
  %v1506 = vmul.f32 %v1502, 1.442695
  %v1507 = vpow.pop %v1506
  %v1508 = vmul.f32 %v1503, 1.442695
  %v1509 = vpow.pop %v1508
  %v1510 = vmul.f32 %v1504, 1.442695
  %v1511 = vpow.pop %v1510
  %v1512 = vmul.f32 %v1505, 1.442695
  %v1513 = vpow.pop %v1512
  %v1514 = vsel %vm22, %v1507, 0.0
  %1515 = vadd.xlane.f32.xlu0 %v1514
  %v1516 = vpop.xlane.xlu0 %1515
  %v1517 = vsel %vm22, %v1509, 0.0
  %1518 = vadd.xlane.f32.xlu0 %v1517
  %v1519 = vpop.xlane.xlu0 %1518
  %v1520 = vsel %vm22, %v1511, 0.0
  %1521 = vadd.xlane.f32.xlu0 %v1520
  %v1522 = vpop.xlane.xlu0 %1521
  %v1523 = vsel %vm22, %v1513, 0.0
  %1524 = vadd.xlane.f32.xlu0 %v1523
  %v1525 = vpop.xlane.xlu0 %1524
  %v1526 = vrcp.pop %v1516
  %v1527 = vrcp.pop %v1519
  %v1528 = vrcp.pop %v1522
  %v1529 = vrcp.pop %v1525
  %v1530 = vmul.f32 %v1507, %v1526
  %v1531 = vmul.f32 %v1509, %v1527
  %v1532 = vmul.f32 %v1511, %v1528
  %v1533 = vmul.f32 %v1513, %v1529
  %1534 = vrot.lane.b32.xlu0 %v494, 96
  %v1535 = vpop.permute.xlu0 %1534
  %1536 = vrot.lane.b32.xlu0 %v499, 96
  %v1537 = vpop.permute.xlu0 %1536
  %v1541 = vsel %vm22, %v1530, 0
  %v1544 = vsel %vm22, %v1531, 0
  %1546 = vmatprep.subr.mxu0 0.0
  %1547 = vmatpush1.msra.mxu0 %v1535
  %1548 = vmatprep.subr.mxu0 0.0
  %1549 = vmatpush1.msra.mxu0 %v1537
  %1550 = vmatprep.subr.mxu0 0.0
  %1551 = vmatpush1.msra.mxu0 0.0
  %1552 = vmatprep.subr.mxu0 0.0
  %1553 = vmatpush1.msra.mxu0 0.0
  %1554 = vmatprep.subr.mxu0 0.0
  %1555 = vmatpush1.msra.mxu0 0.0
  %1556 = vmatprep.subr.mxu0 0.0
  %1557 = vmatpush1.msra.mxu0 0.0
  %1558 = vmatprep.subr.mxu0 0.0
  %1559 = vmatpush1.msra.mxu0 0.0
  %1560 = vmatprep.subr.mxu0 0.0
  %1561 = vmatpush1.msra.mxu0 0.0
  %1562 = vmatprep.subr.mxu0 0.0
  %1563 = vmatpush1.msra.mxu0 0.0
  %1564 = vmatprep.subr.mxu0 0.0
  %1565 = vmatpush1.msra.mxu0 0.0
  %1566 = vmatprep.subr.mxu0 0.0
  %1567 = vmatpush1.msra.mxu0 0.0
  %1568 = vmatprep.subr.mxu0 0.0
  %1569 = vmatpush1.msra.mxu0 0.0
  %1570 = vmatprep.subr.mxu0 0.0
  %1571 = vmatpush1.msra.mxu0 0.0
  %1572 = vmatprep.subr.mxu0 0.0
  %1573 = vmatpush1.msra.mxu0 0.0
  %1574 = vmatprep.subr.mxu0 0.0
  %1575 = vmatpush1.msra.mxu0 0.0
  %1576 = vmatprep.subr.mxu0 0.0
  %1577 = vmatpush1.msra.mxu0 0.0
  %1578 = vmatprep.subr.mxu0 0.0
  %1579 = vmatpush1.msra.mxu0 0.0
  %1580 = vmatprep.subr.mxu0 0.0
  %1581 = vmatpush1.msra.mxu0 0.0
  %1582 = vmatprep.subr.mxu0 0.0
  %1583 = vmatpush1.msra.mxu0 0.0
  %1584 = vmatprep.subr.mxu0 0.0
  %1585 = vmatpush1.msra.mxu0 0.0
  %1586 = vmatprep.subr.mxu0 0.0
  %1587 = vmatpush1.msra.mxu0 0.0
  %1588 = vmatprep.subr.mxu0 0.0
  %1589 = vmatpush1.msra.mxu0 0.0
  %1590 = vmatprep.subr.mxu0 0.0
  %1591 = vmatpush1.msra.mxu0 0.0
  %1592 = vmatprep.subr.mxu0 0.0
  %1593 = vmatpush1.msra.mxu0 0.0
  %1594 = vmatprep.subr.mxu0 0.0
  %1595 = vmatpush1.msra.mxu0 0.0
  %1596 = vmatprep.subr.mxu0 0.0
  %1597 = vmatpush1.msra.mxu0 0.0
  %1598 = vmatprep.subr.mxu0 0.0
  %1599 = vmatpush1.msra.mxu0 0.0
  %1600 = vmatprep.subr.mxu0 0.0
  %1601 = vmatpush1.msra.mxu0 0.0
  %1602 = vmatprep.subr.mxu0 0.0
  %1603 = vmatpush1.msra.mxu0 0.0
  %1604 = vmatprep.subr.mxu0 0.0
  %1605 = vmatpush1.msra.mxu0 0.0
  %1606 = vmatprep.subr.mxu0 0.0
  %1607 = vmatpush1.msra.mxu0 0.0
  %1608 = vmatprep.subr.mxu0 0.0
  %1609 = vmatpush1.msra.mxu0 0.0
  %1610 = vmatprep.mubr.f32.mxu0 0.0
  %1611 = vmatmul.mubr.f32.gmra.mrb[0].mxu0 %v1541
  %v1612 = vpop.f32.mrb[0].mxu0
  %v1613 = vadd.f32 0.0, %v1612
  %v1614 = vpop.f32.mrb[0].mxu0
  %1615 = vmatprep.mubr.f32.mxu0 0.0
  %1616 = vmatmul.mubr.f32.gmra.mrb[0].mxu0 %v1544
  %v1617 = vpop.f32.mrb[0].mxu0
  %v1618 = vadd.f32 0.0, %v1617
  %v1619 = vpop.f32.mrb[0].mxu0
  %1620 = vdwg.mxu0
  %1621 = vrot.lane.b32.xlu0 %v504, 96
  %v1622 = vpop.permute.xlu0 %1621
  %1623 = vrot.lane.b32.xlu0 %v509, 96
  %v1624 = vpop.permute.xlu0 %1623
  %v1628 = vsel %vm22, %v1532, 0
  %v1631 = vsel %vm22, %v1533, 0
  %1633 = vmatprep.subr.mxu0 0.0
  %1634 = vmatpush1.msra.mxu0 %v1622
  %1635 = vmatprep.subr.mxu0 0.0
  %1636 = vmatpush1.msra.mxu0 %v1624
  %1637 = vmatprep.subr.mxu0 0.0
  %1638 = vmatpush1.msra.mxu0 0.0
  %1639 = vmatprep.subr.mxu0 0.0
  %1640 = vmatpush1.msra.mxu0 0.0
  %1641 = vmatprep.subr.mxu0 0.0
  %1642 = vmatpush1.msra.mxu0 0.0
  %1643 = vmatprep.subr.mxu0 0.0
  %1644 = vmatpush1.msra.mxu0 0.0
  %1645 = vmatprep.subr.mxu0 0.0
  %1646 = vmatpush1.msra.mxu0 0.0
  %1647 = vmatprep.subr.mxu0 0.0
  %1648 = vmatpush1.msra.mxu0 0.0
  %1649 = vmatprep.subr.mxu0 0.0
  %1650 = vmatpush1.msra.mxu0 0.0
  %1651 = vmatprep.subr.mxu0 0.0
  %1652 = vmatpush1.msra.mxu0 0.0
  %1653 = vmatprep.subr.mxu0 0.0
  %1654 = vmatpush1.msra.mxu0 0.0
  %1655 = vmatprep.subr.mxu0 0.0
  %1656 = vmatpush1.msra.mxu0 0.0
  %1657 = vmatprep.subr.mxu0 0.0
  %1658 = vmatpush1.msra.mxu0 0.0
  %1659 = vmatprep.subr.mxu0 0.0
  %1660 = vmatpush1.msra.mxu0 0.0
  %1661 = vmatprep.subr.mxu0 0.0
  %1662 = vmatpush1.msra.mxu0 0.0
  %1663 = vmatprep.subr.mxu0 0.0
  %1664 = vmatpush1.msra.mxu0 0.0
  %1665 = vmatprep.subr.mxu0 0.0
  %1666 = vmatpush1.msra.mxu0 0.0
  %1667 = vmatprep.subr.mxu0 0.0
  %1668 = vmatpush1.msra.mxu0 0.0
  %1669 = vmatprep.subr.mxu0 0.0
  %1670 = vmatpush1.msra.mxu0 0.0
  %1671 = vmatprep.subr.mxu0 0.0
  %1672 = vmatpush1.msra.mxu0 0.0
  %1673 = vmatprep.subr.mxu0 0.0
  %1674 = vmatpush1.msra.mxu0 0.0
  %1675 = vmatprep.subr.mxu0 0.0
  %1676 = vmatpush1.msra.mxu0 0.0
  %1677 = vmatprep.subr.mxu0 0.0
  %1678 = vmatpush1.msra.mxu0 0.0
  %1679 = vmatprep.subr.mxu0 0.0
  %1680 = vmatpush1.msra.mxu0 0.0
  %1681 = vmatprep.subr.mxu0 0.0
  %1682 = vmatpush1.msra.mxu0 0.0
  %1683 = vmatprep.subr.mxu0 0.0
  %1684 = vmatpush1.msra.mxu0 0.0
  %1685 = vmatprep.subr.mxu0 0.0
  %1686 = vmatpush1.msra.mxu0 0.0
  %1687 = vmatprep.subr.mxu0 0.0
  %1688 = vmatpush1.msra.mxu0 0.0
  %1689 = vmatprep.subr.mxu0 0.0
  %1690 = vmatpush1.msra.mxu0 0.0
  %1691 = vmatprep.subr.mxu0 0.0
  %1692 = vmatpush1.msra.mxu0 0.0
  %1693 = vmatprep.subr.mxu0 0.0
  %1694 = vmatpush1.msra.mxu0 0.0
  %1695 = vmatprep.subr.mxu0 0.0
  %1696 = vmatpush1.msra.mxu0 0.0
  %1697 = vmatprep.mubr.f32.mxu0 0.0
  %1698 = vmatmul.mubr.f32.gmra.mrb[0].mxu0 %v1628
  %v1699 = vpop.f32.mrb[0].mxu0
  %v1700 = vadd.f32 0.0, %v1699
  %v1701 = vpop.f32.mrb[0].mxu0
  %1702 = vmatprep.mubr.f32.mxu0 0.0
  %1703 = vmatmul.mubr.f32.gmra.mrb[0].mxu0 %v1631
  %v1704 = vpop.f32.mrb[0].mxu0
  %v1705 = vadd.f32 0.0, %v1704
  %v1706 = vpop.f32.mrb[0].mxu0
  %1707 = vdwg.mxu0
  %1708 = vrot.lane.b32.xlu0 %v324, 80
  %v1709 = vpop.permute.xlu0 %1708
  %1710 = vrot.lane.b32.xlu0 %v329, 80
  %v1711 = vpop.permute.xlu0 %1710
  %1712 = vrot.lane.b32.xlu0 %v409, 80
  %v1713 = vpop.permute.xlu0 %1712
  %1714 = vrot.lane.b32.xlu0 %v414, 80
  %v1715 = vpop.permute.xlu0 %1714
  %v1716 = vsel %vm22, %v1709, 0
  %v1718 = vsel %vm22, %v1711, 0
  %v1720 = vsel %vm22, %v1713, 0
  %v1722 = vsel %vm22, %v1715, 0
  %1724 = vmatprep.subr.mxu0 0.0
  %1725 = vmatpush1.xpose.msra.mxu0 %v1720
  %1726 = vmatprep.subr.mxu0 0.0
  %1727 = vmatpush1.xpose.msra.mxu0 %v1722
  %1728 = vmatprep.subr.mxu0 0.0
  %1729 = vmatpush1.xpose.msra.mxu0 0.0
  %1730 = vmatprep.subr.mxu0 0.0
  %1731 = vmatpush1.xpose.msra.mxu0 0.0
  %1732 = vmatprep.subr.mxu0 0.0
  %1733 = vmatpush1.xpose.msra.mxu0 0.0
  %1734 = vmatprep.subr.mxu0 0.0
  %1735 = vmatpush1.xpose.msra.mxu0 0.0
  %1736 = vmatprep.subr.mxu0 0.0
  %1737 = vmatpush1.xpose.msra.mxu0 0.0
  %1738 = vmatprep.subr.mxu0 0.0
  %1739 = vmatpush1.xpose.msra.mxu0 0.0
  %1740 = vmatprep.subr.mxu0 0.0
  %1741 = vmatpush1.xpose.msra.mxu0 0.0
  %1742 = vmatprep.subr.mxu0 0.0
  %1743 = vmatpush1.xpose.msra.mxu0 0.0
  %1744 = vmatprep.subr.mxu0 0.0
  %1745 = vmatpush1.xpose.msra.mxu0 0.0
  %1746 = vmatprep.subr.mxu0 0.0
  %1747 = vmatpush1.xpose.msra.mxu0 0.0
  %1748 = vmatprep.subr.mxu0 0.0
  %1749 = vmatpush1.xpose.msra.mxu0 0.0
  %1750 = vmatprep.subr.mxu0 0.0
  %1751 = vmatpush1.xpose.msra.mxu0 0.0
  %1752 = vmatprep.subr.mxu0 0.0
  %1753 = vmatpush1.xpose.msra.mxu0 0.0
  %1754 = vmatprep.subr.mxu0 0.0
  %1755 = vmatpush1.xpose.msra.mxu0 0.0
  %1756 = vmatprep.subr.mxu0 0.0
  %1757 = vmatpush1.xpose.msra.mxu0 0.0
  %1758 = vmatprep.subr.mxu0 0.0
  %1759 = vmatpush1.xpose.msra.mxu0 0.0
  %1760 = vmatprep.subr.mxu0 0.0
  %1761 = vmatpush1.xpose.msra.mxu0 0.0
  %1762 = vmatprep.subr.mxu0 0.0
  %1763 = vmatpush1.xpose.msra.mxu0 0.0
  %1764 = vmatprep.subr.mxu0 0.0
  %1765 = vmatpush1.xpose.msra.mxu0 0.0
  %1766 = vmatprep.subr.mxu0 0.0
  %1767 = vmatpush1.xpose.msra.mxu0 0.0
  %1768 = vmatprep.subr.mxu0 0.0
  %1769 = vmatpush1.xpose.msra.mxu0 0.0
  %1770 = vmatprep.subr.mxu0 0.0
  %1771 = vmatpush1.xpose.msra.mxu0 0.0
  %1772 = vmatprep.subr.mxu0 0.0
  %1773 = vmatpush1.xpose.msra.mxu0 0.0
  %1774 = vmatprep.subr.mxu0 0.0
  %1775 = vmatpush1.xpose.msra.mxu0 0.0
  %1776 = vmatprep.subr.mxu0 0.0
  %1777 = vmatpush1.xpose.msra.mxu0 0.0
  %1778 = vmatprep.subr.mxu0 0.0
  %1779 = vmatpush1.xpose.msra.mxu0 0.0
  %1780 = vmatprep.subr.mxu0 0.0
  %1781 = vmatpush1.xpose.msra.mxu0 0.0
  %1782 = vmatprep.subr.mxu0 0.0
  %1783 = vmatpush1.xpose.msra.mxu0 0.0
  %1784 = vmatprep.subr.mxu0 0.0
  %1785 = vmatpush1.xpose.msra.mxu0 0.0
  %1786 = vmatprep.subr.mxu0 0.0
  %1787 = vmatpush1.xpose.msra.mxu0 0.0
  %1788 = vmatprep.mubr.f32.mxu0 0.0
  %1789 = vmatmul.mubr.f32.gmra.mrb[0].mxu0 %v1716
  %v1790 = vpop.f32.mrb[0].mxu0
  %v1791 = vadd.f32 0.0, %v1790
  %v1792 = vpop.f32.mrb[0].mxu0
  %1793 = vmatprep.mubr.f32.mxu0 0.0
  %1794 = vmatmul.mubr.f32.gmra.mrb[0].mxu0 %v1718
  %v1795 = vpop.f32.mrb[0].mxu0
  %v1796 = vadd.f32 0.0, %v1795
  %v1797 = vpop.f32.mrb[0].mxu0
  %1798 = vdwg.mxu0
  %1799 = vrot.lane.b32.xlu0 %v334, 80
  %v1800 = vpop.permute.xlu0 %1799
  %1801 = vrot.lane.b32.xlu0 %v339, 80
  %v1802 = vpop.permute.xlu0 %1801
  %1803 = vrot.lane.b32.xlu0 %v419, 80
  %v1804 = vpop.permute.xlu0 %1803
  %1805 = vrot.lane.b32.xlu0 %v424, 80
  %v1806 = vpop.permute.xlu0 %1805
  %v1807 = vsel %vm22, %v1800, 0
  %v1809 = vsel %vm22, %v1802, 0
  %v1811 = vsel %vm22, %v1804, 0
  %v1813 = vsel %vm22, %v1806, 0
  %1815 = vmatprep.subr.mxu0 0.0
  %1816 = vmatpush1.xpose.msra.mxu0 %v1811
  %1817 = vmatprep.subr.mxu0 0.0
  %1818 = vmatpush1.xpose.msra.mxu0 %v1813
  %1819 = vmatprep.subr.mxu0 0.0
  %1820 = vmatpush1.xpose.msra.mxu0 0.0
  %1821 = vmatprep.subr.mxu0 0.0
  %1822 = vmatpush1.xpose.msra.mxu0 0.0
  %1823 = vmatprep.subr.mxu0 0.0
  %1824 = vmatpush1.xpose.msra.mxu0 0.0
  %1825 = vmatprep.subr.mxu0 0.0
  %1826 = vmatpush1.xpose.msra.mxu0 0.0
  %1827 = vmatprep.subr.mxu0 0.0
  %1828 = vmatpush1.xpose.msra.mxu0 0.0
  %1829 = vmatprep.subr.mxu0 0.0
  %1830 = vmatpush1.xpose.msra.mxu0 0.0
  %1831 = vmatprep.subr.mxu0 0.0
  %1832 = vmatpush1.xpose.msra.mxu0 0.0
  %1833 = vmatprep.subr.mxu0 0.0
  %1834 = vmatpush1.xpose.msra.mxu0 0.0
  %1835 = vmatprep.subr.mxu0 0.0
  %1836 = vmatpush1.xpose.msra.mxu0 0.0
  %1837 = vmatprep.subr.mxu0 0.0
  %1838 = vmatpush1.xpose.msra.mxu0 0.0
  %1839 = vmatprep.subr.mxu0 0.0
  %1840 = vmatpush1.xpose.msra.mxu0 0.0
  %1841 = vmatprep.subr.mxu0 0.0
  %1842 = vmatpush1.xpose.msra.mxu0 0.0
  %1843 = vmatprep.subr.mxu0 0.0
  %1844 = vmatpush1.xpose.msra.mxu0 0.0
  %1845 = vmatprep.subr.mxu0 0.0
  %1846 = vmatpush1.xpose.msra.mxu0 0.0
  %1847 = vmatprep.subr.mxu0 0.0
  %1848 = vmatpush1.xpose.msra.mxu0 0.0
  %1849 = vmatprep.subr.mxu0 0.0
  %1850 = vmatpush1.xpose.msra.mxu0 0.0
  %1851 = vmatprep.subr.mxu0 0.0
  %1852 = vmatpush1.xpose.msra.mxu0 0.0
  %1853 = vmatprep.subr.mxu0 0.0
  %1854 = vmatpush1.xpose.msra.mxu0 0.0
  %1855 = vmatprep.subr.mxu0 0.0
  %1856 = vmatpush1.xpose.msra.mxu0 0.0
  %1857 = vmatprep.subr.mxu0 0.0
  %1858 = vmatpush1.xpose.msra.mxu0 0.0
  %1859 = vmatprep.subr.mxu0 0.0
  %1860 = vmatpush1.xpose.msra.mxu0 0.0
  %1861 = vmatprep.subr.mxu0 0.0
  %1862 = vmatpush1.xpose.msra.mxu0 0.0
  %1863 = vmatprep.subr.mxu0 0.0
  %1864 = vmatpush1.xpose.msra.mxu0 0.0
  %1865 = vmatprep.subr.mxu0 0.0
  %1866 = vmatpush1.xpose.msra.mxu0 0.0
  %1867 = vmatprep.subr.mxu0 0.0
  %1868 = vmatpush1.xpose.msra.mxu0 0.0
  %1869 = vmatprep.subr.mxu0 0.0
  %1870 = vmatpush1.xpose.msra.mxu0 0.0
  %1871 = vmatprep.subr.mxu0 0.0
  %1872 = vmatpush1.xpose.msra.mxu0 0.0
  %1873 = vmatprep.subr.mxu0 0.0
  %1874 = vmatpush1.xpose.msra.mxu0 0.0
  %1875 = vmatprep.subr.mxu0 0.0
  %1876 = vmatpush1.xpose.msra.mxu0 0.0
  %1877 = vmatprep.subr.mxu0 0.0
  %1878 = vmatpush1.xpose.msra.mxu0 0.0
  %1879 = vmatprep.mubr.f32.mxu0 0.0
  %1880 = vmatmul.mubr.f32.gmra.mrb[0].mxu0 %v1807
  %v1881 = vpop.f32.mrb[0].mxu0
  %v1882 = vadd.f32 0.0, %v1881
  %v1883 = vpop.f32.mrb[0].mxu0
  %1884 = vmatprep.mubr.f32.mxu0 0.0
  %1885 = vmatmul.mubr.f32.gmra.mrb[0].mxu0 %v1809
  %v1886 = vpop.f32.mrb[0].mxu0
  %v1887 = vadd.f32 0.0, %v1886
  %v1888 = vpop.f32.mrb[0].mxu0
  %1889 = vdwg.mxu0
  %v1890 = vsel %vm137, -1e+09, %v1791
  %v1891 = vsel %vm138, -1e+09, %v1796
  %v1892 = vsel %vm137, -1e+09, %v1882
  %v1893 = vsel %vm138, -1e+09, %v1887
  %v1894 = vsel %vm22, %v1890, -inf
  %1895 = vmax.xlane.f32.xlu0 %v1894
  %v1896 = vpop.xlane.xlu0 %1895
  %v1897 = vsel %vm22, %v1891, -inf
  %1898 = vmax.xlane.f32.xlu0 %v1897
  %v1899 = vpop.xlane.xlu0 %1898
  %v1900 = vsel %vm22, %v1892, -inf
  %1901 = vmax.xlane.f32.xlu0 %v1900
  %v1902 = vpop.xlane.xlu0 %1901
  %v1903 = vsel %vm22, %v1893, -inf
  %1904 = vmax.xlane.f32.xlu0 %v1903
  %v1905 = vpop.xlane.xlu0 %1904
  %v1906 = vsub.f32 %v1890, %v1896
  %v1907 = vsub.f32 %v1891, %v1899
  %v1908 = vsub.f32 %v1892, %v1902
  %v1909 = vsub.f32 %v1893, %v1905
  %v1910 = vmul.f32 %v1906, 1.442695
  %v1911 = vpow.pop %v1910
  %v1912 = vmul.f32 %v1907, 1.442695
  %v1913 = vpow.pop %v1912
  %v1914 = vmul.f32 %v1908, 1.442695
  %v1915 = vpow.pop %v1914
  %v1916 = vmul.f32 %v1909, 1.442695
  %v1917 = vpow.pop %v1916
  %v1918 = vsel %vm22, %v1911, 0.0
  %1919 = vadd.xlane.f32.xlu0 %v1918
  %v1920 = vpop.xlane.xlu0 %1919
  %v1921 = vsel %vm22, %v1913, 0.0
  %1922 = vadd.xlane.f32.xlu0 %v1921
  %v1923 = vpop.xlane.xlu0 %1922
  %v1924 = vsel %vm22, %v1915, 0.0
  %1925 = vadd.xlane.f32.xlu0 %v1924
  %v1926 = vpop.xlane.xlu0 %1925
  %v1927 = vsel %vm22, %v1917, 0.0
  %1928 = vadd.xlane.f32.xlu0 %v1927
  %v1929 = vpop.xlane.xlu0 %1928
  %v1930 = vrcp.pop %v1920
  %v1931 = vrcp.pop %v1923
  %v1932 = vrcp.pop %v1926
  %v1933 = vrcp.pop %v1929
  %v1934 = vmul.f32 %v1911, %v1930
  %v1935 = vmul.f32 %v1913, %v1931
  %v1936 = vmul.f32 %v1915, %v1932
  %v1937 = vmul.f32 %v1917, %v1933
  %1938 = vrot.lane.b32.xlu0 %v494, 80
  %v1939 = vpop.permute.xlu0 %1938
  %1940 = vrot.lane.b32.xlu0 %v499, 80
  %v1941 = vpop.permute.xlu0 %1940
  %v1945 = vsel %vm22, %v1934, 0
  %v1948 = vsel %vm22, %v1935, 0
  %1950 = vmatprep.subr.mxu0 0.0
  %1951 = vmatpush1.msra.mxu0 %v1939
  %1952 = vmatprep.subr.mxu0 0.0
  %1953 = vmatpush1.msra.mxu0 %v1941
  %1954 = vmatprep.subr.mxu0 0.0
  %1955 = vmatpush1.msra.mxu0 0.0
  %1956 = vmatprep.subr.mxu0 0.0
  %1957 = vmatpush1.msra.mxu0 0.0
  %1958 = vmatprep.subr.mxu0 0.0
  %1959 = vmatpush1.msra.mxu0 0.0
  %1960 = vmatprep.subr.mxu0 0.0
  %1961 = vmatpush1.msra.mxu0 0.0
  %1962 = vmatprep.subr.mxu0 0.0
  %1963 = vmatpush1.msra.mxu0 0.0
  %1964 = vmatprep.subr.mxu0 0.0
  %1965 = vmatpush1.msra.mxu0 0.0
  %1966 = vmatprep.subr.mxu0 0.0
  %1967 = vmatpush1.msra.mxu0 0.0
  %1968 = vmatprep.subr.mxu0 0.0
  %1969 = vmatpush1.msra.mxu0 0.0
  %1970 = vmatprep.subr.mxu0 0.0
  %1971 = vmatpush1.msra.mxu0 0.0
  %1972 = vmatprep.subr.mxu0 0.0
  %1973 = vmatpush1.msra.mxu0 0.0
  %1974 = vmatprep.subr.mxu0 0.0
  %1975 = vmatpush1.msra.mxu0 0.0
  %1976 = vmatprep.subr.mxu0 0.0
  %1977 = vmatpush1.msra.mxu0 0.0
  %1978 = vmatprep.subr.mxu0 0.0
  %1979 = vmatpush1.msra.mxu0 0.0
  %1980 = vmatprep.subr.mxu0 0.0
  %1981 = vmatpush1.msra.mxu0 0.0
  %1982 = vmatprep.subr.mxu0 0.0
  %1983 = vmatpush1.msra.mxu0 0.0
  %1984 = vmatprep.subr.mxu0 0.0
  %1985 = vmatpush1.msra.mxu0 0.0
  %1986 = vmatprep.subr.mxu0 0.0
  %1987 = vmatpush1.msra.mxu0 0.0
  %1988 = vmatprep.subr.mxu0 0.0
  %1989 = vmatpush1.msra.mxu0 0.0
  %1990 = vmatprep.subr.mxu0 0.0
  %1991 = vmatpush1.msra.mxu0 0.0
  %1992 = vmatprep.subr.mxu0 0.0
  %1993 = vmatpush1.msra.mxu0 0.0
  %1994 = vmatprep.subr.mxu0 0.0
  %1995 = vmatpush1.msra.mxu0 0.0
  %1996 = vmatprep.subr.mxu0 0.0
  %1997 = vmatpush1.msra.mxu0 0.0
  %1998 = vmatprep.subr.mxu0 0.0
  %1999 = vmatpush1.msra.mxu0 0.0
  %2000 = vmatprep.subr.mxu0 0.0
  %2001 = vmatpush1.msra.mxu0 0.0
  %2002 = vmatprep.subr.mxu0 0.0
  %2003 = vmatpush1.msra.mxu0 0.0
  %2004 = vmatprep.subr.mxu0 0.0
  %2005 = vmatpush1.msra.mxu0 0.0
  %2006 = vmatprep.subr.mxu0 0.0
  %2007 = vmatpush1.msra.mxu0 0.0
  %2008 = vmatprep.subr.mxu0 0.0
  %2009 = vmatpush1.msra.mxu0 0.0
  %2010 = vmatprep.subr.mxu0 0.0
  %2011 = vmatpush1.msra.mxu0 0.0
  %2012 = vmatprep.subr.mxu0 0.0
  %2013 = vmatpush1.msra.mxu0 0.0
  %2014 = vmatprep.mubr.f32.mxu0 0.0
  %2015 = vmatmul.mubr.f32.gmra.mrb[0].mxu0 %v1945
  %v2016 = vpop.f32.mrb[0].mxu0
  %v2017 = vadd.f32 0.0, %v2016
  %v2018 = vpop.f32.mrb[0].mxu0
  %2019 = vmatprep.mubr.f32.mxu0 0.0
  %2020 = vmatmul.mubr.f32.gmra.mrb[0].mxu0 %v1948
  %v2021 = vpop.f32.mrb[0].mxu0
  %v2022 = vadd.f32 0.0, %v2021
  %v2023 = vpop.f32.mrb[0].mxu0
  %2024 = vdwg.mxu0
  %2025 = vrot.lane.b32.xlu0 %v504, 80
  %v2026 = vpop.permute.xlu0 %2025
  %2027 = vrot.lane.b32.xlu0 %v509, 80
  %v2028 = vpop.permute.xlu0 %2027
  %v2032 = vsel %vm22, %v1936, 0
  %v2035 = vsel %vm22, %v1937, 0
  %2037 = vmatprep.subr.mxu0 0.0
  %2038 = vmatpush1.msra.mxu0 %v2026
  %2039 = vmatprep.subr.mxu0 0.0
  %2040 = vmatpush1.msra.mxu0 %v2028
  %2041 = vmatprep.subr.mxu0 0.0
  %2042 = vmatpush1.msra.mxu0 0.0
  %2043 = vmatprep.subr.mxu0 0.0
  %2044 = vmatpush1.msra.mxu0 0.0
  %2045 = vmatprep.subr.mxu0 0.0
  %2046 = vmatpush1.msra.mxu0 0.0
  %2047 = vmatprep.subr.mxu0 0.0
  %2048 = vmatpush1.msra.mxu0 0.0
  %2049 = vmatprep.subr.mxu0 0.0
  %2050 = vmatpush1.msra.mxu0 0.0
  %2051 = vmatprep.subr.mxu0 0.0
  %2052 = vmatpush1.msra.mxu0 0.0
  %2053 = vmatprep.subr.mxu0 0.0
  %2054 = vmatpush1.msra.mxu0 0.0
  %2055 = vmatprep.subr.mxu0 0.0
  %2056 = vmatpush1.msra.mxu0 0.0
  %2057 = vmatprep.subr.mxu0 0.0
  %2058 = vmatpush1.msra.mxu0 0.0
  %2059 = vmatprep.subr.mxu0 0.0
  %2060 = vmatpush1.msra.mxu0 0.0
  %2061 = vmatprep.subr.mxu0 0.0
  %2062 = vmatpush1.msra.mxu0 0.0
  %2063 = vmatprep.subr.mxu0 0.0
  %2064 = vmatpush1.msra.mxu0 0.0
  %2065 = vmatprep.subr.mxu0 0.0
  %2066 = vmatpush1.msra.mxu0 0.0
  %2067 = vmatprep.subr.mxu0 0.0
  %2068 = vmatpush1.msra.mxu0 0.0
  %2069 = vmatprep.subr.mxu0 0.0
  %2070 = vmatpush1.msra.mxu0 0.0
  %2071 = vmatprep.subr.mxu0 0.0
  %2072 = vmatpush1.msra.mxu0 0.0
  %2073 = vmatprep.subr.mxu0 0.0
  %2074 = vmatpush1.msra.mxu0 0.0
  %2075 = vmatprep.subr.mxu0 0.0
  %2076 = vmatpush1.msra.mxu0 0.0
  %2077 = vmatprep.subr.mxu0 0.0
  %2078 = vmatpush1.msra.mxu0 0.0
  %2079 = vmatprep.subr.mxu0 0.0
  %2080 = vmatpush1.msra.mxu0 0.0
  %2081 = vmatprep.subr.mxu0 0.0
  %2082 = vmatpush1.msra.mxu0 0.0
  %2083 = vmatprep.subr.mxu0 0.0
  %2084 = vmatpush1.msra.mxu0 0.0
  %2085 = vmatprep.subr.mxu0 0.0
  %2086 = vmatpush1.msra.mxu0 0.0
  %2087 = vmatprep.subr.mxu0 0.0
  %2088 = vmatpush1.msra.mxu0 0.0
  %2089 = vmatprep.subr.mxu0 0.0
  %2090 = vmatpush1.msra.mxu0 0.0
  %2091 = vmatprep.subr.mxu0 0.0
  %2092 = vmatpush1.msra.mxu0 0.0
  %2093 = vmatprep.subr.mxu0 0.0
  %2094 = vmatpush1.msra.mxu0 0.0
  %2095 = vmatprep.subr.mxu0 0.0
  %2096 = vmatpush1.msra.mxu0 0.0
  %2097 = vmatprep.subr.mxu0 0.0
  %2098 = vmatpush1.msra.mxu0 0.0
  %2099 = vmatprep.subr.mxu0 0.0
  %2100 = vmatpush1.msra.mxu0 0.0
  %2101 = vmatprep.mubr.f32.mxu0 0.0
  %2102 = vmatmul.mubr.f32.gmra.mrb[0].mxu0 %v2032
  %v2103 = vpop.f32.mrb[0].mxu0
  %v2104 = vadd.f32 0.0, %v2103
  %v2105 = vpop.f32.mrb[0].mxu0
  %2106 = vmatprep.mubr.f32.mxu0 0.0
  %2107 = vmatmul.mubr.f32.gmra.mrb[0].mxu0 %v2035
  %v2108 = vpop.f32.mrb[0].mxu0
  %v2109 = vadd.f32 0.0, %v2108
  %v2110 = vpop.f32.mrb[0].mxu0
  %2111 = vdwg.mxu0
  %2116 = vrot.lane.b32.xlu0 %v1207, 16
  %v2117 = vpop.permute.xlu0 %2116
  %2118 = vrot.lane.b32.xlu0 %v1212, 16
  %v2119 = vpop.permute.xlu0 %2118
  %2120 = vrot.lane.b32.xlu0 %v1296, 16
  %v2121 = vpop.permute.xlu0 %2120
  %2122 = vrot.lane.b32.xlu0 %v1301, 16
  %v2123 = vpop.permute.xlu0 %2122
  %2132 = vrot.lane.b32.xlu0 %v1613, 32
  %v2133 = vpop.permute.xlu0 %2132
  %2134 = vrot.lane.b32.xlu0 %v1618, 32
  %v2135 = vpop.permute.xlu0 %2134
  %2136 = vrot.lane.b32.xlu0 %v1700, 32
  %v2137 = vpop.permute.xlu0 %2136
  %2138 = vrot.lane.b32.xlu0 %v1705, 32
  %v2139 = vpop.permute.xlu0 %2138
  %2148 = vrot.lane.b32.xlu0 %v2017, 48
  %v2149 = vpop.permute.xlu0 %2148
  %2150 = vrot.lane.b32.xlu0 %v2022, 48
  %v2151 = vpop.permute.xlu0 %2150
  %2152 = vrot.lane.b32.xlu0 %v2104, 48
  %v2153 = vpop.permute.xlu0 %2152
  %2154 = vrot.lane.b32.xlu0 %v2109, 48
  %v2155 = vpop.permute.xlu0 %2154
  %v2160 = vsel %vm22, %v807, %v2117
  %v2161 = vsel %vm22, %v812, %v2119
  %v2162 = vsel %vm22, %v888, %v2121
  %v2163 = vsel %vm22, %v893, %v2123
  %v2164 = vsel %vm175, %v2160, %v2133
  %v2165 = vsel %vm175, %v2161, %v2135
  %v2166 = vsel %vm175, %v2162, %v2137
  %v2167 = vsel %vm175, %v2163, %v2139
  %vm2168 = vcmask 392192
  %v2169 = vsel %vm2168, %v2164, %v2149
  %v2170 = vsel %vm2168, %v2165, %v2151
  %v2171 = vsel %vm2168, %v2166, %v2153
  %v2172 = vsel %vm2168, %v2167, %v2155
  %vm2173 = vcmask 523264
  %v2175 = vsel %vm2173, %v2169, 0
  %v2178 = vsel %vm2173, %v2170, 0
  %v2181 = vsel %vm2173, %v2171, 0
  %v2184 = vsel %vm2173, %v2172, 0
  %2186 = vmatprep.subr.mxu0 0.0
  %2187 = vmatpush1.msra.mxu0 %v151
  %2188 = vmatprep.subr.mxu0 0.0
  %2189 = vmatpush1.msra.mxu0 %v152
  %2190 = vmatprep.subr.mxu0 0.0
  %2191 = vmatpush1.msra.mxu0 %v153
  %2192 = vmatprep.subr.mxu0 0.0
  %2193 = vmatpush1.msra.mxu0 %v154
  %2194 = vmatprep.subr.mxu0 0.0
  %2195 = vmatpush1.msra.mxu0 %v155
  %2196 = vmatprep.subr.mxu0 0.0
  %2197 = vmatpush1.msra.mxu0 %v156
  %2198 = vmatprep.subr.mxu0 0.0
  %2199 = vmatpush1.msra.mxu0 %v157
  %2200 = vmatprep.subr.mxu0 0.0
  %2201 = vmatpush1.msra.mxu0 %v158
  %2202 = vmatprep.subr.mxu0 0.0
  %2203 = vmatpush1.msra.mxu0 0.0
  %2204 = vmatprep.subr.mxu0 0.0
  %2205 = vmatpush1.msra.mxu0 0.0
  %2206 = vmatprep.subr.mxu0 0.0
  %2207 = vmatpush1.msra.mxu0 0.0
  %2208 = vmatprep.subr.mxu0 0.0
  %2209 = vmatpush1.msra.mxu0 0.0
  %2210 = vmatprep.subr.mxu0 0.0
  %2211 = vmatpush1.msra.mxu0 0.0
  %2212 = vmatprep.subr.mxu0 0.0
  %2213 = vmatpush1.msra.mxu0 0.0
  %2214 = vmatprep.subr.mxu0 0.0
  %2215 = vmatpush1.msra.mxu0 0.0
  %2216 = vmatprep.subr.mxu0 0.0
  %2217 = vmatpush1.msra.mxu0 0.0
  %2218 = vmatprep.subr.mxu0 0.0
  %2219 = vmatpush1.msra.mxu0 0.0
  %2220 = vmatprep.subr.mxu0 0.0
  %2221 = vmatpush1.msra.mxu0 0.0
  %2222 = vmatprep.subr.mxu0 0.0
  %2223 = vmatpush1.msra.mxu0 0.0
  %2224 = vmatprep.subr.mxu0 0.0
  %2225 = vmatpush1.msra.mxu0 0.0
  %2226 = vmatprep.subr.mxu0 0.0
  %2227 = vmatpush1.msra.mxu0 0.0
  %2228 = vmatprep.subr.mxu0 0.0
  %2229 = vmatpush1.msra.mxu0 0.0
  %2230 = vmatprep.subr.mxu0 0.0
  %2231 = vmatpush1.msra.mxu0 0.0
  %2232 = vmatprep.subr.mxu0 0.0
  %2233 = vmatpush1.msra.mxu0 0.0
  %2234 = vmatprep.subr.mxu0 0.0
  %2235 = vmatpush1.msra.mxu0 0.0
  %2236 = vmatprep.subr.mxu0 0.0
  %2237 = vmatpush1.msra.mxu0 0.0
  %2238 = vmatprep.subr.mxu0 0.0
  %2239 = vmatpush1.msra.mxu0 0.0
  %2240 = vmatprep.subr.mxu0 0.0
  %2241 = vmatpush1.msra.mxu0 0.0
  %2242 = vmatprep.subr.mxu0 0.0
  %2243 = vmatpush1.msra.mxu0 0.0
  %2244 = vmatprep.subr.mxu0 0.0
  %2245 = vmatpush1.msra.mxu0 0.0
  %2246 = vmatprep.subr.mxu0 0.0
  %2247 = vmatpush1.msra.mxu0 0.0
  %2248 = vmatprep.subr.mxu0 0.0
  %2249 = vmatpush1.msra.mxu0 0.0
  %2250 = vmatprep.mubr.f32.mxu0 0.0
  %2251 = vmatmul.mubr.f32.gmra.mrb[0].mxu0 %v2175
  %v2252 = vpop.f32.mrb[0].mxu0
  %v2253 = vadd.f32 0.0, %v2252
  %v2254 = vpop.f32.mrb[0].mxu0
  %2255 = vmatprep.mubr.f32.mxu0 0.0
  %2256 = vmatmul.mubr.f32.gmra.mrb[0].mxu0 %v2178
  %v2257 = vpop.f32.mrb[0].mxu0
  %v2258 = vadd.f32 0.0, %v2257
  %v2259 = vpop.f32.mrb[0].mxu0
  %2260 = vmatprep.mubr.f32.mxu0 0.0
  %2261 = vmatmul.mubr.f32.gmra.mrb[0].mxu0 %v2181
  %v2262 = vpop.f32.mrb[0].mxu0
  %v2263 = vadd.f32 0.0, %v2262
  %v2264 = vpop.f32.mrb[0].mxu0
  %2265 = vmatprep.mubr.f32.mxu0 0.0
  %2266 = vmatmul.mubr.f32.gmra.mrb[0].mxu0 %v2184
  %v2267 = vpop.f32.mrb[0].mxu0
  %v2268 = vadd.f32 0.0, %v2267
  %v2269 = vpop.f32.mrb[0].mxu0
  %2270 = vdwg.mxu0
  %v2271 = vadd.f32 %v128, %v2253
  %v2272 = vadd.f32 %v129, %v2258
  %v2273 = vadd.f32 %v130, %v2263
  %v2274 = vadd.f32 %v131, %v2268
  %v2275 = vsel %vm175, %v2271, 0.0
  %2276 = vadd.xlane.f32.xlu0 %v2275
  %v2277 = vpop.xlane.xlu0 %2276
  %v2278 = vsel %vm175, %v2272, 0.0
  %2279 = vadd.xlane.f32.xlu0 %v2278
  %v2280 = vpop.xlane.xlu0 %2279
  %v2281 = vsel %vm175, %v2273, 0.0
  %2282 = vadd.xlane.f32.xlu0 %v2281
  %v2283 = vpop.xlane.xlu0 %2282
  %v2284 = vsel %vm175, %v2274, 0.0
  %2285 = vadd.xlane.f32.xlu0 %v2284
  %v2286 = vpop.xlane.xlu0 %2285
  %v2287 = vmul.f32 %v2277, %v188
  %v2288 = vmul.f32 %v2280, %v188
  %v2289 = vmul.f32 %v2283, %v188
  %v2290 = vmul.f32 %v2286, %v188
  %v2291 = vsub.f32 %v2271, %v2287
  %v2292 = vsub.f32 %v2272, %v2288
  %v2293 = vsub.f32 %v2273, %v2289
  %v2294 = vsub.f32 %v2274, %v2290
  %v2295 = vmul.f32 %v2291, %v2291
  %v2296 = vmul.f32 %v2292, %v2292
  %v2297 = vmul.f32 %v2293, %v2293
  %v2298 = vmul.f32 %v2294, %v2294
  %v2299 = vsel %vm175, %v2295, 0.0
  %2300 = vadd.xlane.f32.xlu0 %v2299
  %v2301 = vpop.xlane.xlu0 %2300
  %v2302 = vsel %vm175, %v2296, 0.0
  %2303 = vadd.xlane.f32.xlu0 %v2302
  %v2304 = vpop.xlane.xlu0 %2303
  %v2305 = vsel %vm175, %v2297, 0.0
  %2306 = vadd.xlane.f32.xlu0 %v2305
  %v2307 = vpop.xlane.xlu0 %2306
  %v2308 = vsel %vm175, %v2298, 0.0
  %2309 = vadd.xlane.f32.xlu0 %v2308
  %v2310 = vpop.xlane.xlu0 %2309
  %v2311 = vmul.f32 %v2301, %v188
  %v2312 = vmul.f32 %v2304, %v188
  %v2313 = vmul.f32 %v2307, %v188
  %v2314 = vmul.f32 %v2310, %v188
  %v2315 = vadd.f32 %v2311, 1e-06
  %v2316 = vadd.f32 %v2312, 1e-06
  %v2317 = vadd.f32 %v2313, 1e-06
  %v2318 = vadd.f32 %v2314, 1e-06
  %v2319 = vrsqrt.pop %v2315
  %v2320 = vrsqrt.pop %v2316
  %v2321 = vrsqrt.pop %v2317
  %v2322 = vrsqrt.pop %v2318
  %v2323 = vmul.f32 %v2291, %v2319
  %v2324 = vmul.f32 %v2292, %v2320
  %v2325 = vmul.f32 %v2293, %v2321
  %v2326 = vmul.f32 %v2294, %v2322
  %v2327 = vlaneseq
  %v2328 = vshrl.u32 %v2327, 7
  %v2329 = vsub.s32 0, %v2328
  %v2330 = vrot.slane %v173, %v2329
  %2332 = vrot.lane.b32.xlu0 %v2330, 96
  %v2333 = vpop.permute.xlu0 %2332
  %v2335 = vmul.f32 %v2323, %v2333
  %v2336 = vmul.f32 %v2324, %v2333
  %v2337 = vmul.f32 %v2325, %v2333
  %v2338 = vmul.f32 %v2326, %v2333
  %v2339 = vlaneseq
  %v2340 = vshrl.u32 %v2339, 7
  %v2341 = vsub.s32 0, %v2340
  %v2342 = vrot.slane %v174, %v2341
  %v2343 = vadd.f32 %v2335, %v2342
  %v2344 = vadd.f32 %v2336, %v2342
  %v2345 = vadd.f32 %v2337, %v2342
  %v2346 = vadd.f32 %v2338, %v2342
  %v2347 = vlaneseq
  %v2348 = vshrl.u32 %v2347, 7
  %v2349 = vsub.s32 0, %v2348
  %v2350 = vrot.slane %v172, %v2349
  %v2352 = vsel %vm175, %v2343, 0
  %v2355 = vsel %vm175, %v2344, 0
  %v2358 = vsel %vm175, %v2345, 0
  %v2361 = vsel %vm175, %v2346, 0
  %2363 = vmatprep.subr.mxu0 0.0
  %2364 = vmatpush1.msra.mxu0 %v159
  %2365 = vmatprep.subr.mxu0 0.0
  %2366 = vmatpush1.msra.mxu0 %v160
  %2367 = vmatprep.subr.mxu0 0.0
  %2368 = vmatpush1.msra.mxu0 %v161
  %2369 = vmatprep.subr.mxu0 0.0
  %2370 = vmatpush1.msra.mxu0 %v162
  %2371 = vmatprep.subr.mxu0 0.0
  %2372 = vmatpush1.msra.mxu0 0.0
  %2373 = vmatprep.subr.mxu0 0.0
  %2374 = vmatpush1.msra.mxu0 0.0
  %2375 = vmatprep.subr.mxu0 0.0
  %2376 = vmatpush1.msra.mxu0 0.0
  %2377 = vmatprep.subr.mxu0 0.0
  %2378 = vmatpush1.msra.mxu0 0.0
  %2379 = vmatprep.subr.mxu0 0.0
  %2380 = vmatpush1.msra.mxu0 0.0
  %2381 = vmatprep.subr.mxu0 0.0
  %2382 = vmatpush1.msra.mxu0 0.0
  %2383 = vmatprep.subr.mxu0 0.0
  %2384 = vmatpush1.msra.mxu0 0.0
  %2385 = vmatprep.subr.mxu0 0.0
  %2386 = vmatpush1.msra.mxu0 0.0
  %2387 = vmatprep.subr.mxu0 0.0
  %2388 = vmatpush1.msra.mxu0 0.0
  %2389 = vmatprep.subr.mxu0 0.0
  %2390 = vmatpush1.msra.mxu0 0.0
  %2391 = vmatprep.subr.mxu0 0.0
  %2392 = vmatpush1.msra.mxu0 0.0
  %2393 = vmatprep.subr.mxu0 0.0
  %2394 = vmatpush1.msra.mxu0 0.0
  %2395 = vmatprep.subr.mxu0 0.0
  %2396 = vmatpush1.msra.mxu0 0.0
  %2397 = vmatprep.subr.mxu0 0.0
  %2398 = vmatpush1.msra.mxu0 0.0
  %2399 = vmatprep.subr.mxu0 0.0
  %2400 = vmatpush1.msra.mxu0 0.0
  %2401 = vmatprep.subr.mxu0 0.0
  %2402 = vmatpush1.msra.mxu0 0.0
  %2403 = vmatprep.subr.mxu0 0.0
  %2404 = vmatpush1.msra.mxu0 0.0
  %2405 = vmatprep.subr.mxu0 0.0
  %2406 = vmatpush1.msra.mxu0 0.0
  %2407 = vmatprep.subr.mxu0 0.0
  %2408 = vmatpush1.msra.mxu0 0.0
  %2409 = vmatprep.subr.mxu0 0.0
  %2410 = vmatpush1.msra.mxu0 0.0
  %2411 = vmatprep.subr.mxu0 0.0
  %2412 = vmatpush1.msra.mxu0 0.0
  %2413 = vmatprep.subr.mxu0 0.0
  %2414 = vmatpush1.msra.mxu0 0.0
  %2415 = vmatprep.subr.mxu0 0.0
  %2416 = vmatpush1.msra.mxu0 0.0
  %2417 = vmatprep.subr.mxu0 0.0
  %2418 = vmatpush1.msra.mxu0 0.0
  %2419 = vmatprep.subr.mxu0 0.0
  %2420 = vmatpush1.msra.mxu0 0.0
  %2421 = vmatprep.subr.mxu0 0.0
  %2422 = vmatpush1.msra.mxu0 0.0
  %2423 = vmatprep.subr.mxu0 0.0
  %2424 = vmatpush1.msra.mxu0 0.0
  %2425 = vmatprep.subr.mxu0 0.0
  %2426 = vmatpush1.msra.mxu0 0.0
  %2427 = vmatprep.mubr.f32.mxu0 0.0
  %2428 = vmatmul.mubr.f32.gmra.mrb[0].mxu0 %v2352
  %v2429 = vpop.f32.mrb[0].mxu0
  %v2430 = vadd.f32 %v2350, %v2429
  %v2431 = vpop.f32.mrb[0].mxu0
  %2432 = vmatprep.mubr.f32.mxu0 0.0
  %2433 = vmatmul.mubr.f32.gmra.mrb[0].mxu0 %v2355
  %v2434 = vpop.f32.mrb[0].mxu0
  %v2435 = vadd.f32 %v2350, %v2434
  %v2436 = vpop.f32.mrb[0].mxu0
  %2437 = vmatprep.mubr.f32.mxu0 0.0
  %2438 = vmatmul.mubr.f32.gmra.mrb[0].mxu0 %v2358
  %v2439 = vpop.f32.mrb[0].mxu0
  %v2440 = vadd.f32 %v2350, %v2439
  %v2441 = vpop.f32.mrb[0].mxu0
  %2442 = vmatprep.mubr.f32.mxu0 0.0
  %2443 = vmatmul.mubr.f32.gmra.mrb[0].mxu0 %v2361
  %v2444 = vpop.f32.mrb[0].mxu0
  %v2445 = vadd.f32 %v2350, %v2444
  %v2446 = vpop.f32.mrb[0].mxu0
  %2447 = vdwg.mxu0
  %v2448 = vmax.f32 %v2430, 0.0
  %v2449 = vmax.f32 %v2435, 0.0
  %v2450 = vmax.f32 %v2440, 0.0
  %v2451 = vmax.f32 %v2445, 0.0
  %v2453 = vsel %vm2173, %v2448, 0
  %v2456 = vsel %vm2173, %v2449, 0
  %v2459 = vsel %vm2173, %v2450, 0
  %v2462 = vsel %vm2173, %v2451, 0
  %2464 = vmatprep.subr.mxu0 0.0
  %2465 = vmatpush1.msra.mxu0 %v163
  %2466 = vmatprep.subr.mxu0 0.0
  %2467 = vmatpush1.msra.mxu0 %v164
  %2468 = vmatprep.subr.mxu0 0.0
  %2469 = vmatpush1.msra.mxu0 %v165
  %2470 = vmatprep.subr.mxu0 0.0
  %2471 = vmatpush1.msra.mxu0 %v166
  %2472 = vmatprep.subr.mxu0 0.0
  %2473 = vmatpush1.msra.mxu0 %v167
  %2474 = vmatprep.subr.mxu0 0.0
  %2475 = vmatpush1.msra.mxu0 %v168
  %2476 = vmatprep.subr.mxu0 0.0
  %2477 = vmatpush1.msra.mxu0 %v169
  %2478 = vmatprep.subr.mxu0 0.0
  %2479 = vmatpush1.msra.mxu0 %v170
  %2480 = vmatprep.subr.mxu0 0.0
  %2481 = vmatpush1.msra.mxu0 0.0
  %2482 = vmatprep.subr.mxu0 0.0
  %2483 = vmatpush1.msra.mxu0 0.0
  %2484 = vmatprep.subr.mxu0 0.0
  %2485 = vmatpush1.msra.mxu0 0.0
  %2486 = vmatprep.subr.mxu0 0.0
  %2487 = vmatpush1.msra.mxu0 0.0
  %2488 = vmatprep.subr.mxu0 0.0
  %2489 = vmatpush1.msra.mxu0 0.0
  %2490 = vmatprep.subr.mxu0 0.0
  %2491 = vmatpush1.msra.mxu0 0.0
  %2492 = vmatprep.subr.mxu0 0.0
  %2493 = vmatpush1.msra.mxu0 0.0
  %2494 = vmatprep.subr.mxu0 0.0
  %2495 = vmatpush1.msra.mxu0 0.0
  %2496 = vmatprep.subr.mxu0 0.0
  %2497 = vmatpush1.msra.mxu0 0.0
  %2498 = vmatprep.subr.mxu0 0.0
  %2499 = vmatpush1.msra.mxu0 0.0
  %2500 = vmatprep.subr.mxu0 0.0
  %2501 = vmatpush1.msra.mxu0 0.0
  %2502 = vmatprep.subr.mxu0 0.0
  %2503 = vmatpush1.msra.mxu0 0.0
  %2504 = vmatprep.subr.mxu0 0.0
  %2505 = vmatpush1.msra.mxu0 0.0
  %2506 = vmatprep.subr.mxu0 0.0
  %2507 = vmatpush1.msra.mxu0 0.0
  %2508 = vmatprep.subr.mxu0 0.0
  %2509 = vmatpush1.msra.mxu0 0.0
  %2510 = vmatprep.subr.mxu0 0.0
  %2511 = vmatpush1.msra.mxu0 0.0
  %2512 = vmatprep.subr.mxu0 0.0
  %2513 = vmatpush1.msra.mxu0 0.0
  %2514 = vmatprep.subr.mxu0 0.0
  %2515 = vmatpush1.msra.mxu0 0.0
  %2516 = vmatprep.subr.mxu0 0.0
  %2517 = vmatpush1.msra.mxu0 0.0
  %2518 = vmatprep.subr.mxu0 0.0
  %2519 = vmatpush1.msra.mxu0 0.0
  %2520 = vmatprep.subr.mxu0 0.0
  %2521 = vmatpush1.msra.mxu0 0.0
  %2522 = vmatprep.subr.mxu0 0.0
  %2523 = vmatpush1.msra.mxu0 0.0
  %2524 = vmatprep.subr.mxu0 0.0
  %2525 = vmatpush1.msra.mxu0 0.0
  %2526 = vmatprep.subr.mxu0 0.0
  %2527 = vmatpush1.msra.mxu0 0.0
  %2528 = vmatprep.mubr.f32.mxu0 0.0
  %2529 = vmatmul.mubr.f32.gmra.mrb[0].mxu0 %v2453
  %v2530 = vpop.f32.mrb[0].mxu0
  %v2531 = vadd.f32 0.0, %v2530
  %v2532 = vpop.f32.mrb[0].mxu0
  %2533 = vmatprep.mubr.f32.mxu0 0.0
  %2534 = vmatmul.mubr.f32.gmra.mrb[0].mxu0 %v2456
  %v2535 = vpop.f32.mrb[0].mxu0
  %v2536 = vadd.f32 0.0, %v2535
  %v2537 = vpop.f32.mrb[0].mxu0
  %2538 = vmatprep.mubr.f32.mxu0 0.0
  %2539 = vmatmul.mubr.f32.gmra.mrb[0].mxu0 %v2459
  %v2540 = vpop.f32.mrb[0].mxu0
  %v2541 = vadd.f32 0.0, %v2540
  %v2542 = vpop.f32.mrb[0].mxu0
  %2543 = vmatprep.mubr.f32.mxu0 0.0
  %2544 = vmatmul.mubr.f32.gmra.mrb[0].mxu0 %v2462
  %v2545 = vpop.f32.mrb[0].mxu0
  %v2546 = vadd.f32 0.0, %v2545
  %v2547 = vpop.f32.mrb[0].mxu0
  %2548 = vdwg.mxu0
  %v2549 = vadd.f32 %v2271, %v2531
  %v2550 = vadd.f32 %v2272, %v2536
  %v2551 = vadd.f32 %v2273, %v2541
  %v2552 = vadd.f32 %v2274, %v2546
  %v2553 = vadd.f32 %v2549, %v2330
  %v2554 = vadd.f32 %v2550, %v2330
  %v2555 = vadd.f32 %v2551, %v2330
  %v2556 = vadd.f32 %v2552, %v2330
  %v2557 = vld [vmem:[%s2 + $0x108] sm:$0xff]
  %v2558 = vld [vmem:[%s2 + $0x110] sm:$0xff]
  %v2559 = vld [vmem:[%s2 + $0x118] sm:$0xff]
  %v2560 = vld [vmem:[%s2 + $0x120] sm:$0xff]
  %v2561 = vld [vmem:[%s2 + $0x128] sm:$0xff]
  %v2562 = vld [vmem:[%s2 + $0x130] sm:$0xff]
  %v2563 = vld [vmem:[%s2 + $0x138] sm:$0xff]
  %v2564 = vld [vmem:[%s2 + $0x140] sm:$0xff]
  %v2565 = vld [vmem:[%s2 + $0x148] sm:$0xff]
  %v2566 = vld [vmem:[%s2 + $0x150] sm:$0xff]
  %v2567 = vld [vmem:[%s2 + $0x158] sm:$0xff]
  %v2568 = vld [vmem:[%s2 + $0x160] sm:$0xff]
  %v2569 = vld [vmem:[%s2 + $0x168] sm:$0xff]
  %v2570 = vld [vmem:[%s2 + $0x170] sm:$0xff]
  %v2571 = vld [vmem:[%s2 + $0x178] sm:$0xff]
  %v2572 = vld [vmem:[%s2 + $0x180] sm:$0xff]
  %v2573 = vld [vmem:[%s2 + $0x188] sm:$0xff]
  %v2574 = vld [vmem:[%s2 + $0x190] sm:$0xff]
  %v2575 = vld [vmem:[%s2 + $0x198] sm:$0xff]
  %v2576 = vld [vmem:[%s2 + $0x1a0] sm:$0xff]
  %v2577 = vld [vmem:[%s2 + $0x1a8] sm:$0xff]
  %v2578 = vld [vmem:[%s2 + $0x1b0] sm:$0xff]
  %v2579 = vld [vmem:[%s2 + $0x1b8] sm:$0xff]
  %v2580 = vld [vmem:[%s2 + $0x1c0] sm:$0xff]
  %v2581 = vld [vmem:[%s2 + $0x1c8] sm:$0xff]
  %v2582 = vld [vmem:[%s2 + $0x1d0] sm:$0xff]
  %v2583 = vld [vmem:[%s2 + $0x1d8] sm:$0xff]
  %v2584 = vld [vmem:[%s2 + $0x1e0] sm:$0xff]
  %v2585 = vld [vmem:[%s2 + $0x1e8] sm:$0xff]
  %v2586 = vld [vmem:[%s2 + $0x1f0] sm:$0xff]
  %v2587 = vld [vmem:[%s2 + $0x1f8] sm:$0xff]
  %v2588 = vld [vmem:[%s2 + $0x200] sm:$0xff]
  %v2589 = vld [vmem:[%s2 + $0x208] sm:$0x1]
  %v2590 = vld [vmem:[%s2 + $0x209] sm:$0x1]
  %v2591 = vld [vmem:[%s2 + $0x20a] sm:$0x1]
  %v2592 = vld [vmem:[%s2 + $0x20b] sm:$0x1]
  %v2593 = vsel %vm175, %v2553, 0.0
  %2594 = vadd.xlane.f32.xlu0 %v2593
  %v2595 = vpop.xlane.xlu0 %2594
  %v2596 = vsel %vm175, %v2554, 0.0
  %2597 = vadd.xlane.f32.xlu0 %v2596
  %v2598 = vpop.xlane.xlu0 %2597
  %v2599 = vsel %vm175, %v2555, 0.0
  %2600 = vadd.xlane.f32.xlu0 %v2599
  %v2601 = vpop.xlane.xlu0 %2600
  %v2602 = vsel %vm175, %v2556, 0.0
  %2603 = vadd.xlane.f32.xlu0 %v2602
  %v2604 = vpop.xlane.xlu0 %2603
  %v2605 = vmul.f32 %v2595, %v188
  %v2606 = vmul.f32 %v2598, %v188
  %v2607 = vmul.f32 %v2601, %v188
  %v2608 = vmul.f32 %v2604, %v188
  %v2609 = vsub.f32 %v2553, %v2605
  %v2610 = vsub.f32 %v2554, %v2606
  %v2611 = vsub.f32 %v2555, %v2607
  %v2612 = vsub.f32 %v2556, %v2608
  %v2613 = vmul.f32 %v2609, %v2609
  %v2614 = vmul.f32 %v2610, %v2610
  %v2615 = vmul.f32 %v2611, %v2611
  %v2616 = vmul.f32 %v2612, %v2612
  %v2617 = vsel %vm175, %v2613, 0.0
  %2618 = vadd.xlane.f32.xlu0 %v2617
  %v2619 = vpop.xlane.xlu0 %2618
  %v2620 = vsel %vm175, %v2614, 0.0
  %2621 = vadd.xlane.f32.xlu0 %v2620
  %v2622 = vpop.xlane.xlu0 %2621
  %v2623 = vsel %vm175, %v2615, 0.0
  %2624 = vadd.xlane.f32.xlu0 %v2623
  %v2625 = vpop.xlane.xlu0 %2624
  %v2626 = vsel %vm175, %v2616, 0.0
  %2627 = vadd.xlane.f32.xlu0 %v2626
  %v2628 = vpop.xlane.xlu0 %2627
  %v2629 = vmul.f32 %v2619, %v188
  %v2630 = vmul.f32 %v2622, %v188
  %v2631 = vmul.f32 %v2625, %v188
  %v2632 = vmul.f32 %v2628, %v188
  %v2633 = vadd.f32 %v2629, 1e-05
  %v2634 = vadd.f32 %v2630, 1e-05
  %v2635 = vadd.f32 %v2631, 1e-05
  %v2636 = vadd.f32 %v2632, 1e-05
  %v2637 = vrsqrt.pop %v2633
  %v2638 = vrsqrt.pop %v2634
  %v2639 = vrsqrt.pop %v2635
  %v2640 = vrsqrt.pop %v2636
  %v2641 = vmul.f32 %v2609, %v2637
  %v2642 = vmul.f32 %v2610, %v2638
  %v2643 = vmul.f32 %v2611, %v2639
  %v2644 = vmul.f32 %v2612, %v2640
  %v2645 = vlaneseq
  %v2646 = vshrl.u32 %v2645, 7
  %v2647 = vsub.s32 0, %v2646
  %v2648 = vrot.slane %v2589, %v2647
  %v2649 = vmul.f32 %v2641, %v2648
  %v2650 = vmul.f32 %v2642, %v2648
  %v2651 = vmul.f32 %v2643, %v2648
  %v2652 = vmul.f32 %v2644, %v2648
  %2654 = vrot.lane.b32.xlu0 %v2648, 96
  %v2655 = vpop.permute.xlu0 %2654
  %v2657 = vadd.f32 %v2649, %v2655
  %v2658 = vadd.f32 %v2650, %v2655
  %v2659 = vadd.f32 %v2651, %v2655
  %v2660 = vadd.f32 %v2652, %v2655
  %v2662 = vsel %vm175, %v2657, 0
  %v2665 = vsel %vm175, %v2658, 0
  %v2668 = vsel %vm175, %v2659, 0
  %v2671 = vsel %vm175, %v2660, 0
  %2673 = vmatprep.subr.mxu0 0.0
  %2674 = vmatpush1.msra.mxu0 %v2557
  %2675 = vmatprep.subr.mxu0 0.0
  %2676 = vmatpush1.msra.mxu0 %v2558
  %2677 = vmatprep.subr.mxu0 0.0
  %2678 = vmatpush1.msra.mxu0 %v2559
  %2679 = vmatprep.subr.mxu0 0.0
  %2680 = vmatpush1.msra.mxu0 %v2560
  %2681 = vmatprep.subr.mxu0 0.0
  %2682 = vmatpush1.msra.mxu0 0.0
  %2683 = vmatprep.subr.mxu0 0.0
  %2684 = vmatpush1.msra.mxu0 0.0
  %2685 = vmatprep.subr.mxu0 0.0
  %2686 = vmatpush1.msra.mxu0 0.0
  %2687 = vmatprep.subr.mxu0 0.0
  %2688 = vmatpush1.msra.mxu0 0.0
  %2689 = vmatprep.subr.mxu0 0.0
  %2690 = vmatpush1.msra.mxu0 0.0
  %2691 = vmatprep.subr.mxu0 0.0
  %2692 = vmatpush1.msra.mxu0 0.0
  %2693 = vmatprep.subr.mxu0 0.0
  %2694 = vmatpush1.msra.mxu0 0.0
  %2695 = vmatprep.subr.mxu0 0.0
  %2696 = vmatpush1.msra.mxu0 0.0
  %2697 = vmatprep.subr.mxu0 0.0
  %2698 = vmatpush1.msra.mxu0 0.0
  %2699 = vmatprep.subr.mxu0 0.0
  %2700 = vmatpush1.msra.mxu0 0.0
  %2701 = vmatprep.subr.mxu0 0.0
  %2702 = vmatpush1.msra.mxu0 0.0
  %2703 = vmatprep.subr.mxu0 0.0
  %2704 = vmatpush1.msra.mxu0 0.0
  %2705 = vmatprep.subr.mxu0 0.0
  %2706 = vmatpush1.msra.mxu0 0.0
  %2707 = vmatprep.subr.mxu0 0.0
  %2708 = vmatpush1.msra.mxu0 0.0
  %2709 = vmatprep.subr.mxu0 0.0
  %2710 = vmatpush1.msra.mxu0 0.0
  %2711 = vmatprep.subr.mxu0 0.0
  %2712 = vmatpush1.msra.mxu0 0.0
  %2713 = vmatprep.subr.mxu0 0.0
  %2714 = vmatpush1.msra.mxu0 0.0
  %2715 = vmatprep.subr.mxu0 0.0
  %2716 = vmatpush1.msra.mxu0 0.0
  %2717 = vmatprep.subr.mxu0 0.0
  %2718 = vmatpush1.msra.mxu0 0.0
  %2719 = vmatprep.subr.mxu0 0.0
  %2720 = vmatpush1.msra.mxu0 0.0
  %2721 = vmatprep.subr.mxu0 0.0
  %2722 = vmatpush1.msra.mxu0 0.0
  %2723 = vmatprep.subr.mxu0 0.0
  %2724 = vmatpush1.msra.mxu0 0.0
  %2725 = vmatprep.subr.mxu0 0.0
  %2726 = vmatpush1.msra.mxu0 0.0
  %2727 = vmatprep.subr.mxu0 0.0
  %2728 = vmatpush1.msra.mxu0 0.0
  %2729 = vmatprep.subr.mxu0 0.0
  %2730 = vmatpush1.msra.mxu0 0.0
  %2731 = vmatprep.subr.mxu0 0.0
  %2732 = vmatpush1.msra.mxu0 0.0
  %2733 = vmatprep.subr.mxu0 0.0
  %2734 = vmatpush1.msra.mxu0 0.0
  %2735 = vmatprep.subr.mxu0 0.0
  %2736 = vmatpush1.msra.mxu0 0.0
  %2737 = vmatprep.mubr.f32.mxu0 0.0
  %2738 = vmatmul.mubr.f32.gmra.mrb[0].mxu0 %v2662
  %v2739 = vpop.f32.mrb[0].mxu0
  %v2740 = vadd.f32 0.0, %v2739
  %v2741 = vpop.f32.mrb[0].mxu0
  %2742 = vmatprep.mubr.f32.mxu0 0.0
  %2743 = vmatmul.mubr.f32.gmra.mrb[0].mxu0 %v2665
  %v2744 = vpop.f32.mrb[0].mxu0
  %v2745 = vadd.f32 0.0, %v2744
  %v2746 = vpop.f32.mrb[0].mxu0
  %2747 = vmatprep.mubr.f32.mxu0 0.0
  %2748 = vmatmul.mubr.f32.gmra.mrb[0].mxu0 %v2668
  %v2749 = vpop.f32.mrb[0].mxu0
  %v2750 = vadd.f32 0.0, %v2749
  %v2751 = vpop.f32.mrb[0].mxu0
  %2752 = vmatprep.mubr.f32.mxu0 0.0
  %2753 = vmatmul.mubr.f32.gmra.mrb[0].mxu0 %v2671
  %v2754 = vpop.f32.mrb[0].mxu0
  %v2755 = vadd.f32 0.0, %v2754
  %v2756 = vpop.f32.mrb[0].mxu0
  %2757 = vdwg.mxu0
  %2758 = vmatprep.subr.mxu0 0.0
  %2759 = vmatpush1.msra.mxu0 %v2561
  %2760 = vmatprep.subr.mxu0 0.0
  %2761 = vmatpush1.msra.mxu0 %v2562
  %2762 = vmatprep.subr.mxu0 0.0
  %2763 = vmatpush1.msra.mxu0 %v2563
  %2764 = vmatprep.subr.mxu0 0.0
  %2765 = vmatpush1.msra.mxu0 %v2564
  %2766 = vmatprep.subr.mxu0 0.0
  %2767 = vmatpush1.msra.mxu0 0.0
  %2768 = vmatprep.subr.mxu0 0.0
  %2769 = vmatpush1.msra.mxu0 0.0
  %2770 = vmatprep.subr.mxu0 0.0
  %2771 = vmatpush1.msra.mxu0 0.0
  %2772 = vmatprep.subr.mxu0 0.0
  %2773 = vmatpush1.msra.mxu0 0.0
  %2774 = vmatprep.subr.mxu0 0.0
  %2775 = vmatpush1.msra.mxu0 0.0
  %2776 = vmatprep.subr.mxu0 0.0
  %2777 = vmatpush1.msra.mxu0 0.0
  %2778 = vmatprep.subr.mxu0 0.0
  %2779 = vmatpush1.msra.mxu0 0.0
  %2780 = vmatprep.subr.mxu0 0.0
  %2781 = vmatpush1.msra.mxu0 0.0
  %2782 = vmatprep.subr.mxu0 0.0
  %2783 = vmatpush1.msra.mxu0 0.0
  %2784 = vmatprep.subr.mxu0 0.0
  %2785 = vmatpush1.msra.mxu0 0.0
  %2786 = vmatprep.subr.mxu0 0.0
  %2787 = vmatpush1.msra.mxu0 0.0
  %2788 = vmatprep.subr.mxu0 0.0
  %2789 = vmatpush1.msra.mxu0 0.0
  %2790 = vmatprep.subr.mxu0 0.0
  %2791 = vmatpush1.msra.mxu0 0.0
  %2792 = vmatprep.subr.mxu0 0.0
  %2793 = vmatpush1.msra.mxu0 0.0
  %2794 = vmatprep.subr.mxu0 0.0
  %2795 = vmatpush1.msra.mxu0 0.0
  %2796 = vmatprep.subr.mxu0 0.0
  %2797 = vmatpush1.msra.mxu0 0.0
  %2798 = vmatprep.subr.mxu0 0.0
  %2799 = vmatpush1.msra.mxu0 0.0
  %2800 = vmatprep.subr.mxu0 0.0
  %2801 = vmatpush1.msra.mxu0 0.0
  %2802 = vmatprep.subr.mxu0 0.0
  %2803 = vmatpush1.msra.mxu0 0.0
  %2804 = vmatprep.subr.mxu0 0.0
  %2805 = vmatpush1.msra.mxu0 0.0
  %2806 = vmatprep.subr.mxu0 0.0
  %2807 = vmatpush1.msra.mxu0 0.0
  %2808 = vmatprep.subr.mxu0 0.0
  %2809 = vmatpush1.msra.mxu0 0.0
  %2810 = vmatprep.subr.mxu0 0.0
  %2811 = vmatpush1.msra.mxu0 0.0
  %2812 = vmatprep.subr.mxu0 0.0
  %2813 = vmatpush1.msra.mxu0 0.0
  %2814 = vmatprep.subr.mxu0 0.0
  %2815 = vmatpush1.msra.mxu0 0.0
  %2816 = vmatprep.subr.mxu0 0.0
  %2817 = vmatpush1.msra.mxu0 0.0
  %2818 = vmatprep.subr.mxu0 0.0
  %2819 = vmatpush1.msra.mxu0 0.0
  %2820 = vmatprep.subr.mxu0 0.0
  %2821 = vmatpush1.msra.mxu0 0.0
  %2822 = vmatprep.mubr.f32.mxu0 0.0
  %2823 = vmatmul.mubr.f32.gmra.mrb[0].mxu0 %v2662
  %v2824 = vpop.f32.mrb[0].mxu0
  %v2825 = vadd.f32 0.0, %v2824
  %v2826 = vpop.f32.mrb[0].mxu0
  %2827 = vmatprep.mubr.f32.mxu0 0.0
  %2828 = vmatmul.mubr.f32.gmra.mrb[0].mxu0 %v2665
  %v2829 = vpop.f32.mrb[0].mxu0
  %v2830 = vadd.f32 0.0, %v2829
  %v2831 = vpop.f32.mrb[0].mxu0
  %2832 = vmatprep.mubr.f32.mxu0 0.0
  %2833 = vmatmul.mubr.f32.gmra.mrb[0].mxu0 %v2668
  %v2834 = vpop.f32.mrb[0].mxu0
  %v2835 = vadd.f32 0.0, %v2834
  %v2836 = vpop.f32.mrb[0].mxu0
  %2837 = vmatprep.mubr.f32.mxu0 0.0
  %2838 = vmatmul.mubr.f32.gmra.mrb[0].mxu0 %v2671
  %v2839 = vpop.f32.mrb[0].mxu0
  %v2840 = vadd.f32 0.0, %v2839
  %v2841 = vpop.f32.mrb[0].mxu0
  %2842 = vdwg.mxu0
  %2843 = vmatprep.subr.mxu0 0.0
  %2844 = vmatpush1.msra.mxu0 %v2565
  %2845 = vmatprep.subr.mxu0 0.0
  %2846 = vmatpush1.msra.mxu0 %v2566
  %2847 = vmatprep.subr.mxu0 0.0
  %2848 = vmatpush1.msra.mxu0 %v2567
  %2849 = vmatprep.subr.mxu0 0.0
  %2850 = vmatpush1.msra.mxu0 %v2568
  %2851 = vmatprep.subr.mxu0 0.0
  %2852 = vmatpush1.msra.mxu0 0.0
  %2853 = vmatprep.subr.mxu0 0.0
  %2854 = vmatpush1.msra.mxu0 0.0
  %2855 = vmatprep.subr.mxu0 0.0
  %2856 = vmatpush1.msra.mxu0 0.0
  %2857 = vmatprep.subr.mxu0 0.0
  %2858 = vmatpush1.msra.mxu0 0.0
  %2859 = vmatprep.subr.mxu0 0.0
  %2860 = vmatpush1.msra.mxu0 0.0
  %2861 = vmatprep.subr.mxu0 0.0
  %2862 = vmatpush1.msra.mxu0 0.0
  %2863 = vmatprep.subr.mxu0 0.0
  %2864 = vmatpush1.msra.mxu0 0.0
  %2865 = vmatprep.subr.mxu0 0.0
  %2866 = vmatpush1.msra.mxu0 0.0
  %2867 = vmatprep.subr.mxu0 0.0
  %2868 = vmatpush1.msra.mxu0 0.0
  %2869 = vmatprep.subr.mxu0 0.0
  %2870 = vmatpush1.msra.mxu0 0.0
  %2871 = vmatprep.subr.mxu0 0.0
  %2872 = vmatpush1.msra.mxu0 0.0
  %2873 = vmatprep.subr.mxu0 0.0
  %2874 = vmatpush1.msra.mxu0 0.0
  %2875 = vmatprep.subr.mxu0 0.0
  %2876 = vmatpush1.msra.mxu0 0.0
  %2877 = vmatprep.subr.mxu0 0.0
  %2878 = vmatpush1.msra.mxu0 0.0
  %2879 = vmatprep.subr.mxu0 0.0
  %2880 = vmatpush1.msra.mxu0 0.0
  %2881 = vmatprep.subr.mxu0 0.0
  %2882 = vmatpush1.msra.mxu0 0.0
  %2883 = vmatprep.subr.mxu0 0.0
  %2884 = vmatpush1.msra.mxu0 0.0
  %2885 = vmatprep.subr.mxu0 0.0
  %2886 = vmatpush1.msra.mxu0 0.0
  %2887 = vmatprep.subr.mxu0 0.0
  %2888 = vmatpush1.msra.mxu0 0.0
  %2889 = vmatprep.subr.mxu0 0.0
  %2890 = vmatpush1.msra.mxu0 0.0
  %2891 = vmatprep.subr.mxu0 0.0
  %2892 = vmatpush1.msra.mxu0 0.0
  %2893 = vmatprep.subr.mxu0 0.0
  %2894 = vmatpush1.msra.mxu0 0.0
  %2895 = vmatprep.subr.mxu0 0.0
  %2896 = vmatpush1.msra.mxu0 0.0
  %2897 = vmatprep.subr.mxu0 0.0
  %2898 = vmatpush1.msra.mxu0 0.0
  %2899 = vmatprep.subr.mxu0 0.0
  %2900 = vmatpush1.msra.mxu0 0.0
  %2901 = vmatprep.subr.mxu0 0.0
  %2902 = vmatpush1.msra.mxu0 0.0
  %2903 = vmatprep.subr.mxu0 0.0
  %2904 = vmatpush1.msra.mxu0 0.0
  %2905 = vmatprep.subr.mxu0 0.0
  %2906 = vmatpush1.msra.mxu0 0.0
  %2907 = vmatprep.mubr.f32.mxu0 0.0
  %2908 = vmatmul.mubr.f32.gmra.mrb[0].mxu0 %v2662
  %v2909 = vpop.f32.mrb[0].mxu0
  %v2910 = vadd.f32 0.0, %v2909
  %v2911 = vpop.f32.mrb[0].mxu0
  %2912 = vmatprep.mubr.f32.mxu0 0.0
  %2913 = vmatmul.mubr.f32.gmra.mrb[0].mxu0 %v2665
  %v2914 = vpop.f32.mrb[0].mxu0
  %v2915 = vadd.f32 0.0, %v2914
  %v2916 = vpop.f32.mrb[0].mxu0
  %2917 = vmatprep.mubr.f32.mxu0 0.0
  %2918 = vmatmul.mubr.f32.gmra.mrb[0].mxu0 %v2668
  %v2919 = vpop.f32.mrb[0].mxu0
  %v2920 = vadd.f32 0.0, %v2919
  %v2921 = vpop.f32.mrb[0].mxu0
  %2922 = vmatprep.mubr.f32.mxu0 0.0
  %2923 = vmatmul.mubr.f32.gmra.mrb[0].mxu0 %v2671
  %v2924 = vpop.f32.mrb[0].mxu0
  %v2925 = vadd.f32 0.0, %v2924
  %v2926 = vpop.f32.mrb[0].mxu0
  %2927 = vdwg.mxu0
  %v2929 = vsel %vm22, %v2740, 0
  %v2932 = vsel %vm22, %v2745, 0
  %v2935 = vsel %vm22, %v2825, 0
  %v2938 = vsel %vm22, %v2830, 0
  %2940 = vmatprep.subr.mxu0 0.0
  %2941 = vmatpush1.xpose.msra.mxu0 %v2935
  %2942 = vmatprep.subr.mxu0 0.0
  %2943 = vmatpush1.xpose.msra.mxu0 %v2938
  %2944 = vmatprep.subr.mxu0 0.0
  %2945 = vmatpush1.xpose.msra.mxu0 0.0
  %2946 = vmatprep.subr.mxu0 0.0
  %2947 = vmatpush1.xpose.msra.mxu0 0.0
  %2948 = vmatprep.subr.mxu0 0.0
  %2949 = vmatpush1.xpose.msra.mxu0 0.0
  %2950 = vmatprep.subr.mxu0 0.0
  %2951 = vmatpush1.xpose.msra.mxu0 0.0
  %2952 = vmatprep.subr.mxu0 0.0
  %2953 = vmatpush1.xpose.msra.mxu0 0.0
  %2954 = vmatprep.subr.mxu0 0.0
  %2955 = vmatpush1.xpose.msra.mxu0 0.0
  %2956 = vmatprep.subr.mxu0 0.0
  %2957 = vmatpush1.xpose.msra.mxu0 0.0
  %2958 = vmatprep.subr.mxu0 0.0
  %2959 = vmatpush1.xpose.msra.mxu0 0.0
  %2960 = vmatprep.subr.mxu0 0.0
  %2961 = vmatpush1.xpose.msra.mxu0 0.0
  %2962 = vmatprep.subr.mxu0 0.0
  %2963 = vmatpush1.xpose.msra.mxu0 0.0
  %2964 = vmatprep.subr.mxu0 0.0
  %2965 = vmatpush1.xpose.msra.mxu0 0.0
  %2966 = vmatprep.subr.mxu0 0.0
  %2967 = vmatpush1.xpose.msra.mxu0 0.0
  %2968 = vmatprep.subr.mxu0 0.0
  %2969 = vmatpush1.xpose.msra.mxu0 0.0
  %2970 = vmatprep.subr.mxu0 0.0
  %2971 = vmatpush1.xpose.msra.mxu0 0.0
  %2972 = vmatprep.subr.mxu0 0.0
  %2973 = vmatpush1.xpose.msra.mxu0 0.0
  %2974 = vmatprep.subr.mxu0 0.0
  %2975 = vmatpush1.xpose.msra.mxu0 0.0
  %2976 = vmatprep.subr.mxu0 0.0
  %2977 = vmatpush1.xpose.msra.mxu0 0.0
  %2978 = vmatprep.subr.mxu0 0.0
  %2979 = vmatpush1.xpose.msra.mxu0 0.0
  %2980 = vmatprep.subr.mxu0 0.0
  %2981 = vmatpush1.xpose.msra.mxu0 0.0
  %2982 = vmatprep.subr.mxu0 0.0
  %2983 = vmatpush1.xpose.msra.mxu0 0.0
  %2984 = vmatprep.subr.mxu0 0.0
  %2985 = vmatpush1.xpose.msra.mxu0 0.0
  %2986 = vmatprep.subr.mxu0 0.0
  %2987 = vmatpush1.xpose.msra.mxu0 0.0
  %2988 = vmatprep.subr.mxu0 0.0
  %2989 = vmatpush1.xpose.msra.mxu0 0.0
  %2990 = vmatprep.subr.mxu0 0.0
  %2991 = vmatpush1.xpose.msra.mxu0 0.0
  %2992 = vmatprep.subr.mxu0 0.0
  %2993 = vmatpush1.xpose.msra.mxu0 0.0
  %2994 = vmatprep.subr.mxu0 0.0
  %2995 = vmatpush1.xpose.msra.mxu0 0.0
  %2996 = vmatprep.subr.mxu0 0.0
  %2997 = vmatpush1.xpose.msra.mxu0 0.0
  %2998 = vmatprep.subr.mxu0 0.0
  %2999 = vmatpush1.xpose.msra.mxu0 0.0
  %3000 = vmatprep.subr.mxu0 0.0
  %3001 = vmatpush1.xpose.msra.mxu0 0.0
  %3002 = vmatprep.subr.mxu0 0.0
  %3003 = vmatpush1.xpose.msra.mxu0 0.0
  %3004 = vmatprep.mubr.f32.mxu0 0.0
  %3005 = vmatmul.mubr.f32.gmra.mrb[0].mxu0 %v2929
  %v3006 = vpop.f32.mrb[0].mxu0
  %v3007 = vadd.f32 0.0, %v3006
  %v3008 = vpop.f32.mrb[0].mxu0
  %3009 = vmatprep.mubr.f32.mxu0 0.0
  %3010 = vmatmul.mubr.f32.gmra.mrb[0].mxu0 %v2932
  %v3011 = vpop.f32.mrb[0].mxu0
  %v3012 = vadd.f32 0.0, %v3011
  %v3013 = vpop.f32.mrb[0].mxu0
  %3014 = vdwg.mxu0
  %v3016 = vsel %vm22, %v2750, 0
  %v3019 = vsel %vm22, %v2755, 0
  %v3022 = vsel %vm22, %v2835, 0
  %v3025 = vsel %vm22, %v2840, 0
  %3027 = vmatprep.subr.mxu0 0.0
  %3028 = vmatpush1.xpose.msra.mxu0 %v3022
  %3029 = vmatprep.subr.mxu0 0.0
  %3030 = vmatpush1.xpose.msra.mxu0 %v3025
  %3031 = vmatprep.subr.mxu0 0.0
  %3032 = vmatpush1.xpose.msra.mxu0 0.0
  %3033 = vmatprep.subr.mxu0 0.0
  %3034 = vmatpush1.xpose.msra.mxu0 0.0
  %3035 = vmatprep.subr.mxu0 0.0
  %3036 = vmatpush1.xpose.msra.mxu0 0.0
  %3037 = vmatprep.subr.mxu0 0.0
  %3038 = vmatpush1.xpose.msra.mxu0 0.0
  %3039 = vmatprep.subr.mxu0 0.0
  %3040 = vmatpush1.xpose.msra.mxu0 0.0
  %3041 = vmatprep.subr.mxu0 0.0
  %3042 = vmatpush1.xpose.msra.mxu0 0.0
  %3043 = vmatprep.subr.mxu0 0.0
  %3044 = vmatpush1.xpose.msra.mxu0 0.0
  %3045 = vmatprep.subr.mxu0 0.0
  %3046 = vmatpush1.xpose.msra.mxu0 0.0
  %3047 = vmatprep.subr.mxu0 0.0
  %3048 = vmatpush1.xpose.msra.mxu0 0.0
  %3049 = vmatprep.subr.mxu0 0.0
  %3050 = vmatpush1.xpose.msra.mxu0 0.0
  %3051 = vmatprep.subr.mxu0 0.0
  %3052 = vmatpush1.xpose.msra.mxu0 0.0
  %3053 = vmatprep.subr.mxu0 0.0
  %3054 = vmatpush1.xpose.msra.mxu0 0.0
  %3055 = vmatprep.subr.mxu0 0.0
  %3056 = vmatpush1.xpose.msra.mxu0 0.0
  %3057 = vmatprep.subr.mxu0 0.0
  %3058 = vmatpush1.xpose.msra.mxu0 0.0
  %3059 = vmatprep.subr.mxu0 0.0
  %3060 = vmatpush1.xpose.msra.mxu0 0.0
  %3061 = vmatprep.subr.mxu0 0.0
  %3062 = vmatpush1.xpose.msra.mxu0 0.0
  %3063 = vmatprep.subr.mxu0 0.0
  %3064 = vmatpush1.xpose.msra.mxu0 0.0
  %3065 = vmatprep.subr.mxu0 0.0
  %3066 = vmatpush1.xpose.msra.mxu0 0.0
  %3067 = vmatprep.subr.mxu0 0.0
  %3068 = vmatpush1.xpose.msra.mxu0 0.0
  %3069 = vmatprep.subr.mxu0 0.0
  %3070 = vmatpush1.xpose.msra.mxu0 0.0
  %3071 = vmatprep.subr.mxu0 0.0
  %3072 = vmatpush1.xpose.msra.mxu0 0.0
  %3073 = vmatprep.subr.mxu0 0.0
  %3074 = vmatpush1.xpose.msra.mxu0 0.0
  %3075 = vmatprep.subr.mxu0 0.0
  %3076 = vmatpush1.xpose.msra.mxu0 0.0
  %3077 = vmatprep.subr.mxu0 0.0
  %3078 = vmatpush1.xpose.msra.mxu0 0.0
  %3079 = vmatprep.subr.mxu0 0.0
  %3080 = vmatpush1.xpose.msra.mxu0 0.0
  %3081 = vmatprep.subr.mxu0 0.0
  %3082 = vmatpush1.xpose.msra.mxu0 0.0
  %3083 = vmatprep.subr.mxu0 0.0
  %3084 = vmatpush1.xpose.msra.mxu0 0.0
  %3085 = vmatprep.subr.mxu0 0.0
  %3086 = vmatpush1.xpose.msra.mxu0 0.0
  %3087 = vmatprep.subr.mxu0 0.0
  %3088 = vmatpush1.xpose.msra.mxu0 0.0
  %3089 = vmatprep.subr.mxu0 0.0
  %3090 = vmatpush1.xpose.msra.mxu0 0.0
  %3091 = vmatprep.mubr.f32.mxu0 0.0
  %3092 = vmatmul.mubr.f32.gmra.mrb[0].mxu0 %v3016
  %v3093 = vpop.f32.mrb[0].mxu0
  %v3094 = vadd.f32 0.0, %v3093
  %v3095 = vpop.f32.mrb[0].mxu0
  %3096 = vmatprep.mubr.f32.mxu0 0.0
  %3097 = vmatmul.mubr.f32.gmra.mrb[0].mxu0 %v3019
  %v3098 = vpop.f32.mrb[0].mxu0
  %v3099 = vadd.f32 0.0, %v3098
  %v3100 = vpop.f32.mrb[0].mxu0
  %3101 = vdwg.mxu0
  %v3102 = vsel %vm137, -1e+09, %v3007
  %v3103 = vsel %vm138, -1e+09, %v3012
  %v3104 = vsel %vm137, -1e+09, %v3094
  %v3105 = vsel %vm138, -1e+09, %v3099
  %v3106 = vsel %vm22, %v3102, -inf
  %3107 = vmax.xlane.f32.xlu0 %v3106
  %v3108 = vpop.xlane.xlu0 %3107
  %v3109 = vsel %vm22, %v3103, -inf
  %3110 = vmax.xlane.f32.xlu0 %v3109
  %v3111 = vpop.xlane.xlu0 %3110
  %v3112 = vsel %vm22, %v3104, -inf
  %3113 = vmax.xlane.f32.xlu0 %v3112
  %v3114 = vpop.xlane.xlu0 %3113
  %v3115 = vsel %vm22, %v3105, -inf
  %3116 = vmax.xlane.f32.xlu0 %v3115
  %v3117 = vpop.xlane.xlu0 %3116
  %v3118 = vsub.f32 %v3102, %v3108
  %v3119 = vsub.f32 %v3103, %v3111
  %v3120 = vsub.f32 %v3104, %v3114
  %v3121 = vsub.f32 %v3105, %v3117
  %v3122 = vmul.f32 %v3118, 1.442695
  %v3123 = vpow.pop %v3122
  %v3124 = vmul.f32 %v3119, 1.442695
  %v3125 = vpow.pop %v3124
  %v3126 = vmul.f32 %v3120, 1.442695
  %v3127 = vpow.pop %v3126
  %v3128 = vmul.f32 %v3121, 1.442695
  %v3129 = vpow.pop %v3128
  %v3130 = vsel %vm22, %v3123, 0.0
  %3131 = vadd.xlane.f32.xlu0 %v3130
  %v3132 = vpop.xlane.xlu0 %3131
  %v3133 = vsel %vm22, %v3125, 0.0
  %3134 = vadd.xlane.f32.xlu0 %v3133
  %v3135 = vpop.xlane.xlu0 %3134
  %v3136 = vsel %vm22, %v3127, 0.0
  %3137 = vadd.xlane.f32.xlu0 %v3136
  %v3138 = vpop.xlane.xlu0 %3137
  %v3139 = vsel %vm22, %v3129, 0.0
  %3140 = vadd.xlane.f32.xlu0 %v3139
  %v3141 = vpop.xlane.xlu0 %3140
  %v3142 = vrcp.pop %v3132
  %v3143 = vrcp.pop %v3135
  %v3144 = vrcp.pop %v3138
  %v3145 = vrcp.pop %v3141
  %v3146 = vmul.f32 %v3123, %v3142
  %v3147 = vmul.f32 %v3125, %v3143
  %v3148 = vmul.f32 %v3127, %v3144
  %v3149 = vmul.f32 %v3129, %v3145
  %v3151 = vsel %vm22, %v3146, 0
  %v3154 = vsel %vm22, %v3147, 0
  %3156 = vmatprep.subr.mxu0 0.0
  %3157 = vmatpush1.msra.mxu0 %v2910
  %3158 = vmatprep.subr.mxu0 0.0
  %3159 = vmatpush1.msra.mxu0 %v2915
  %3160 = vmatprep.subr.mxu0 0.0
  %3161 = vmatpush1.msra.mxu0 0.0
  %3162 = vmatprep.subr.mxu0 0.0
  %3163 = vmatpush1.msra.mxu0 0.0
  %3164 = vmatprep.subr.mxu0 0.0
  %3165 = vmatpush1.msra.mxu0 0.0
  %3166 = vmatprep.subr.mxu0 0.0
  %3167 = vmatpush1.msra.mxu0 0.0
  %3168 = vmatprep.subr.mxu0 0.0
  %3169 = vmatpush1.msra.mxu0 0.0
  %3170 = vmatprep.subr.mxu0 0.0
  %3171 = vmatpush1.msra.mxu0 0.0
  %3172 = vmatprep.subr.mxu0 0.0
  %3173 = vmatpush1.msra.mxu0 0.0
  %3174 = vmatprep.subr.mxu0 0.0
  %3175 = vmatpush1.msra.mxu0 0.0
  %3176 = vmatprep.subr.mxu0 0.0
  %3177 = vmatpush1.msra.mxu0 0.0
  %3178 = vmatprep.subr.mxu0 0.0
  %3179 = vmatpush1.msra.mxu0 0.0
  %3180 = vmatprep.subr.mxu0 0.0
  %3181 = vmatpush1.msra.mxu0 0.0
  %3182 = vmatprep.subr.mxu0 0.0
  %3183 = vmatpush1.msra.mxu0 0.0
  %3184 = vmatprep.subr.mxu0 0.0
  %3185 = vmatpush1.msra.mxu0 0.0
  %3186 = vmatprep.subr.mxu0 0.0
  %3187 = vmatpush1.msra.mxu0 0.0
  %3188 = vmatprep.subr.mxu0 0.0
  %3189 = vmatpush1.msra.mxu0 0.0
  %3190 = vmatprep.subr.mxu0 0.0
  %3191 = vmatpush1.msra.mxu0 0.0
  %3192 = vmatprep.subr.mxu0 0.0
  %3193 = vmatpush1.msra.mxu0 0.0
  %3194 = vmatprep.subr.mxu0 0.0
  %3195 = vmatpush1.msra.mxu0 0.0
  %3196 = vmatprep.subr.mxu0 0.0
  %3197 = vmatpush1.msra.mxu0 0.0
  %3198 = vmatprep.subr.mxu0 0.0
  %3199 = vmatpush1.msra.mxu0 0.0
  %3200 = vmatprep.subr.mxu0 0.0
  %3201 = vmatpush1.msra.mxu0 0.0
  %3202 = vmatprep.subr.mxu0 0.0
  %3203 = vmatpush1.msra.mxu0 0.0
  %3204 = vmatprep.subr.mxu0 0.0
  %3205 = vmatpush1.msra.mxu0 0.0
  %3206 = vmatprep.subr.mxu0 0.0
  %3207 = vmatpush1.msra.mxu0 0.0
  %3208 = vmatprep.subr.mxu0 0.0
  %3209 = vmatpush1.msra.mxu0 0.0
  %3210 = vmatprep.subr.mxu0 0.0
  %3211 = vmatpush1.msra.mxu0 0.0
  %3212 = vmatprep.subr.mxu0 0.0
  %3213 = vmatpush1.msra.mxu0 0.0
  %3214 = vmatprep.subr.mxu0 0.0
  %3215 = vmatpush1.msra.mxu0 0.0
  %3216 = vmatprep.subr.mxu0 0.0
  %3217 = vmatpush1.msra.mxu0 0.0
  %3218 = vmatprep.subr.mxu0 0.0
  %3219 = vmatpush1.msra.mxu0 0.0
  %3220 = vmatprep.mubr.f32.mxu0 0.0
  %3221 = vmatmul.mubr.f32.gmra.mrb[0].mxu0 %v3151
  %v3222 = vpop.f32.mrb[0].mxu0
  %v3223 = vadd.f32 0.0, %v3222
  %v3224 = vpop.f32.mrb[0].mxu0
  %3225 = vmatprep.mubr.f32.mxu0 0.0
  %3226 = vmatmul.mubr.f32.gmra.mrb[0].mxu0 %v3154
  %v3227 = vpop.f32.mrb[0].mxu0
  %v3228 = vadd.f32 0.0, %v3227
  %v3229 = vpop.f32.mrb[0].mxu0
  %3230 = vdwg.mxu0
  %v3232 = vsel %vm22, %v3148, 0
  %v3235 = vsel %vm22, %v3149, 0
  %3237 = vmatprep.subr.mxu0 0.0
  %3238 = vmatpush1.msra.mxu0 %v2920
  %3239 = vmatprep.subr.mxu0 0.0
  %3240 = vmatpush1.msra.mxu0 %v2925
  %3241 = vmatprep.subr.mxu0 0.0
  %3242 = vmatpush1.msra.mxu0 0.0
  %3243 = vmatprep.subr.mxu0 0.0
  %3244 = vmatpush1.msra.mxu0 0.0
  %3245 = vmatprep.subr.mxu0 0.0
  %3246 = vmatpush1.msra.mxu0 0.0
  %3247 = vmatprep.subr.mxu0 0.0
  %3248 = vmatpush1.msra.mxu0 0.0
  %3249 = vmatprep.subr.mxu0 0.0
  %3250 = vmatpush1.msra.mxu0 0.0
  %3251 = vmatprep.subr.mxu0 0.0
  %3252 = vmatpush1.msra.mxu0 0.0
  %3253 = vmatprep.subr.mxu0 0.0
  %3254 = vmatpush1.msra.mxu0 0.0
  %3255 = vmatprep.subr.mxu0 0.0
  %3256 = vmatpush1.msra.mxu0 0.0
  %3257 = vmatprep.subr.mxu0 0.0
  %3258 = vmatpush1.msra.mxu0 0.0
  %3259 = vmatprep.subr.mxu0 0.0
  %3260 = vmatpush1.msra.mxu0 0.0
  %3261 = vmatprep.subr.mxu0 0.0
  %3262 = vmatpush1.msra.mxu0 0.0
  %3263 = vmatprep.subr.mxu0 0.0
  %3264 = vmatpush1.msra.mxu0 0.0
  %3265 = vmatprep.subr.mxu0 0.0
  %3266 = vmatpush1.msra.mxu0 0.0
  %3267 = vmatprep.subr.mxu0 0.0
  %3268 = vmatpush1.msra.mxu0 0.0
  %3269 = vmatprep.subr.mxu0 0.0
  %3270 = vmatpush1.msra.mxu0 0.0
  %3271 = vmatprep.subr.mxu0 0.0
  %3272 = vmatpush1.msra.mxu0 0.0
  %3273 = vmatprep.subr.mxu0 0.0
  %3274 = vmatpush1.msra.mxu0 0.0
  %3275 = vmatprep.subr.mxu0 0.0
  %3276 = vmatpush1.msra.mxu0 0.0
  %3277 = vmatprep.subr.mxu0 0.0
  %3278 = vmatpush1.msra.mxu0 0.0
  %3279 = vmatprep.subr.mxu0 0.0
  %3280 = vmatpush1.msra.mxu0 0.0
  %3281 = vmatprep.subr.mxu0 0.0
  %3282 = vmatpush1.msra.mxu0 0.0
  %3283 = vmatprep.subr.mxu0 0.0
  %3284 = vmatpush1.msra.mxu0 0.0
  %3285 = vmatprep.subr.mxu0 0.0
  %3286 = vmatpush1.msra.mxu0 0.0
  %3287 = vmatprep.subr.mxu0 0.0
  %3288 = vmatpush1.msra.mxu0 0.0
  %3289 = vmatprep.subr.mxu0 0.0
  %3290 = vmatpush1.msra.mxu0 0.0
  %3291 = vmatprep.subr.mxu0 0.0
  %3292 = vmatpush1.msra.mxu0 0.0
  %3293 = vmatprep.subr.mxu0 0.0
  %3294 = vmatpush1.msra.mxu0 0.0
  %3295 = vmatprep.subr.mxu0 0.0
  %3296 = vmatpush1.msra.mxu0 0.0
  %3297 = vmatprep.subr.mxu0 0.0
  %3298 = vmatpush1.msra.mxu0 0.0
  %3299 = vmatprep.subr.mxu0 0.0
  %3300 = vmatpush1.msra.mxu0 0.0
  %3301 = vmatprep.mubr.f32.mxu0 0.0
  %3302 = vmatmul.mubr.f32.gmra.mrb[0].mxu0 %v3232
  %v3303 = vpop.f32.mrb[0].mxu0
  %v3304 = vadd.f32 0.0, %v3303
  %v3305 = vpop.f32.mrb[0].mxu0
  %3306 = vmatprep.mubr.f32.mxu0 0.0
  %3307 = vmatmul.mubr.f32.gmra.mrb[0].mxu0 %v3235
  %v3308 = vpop.f32.mrb[0].mxu0
  %v3309 = vadd.f32 0.0, %v3308
  %v3310 = vpop.f32.mrb[0].mxu0
  %3311 = vdwg.mxu0
  %3312 = vrot.lane.b32.xlu0 %v2740, 112
  %v3313 = vpop.permute.xlu0 %3312
  %3314 = vrot.lane.b32.xlu0 %v2745, 112
  %v3315 = vpop.permute.xlu0 %3314
  %3316 = vrot.lane.b32.xlu0 %v2825, 112
  %v3317 = vpop.permute.xlu0 %3316
  %3318 = vrot.lane.b32.xlu0 %v2830, 112
  %v3319 = vpop.permute.xlu0 %3318
  %v3320 = vsel %vm22, %v3313, 0
  %v3322 = vsel %vm22, %v3315, 0
  %v3324 = vsel %vm22, %v3317, 0
  %v3326 = vsel %vm22, %v3319, 0
  %3328 = vmatprep.subr.mxu0 0.0
  %3329 = vmatpush1.xpose.msra.mxu0 %v3324
  %3330 = vmatprep.subr.mxu0 0.0
  %3331 = vmatpush1.xpose.msra.mxu0 %v3326
  %3332 = vmatprep.subr.mxu0 0.0
  %3333 = vmatpush1.xpose.msra.mxu0 0.0
  %3334 = vmatprep.subr.mxu0 0.0
  %3335 = vmatpush1.xpose.msra.mxu0 0.0
  %3336 = vmatprep.subr.mxu0 0.0
  %3337 = vmatpush1.xpose.msra.mxu0 0.0
  %3338 = vmatprep.subr.mxu0 0.0
  %3339 = vmatpush1.xpose.msra.mxu0 0.0
  %3340 = vmatprep.subr.mxu0 0.0
  %3341 = vmatpush1.xpose.msra.mxu0 0.0
  %3342 = vmatprep.subr.mxu0 0.0
  %3343 = vmatpush1.xpose.msra.mxu0 0.0
  %3344 = vmatprep.subr.mxu0 0.0
  %3345 = vmatpush1.xpose.msra.mxu0 0.0
  %3346 = vmatprep.subr.mxu0 0.0
  %3347 = vmatpush1.xpose.msra.mxu0 0.0
  %3348 = vmatprep.subr.mxu0 0.0
  %3349 = vmatpush1.xpose.msra.mxu0 0.0
  %3350 = vmatprep.subr.mxu0 0.0
  %3351 = vmatpush1.xpose.msra.mxu0 0.0
  %3352 = vmatprep.subr.mxu0 0.0
  %3353 = vmatpush1.xpose.msra.mxu0 0.0
  %3354 = vmatprep.subr.mxu0 0.0
  %3355 = vmatpush1.xpose.msra.mxu0 0.0
  %3356 = vmatprep.subr.mxu0 0.0
  %3357 = vmatpush1.xpose.msra.mxu0 0.0
  %3358 = vmatprep.subr.mxu0 0.0
  %3359 = vmatpush1.xpose.msra.mxu0 0.0
  %3360 = vmatprep.subr.mxu0 0.0
  %3361 = vmatpush1.xpose.msra.mxu0 0.0
  %3362 = vmatprep.subr.mxu0 0.0
  %3363 = vmatpush1.xpose.msra.mxu0 0.0
  %3364 = vmatprep.subr.mxu0 0.0
  %3365 = vmatpush1.xpose.msra.mxu0 0.0
  %3366 = vmatprep.subr.mxu0 0.0
  %3367 = vmatpush1.xpose.msra.mxu0 0.0
  %3368 = vmatprep.subr.mxu0 0.0
  %3369 = vmatpush1.xpose.msra.mxu0 0.0
  %3370 = vmatprep.subr.mxu0 0.0
  %3371 = vmatpush1.xpose.msra.mxu0 0.0
  %3372 = vmatprep.subr.mxu0 0.0
  %3373 = vmatpush1.xpose.msra.mxu0 0.0
  %3374 = vmatprep.subr.mxu0 0.0
  %3375 = vmatpush1.xpose.msra.mxu0 0.0
  %3376 = vmatprep.subr.mxu0 0.0
  %3377 = vmatpush1.xpose.msra.mxu0 0.0
  %3378 = vmatprep.subr.mxu0 0.0
  %3379 = vmatpush1.xpose.msra.mxu0 0.0
  %3380 = vmatprep.subr.mxu0 0.0
  %3381 = vmatpush1.xpose.msra.mxu0 0.0
  %3382 = vmatprep.subr.mxu0 0.0
  %3383 = vmatpush1.xpose.msra.mxu0 0.0
  %3384 = vmatprep.subr.mxu0 0.0
  %3385 = vmatpush1.xpose.msra.mxu0 0.0
  %3386 = vmatprep.subr.mxu0 0.0
  %3387 = vmatpush1.xpose.msra.mxu0 0.0
  %3388 = vmatprep.subr.mxu0 0.0
  %3389 = vmatpush1.xpose.msra.mxu0 0.0
  %3390 = vmatprep.subr.mxu0 0.0
  %3391 = vmatpush1.xpose.msra.mxu0 0.0
  %3392 = vmatprep.mubr.f32.mxu0 0.0
  %3393 = vmatmul.mubr.f32.gmra.mrb[0].mxu0 %v3320
  %v3394 = vpop.f32.mrb[0].mxu0
  %v3395 = vadd.f32 0.0, %v3394
  %v3396 = vpop.f32.mrb[0].mxu0
  %3397 = vmatprep.mubr.f32.mxu0 0.0
  %3398 = vmatmul.mubr.f32.gmra.mrb[0].mxu0 %v3322
  %v3399 = vpop.f32.mrb[0].mxu0
  %v3400 = vadd.f32 0.0, %v3399
  %v3401 = vpop.f32.mrb[0].mxu0
  %3402 = vdwg.mxu0
  %3403 = vrot.lane.b32.xlu0 %v2750, 112
  %v3404 = vpop.permute.xlu0 %3403
  %3405 = vrot.lane.b32.xlu0 %v2755, 112
  %v3406 = vpop.permute.xlu0 %3405
  %3407 = vrot.lane.b32.xlu0 %v2835, 112
  %v3408 = vpop.permute.xlu0 %3407
  %3409 = vrot.lane.b32.xlu0 %v2840, 112
  %v3410 = vpop.permute.xlu0 %3409
  %v3411 = vsel %vm22, %v3404, 0
  %v3413 = vsel %vm22, %v3406, 0
  %v3415 = vsel %vm22, %v3408, 0
  %v3417 = vsel %vm22, %v3410, 0
  %3419 = vmatprep.subr.mxu0 0.0
  %3420 = vmatpush1.xpose.msra.mxu0 %v3415
  %3421 = vmatprep.subr.mxu0 0.0
  %3422 = vmatpush1.xpose.msra.mxu0 %v3417
  %3423 = vmatprep.subr.mxu0 0.0
  %3424 = vmatpush1.xpose.msra.mxu0 0.0
  %3425 = vmatprep.subr.mxu0 0.0
  %3426 = vmatpush1.xpose.msra.mxu0 0.0
  %3427 = vmatprep.subr.mxu0 0.0
  %3428 = vmatpush1.xpose.msra.mxu0 0.0
  %3429 = vmatprep.subr.mxu0 0.0
  %3430 = vmatpush1.xpose.msra.mxu0 0.0
  %3431 = vmatprep.subr.mxu0 0.0
  %3432 = vmatpush1.xpose.msra.mxu0 0.0
  %3433 = vmatprep.subr.mxu0 0.0
  %3434 = vmatpush1.xpose.msra.mxu0 0.0
  %3435 = vmatprep.subr.mxu0 0.0
  %3436 = vmatpush1.xpose.msra.mxu0 0.0
  %3437 = vmatprep.subr.mxu0 0.0
  %3438 = vmatpush1.xpose.msra.mxu0 0.0
  %3439 = vmatprep.subr.mxu0 0.0
  %3440 = vmatpush1.xpose.msra.mxu0 0.0
  %3441 = vmatprep.subr.mxu0 0.0
  %3442 = vmatpush1.xpose.msra.mxu0 0.0
  %3443 = vmatprep.subr.mxu0 0.0
  %3444 = vmatpush1.xpose.msra.mxu0 0.0
  %3445 = vmatprep.subr.mxu0 0.0
  %3446 = vmatpush1.xpose.msra.mxu0 0.0
  %3447 = vmatprep.subr.mxu0 0.0
  %3448 = vmatpush1.xpose.msra.mxu0 0.0
  %3449 = vmatprep.subr.mxu0 0.0
  %3450 = vmatpush1.xpose.msra.mxu0 0.0
  %3451 = vmatprep.subr.mxu0 0.0
  %3452 = vmatpush1.xpose.msra.mxu0 0.0
  %3453 = vmatprep.subr.mxu0 0.0
  %3454 = vmatpush1.xpose.msra.mxu0 0.0
  %3455 = vmatprep.subr.mxu0 0.0
  %3456 = vmatpush1.xpose.msra.mxu0 0.0
  %3457 = vmatprep.subr.mxu0 0.0
  %3458 = vmatpush1.xpose.msra.mxu0 0.0
  %3459 = vmatprep.subr.mxu0 0.0
  %3460 = vmatpush1.xpose.msra.mxu0 0.0
  %3461 = vmatprep.subr.mxu0 0.0
  %3462 = vmatpush1.xpose.msra.mxu0 0.0
  %3463 = vmatprep.subr.mxu0 0.0
  %3464 = vmatpush1.xpose.msra.mxu0 0.0
  %3465 = vmatprep.subr.mxu0 0.0
  %3466 = vmatpush1.xpose.msra.mxu0 0.0
  %3467 = vmatprep.subr.mxu0 0.0
  %3468 = vmatpush1.xpose.msra.mxu0 0.0
  %3469 = vmatprep.subr.mxu0 0.0
  %3470 = vmatpush1.xpose.msra.mxu0 0.0
  %3471 = vmatprep.subr.mxu0 0.0
  %3472 = vmatpush1.xpose.msra.mxu0 0.0
  %3473 = vmatprep.subr.mxu0 0.0
  %3474 = vmatpush1.xpose.msra.mxu0 0.0
  %3475 = vmatprep.subr.mxu0 0.0
  %3476 = vmatpush1.xpose.msra.mxu0 0.0
  %3477 = vmatprep.subr.mxu0 0.0
  %3478 = vmatpush1.xpose.msra.mxu0 0.0
  %3479 = vmatprep.subr.mxu0 0.0
  %3480 = vmatpush1.xpose.msra.mxu0 0.0
  %3481 = vmatprep.subr.mxu0 0.0
  %3482 = vmatpush1.xpose.msra.mxu0 0.0
  %3483 = vmatprep.mubr.f32.mxu0 0.0
  %3484 = vmatmul.mubr.f32.gmra.mrb[0].mxu0 %v3411
  %v3485 = vpop.f32.mrb[0].mxu0
  %v3486 = vadd.f32 0.0, %v3485
  %v3487 = vpop.f32.mrb[0].mxu0
  %3488 = vmatprep.mubr.f32.mxu0 0.0
  %3489 = vmatmul.mubr.f32.gmra.mrb[0].mxu0 %v3413
  %v3490 = vpop.f32.mrb[0].mxu0
  %v3491 = vadd.f32 0.0, %v3490
  %v3492 = vpop.f32.mrb[0].mxu0
  %3493 = vdwg.mxu0
  %v3494 = vsel %vm137, -1e+09, %v3395
  %v3495 = vsel %vm138, -1e+09, %v3400
  %v3496 = vsel %vm137, -1e+09, %v3486
  %v3497 = vsel %vm138, -1e+09, %v3491
  %v3498 = vsel %vm22, %v3494, -inf
  %3499 = vmax.xlane.f32.xlu0 %v3498
  %v3500 = vpop.xlane.xlu0 %3499
  %v3501 = vsel %vm22, %v3495, -inf
  %3502 = vmax.xlane.f32.xlu0 %v3501
  %v3503 = vpop.xlane.xlu0 %3502
  %v3504 = vsel %vm22, %v3496, -inf
  %3505 = vmax.xlane.f32.xlu0 %v3504
  %v3506 = vpop.xlane.xlu0 %3505
  %v3507 = vsel %vm22, %v3497, -inf
  %3508 = vmax.xlane.f32.xlu0 %v3507
  %v3509 = vpop.xlane.xlu0 %3508
  %v3510 = vsub.f32 %v3494, %v3500
  %v3511 = vsub.f32 %v3495, %v3503
  %v3512 = vsub.f32 %v3496, %v3506
  %v3513 = vsub.f32 %v3497, %v3509
  %v3514 = vmul.f32 %v3510, 1.442695
  %v3515 = vpow.pop %v3514
  %v3516 = vmul.f32 %v3511, 1.442695
  %v3517 = vpow.pop %v3516
  %v3518 = vmul.f32 %v3512, 1.442695
  %v3519 = vpow.pop %v3518
  %v3520 = vmul.f32 %v3513, 1.442695
  %v3521 = vpow.pop %v3520
  %v3522 = vsel %vm22, %v3515, 0.0
  %3523 = vadd.xlane.f32.xlu0 %v3522
  %v3524 = vpop.xlane.xlu0 %3523
  %v3525 = vsel %vm22, %v3517, 0.0
  %3526 = vadd.xlane.f32.xlu0 %v3525
  %v3527 = vpop.xlane.xlu0 %3526
  %v3528 = vsel %vm22, %v3519, 0.0
  %3529 = vadd.xlane.f32.xlu0 %v3528
  %v3530 = vpop.xlane.xlu0 %3529
  %v3531 = vsel %vm22, %v3521, 0.0
  %3532 = vadd.xlane.f32.xlu0 %v3531
  %v3533 = vpop.xlane.xlu0 %3532
  %v3534 = vrcp.pop %v3524
  %v3535 = vrcp.pop %v3527
  %v3536 = vrcp.pop %v3530
  %v3537 = vrcp.pop %v3533
  %v3538 = vmul.f32 %v3515, %v3534
  %v3539 = vmul.f32 %v3517, %v3535
  %v3540 = vmul.f32 %v3519, %v3536
  %v3541 = vmul.f32 %v3521, %v3537
  %3544 = vrot.lane.b32.xlu0 %v2910, 112
  %v3545 = vpop.permute.xlu0 %3544
  %3546 = vrot.lane.b32.xlu0 %v2915, 112
  %v3547 = vpop.permute.xlu0 %3546
  %v3551 = vsel %vm22, %v3538, 0
  %v3554 = vsel %vm22, %v3539, 0
  %3556 = vmatprep.subr.mxu0 0.0
  %3557 = vmatpush1.msra.mxu0 %v3545
  %3558 = vmatprep.subr.mxu0 0.0
  %3559 = vmatpush1.msra.mxu0 %v3547
  %3560 = vmatprep.subr.mxu0 0.0
  %3561 = vmatpush1.msra.mxu0 0.0
  %3562 = vmatprep.subr.mxu0 0.0
  %3563 = vmatpush1.msra.mxu0 0.0
  %3564 = vmatprep.subr.mxu0 0.0
  %3565 = vmatpush1.msra.mxu0 0.0
  %3566 = vmatprep.subr.mxu0 0.0
  %3567 = vmatpush1.msra.mxu0 0.0
  %3568 = vmatprep.subr.mxu0 0.0
  %3569 = vmatpush1.msra.mxu0 0.0
  %3570 = vmatprep.subr.mxu0 0.0
  %3571 = vmatpush1.msra.mxu0 0.0
  %3572 = vmatprep.subr.mxu0 0.0
  %3573 = vmatpush1.msra.mxu0 0.0
  %3574 = vmatprep.subr.mxu0 0.0
  %3575 = vmatpush1.msra.mxu0 0.0
  %3576 = vmatprep.subr.mxu0 0.0
  %3577 = vmatpush1.msra.mxu0 0.0
  %3578 = vmatprep.subr.mxu0 0.0
  %3579 = vmatpush1.msra.mxu0 0.0
  %3580 = vmatprep.subr.mxu0 0.0
  %3581 = vmatpush1.msra.mxu0 0.0
  %3582 = vmatprep.subr.mxu0 0.0
  %3583 = vmatpush1.msra.mxu0 0.0
  %3584 = vmatprep.subr.mxu0 0.0
  %3585 = vmatpush1.msra.mxu0 0.0
  %3586 = vmatprep.subr.mxu0 0.0
  %3587 = vmatpush1.msra.mxu0 0.0
  %3588 = vmatprep.subr.mxu0 0.0
  %3589 = vmatpush1.msra.mxu0 0.0
  %3590 = vmatprep.subr.mxu0 0.0
  %3591 = vmatpush1.msra.mxu0 0.0
  %3592 = vmatprep.subr.mxu0 0.0
  %3593 = vmatpush1.msra.mxu0 0.0
  %3594 = vmatprep.subr.mxu0 0.0
  %3595 = vmatpush1.msra.mxu0 0.0
  %3596 = vmatprep.subr.mxu0 0.0
  %3597 = vmatpush1.msra.mxu0 0.0
  %3598 = vmatprep.subr.mxu0 0.0
  %3599 = vmatpush1.msra.mxu0 0.0
  %3600 = vmatprep.subr.mxu0 0.0
  %3601 = vmatpush1.msra.mxu0 0.0
  %3602 = vmatprep.subr.mxu0 0.0
  %3603 = vmatpush1.msra.mxu0 0.0
  %3604 = vmatprep.subr.mxu0 0.0
  %3605 = vmatpush1.msra.mxu0 0.0
  %3606 = vmatprep.subr.mxu0 0.0
  %3607 = vmatpush1.msra.mxu0 0.0
  %3608 = vmatprep.subr.mxu0 0.0
  %3609 = vmatpush1.msra.mxu0 0.0
  %3610 = vmatprep.subr.mxu0 0.0
  %3611 = vmatpush1.msra.mxu0 0.0
  %3612 = vmatprep.subr.mxu0 0.0
  %3613 = vmatpush1.msra.mxu0 0.0
  %3614 = vmatprep.subr.mxu0 0.0
  %3615 = vmatpush1.msra.mxu0 0.0
  %3616 = vmatprep.subr.mxu0 0.0
  %3617 = vmatpush1.msra.mxu0 0.0
  %3618 = vmatprep.subr.mxu0 0.0
  %3619 = vmatpush1.msra.mxu0 0.0
  %3620 = vmatprep.mubr.f32.mxu0 0.0
  %3621 = vmatmul.mubr.f32.gmra.mrb[0].mxu0 %v3551
  %v3622 = vpop.f32.mrb[0].mxu0
  %v3623 = vadd.f32 0.0, %v3622
  %v3624 = vpop.f32.mrb[0].mxu0
  %3625 = vmatprep.mubr.f32.mxu0 0.0
  %3626 = vmatmul.mubr.f32.gmra.mrb[0].mxu0 %v3554
  %v3627 = vpop.f32.mrb[0].mxu0
  %v3628 = vadd.f32 0.0, %v3627
  %v3629 = vpop.f32.mrb[0].mxu0
  %3630 = vdwg.mxu0
  %3633 = vrot.lane.b32.xlu0 %v2920, 112
  %v3634 = vpop.permute.xlu0 %3633
  %3635 = vrot.lane.b32.xlu0 %v2925, 112
  %v3636 = vpop.permute.xlu0 %3635
  %v3640 = vsel %vm22, %v3540, 0
  %v3643 = vsel %vm22, %v3541, 0
  %3645 = vmatprep.subr.mxu0 0.0
  %3646 = vmatpush1.msra.mxu0 %v3634
  %3647 = vmatprep.subr.mxu0 0.0
  %3648 = vmatpush1.msra.mxu0 %v3636
  %3649 = vmatprep.subr.mxu0 0.0
  %3650 = vmatpush1.msra.mxu0 0.0
  %3651 = vmatprep.subr.mxu0 0.0
  %3652 = vmatpush1.msra.mxu0 0.0
  %3653 = vmatprep.subr.mxu0 0.0
  %3654 = vmatpush1.msra.mxu0 0.0
  %3655 = vmatprep.subr.mxu0 0.0
  %3656 = vmatpush1.msra.mxu0 0.0
  %3657 = vmatprep.subr.mxu0 0.0
  %3658 = vmatpush1.msra.mxu0 0.0
  %3659 = vmatprep.subr.mxu0 0.0
  %3660 = vmatpush1.msra.mxu0 0.0
  %3661 = vmatprep.subr.mxu0 0.0
  %3662 = vmatpush1.msra.mxu0 0.0
  %3663 = vmatprep.subr.mxu0 0.0
  %3664 = vmatpush1.msra.mxu0 0.0
  %3665 = vmatprep.subr.mxu0 0.0
  %3666 = vmatpush1.msra.mxu0 0.0
  %3667 = vmatprep.subr.mxu0 0.0
  %3668 = vmatpush1.msra.mxu0 0.0
  %3669 = vmatprep.subr.mxu0 0.0
  %3670 = vmatpush1.msra.mxu0 0.0
  %3671 = vmatprep.subr.mxu0 0.0
  %3672 = vmatpush1.msra.mxu0 0.0
  %3673 = vmatprep.subr.mxu0 0.0
  %3674 = vmatpush1.msra.mxu0 0.0
  %3675 = vmatprep.subr.mxu0 0.0
  %3676 = vmatpush1.msra.mxu0 0.0
  %3677 = vmatprep.subr.mxu0 0.0
  %3678 = vmatpush1.msra.mxu0 0.0
  %3679 = vmatprep.subr.mxu0 0.0
  %3680 = vmatpush1.msra.mxu0 0.0
  %3681 = vmatprep.subr.mxu0 0.0
  %3682 = vmatpush1.msra.mxu0 0.0
  %3683 = vmatprep.subr.mxu0 0.0
  %3684 = vmatpush1.msra.mxu0 0.0
  %3685 = vmatprep.subr.mxu0 0.0
  %3686 = vmatpush1.msra.mxu0 0.0
  %3687 = vmatprep.subr.mxu0 0.0
  %3688 = vmatpush1.msra.mxu0 0.0
  %3689 = vmatprep.subr.mxu0 0.0
  %3690 = vmatpush1.msra.mxu0 0.0
  %3691 = vmatprep.subr.mxu0 0.0
  %3692 = vmatpush1.msra.mxu0 0.0
  %3693 = vmatprep.subr.mxu0 0.0
  %3694 = vmatpush1.msra.mxu0 0.0
  %3695 = vmatprep.subr.mxu0 0.0
  %3696 = vmatpush1.msra.mxu0 0.0
  %3697 = vmatprep.subr.mxu0 0.0
  %3698 = vmatpush1.msra.mxu0 0.0
  %3699 = vmatprep.subr.mxu0 0.0
  %3700 = vmatpush1.msra.mxu0 0.0
  %3701 = vmatprep.subr.mxu0 0.0
  %3702 = vmatpush1.msra.mxu0 0.0
  %3703 = vmatprep.subr.mxu0 0.0
  %3704 = vmatpush1.msra.mxu0 0.0
  %3705 = vmatprep.subr.mxu0 0.0
  %3706 = vmatpush1.msra.mxu0 0.0
  %3707 = vmatprep.subr.mxu0 0.0
  %3708 = vmatpush1.msra.mxu0 0.0
  %3709 = vmatprep.mubr.f32.mxu0 0.0
  %3710 = vmatmul.mubr.f32.gmra.mrb[0].mxu0 %v3640
  %v3711 = vpop.f32.mrb[0].mxu0
  %v3712 = vadd.f32 0.0, %v3711
  %v3713 = vpop.f32.mrb[0].mxu0
  %3714 = vmatprep.mubr.f32.mxu0 0.0
  %3715 = vmatmul.mubr.f32.gmra.mrb[0].mxu0 %v3643
  %v3716 = vpop.f32.mrb[0].mxu0
  %v3717 = vadd.f32 0.0, %v3716
  %v3718 = vpop.f32.mrb[0].mxu0
  %3719 = vdwg.mxu0
  %3720 = vrot.lane.b32.xlu0 %v2740, 96
  %v3721 = vpop.permute.xlu0 %3720
  %3722 = vrot.lane.b32.xlu0 %v2745, 96
  %v3723 = vpop.permute.xlu0 %3722
  %3724 = vrot.lane.b32.xlu0 %v2825, 96
  %v3725 = vpop.permute.xlu0 %3724
  %3726 = vrot.lane.b32.xlu0 %v2830, 96
  %v3727 = vpop.permute.xlu0 %3726
  %v3728 = vsel %vm22, %v3721, 0
  %v3730 = vsel %vm22, %v3723, 0
  %v3732 = vsel %vm22, %v3725, 0
  %v3734 = vsel %vm22, %v3727, 0
  %3736 = vmatprep.subr.mxu0 0.0
  %3737 = vmatpush1.xpose.msra.mxu0 %v3732
  %3738 = vmatprep.subr.mxu0 0.0
  %3739 = vmatpush1.xpose.msra.mxu0 %v3734
  %3740 = vmatprep.subr.mxu0 0.0
  %3741 = vmatpush1.xpose.msra.mxu0 0.0
  %3742 = vmatprep.subr.mxu0 0.0
  %3743 = vmatpush1.xpose.msra.mxu0 0.0
  %3744 = vmatprep.subr.mxu0 0.0
  %3745 = vmatpush1.xpose.msra.mxu0 0.0
  %3746 = vmatprep.subr.mxu0 0.0
  %3747 = vmatpush1.xpose.msra.mxu0 0.0
  %3748 = vmatprep.subr.mxu0 0.0
  %3749 = vmatpush1.xpose.msra.mxu0 0.0
  %3750 = vmatprep.subr.mxu0 0.0
  %3751 = vmatpush1.xpose.msra.mxu0 0.0
  %3752 = vmatprep.subr.mxu0 0.0
  %3753 = vmatpush1.xpose.msra.mxu0 0.0
  %3754 = vmatprep.subr.mxu0 0.0
  %3755 = vmatpush1.xpose.msra.mxu0 0.0
  %3756 = vmatprep.subr.mxu0 0.0
  %3757 = vmatpush1.xpose.msra.mxu0 0.0
  %3758 = vmatprep.subr.mxu0 0.0
  %3759 = vmatpush1.xpose.msra.mxu0 0.0
  %3760 = vmatprep.subr.mxu0 0.0
  %3761 = vmatpush1.xpose.msra.mxu0 0.0
  %3762 = vmatprep.subr.mxu0 0.0
  %3763 = vmatpush1.xpose.msra.mxu0 0.0
  %3764 = vmatprep.subr.mxu0 0.0
  %3765 = vmatpush1.xpose.msra.mxu0 0.0
  %3766 = vmatprep.subr.mxu0 0.0
  %3767 = vmatpush1.xpose.msra.mxu0 0.0
  %3768 = vmatprep.subr.mxu0 0.0
  %3769 = vmatpush1.xpose.msra.mxu0 0.0
  %3770 = vmatprep.subr.mxu0 0.0
  %3771 = vmatpush1.xpose.msra.mxu0 0.0
  %3772 = vmatprep.subr.mxu0 0.0
  %3773 = vmatpush1.xpose.msra.mxu0 0.0
  %3774 = vmatprep.subr.mxu0 0.0
  %3775 = vmatpush1.xpose.msra.mxu0 0.0
  %3776 = vmatprep.subr.mxu0 0.0
  %3777 = vmatpush1.xpose.msra.mxu0 0.0
  %3778 = vmatprep.subr.mxu0 0.0
  %3779 = vmatpush1.xpose.msra.mxu0 0.0
  %3780 = vmatprep.subr.mxu0 0.0
  %3781 = vmatpush1.xpose.msra.mxu0 0.0
  %3782 = vmatprep.subr.mxu0 0.0
  %3783 = vmatpush1.xpose.msra.mxu0 0.0
  %3784 = vmatprep.subr.mxu0 0.0
  %3785 = vmatpush1.xpose.msra.mxu0 0.0
  %3786 = vmatprep.subr.mxu0 0.0
  %3787 = vmatpush1.xpose.msra.mxu0 0.0
  %3788 = vmatprep.subr.mxu0 0.0
  %3789 = vmatpush1.xpose.msra.mxu0 0.0
  %3790 = vmatprep.subr.mxu0 0.0
  %3791 = vmatpush1.xpose.msra.mxu0 0.0
  %3792 = vmatprep.subr.mxu0 0.0
  %3793 = vmatpush1.xpose.msra.mxu0 0.0
  %3794 = vmatprep.subr.mxu0 0.0
  %3795 = vmatpush1.xpose.msra.mxu0 0.0
  %3796 = vmatprep.subr.mxu0 0.0
  %3797 = vmatpush1.xpose.msra.mxu0 0.0
  %3798 = vmatprep.subr.mxu0 0.0
  %3799 = vmatpush1.xpose.msra.mxu0 0.0
  %3800 = vmatprep.mubr.f32.mxu0 0.0
  %3801 = vmatmul.mubr.f32.gmra.mrb[0].mxu0 %v3728
  %v3802 = vpop.f32.mrb[0].mxu0
  %v3803 = vadd.f32 0.0, %v3802
  %v3804 = vpop.f32.mrb[0].mxu0
  %3805 = vmatprep.mubr.f32.mxu0 0.0
  %3806 = vmatmul.mubr.f32.gmra.mrb[0].mxu0 %v3730
  %v3807 = vpop.f32.mrb[0].mxu0
  %v3808 = vadd.f32 0.0, %v3807
  %v3809 = vpop.f32.mrb[0].mxu0
  %3810 = vdwg.mxu0
  %3811 = vrot.lane.b32.xlu0 %v2750, 96
  %v3812 = vpop.permute.xlu0 %3811
  %3813 = vrot.lane.b32.xlu0 %v2755, 96
  %v3814 = vpop.permute.xlu0 %3813
  %3815 = vrot.lane.b32.xlu0 %v2835, 96
  %v3816 = vpop.permute.xlu0 %3815
  %3817 = vrot.lane.b32.xlu0 %v2840, 96
  %v3818 = vpop.permute.xlu0 %3817
  %v3819 = vsel %vm22, %v3812, 0
  %v3821 = vsel %vm22, %v3814, 0
  %v3823 = vsel %vm22, %v3816, 0
  %v3825 = vsel %vm22, %v3818, 0
  %3827 = vmatprep.subr.mxu0 0.0
  %3828 = vmatpush1.xpose.msra.mxu0 %v3823
  %3829 = vmatprep.subr.mxu0 0.0
  %3830 = vmatpush1.xpose.msra.mxu0 %v3825
  %3831 = vmatprep.subr.mxu0 0.0
  %3832 = vmatpush1.xpose.msra.mxu0 0.0
  %3833 = vmatprep.subr.mxu0 0.0
  %3834 = vmatpush1.xpose.msra.mxu0 0.0
  %3835 = vmatprep.subr.mxu0 0.0
  %3836 = vmatpush1.xpose.msra.mxu0 0.0
  %3837 = vmatprep.subr.mxu0 0.0
  %3838 = vmatpush1.xpose.msra.mxu0 0.0
  %3839 = vmatprep.subr.mxu0 0.0
  %3840 = vmatpush1.xpose.msra.mxu0 0.0
  %3841 = vmatprep.subr.mxu0 0.0
  %3842 = vmatpush1.xpose.msra.mxu0 0.0
  %3843 = vmatprep.subr.mxu0 0.0
  %3844 = vmatpush1.xpose.msra.mxu0 0.0
  %3845 = vmatprep.subr.mxu0 0.0
  %3846 = vmatpush1.xpose.msra.mxu0 0.0
  %3847 = vmatprep.subr.mxu0 0.0
  %3848 = vmatpush1.xpose.msra.mxu0 0.0
  %3849 = vmatprep.subr.mxu0 0.0
  %3850 = vmatpush1.xpose.msra.mxu0 0.0
  %3851 = vmatprep.subr.mxu0 0.0
  %3852 = vmatpush1.xpose.msra.mxu0 0.0
  %3853 = vmatprep.subr.mxu0 0.0
  %3854 = vmatpush1.xpose.msra.mxu0 0.0
  %3855 = vmatprep.subr.mxu0 0.0
  %3856 = vmatpush1.xpose.msra.mxu0 0.0
  %3857 = vmatprep.subr.mxu0 0.0
  %3858 = vmatpush1.xpose.msra.mxu0 0.0
  %3859 = vmatprep.subr.mxu0 0.0
  %3860 = vmatpush1.xpose.msra.mxu0 0.0
  %3861 = vmatprep.subr.mxu0 0.0
  %3862 = vmatpush1.xpose.msra.mxu0 0.0
  %3863 = vmatprep.subr.mxu0 0.0
  %3864 = vmatpush1.xpose.msra.mxu0 0.0
  %3865 = vmatprep.subr.mxu0 0.0
  %3866 = vmatpush1.xpose.msra.mxu0 0.0
  %3867 = vmatprep.subr.mxu0 0.0
  %3868 = vmatpush1.xpose.msra.mxu0 0.0
  %3869 = vmatprep.subr.mxu0 0.0
  %3870 = vmatpush1.xpose.msra.mxu0 0.0
  %3871 = vmatprep.subr.mxu0 0.0
  %3872 = vmatpush1.xpose.msra.mxu0 0.0
  %3873 = vmatprep.subr.mxu0 0.0
  %3874 = vmatpush1.xpose.msra.mxu0 0.0
  %3875 = vmatprep.subr.mxu0 0.0
  %3876 = vmatpush1.xpose.msra.mxu0 0.0
  %3877 = vmatprep.subr.mxu0 0.0
  %3878 = vmatpush1.xpose.msra.mxu0 0.0
  %3879 = vmatprep.subr.mxu0 0.0
  %3880 = vmatpush1.xpose.msra.mxu0 0.0
  %3881 = vmatprep.subr.mxu0 0.0
  %3882 = vmatpush1.xpose.msra.mxu0 0.0
  %3883 = vmatprep.subr.mxu0 0.0
  %3884 = vmatpush1.xpose.msra.mxu0 0.0
  %3885 = vmatprep.subr.mxu0 0.0
  %3886 = vmatpush1.xpose.msra.mxu0 0.0
  %3887 = vmatprep.subr.mxu0 0.0
  %3888 = vmatpush1.xpose.msra.mxu0 0.0
  %3889 = vmatprep.subr.mxu0 0.0
  %3890 = vmatpush1.xpose.msra.mxu0 0.0
  %3891 = vmatprep.mubr.f32.mxu0 0.0
  %3892 = vmatmul.mubr.f32.gmra.mrb[0].mxu0 %v3819
  %v3893 = vpop.f32.mrb[0].mxu0
  %v3894 = vadd.f32 0.0, %v3893
  %v3895 = vpop.f32.mrb[0].mxu0
  %3896 = vmatprep.mubr.f32.mxu0 0.0
  %3897 = vmatmul.mubr.f32.gmra.mrb[0].mxu0 %v3821
  %v3898 = vpop.f32.mrb[0].mxu0
  %v3899 = vadd.f32 0.0, %v3898
  %v3900 = vpop.f32.mrb[0].mxu0
  %3901 = vdwg.mxu0
  %v3902 = vsel %vm137, -1e+09, %v3803
  %v3903 = vsel %vm138, -1e+09, %v3808
  %v3904 = vsel %vm137, -1e+09, %v3894
  %v3905 = vsel %vm138, -1e+09, %v3899
  %v3906 = vsel %vm22, %v3902, -inf
  %3907 = vmax.xlane.f32.xlu0 %v3906
  %v3908 = vpop.xlane.xlu0 %3907
  %v3909 = vsel %vm22, %v3903, -inf
  %3910 = vmax.xlane.f32.xlu0 %v3909
  %v3911 = vpop.xlane.xlu0 %3910
  %v3912 = vsel %vm22, %v3904, -inf
  %3913 = vmax.xlane.f32.xlu0 %v3912
  %v3914 = vpop.xlane.xlu0 %3913
  %v3915 = vsel %vm22, %v3905, -inf
  %3916 = vmax.xlane.f32.xlu0 %v3915
  %v3917 = vpop.xlane.xlu0 %3916
  %v3918 = vsub.f32 %v3902, %v3908
  %v3919 = vsub.f32 %v3903, %v3911
  %v3920 = vsub.f32 %v3904, %v3914
  %v3921 = vsub.f32 %v3905, %v3917
  %v3922 = vmul.f32 %v3918, 1.442695
  %v3923 = vpow.pop %v3922
  %v3924 = vmul.f32 %v3919, 1.442695
  %v3925 = vpow.pop %v3924
  %v3926 = vmul.f32 %v3920, 1.442695
  %v3927 = vpow.pop %v3926
  %v3928 = vmul.f32 %v3921, 1.442695
  %v3929 = vpow.pop %v3928
  %v3930 = vsel %vm22, %v3923, 0.0
  %3931 = vadd.xlane.f32.xlu0 %v3930
  %v3932 = vpop.xlane.xlu0 %3931
  %v3933 = vsel %vm22, %v3925, 0.0
  %3934 = vadd.xlane.f32.xlu0 %v3933
  %v3935 = vpop.xlane.xlu0 %3934
  %v3936 = vsel %vm22, %v3927, 0.0
  %3937 = vadd.xlane.f32.xlu0 %v3936
  %v3938 = vpop.xlane.xlu0 %3937
  %v3939 = vsel %vm22, %v3929, 0.0
  %3940 = vadd.xlane.f32.xlu0 %v3939
  %v3941 = vpop.xlane.xlu0 %3940
  %v3942 = vrcp.pop %v3932
  %v3943 = vrcp.pop %v3935
  %v3944 = vrcp.pop %v3938
  %v3945 = vrcp.pop %v3941
  %v3946 = vmul.f32 %v3923, %v3942
  %v3947 = vmul.f32 %v3925, %v3943
  %v3948 = vmul.f32 %v3927, %v3944
  %v3949 = vmul.f32 %v3929, %v3945
  %3950 = vrot.lane.b32.xlu0 %v2910, 96
  %v3951 = vpop.permute.xlu0 %3950
  %3952 = vrot.lane.b32.xlu0 %v2915, 96
  %v3953 = vpop.permute.xlu0 %3952
  %v3957 = vsel %vm22, %v3946, 0
  %v3960 = vsel %vm22, %v3947, 0
  %3962 = vmatprep.subr.mxu0 0.0
  %3963 = vmatpush1.msra.mxu0 %v3951
  %3964 = vmatprep.subr.mxu0 0.0
  %3965 = vmatpush1.msra.mxu0 %v3953
  %3966 = vmatprep.subr.mxu0 0.0
  %3967 = vmatpush1.msra.mxu0 0.0
  %3968 = vmatprep.subr.mxu0 0.0
  %3969 = vmatpush1.msra.mxu0 0.0
  %3970 = vmatprep.subr.mxu0 0.0
  %3971 = vmatpush1.msra.mxu0 0.0
  %3972 = vmatprep.subr.mxu0 0.0
  %3973 = vmatpush1.msra.mxu0 0.0
  %3974 = vmatprep.subr.mxu0 0.0
  %3975 = vmatpush1.msra.mxu0 0.0
  %3976 = vmatprep.subr.mxu0 0.0
  %3977 = vmatpush1.msra.mxu0 0.0
  %3978 = vmatprep.subr.mxu0 0.0
  %3979 = vmatpush1.msra.mxu0 0.0
  %3980 = vmatprep.subr.mxu0 0.0
  %3981 = vmatpush1.msra.mxu0 0.0
  %3982 = vmatprep.subr.mxu0 0.0
  %3983 = vmatpush1.msra.mxu0 0.0
  %3984 = vmatprep.subr.mxu0 0.0
  %3985 = vmatpush1.msra.mxu0 0.0
  %3986 = vmatprep.subr.mxu0 0.0
  %3987 = vmatpush1.msra.mxu0 0.0
  %3988 = vmatprep.subr.mxu0 0.0
  %3989 = vmatpush1.msra.mxu0 0.0
  %3990 = vmatprep.subr.mxu0 0.0
  %3991 = vmatpush1.msra.mxu0 0.0
  %3992 = vmatprep.subr.mxu0 0.0
  %3993 = vmatpush1.msra.mxu0 0.0
  %3994 = vmatprep.subr.mxu0 0.0
  %3995 = vmatpush1.msra.mxu0 0.0
  %3996 = vmatprep.subr.mxu0 0.0
  %3997 = vmatpush1.msra.mxu0 0.0
  %3998 = vmatprep.subr.mxu0 0.0
  %3999 = vmatpush1.msra.mxu0 0.0
  %4000 = vmatprep.subr.mxu0 0.0
  %4001 = vmatpush1.msra.mxu0 0.0
  %4002 = vmatprep.subr.mxu0 0.0
  %4003 = vmatpush1.msra.mxu0 0.0
  %4004 = vmatprep.subr.mxu0 0.0
  %4005 = vmatpush1.msra.mxu0 0.0
  %4006 = vmatprep.subr.mxu0 0.0
  %4007 = vmatpush1.msra.mxu0 0.0
  %4008 = vmatprep.subr.mxu0 0.0
  %4009 = vmatpush1.msra.mxu0 0.0
  %4010 = vmatprep.subr.mxu0 0.0
  %4011 = vmatpush1.msra.mxu0 0.0
  %4012 = vmatprep.subr.mxu0 0.0
  %4013 = vmatpush1.msra.mxu0 0.0
  %4014 = vmatprep.subr.mxu0 0.0
  %4015 = vmatpush1.msra.mxu0 0.0
  %4016 = vmatprep.subr.mxu0 0.0
  %4017 = vmatpush1.msra.mxu0 0.0
  %4018 = vmatprep.subr.mxu0 0.0
  %4019 = vmatpush1.msra.mxu0 0.0
  %4020 = vmatprep.subr.mxu0 0.0
  %4021 = vmatpush1.msra.mxu0 0.0
  %4022 = vmatprep.subr.mxu0 0.0
  %4023 = vmatpush1.msra.mxu0 0.0
  %4024 = vmatprep.subr.mxu0 0.0
  %4025 = vmatpush1.msra.mxu0 0.0
  %4026 = vmatprep.mubr.f32.mxu0 0.0
  %4027 = vmatmul.mubr.f32.gmra.mrb[0].mxu0 %v3957
  %v4028 = vpop.f32.mrb[0].mxu0
  %v4029 = vadd.f32 0.0, %v4028
  %v4030 = vpop.f32.mrb[0].mxu0
  %4031 = vmatprep.mubr.f32.mxu0 0.0
  %4032 = vmatmul.mubr.f32.gmra.mrb[0].mxu0 %v3960
  %v4033 = vpop.f32.mrb[0].mxu0
  %v4034 = vadd.f32 0.0, %v4033
  %v4035 = vpop.f32.mrb[0].mxu0
  %4036 = vdwg.mxu0
  %4037 = vrot.lane.b32.xlu0 %v2920, 96
  %v4038 = vpop.permute.xlu0 %4037
  %4039 = vrot.lane.b32.xlu0 %v2925, 96
  %v4040 = vpop.permute.xlu0 %4039
  %v4044 = vsel %vm22, %v3948, 0
  %v4047 = vsel %vm22, %v3949, 0
  %4049 = vmatprep.subr.mxu0 0.0
  %4050 = vmatpush1.msra.mxu0 %v4038
  %4051 = vmatprep.subr.mxu0 0.0
  %4052 = vmatpush1.msra.mxu0 %v4040
  %4053 = vmatprep.subr.mxu0 0.0
  %4054 = vmatpush1.msra.mxu0 0.0
  %4055 = vmatprep.subr.mxu0 0.0
  %4056 = vmatpush1.msra.mxu0 0.0
  %4057 = vmatprep.subr.mxu0 0.0
  %4058 = vmatpush1.msra.mxu0 0.0
  %4059 = vmatprep.subr.mxu0 0.0
  %4060 = vmatpush1.msra.mxu0 0.0
  %4061 = vmatprep.subr.mxu0 0.0
  %4062 = vmatpush1.msra.mxu0 0.0
  %4063 = vmatprep.subr.mxu0 0.0
  %4064 = vmatpush1.msra.mxu0 0.0
  %4065 = vmatprep.subr.mxu0 0.0
  %4066 = vmatpush1.msra.mxu0 0.0
  %4067 = vmatprep.subr.mxu0 0.0
  %4068 = vmatpush1.msra.mxu0 0.0
  %4069 = vmatprep.subr.mxu0 0.0
  %4070 = vmatpush1.msra.mxu0 0.0
  %4071 = vmatprep.subr.mxu0 0.0
  %4072 = vmatpush1.msra.mxu0 0.0
  %4073 = vmatprep.subr.mxu0 0.0
  %4074 = vmatpush1.msra.mxu0 0.0
  %4075 = vmatprep.subr.mxu0 0.0
  %4076 = vmatpush1.msra.mxu0 0.0
  %4077 = vmatprep.subr.mxu0 0.0
  %4078 = vmatpush1.msra.mxu0 0.0
  %4079 = vmatprep.subr.mxu0 0.0
  %4080 = vmatpush1.msra.mxu0 0.0
  %4081 = vmatprep.subr.mxu0 0.0
  %4082 = vmatpush1.msra.mxu0 0.0
  %4083 = vmatprep.subr.mxu0 0.0
  %4084 = vmatpush1.msra.mxu0 0.0
  %4085 = vmatprep.subr.mxu0 0.0
  %4086 = vmatpush1.msra.mxu0 0.0
  %4087 = vmatprep.subr.mxu0 0.0
  %4088 = vmatpush1.msra.mxu0 0.0
  %4089 = vmatprep.subr.mxu0 0.0
  %4090 = vmatpush1.msra.mxu0 0.0
  %4091 = vmatprep.subr.mxu0 0.0
  %4092 = vmatpush1.msra.mxu0 0.0
  %4093 = vmatprep.subr.mxu0 0.0
  %4094 = vmatpush1.msra.mxu0 0.0
  %4095 = vmatprep.subr.mxu0 0.0
  %4096 = vmatpush1.msra.mxu0 0.0
  %4097 = vmatprep.subr.mxu0 0.0
  %4098 = vmatpush1.msra.mxu0 0.0
  %4099 = vmatprep.subr.mxu0 0.0
  %4100 = vmatpush1.msra.mxu0 0.0
  %4101 = vmatprep.subr.mxu0 0.0
  %4102 = vmatpush1.msra.mxu0 0.0
  %4103 = vmatprep.subr.mxu0 0.0
  %4104 = vmatpush1.msra.mxu0 0.0
  %4105 = vmatprep.subr.mxu0 0.0
  %4106 = vmatpush1.msra.mxu0 0.0
  %4107 = vmatprep.subr.mxu0 0.0
  %4108 = vmatpush1.msra.mxu0 0.0
  %4109 = vmatprep.subr.mxu0 0.0
  %4110 = vmatpush1.msra.mxu0 0.0
  %4111 = vmatprep.subr.mxu0 0.0
  %4112 = vmatpush1.msra.mxu0 0.0
  %4113 = vmatprep.mubr.f32.mxu0 0.0
  %4114 = vmatmul.mubr.f32.gmra.mrb[0].mxu0 %v4044
  %v4115 = vpop.f32.mrb[0].mxu0
  %v4116 = vadd.f32 0.0, %v4115
  %v4117 = vpop.f32.mrb[0].mxu0
  %4118 = vmatprep.mubr.f32.mxu0 0.0
  %4119 = vmatmul.mubr.f32.gmra.mrb[0].mxu0 %v4047
  %v4120 = vpop.f32.mrb[0].mxu0
  %v4121 = vadd.f32 0.0, %v4120
  %v4122 = vpop.f32.mrb[0].mxu0
  %4123 = vdwg.mxu0
  %4124 = vrot.lane.b32.xlu0 %v2740, 80
  %v4125 = vpop.permute.xlu0 %4124
  %4126 = vrot.lane.b32.xlu0 %v2745, 80
  %v4127 = vpop.permute.xlu0 %4126
  %4128 = vrot.lane.b32.xlu0 %v2825, 80
  %v4129 = vpop.permute.xlu0 %4128
  %4130 = vrot.lane.b32.xlu0 %v2830, 80
  %v4131 = vpop.permute.xlu0 %4130
  %v4132 = vsel %vm22, %v4125, 0
  %v4134 = vsel %vm22, %v4127, 0
  %v4136 = vsel %vm22, %v4129, 0
  %v4138 = vsel %vm22, %v4131, 0
  %4140 = vmatprep.subr.mxu0 0.0
  %4141 = vmatpush1.xpose.msra.mxu0 %v4136
  %4142 = vmatprep.subr.mxu0 0.0
  %4143 = vmatpush1.xpose.msra.mxu0 %v4138
  %4144 = vmatprep.subr.mxu0 0.0
  %4145 = vmatpush1.xpose.msra.mxu0 0.0
  %4146 = vmatprep.subr.mxu0 0.0
  %4147 = vmatpush1.xpose.msra.mxu0 0.0
  %4148 = vmatprep.subr.mxu0 0.0
  %4149 = vmatpush1.xpose.msra.mxu0 0.0
  %4150 = vmatprep.subr.mxu0 0.0
  %4151 = vmatpush1.xpose.msra.mxu0 0.0
  %4152 = vmatprep.subr.mxu0 0.0
  %4153 = vmatpush1.xpose.msra.mxu0 0.0
  %4154 = vmatprep.subr.mxu0 0.0
  %4155 = vmatpush1.xpose.msra.mxu0 0.0
  %4156 = vmatprep.subr.mxu0 0.0
  %4157 = vmatpush1.xpose.msra.mxu0 0.0
  %4158 = vmatprep.subr.mxu0 0.0
  %4159 = vmatpush1.xpose.msra.mxu0 0.0
  %4160 = vmatprep.subr.mxu0 0.0
  %4161 = vmatpush1.xpose.msra.mxu0 0.0
  %4162 = vmatprep.subr.mxu0 0.0
  %4163 = vmatpush1.xpose.msra.mxu0 0.0
  %4164 = vmatprep.subr.mxu0 0.0
  %4165 = vmatpush1.xpose.msra.mxu0 0.0
  %4166 = vmatprep.subr.mxu0 0.0
  %4167 = vmatpush1.xpose.msra.mxu0 0.0
  %4168 = vmatprep.subr.mxu0 0.0
  %4169 = vmatpush1.xpose.msra.mxu0 0.0
  %4170 = vmatprep.subr.mxu0 0.0
  %4171 = vmatpush1.xpose.msra.mxu0 0.0
  %4172 = vmatprep.subr.mxu0 0.0
  %4173 = vmatpush1.xpose.msra.mxu0 0.0
  %4174 = vmatprep.subr.mxu0 0.0
  %4175 = vmatpush1.xpose.msra.mxu0 0.0
  %4176 = vmatprep.subr.mxu0 0.0
  %4177 = vmatpush1.xpose.msra.mxu0 0.0
  %4178 = vmatprep.subr.mxu0 0.0
  %4179 = vmatpush1.xpose.msra.mxu0 0.0
  %4180 = vmatprep.subr.mxu0 0.0
  %4181 = vmatpush1.xpose.msra.mxu0 0.0
  %4182 = vmatprep.subr.mxu0 0.0
  %4183 = vmatpush1.xpose.msra.mxu0 0.0
  %4184 = vmatprep.subr.mxu0 0.0
  %4185 = vmatpush1.xpose.msra.mxu0 0.0
  %4186 = vmatprep.subr.mxu0 0.0
  %4187 = vmatpush1.xpose.msra.mxu0 0.0
  %4188 = vmatprep.subr.mxu0 0.0
  %4189 = vmatpush1.xpose.msra.mxu0 0.0
  %4190 = vmatprep.subr.mxu0 0.0
  %4191 = vmatpush1.xpose.msra.mxu0 0.0
  %4192 = vmatprep.subr.mxu0 0.0
  %4193 = vmatpush1.xpose.msra.mxu0 0.0
  %4194 = vmatprep.subr.mxu0 0.0
  %4195 = vmatpush1.xpose.msra.mxu0 0.0
  %4196 = vmatprep.subr.mxu0 0.0
  %4197 = vmatpush1.xpose.msra.mxu0 0.0
  %4198 = vmatprep.subr.mxu0 0.0
  %4199 = vmatpush1.xpose.msra.mxu0 0.0
  %4200 = vmatprep.subr.mxu0 0.0
  %4201 = vmatpush1.xpose.msra.mxu0 0.0
  %4202 = vmatprep.subr.mxu0 0.0
  %4203 = vmatpush1.xpose.msra.mxu0 0.0
  %4204 = vmatprep.mubr.f32.mxu0 0.0
  %4205 = vmatmul.mubr.f32.gmra.mrb[0].mxu0 %v4132
  %v4206 = vpop.f32.mrb[0].mxu0
  %v4207 = vadd.f32 0.0, %v4206
  %v4208 = vpop.f32.mrb[0].mxu0
  %4209 = vmatprep.mubr.f32.mxu0 0.0
  %4210 = vmatmul.mubr.f32.gmra.mrb[0].mxu0 %v4134
  %v4211 = vpop.f32.mrb[0].mxu0
  %v4212 = vadd.f32 0.0, %v4211
  %v4213 = vpop.f32.mrb[0].mxu0
  %4214 = vdwg.mxu0
  %4215 = vrot.lane.b32.xlu0 %v2750, 80
  %v4216 = vpop.permute.xlu0 %4215
  %4217 = vrot.lane.b32.xlu0 %v2755, 80
  %v4218 = vpop.permute.xlu0 %4217
  %4219 = vrot.lane.b32.xlu0 %v2835, 80
  %v4220 = vpop.permute.xlu0 %4219
  %4221 = vrot.lane.b32.xlu0 %v2840, 80
  %v4222 = vpop.permute.xlu0 %4221
  %v4223 = vsel %vm22, %v4216, 0
  %v4225 = vsel %vm22, %v4218, 0
  %v4227 = vsel %vm22, %v4220, 0
  %v4229 = vsel %vm22, %v4222, 0
  %4231 = vmatprep.subr.mxu0 0.0
  %4232 = vmatpush1.xpose.msra.mxu0 %v4227
  %4233 = vmatprep.subr.mxu0 0.0
  %4234 = vmatpush1.xpose.msra.mxu0 %v4229
  %4235 = vmatprep.subr.mxu0 0.0
  %4236 = vmatpush1.xpose.msra.mxu0 0.0
  %4237 = vmatprep.subr.mxu0 0.0
  %4238 = vmatpush1.xpose.msra.mxu0 0.0
  %4239 = vmatprep.subr.mxu0 0.0
  %4240 = vmatpush1.xpose.msra.mxu0 0.0
  %4241 = vmatprep.subr.mxu0 0.0
  %4242 = vmatpush1.xpose.msra.mxu0 0.0
  %4243 = vmatprep.subr.mxu0 0.0
  %4244 = vmatpush1.xpose.msra.mxu0 0.0
  %4245 = vmatprep.subr.mxu0 0.0
  %4246 = vmatpush1.xpose.msra.mxu0 0.0
  %4247 = vmatprep.subr.mxu0 0.0
  %4248 = vmatpush1.xpose.msra.mxu0 0.0
  %4249 = vmatprep.subr.mxu0 0.0
  %4250 = vmatpush1.xpose.msra.mxu0 0.0
  %4251 = vmatprep.subr.mxu0 0.0
  %4252 = vmatpush1.xpose.msra.mxu0 0.0
  %4253 = vmatprep.subr.mxu0 0.0
  %4254 = vmatpush1.xpose.msra.mxu0 0.0
  %4255 = vmatprep.subr.mxu0 0.0
  %4256 = vmatpush1.xpose.msra.mxu0 0.0
  %4257 = vmatprep.subr.mxu0 0.0
  %4258 = vmatpush1.xpose.msra.mxu0 0.0
  %4259 = vmatprep.subr.mxu0 0.0
  %4260 = vmatpush1.xpose.msra.mxu0 0.0
  %4261 = vmatprep.subr.mxu0 0.0
  %4262 = vmatpush1.xpose.msra.mxu0 0.0
  %4263 = vmatprep.subr.mxu0 0.0
  %4264 = vmatpush1.xpose.msra.mxu0 0.0
  %4265 = vmatprep.subr.mxu0 0.0
  %4266 = vmatpush1.xpose.msra.mxu0 0.0
  %4267 = vmatprep.subr.mxu0 0.0
  %4268 = vmatpush1.xpose.msra.mxu0 0.0
  %4269 = vmatprep.subr.mxu0 0.0
  %4270 = vmatpush1.xpose.msra.mxu0 0.0
  %4271 = vmatprep.subr.mxu0 0.0
  %4272 = vmatpush1.xpose.msra.mxu0 0.0
  %4273 = vmatprep.subr.mxu0 0.0
  %4274 = vmatpush1.xpose.msra.mxu0 0.0
  %4275 = vmatprep.subr.mxu0 0.0
  %4276 = vmatpush1.xpose.msra.mxu0 0.0
  %4277 = vmatprep.subr.mxu0 0.0
  %4278 = vmatpush1.xpose.msra.mxu0 0.0
  %4279 = vmatprep.subr.mxu0 0.0
  %4280 = vmatpush1.xpose.msra.mxu0 0.0
  %4281 = vmatprep.subr.mxu0 0.0
  %4282 = vmatpush1.xpose.msra.mxu0 0.0
  %4283 = vmatprep.subr.mxu0 0.0
  %4284 = vmatpush1.xpose.msra.mxu0 0.0
  %4285 = vmatprep.subr.mxu0 0.0
  %4286 = vmatpush1.xpose.msra.mxu0 0.0
  %4287 = vmatprep.subr.mxu0 0.0
  %4288 = vmatpush1.xpose.msra.mxu0 0.0
  %4289 = vmatprep.subr.mxu0 0.0
  %4290 = vmatpush1.xpose.msra.mxu0 0.0
  %4291 = vmatprep.subr.mxu0 0.0
  %4292 = vmatpush1.xpose.msra.mxu0 0.0
  %4293 = vmatprep.subr.mxu0 0.0
  %4294 = vmatpush1.xpose.msra.mxu0 0.0
  %4295 = vmatprep.mubr.f32.mxu0 0.0
  %4296 = vmatmul.mubr.f32.gmra.mrb[0].mxu0 %v4223
  %v4297 = vpop.f32.mrb[0].mxu0
  %v4298 = vadd.f32 0.0, %v4297
  %v4299 = vpop.f32.mrb[0].mxu0
  %4300 = vmatprep.mubr.f32.mxu0 0.0
  %4301 = vmatmul.mubr.f32.gmra.mrb[0].mxu0 %v4225
  %v4302 = vpop.f32.mrb[0].mxu0
  %v4303 = vadd.f32 0.0, %v4302
  %v4304 = vpop.f32.mrb[0].mxu0
  %4305 = vdwg.mxu0
  %v4306 = vsel %vm137, -1e+09, %v4207
  %v4307 = vsel %vm138, -1e+09, %v4212
  %v4308 = vsel %vm137, -1e+09, %v4298
  %v4309 = vsel %vm138, -1e+09, %v4303
  %v4310 = vsel %vm22, %v4306, -inf
  %4311 = vmax.xlane.f32.xlu0 %v4310
  %v4312 = vpop.xlane.xlu0 %4311
  %v4313 = vsel %vm22, %v4307, -inf
  %4314 = vmax.xlane.f32.xlu0 %v4313
  %v4315 = vpop.xlane.xlu0 %4314
  %v4316 = vsel %vm22, %v4308, -inf
  %4317 = vmax.xlane.f32.xlu0 %v4316
  %v4318 = vpop.xlane.xlu0 %4317
  %v4319 = vsel %vm22, %v4309, -inf
  %4320 = vmax.xlane.f32.xlu0 %v4319
  %v4321 = vpop.xlane.xlu0 %4320
  %v4322 = vsub.f32 %v4306, %v4312
  %v4323 = vsub.f32 %v4307, %v4315
  %v4324 = vsub.f32 %v4308, %v4318
  %v4325 = vsub.f32 %v4309, %v4321
  %v4326 = vmul.f32 %v4322, 1.442695
  %v4327 = vpow.pop %v4326
  %v4328 = vmul.f32 %v4323, 1.442695
  %v4329 = vpow.pop %v4328
  %v4330 = vmul.f32 %v4324, 1.442695
  %v4331 = vpow.pop %v4330
  %v4332 = vmul.f32 %v4325, 1.442695
  %v4333 = vpow.pop %v4332
  %v4334 = vsel %vm22, %v4327, 0.0
  %4335 = vadd.xlane.f32.xlu0 %v4334
  %v4336 = vpop.xlane.xlu0 %4335
  %v4337 = vsel %vm22, %v4329, 0.0
  %4338 = vadd.xlane.f32.xlu0 %v4337
  %v4339 = vpop.xlane.xlu0 %4338
  %v4340 = vsel %vm22, %v4331, 0.0
  %4341 = vadd.xlane.f32.xlu0 %v4340
  %v4342 = vpop.xlane.xlu0 %4341
  %v4343 = vsel %vm22, %v4333, 0.0
  %4344 = vadd.xlane.f32.xlu0 %v4343
  %v4345 = vpop.xlane.xlu0 %4344
  %v4346 = vrcp.pop %v4336
  %v4347 = vrcp.pop %v4339
  %v4348 = vrcp.pop %v4342
  %v4349 = vrcp.pop %v4345
  %v4350 = vmul.f32 %v4327, %v4346
  %v4351 = vmul.f32 %v4329, %v4347
  %v4352 = vmul.f32 %v4331, %v4348
  %v4353 = vmul.f32 %v4333, %v4349
  %4354 = vrot.lane.b32.xlu0 %v2910, 80
  %v4355 = vpop.permute.xlu0 %4354
  %4356 = vrot.lane.b32.xlu0 %v2915, 80
  %v4357 = vpop.permute.xlu0 %4356
  %v4361 = vsel %vm22, %v4350, 0
  %v4364 = vsel %vm22, %v4351, 0
  %4366 = vmatprep.subr.mxu0 0.0
  %4367 = vmatpush1.msra.mxu0 %v4355
  %4368 = vmatprep.subr.mxu0 0.0
  %4369 = vmatpush1.msra.mxu0 %v4357
  %4370 = vmatprep.subr.mxu0 0.0
  %4371 = vmatpush1.msra.mxu0 0.0
  %4372 = vmatprep.subr.mxu0 0.0
  %4373 = vmatpush1.msra.mxu0 0.0
  %4374 = vmatprep.subr.mxu0 0.0
  %4375 = vmatpush1.msra.mxu0 0.0
  %4376 = vmatprep.subr.mxu0 0.0
  %4377 = vmatpush1.msra.mxu0 0.0
  %4378 = vmatprep.subr.mxu0 0.0
  %4379 = vmatpush1.msra.mxu0 0.0
  %4380 = vmatprep.subr.mxu0 0.0
  %4381 = vmatpush1.msra.mxu0 0.0
  %4382 = vmatprep.subr.mxu0 0.0
  %4383 = vmatpush1.msra.mxu0 0.0
  %4384 = vmatprep.subr.mxu0 0.0
  %4385 = vmatpush1.msra.mxu0 0.0
  %4386 = vmatprep.subr.mxu0 0.0
  %4387 = vmatpush1.msra.mxu0 0.0
  %4388 = vmatprep.subr.mxu0 0.0
  %4389 = vmatpush1.msra.mxu0 0.0
  %4390 = vmatprep.subr.mxu0 0.0
  %4391 = vmatpush1.msra.mxu0 0.0
  %4392 = vmatprep.subr.mxu0 0.0
  %4393 = vmatpush1.msra.mxu0 0.0
  %4394 = vmatprep.subr.mxu0 0.0
  %4395 = vmatpush1.msra.mxu0 0.0
  %4396 = vmatprep.subr.mxu0 0.0
  %4397 = vmatpush1.msra.mxu0 0.0
  %4398 = vmatprep.subr.mxu0 0.0
  %4399 = vmatpush1.msra.mxu0 0.0
  %4400 = vmatprep.subr.mxu0 0.0
  %4401 = vmatpush1.msra.mxu0 0.0
  %4402 = vmatprep.subr.mxu0 0.0
  %4403 = vmatpush1.msra.mxu0 0.0
  %4404 = vmatprep.subr.mxu0 0.0
  %4405 = vmatpush1.msra.mxu0 0.0
  %4406 = vmatprep.subr.mxu0 0.0
  %4407 = vmatpush1.msra.mxu0 0.0
  %4408 = vmatprep.subr.mxu0 0.0
  %4409 = vmatpush1.msra.mxu0 0.0
  %4410 = vmatprep.subr.mxu0 0.0
  %4411 = vmatpush1.msra.mxu0 0.0
  %4412 = vmatprep.subr.mxu0 0.0
  %4413 = vmatpush1.msra.mxu0 0.0
  %4414 = vmatprep.subr.mxu0 0.0
  %4415 = vmatpush1.msra.mxu0 0.0
  %4416 = vmatprep.subr.mxu0 0.0
  %4417 = vmatpush1.msra.mxu0 0.0
  %4418 = vmatprep.subr.mxu0 0.0
  %4419 = vmatpush1.msra.mxu0 0.0
  %4420 = vmatprep.subr.mxu0 0.0
  %4421 = vmatpush1.msra.mxu0 0.0
  %4422 = vmatprep.subr.mxu0 0.0
  %4423 = vmatpush1.msra.mxu0 0.0
  %4424 = vmatprep.subr.mxu0 0.0
  %4425 = vmatpush1.msra.mxu0 0.0
  %4426 = vmatprep.subr.mxu0 0.0
  %4427 = vmatpush1.msra.mxu0 0.0
  %4428 = vmatprep.subr.mxu0 0.0
  %4429 = vmatpush1.msra.mxu0 0.0
  %4430 = vmatprep.mubr.f32.mxu0 0.0
  %4431 = vmatmul.mubr.f32.gmra.mrb[0].mxu0 %v4361
  %v4432 = vpop.f32.mrb[0].mxu0
  %v4433 = vadd.f32 0.0, %v4432
  %v4434 = vpop.f32.mrb[0].mxu0
  %4435 = vmatprep.mubr.f32.mxu0 0.0
  %4436 = vmatmul.mubr.f32.gmra.mrb[0].mxu0 %v4364
  %v4437 = vpop.f32.mrb[0].mxu0
  %v4438 = vadd.f32 0.0, %v4437
  %v4439 = vpop.f32.mrb[0].mxu0
  %4440 = vdwg.mxu0
  %4441 = vrot.lane.b32.xlu0 %v2920, 80
  %v4442 = vpop.permute.xlu0 %4441
  %4443 = vrot.lane.b32.xlu0 %v2925, 80
  %v4444 = vpop.permute.xlu0 %4443
  %v4448 = vsel %vm22, %v4352, 0
  %v4451 = vsel %vm22, %v4353, 0
  %4453 = vmatprep.subr.mxu0 0.0
  %4454 = vmatpush1.msra.mxu0 %v4442
  %4455 = vmatprep.subr.mxu0 0.0
  %4456 = vmatpush1.msra.mxu0 %v4444
  %4457 = vmatprep.subr.mxu0 0.0
  %4458 = vmatpush1.msra.mxu0 0.0
  %4459 = vmatprep.subr.mxu0 0.0
  %4460 = vmatpush1.msra.mxu0 0.0
  %4461 = vmatprep.subr.mxu0 0.0
  %4462 = vmatpush1.msra.mxu0 0.0
  %4463 = vmatprep.subr.mxu0 0.0
  %4464 = vmatpush1.msra.mxu0 0.0
  %4465 = vmatprep.subr.mxu0 0.0
  %4466 = vmatpush1.msra.mxu0 0.0
  %4467 = vmatprep.subr.mxu0 0.0
  %4468 = vmatpush1.msra.mxu0 0.0
  %4469 = vmatprep.subr.mxu0 0.0
  %4470 = vmatpush1.msra.mxu0 0.0
  %4471 = vmatprep.subr.mxu0 0.0
  %4472 = vmatpush1.msra.mxu0 0.0
  %4473 = vmatprep.subr.mxu0 0.0
  %4474 = vmatpush1.msra.mxu0 0.0
  %4475 = vmatprep.subr.mxu0 0.0
  %4476 = vmatpush1.msra.mxu0 0.0
  %4477 = vmatprep.subr.mxu0 0.0
  %4478 = vmatpush1.msra.mxu0 0.0
  %4479 = vmatprep.subr.mxu0 0.0
  %4480 = vmatpush1.msra.mxu0 0.0
  %4481 = vmatprep.subr.mxu0 0.0
  %4482 = vmatpush1.msra.mxu0 0.0
  %4483 = vmatprep.subr.mxu0 0.0
  %4484 = vmatpush1.msra.mxu0 0.0
  %4485 = vmatprep.subr.mxu0 0.0
  %4486 = vmatpush1.msra.mxu0 0.0
  %4487 = vmatprep.subr.mxu0 0.0
  %4488 = vmatpush1.msra.mxu0 0.0
  %4489 = vmatprep.subr.mxu0 0.0
  %4490 = vmatpush1.msra.mxu0 0.0
  %4491 = vmatprep.subr.mxu0 0.0
  %4492 = vmatpush1.msra.mxu0 0.0
  %4493 = vmatprep.subr.mxu0 0.0
  %4494 = vmatpush1.msra.mxu0 0.0
  %4495 = vmatprep.subr.mxu0 0.0
  %4496 = vmatpush1.msra.mxu0 0.0
  %4497 = vmatprep.subr.mxu0 0.0
  %4498 = vmatpush1.msra.mxu0 0.0
  %4499 = vmatprep.subr.mxu0 0.0
  %4500 = vmatpush1.msra.mxu0 0.0
  %4501 = vmatprep.subr.mxu0 0.0
  %4502 = vmatpush1.msra.mxu0 0.0
  %4503 = vmatprep.subr.mxu0 0.0
  %4504 = vmatpush1.msra.mxu0 0.0
  %4505 = vmatprep.subr.mxu0 0.0
  %4506 = vmatpush1.msra.mxu0 0.0
  %4507 = vmatprep.subr.mxu0 0.0
  %4508 = vmatpush1.msra.mxu0 0.0
  %4509 = vmatprep.subr.mxu0 0.0
  %4510 = vmatpush1.msra.mxu0 0.0
  %4511 = vmatprep.subr.mxu0 0.0
  %4512 = vmatpush1.msra.mxu0 0.0
  %4513 = vmatprep.subr.mxu0 0.0
  %4514 = vmatpush1.msra.mxu0 0.0
  %4515 = vmatprep.subr.mxu0 0.0
  %4516 = vmatpush1.msra.mxu0 0.0
  %4517 = vmatprep.mubr.f32.mxu0 0.0
  %4518 = vmatmul.mubr.f32.gmra.mrb[0].mxu0 %v4448
  %v4519 = vpop.f32.mrb[0].mxu0
  %v4520 = vadd.f32 0.0, %v4519
  %v4521 = vpop.f32.mrb[0].mxu0
  %4522 = vmatprep.mubr.f32.mxu0 0.0
  %4523 = vmatmul.mubr.f32.gmra.mrb[0].mxu0 %v4451
  %v4524 = vpop.f32.mrb[0].mxu0
  %v4525 = vadd.f32 0.0, %v4524
  %v4526 = vpop.f32.mrb[0].mxu0
  %4527 = vdwg.mxu0
  %4532 = vrot.lane.b32.xlu0 %v3623, 16
  %v4533 = vpop.permute.xlu0 %4532
  %4534 = vrot.lane.b32.xlu0 %v3628, 16
  %v4535 = vpop.permute.xlu0 %4534
  %4536 = vrot.lane.b32.xlu0 %v3712, 16
  %v4537 = vpop.permute.xlu0 %4536
  %4538 = vrot.lane.b32.xlu0 %v3717, 16
  %v4539 = vpop.permute.xlu0 %4538
  %4548 = vrot.lane.b32.xlu0 %v4029, 32
  %v4549 = vpop.permute.xlu0 %4548
  %4550 = vrot.lane.b32.xlu0 %v4034, 32
  %v4551 = vpop.permute.xlu0 %4550
  %4552 = vrot.lane.b32.xlu0 %v4116, 32
  %v4553 = vpop.permute.xlu0 %4552
  %4554 = vrot.lane.b32.xlu0 %v4121, 32
  %v4555 = vpop.permute.xlu0 %4554
  %4564 = vrot.lane.b32.xlu0 %v4433, 48
  %v4565 = vpop.permute.xlu0 %4564
  %4566 = vrot.lane.b32.xlu0 %v4438, 48
  %v4567 = vpop.permute.xlu0 %4566
  %4568 = vrot.lane.b32.xlu0 %v4520, 48
  %v4569 = vpop.permute.xlu0 %4568
  %4570 = vrot.lane.b32.xlu0 %v4525, 48
  %v4571 = vpop.permute.xlu0 %4570
  %v4576 = vsel %vm22, %v3223, %v4533
  %v4577 = vsel %vm22, %v3228, %v4535
  %v4578 = vsel %vm22, %v3304, %v4537
  %v4579 = vsel %vm22, %v3309, %v4539
  %v4580 = vsel %vm175, %v4576, %v4549
  %v4581 = vsel %vm175, %v4577, %v4551
  %v4582 = vsel %vm175, %v4578, %v4553
  %v4583 = vsel %vm175, %v4579, %v4555
  %v4584 = vsel %vm2168, %v4580, %v4565
  %v4585 = vsel %vm2168, %v4581, %v4567
  %v4586 = vsel %vm2168, %v4582, %v4569
  %v4587 = vsel %vm2168, %v4583, %v4571
  %v4589 = vsel %vm2173, %v4584, 0
  %v4592 = vsel %vm2173, %v4585, 0
  %v4595 = vsel %vm2173, %v4586, 0
  %v4598 = vsel %vm2173, %v4587, 0
  %4600 = vmatprep.subr.mxu0 0.0
  %4601 = vmatpush1.msra.mxu0 %v2569
  %4602 = vmatprep.subr.mxu0 0.0
  %4603 = vmatpush1.msra.mxu0 %v2570
  %4604 = vmatprep.subr.mxu0 0.0
  %4605 = vmatpush1.msra.mxu0 %v2571
  %4606 = vmatprep.subr.mxu0 0.0
  %4607 = vmatpush1.msra.mxu0 %v2572
  %4608 = vmatprep.subr.mxu0 0.0
  %4609 = vmatpush1.msra.mxu0 %v2573
  %4610 = vmatprep.subr.mxu0 0.0
  %4611 = vmatpush1.msra.mxu0 %v2574
  %4612 = vmatprep.subr.mxu0 0.0
  %4613 = vmatpush1.msra.mxu0 %v2575
  %4614 = vmatprep.subr.mxu0 0.0
  %4615 = vmatpush1.msra.mxu0 %v2576
  %4616 = vmatprep.subr.mxu0 0.0
  %4617 = vmatpush1.msra.mxu0 0.0
  %4618 = vmatprep.subr.mxu0 0.0
  %4619 = vmatpush1.msra.mxu0 0.0
  %4620 = vmatprep.subr.mxu0 0.0
  %4621 = vmatpush1.msra.mxu0 0.0
  %4622 = vmatprep.subr.mxu0 0.0
  %4623 = vmatpush1.msra.mxu0 0.0
  %4624 = vmatprep.subr.mxu0 0.0
  %4625 = vmatpush1.msra.mxu0 0.0
  %4626 = vmatprep.subr.mxu0 0.0
  %4627 = vmatpush1.msra.mxu0 0.0
  %4628 = vmatprep.subr.mxu0 0.0
  %4629 = vmatpush1.msra.mxu0 0.0
  %4630 = vmatprep.subr.mxu0 0.0
  %4631 = vmatpush1.msra.mxu0 0.0
  %4632 = vmatprep.subr.mxu0 0.0
  %4633 = vmatpush1.msra.mxu0 0.0
  %4634 = vmatprep.subr.mxu0 0.0
  %4635 = vmatpush1.msra.mxu0 0.0
  %4636 = vmatprep.subr.mxu0 0.0
  %4637 = vmatpush1.msra.mxu0 0.0
  %4638 = vmatprep.subr.mxu0 0.0
  %4639 = vmatpush1.msra.mxu0 0.0
  %4640 = vmatprep.subr.mxu0 0.0
  %4641 = vmatpush1.msra.mxu0 0.0
  %4642 = vmatprep.subr.mxu0 0.0
  %4643 = vmatpush1.msra.mxu0 0.0
  %4644 = vmatprep.subr.mxu0 0.0
  %4645 = vmatpush1.msra.mxu0 0.0
  %4646 = vmatprep.subr.mxu0 0.0
  %4647 = vmatpush1.msra.mxu0 0.0
  %4648 = vmatprep.subr.mxu0 0.0
  %4649 = vmatpush1.msra.mxu0 0.0
  %4650 = vmatprep.subr.mxu0 0.0
  %4651 = vmatpush1.msra.mxu0 0.0
  %4652 = vmatprep.subr.mxu0 0.0
  %4653 = vmatpush1.msra.mxu0 0.0
  %4654 = vmatprep.subr.mxu0 0.0
  %4655 = vmatpush1.msra.mxu0 0.0
  %4656 = vmatprep.subr.mxu0 0.0
  %4657 = vmatpush1.msra.mxu0 0.0
  %4658 = vmatprep.subr.mxu0 0.0
  %4659 = vmatpush1.msra.mxu0 0.0
  %4660 = vmatprep.subr.mxu0 0.0
  %4661 = vmatpush1.msra.mxu0 0.0
  %4662 = vmatprep.subr.mxu0 0.0
  %4663 = vmatpush1.msra.mxu0 0.0
  %4664 = vmatprep.mubr.f32.mxu0 0.0
  %4665 = vmatmul.mubr.f32.gmra.mrb[0].mxu0 %v4589
  %v4666 = vpop.f32.mrb[0].mxu0
  %v4667 = vadd.f32 0.0, %v4666
  %v4668 = vpop.f32.mrb[0].mxu0
  %4669 = vmatprep.mubr.f32.mxu0 0.0
  %4670 = vmatmul.mubr.f32.gmra.mrb[0].mxu0 %v4592
  %v4671 = vpop.f32.mrb[0].mxu0
  %v4672 = vadd.f32 0.0, %v4671
  %v4673 = vpop.f32.mrb[0].mxu0
  %4674 = vmatprep.mubr.f32.mxu0 0.0
  %4675 = vmatmul.mubr.f32.gmra.mrb[0].mxu0 %v4595
  %v4676 = vpop.f32.mrb[0].mxu0
  %v4677 = vadd.f32 0.0, %v4676
  %v4678 = vpop.f32.mrb[0].mxu0
  %4679 = vmatprep.mubr.f32.mxu0 0.0
  %4680 = vmatmul.mubr.f32.gmra.mrb[0].mxu0 %v4598
  %v4681 = vpop.f32.mrb[0].mxu0
  %v4682 = vadd.f32 0.0, %v4681
  %v4683 = vpop.f32.mrb[0].mxu0
  %4684 = vdwg.mxu0
  %v4685 = vadd.f32 %v2553, %v4667
  %v4686 = vadd.f32 %v2554, %v4672
  %v4687 = vadd.f32 %v2555, %v4677
  %v4688 = vadd.f32 %v2556, %v4682
  %v4689 = vsel %vm175, %v4685, 0.0
  %4690 = vadd.xlane.f32.xlu0 %v4689
  %v4691 = vpop.xlane.xlu0 %4690
  %v4692 = vsel %vm175, %v4686, 0.0
  %4693 = vadd.xlane.f32.xlu0 %v4692
  %v4694 = vpop.xlane.xlu0 %4693
  %v4695 = vsel %vm175, %v4687, 0.0
  %4696 = vadd.xlane.f32.xlu0 %v4695
  %v4697 = vpop.xlane.xlu0 %4696
  %v4698 = vsel %vm175, %v4688, 0.0
  %4699 = vadd.xlane.f32.xlu0 %v4698
  %v4700 = vpop.xlane.xlu0 %4699
  %v4701 = vmul.f32 %v4691, %v188
  %v4702 = vmul.f32 %v4694, %v188
  %v4703 = vmul.f32 %v4697, %v188
  %v4704 = vmul.f32 %v4700, %v188
  %v4705 = vsub.f32 %v4685, %v4701
  %v4706 = vsub.f32 %v4686, %v4702
  %v4707 = vsub.f32 %v4687, %v4703
  %v4708 = vsub.f32 %v4688, %v4704
  %v4709 = vmul.f32 %v4705, %v4705
  %v4710 = vmul.f32 %v4706, %v4706
  %v4711 = vmul.f32 %v4707, %v4707
  %v4712 = vmul.f32 %v4708, %v4708
  %v4713 = vsel %vm175, %v4709, 0.0
  %4714 = vadd.xlane.f32.xlu0 %v4713
  %v4715 = vpop.xlane.xlu0 %4714
  %v4716 = vsel %vm175, %v4710, 0.0
  %4717 = vadd.xlane.f32.xlu0 %v4716
  %v4718 = vpop.xlane.xlu0 %4717
  %v4719 = vsel %vm175, %v4711, 0.0
  %4720 = vadd.xlane.f32.xlu0 %v4719
  %v4721 = vpop.xlane.xlu0 %4720
  %v4722 = vsel %vm175, %v4712, 0.0
  %4723 = vadd.xlane.f32.xlu0 %v4722
  %v4724 = vpop.xlane.xlu0 %4723
  %v4725 = vmul.f32 %v4715, %v188
  %v4726 = vmul.f32 %v4718, %v188
  %v4727 = vmul.f32 %v4721, %v188
  %v4728 = vmul.f32 %v4724, %v188
  %v4729 = vadd.f32 %v4725, 1e-06
  %v4730 = vadd.f32 %v4726, 1e-06
  %v4731 = vadd.f32 %v4727, 1e-06
  %v4732 = vadd.f32 %v4728, 1e-06
  %v4733 = vrsqrt.pop %v4729
  %v4734 = vrsqrt.pop %v4730
  %v4735 = vrsqrt.pop %v4731
  %v4736 = vrsqrt.pop %v4732
  %v4737 = vmul.f32 %v4705, %v4733
  %v4738 = vmul.f32 %v4706, %v4734
  %v4739 = vmul.f32 %v4707, %v4735
  %v4740 = vmul.f32 %v4708, %v4736
  %v4741 = vlaneseq
  %v4742 = vshrl.u32 %v4741, 7
  %v4743 = vsub.s32 0, %v4742
  %v4744 = vrot.slane %v2591, %v4743
  %4746 = vrot.lane.b32.xlu0 %v4744, 96
  %v4747 = vpop.permute.xlu0 %4746
  %v4749 = vmul.f32 %v4737, %v4747
  %v4750 = vmul.f32 %v4738, %v4747
  %v4751 = vmul.f32 %v4739, %v4747
  %v4752 = vmul.f32 %v4740, %v4747
  %v4753 = vlaneseq
  %v4754 = vshrl.u32 %v4753, 7
  %v4755 = vsub.s32 0, %v4754
  %v4756 = vrot.slane %v2592, %v4755
  %v4757 = vadd.f32 %v4749, %v4756
  %v4758 = vadd.f32 %v4750, %v4756
  %v4759 = vadd.f32 %v4751, %v4756
  %v4760 = vadd.f32 %v4752, %v4756
  %v4761 = vlaneseq
  %v4762 = vshrl.u32 %v4761, 7
  %v4763 = vsub.s32 0, %v4762
  %v4764 = vrot.slane %v2590, %v4763
  %v4766 = vsel %vm175, %v4757, 0
  %v4769 = vsel %vm175, %v4758, 0
  %v4772 = vsel %vm175, %v4759, 0
  %v4775 = vsel %vm175, %v4760, 0
  %4777 = vmatprep.subr.mxu0 0.0
  %4778 = vmatpush1.msra.mxu0 %v2577
  %4779 = vmatprep.subr.mxu0 0.0
  %4780 = vmatpush1.msra.mxu0 %v2578
  %4781 = vmatprep.subr.mxu0 0.0
  %4782 = vmatpush1.msra.mxu0 %v2579
  %4783 = vmatprep.subr.mxu0 0.0
  %4784 = vmatpush1.msra.mxu0 %v2580
  %4785 = vmatprep.subr.mxu0 0.0
  %4786 = vmatpush1.msra.mxu0 0.0
  %4787 = vmatprep.subr.mxu0 0.0
  %4788 = vmatpush1.msra.mxu0 0.0
  %4789 = vmatprep.subr.mxu0 0.0
  %4790 = vmatpush1.msra.mxu0 0.0
  %4791 = vmatprep.subr.mxu0 0.0
  %4792 = vmatpush1.msra.mxu0 0.0
  %4793 = vmatprep.subr.mxu0 0.0
  %4794 = vmatpush1.msra.mxu0 0.0
  %4795 = vmatprep.subr.mxu0 0.0
  %4796 = vmatpush1.msra.mxu0 0.0
  %4797 = vmatprep.subr.mxu0 0.0
  %4798 = vmatpush1.msra.mxu0 0.0
  %4799 = vmatprep.subr.mxu0 0.0
  %4800 = vmatpush1.msra.mxu0 0.0
  %4801 = vmatprep.subr.mxu0 0.0
  %4802 = vmatpush1.msra.mxu0 0.0
  %4803 = vmatprep.subr.mxu0 0.0
  %4804 = vmatpush1.msra.mxu0 0.0
  %4805 = vmatprep.subr.mxu0 0.0
  %4806 = vmatpush1.msra.mxu0 0.0
  %4807 = vmatprep.subr.mxu0 0.0
  %4808 = vmatpush1.msra.mxu0 0.0
  %4809 = vmatprep.subr.mxu0 0.0
  %4810 = vmatpush1.msra.mxu0 0.0
  %4811 = vmatprep.subr.mxu0 0.0
  %4812 = vmatpush1.msra.mxu0 0.0
  %4813 = vmatprep.subr.mxu0 0.0
  %4814 = vmatpush1.msra.mxu0 0.0
  %4815 = vmatprep.subr.mxu0 0.0
  %4816 = vmatpush1.msra.mxu0 0.0
  %4817 = vmatprep.subr.mxu0 0.0
  %4818 = vmatpush1.msra.mxu0 0.0
  %4819 = vmatprep.subr.mxu0 0.0
  %4820 = vmatpush1.msra.mxu0 0.0
  %4821 = vmatprep.subr.mxu0 0.0
  %4822 = vmatpush1.msra.mxu0 0.0
  %4823 = vmatprep.subr.mxu0 0.0
  %4824 = vmatpush1.msra.mxu0 0.0
  %4825 = vmatprep.subr.mxu0 0.0
  %4826 = vmatpush1.msra.mxu0 0.0
  %4827 = vmatprep.subr.mxu0 0.0
  %4828 = vmatpush1.msra.mxu0 0.0
  %4829 = vmatprep.subr.mxu0 0.0
  %4830 = vmatpush1.msra.mxu0 0.0
  %4831 = vmatprep.subr.mxu0 0.0
  %4832 = vmatpush1.msra.mxu0 0.0
  %4833 = vmatprep.subr.mxu0 0.0
  %4834 = vmatpush1.msra.mxu0 0.0
  %4835 = vmatprep.subr.mxu0 0.0
  %4836 = vmatpush1.msra.mxu0 0.0
  %4837 = vmatprep.subr.mxu0 0.0
  %4838 = vmatpush1.msra.mxu0 0.0
  %4839 = vmatprep.subr.mxu0 0.0
  %4840 = vmatpush1.msra.mxu0 0.0
  %4841 = vmatprep.mubr.f32.mxu0 0.0
  %4842 = vmatmul.mubr.f32.gmra.mrb[0].mxu0 %v4766
  %v4843 = vpop.f32.mrb[0].mxu0
  %v4844 = vadd.f32 %v4764, %v4843
  %v4845 = vpop.f32.mrb[0].mxu0
  %4846 = vmatprep.mubr.f32.mxu0 0.0
  %4847 = vmatmul.mubr.f32.gmra.mrb[0].mxu0 %v4769
  %v4848 = vpop.f32.mrb[0].mxu0
  %v4849 = vadd.f32 %v4764, %v4848
  %v4850 = vpop.f32.mrb[0].mxu0
  %4851 = vmatprep.mubr.f32.mxu0 0.0
  %4852 = vmatmul.mubr.f32.gmra.mrb[0].mxu0 %v4772
  %v4853 = vpop.f32.mrb[0].mxu0
  %v4854 = vadd.f32 %v4764, %v4853
  %v4855 = vpop.f32.mrb[0].mxu0
  %4856 = vmatprep.mubr.f32.mxu0 0.0
  %4857 = vmatmul.mubr.f32.gmra.mrb[0].mxu0 %v4775
  %v4858 = vpop.f32.mrb[0].mxu0
  %v4859 = vadd.f32 %v4764, %v4858
  %v4860 = vpop.f32.mrb[0].mxu0
  %4861 = vdwg.mxu0
  %v4862 = vmax.f32 %v4844, 0.0
  %v4863 = vmax.f32 %v4849, 0.0
  %v4864 = vmax.f32 %v4854, 0.0
  %v4865 = vmax.f32 %v4859, 0.0
  %v4867 = vsel %vm2173, %v4862, 0
  %v4870 = vsel %vm2173, %v4863, 0
  %v4873 = vsel %vm2173, %v4864, 0
  %v4876 = vsel %vm2173, %v4865, 0
  %4878 = vmatprep.subr.mxu0 0.0
  %4879 = vmatpush1.msra.mxu0 %v2581
  %4880 = vmatprep.subr.mxu0 0.0
  %4881 = vmatpush1.msra.mxu0 %v2582
  %4882 = vmatprep.subr.mxu0 0.0
  %4883 = vmatpush1.msra.mxu0 %v2583
  %4884 = vmatprep.subr.mxu0 0.0
  %4885 = vmatpush1.msra.mxu0 %v2584
  %4886 = vmatprep.subr.mxu0 0.0
  %4887 = vmatpush1.msra.mxu0 %v2585
  %4888 = vmatprep.subr.mxu0 0.0
  %4889 = vmatpush1.msra.mxu0 %v2586
  %4890 = vmatprep.subr.mxu0 0.0
  %4891 = vmatpush1.msra.mxu0 %v2587
  %4892 = vmatprep.subr.mxu0 0.0
  %4893 = vmatpush1.msra.mxu0 %v2588
  %4894 = vmatprep.subr.mxu0 0.0
  %4895 = vmatpush1.msra.mxu0 0.0
  %4896 = vmatprep.subr.mxu0 0.0
  %4897 = vmatpush1.msra.mxu0 0.0
  %4898 = vmatprep.subr.mxu0 0.0
  %4899 = vmatpush1.msra.mxu0 0.0
  %4900 = vmatprep.subr.mxu0 0.0
  %4901 = vmatpush1.msra.mxu0 0.0
  %4902 = vmatprep.subr.mxu0 0.0
  %4903 = vmatpush1.msra.mxu0 0.0
  %4904 = vmatprep.subr.mxu0 0.0
  %4905 = vmatpush1.msra.mxu0 0.0
  %4906 = vmatprep.subr.mxu0 0.0
  %4907 = vmatpush1.msra.mxu0 0.0
  %4908 = vmatprep.subr.mxu0 0.0
  %4909 = vmatpush1.msra.mxu0 0.0
  %4910 = vmatprep.subr.mxu0 0.0
  %4911 = vmatpush1.msra.mxu0 0.0
  %4912 = vmatprep.subr.mxu0 0.0
  %4913 = vmatpush1.msra.mxu0 0.0
  %4914 = vmatprep.subr.mxu0 0.0
  %4915 = vmatpush1.msra.mxu0 0.0
  %4916 = vmatprep.subr.mxu0 0.0
  %4917 = vmatpush1.msra.mxu0 0.0
  %4918 = vmatprep.subr.mxu0 0.0
  %4919 = vmatpush1.msra.mxu0 0.0
  %4920 = vmatprep.subr.mxu0 0.0
  %4921 = vmatpush1.msra.mxu0 0.0
  %4922 = vmatprep.subr.mxu0 0.0
  %4923 = vmatpush1.msra.mxu0 0.0
  %4924 = vmatprep.subr.mxu0 0.0
  %4925 = vmatpush1.msra.mxu0 0.0
  %4926 = vmatprep.subr.mxu0 0.0
  %4927 = vmatpush1.msra.mxu0 0.0
  %4928 = vmatprep.subr.mxu0 0.0
  %4929 = vmatpush1.msra.mxu0 0.0
  %4930 = vmatprep.subr.mxu0 0.0
  %4931 = vmatpush1.msra.mxu0 0.0
  %4932 = vmatprep.subr.mxu0 0.0
  %4933 = vmatpush1.msra.mxu0 0.0
  %4934 = vmatprep.subr.mxu0 0.0
  %4935 = vmatpush1.msra.mxu0 0.0
  %4936 = vmatprep.subr.mxu0 0.0
  %4937 = vmatpush1.msra.mxu0 0.0
  %4938 = vmatprep.subr.mxu0 0.0
  %4939 = vmatpush1.msra.mxu0 0.0
  %4940 = vmatprep.subr.mxu0 0.0
  %4941 = vmatpush1.msra.mxu0 0.0
  %4942 = vmatprep.mubr.f32.mxu0 0.0
  %4943 = vmatmul.mubr.f32.gmra.mrb[0].mxu0 %v4867
  %v4944 = vpop.f32.mrb[0].mxu0
  %v4945 = vadd.f32 0.0, %v4944
  %v4946 = vpop.f32.mrb[0].mxu0
  %4947 = vmatprep.mubr.f32.mxu0 0.0
  %4948 = vmatmul.mubr.f32.gmra.mrb[0].mxu0 %v4870
  %v4949 = vpop.f32.mrb[0].mxu0
  %v4950 = vadd.f32 0.0, %v4949
  %v4951 = vpop.f32.mrb[0].mxu0
  %4952 = vmatprep.mubr.f32.mxu0 0.0
  %4953 = vmatmul.mubr.f32.gmra.mrb[0].mxu0 %v4873
  %v4954 = vpop.f32.mrb[0].mxu0
  %v4955 = vadd.f32 0.0, %v4954
  %v4956 = vpop.f32.mrb[0].mxu0
  %4957 = vmatprep.mubr.f32.mxu0 0.0
  %4958 = vmatmul.mubr.f32.gmra.mrb[0].mxu0 %v4876
  %v4959 = vpop.f32.mrb[0].mxu0
  %v4960 = vadd.f32 0.0, %v4959
  %v4961 = vpop.f32.mrb[0].mxu0
  %4962 = vdwg.mxu0
  %v4963 = vadd.f32 %v4685, %v4945
  %v4964 = vadd.f32 %v4686, %v4950
  %v4965 = vadd.f32 %v4687, %v4955
  %v4966 = vadd.f32 %v4688, %v4960
  %v4967 = vadd.f32 %v4963, %v4744
  %v4968 = vadd.f32 %v4964, %v4744
  %v4969 = vadd.f32 %v4965, %v4744
  %v4970 = vadd.f32 %v4966, %v4744
  %v4971 = vld [vmem:[%s1 + $0x20] sm:$0xff]
  %v4972 = vld [vmem:[%s1 + $0x28] sm:$0xff]
  %v4973 = vld [vmem:[%s1 + $0x30] sm:$0xff]
  %v4974 = vld [vmem:[%s1 + $0x38] sm:$0xff]
  %v4975 = vld [vmem:[%s1 + $0x30] sm:$0x1]
  %v4976 = vlaneseq
  %v4977 = vshrl.u32 %v4976, 7
  %v4978 = vsub.s32 0, %v4977
  %v4979 = vrot.slane %v4975, %v4978
  %4981 = vrot.lane.b32.xlu0 %v4979, 96
  %v4982 = vpop.permute.xlu0 %4981
  %v4985 = vsel %vm175, %v4967, 0
  %v4988 = vsel %vm175, %v4968, 0
  %v4991 = vsel %vm175, %v4969, 0
  %v4994 = vsel %vm175, %v4970, 0
  %4996 = vmatprep.subr.mxu0 0.0
  %4997 = vmatpush1.msra.mxu0 %v4971
  %4998 = vmatprep.subr.mxu0 0.0
  %4999 = vmatpush1.msra.mxu0 %v4972
  %5000 = vmatprep.subr.mxu0 0.0
  %5001 = vmatpush1.msra.mxu0 %v4973
  %5002 = vmatprep.subr.mxu0 0.0
  %5003 = vmatpush1.msra.mxu0 %v4974
  %5004 = vmatprep.subr.mxu0 0.0
  %5005 = vmatpush1.msra.mxu0 0.0
  %5006 = vmatprep.subr.mxu0 0.0
  %5007 = vmatpush1.msra.mxu0 0.0
  %5008 = vmatprep.subr.mxu0 0.0
  %5009 = vmatpush1.msra.mxu0 0.0
  %5010 = vmatprep.subr.mxu0 0.0
  %5011 = vmatpush1.msra.mxu0 0.0
  %5012 = vmatprep.subr.mxu0 0.0
  %5013 = vmatpush1.msra.mxu0 0.0
  %5014 = vmatprep.subr.mxu0 0.0
  %5015 = vmatpush1.msra.mxu0 0.0
  %5016 = vmatprep.subr.mxu0 0.0
  %5017 = vmatpush1.msra.mxu0 0.0
  %5018 = vmatprep.subr.mxu0 0.0
  %5019 = vmatpush1.msra.mxu0 0.0
  %5020 = vmatprep.subr.mxu0 0.0
  %5021 = vmatpush1.msra.mxu0 0.0
  %5022 = vmatprep.subr.mxu0 0.0
  %5023 = vmatpush1.msra.mxu0 0.0
  %5024 = vmatprep.subr.mxu0 0.0
  %5025 = vmatpush1.msra.mxu0 0.0
  %5026 = vmatprep.subr.mxu0 0.0
  %5027 = vmatpush1.msra.mxu0 0.0
  %5028 = vmatprep.subr.mxu0 0.0
  %5029 = vmatpush1.msra.mxu0 0.0
  %5030 = vmatprep.subr.mxu0 0.0
  %5031 = vmatpush1.msra.mxu0 0.0
  %5032 = vmatprep.subr.mxu0 0.0
  %5033 = vmatpush1.msra.mxu0 0.0
  %5034 = vmatprep.subr.mxu0 0.0
  %5035 = vmatpush1.msra.mxu0 0.0
  %5036 = vmatprep.subr.mxu0 0.0
  %5037 = vmatpush1.msra.mxu0 0.0
  %5038 = vmatprep.subr.mxu0 0.0
  %5039 = vmatpush1.msra.mxu0 0.0
  %5040 = vmatprep.subr.mxu0 0.0
  %5041 = vmatpush1.msra.mxu0 0.0
  %5042 = vmatprep.subr.mxu0 0.0
  %5043 = vmatpush1.msra.mxu0 0.0
  %5044 = vmatprep.subr.mxu0 0.0
  %5045 = vmatpush1.msra.mxu0 0.0
  %5046 = vmatprep.subr.mxu0 0.0
  %5047 = vmatpush1.msra.mxu0 0.0
  %5048 = vmatprep.subr.mxu0 0.0
  %5049 = vmatpush1.msra.mxu0 0.0
  %5050 = vmatprep.subr.mxu0 0.0
  %5051 = vmatpush1.msra.mxu0 0.0
  %5052 = vmatprep.subr.mxu0 0.0
  %5053 = vmatpush1.msra.mxu0 0.0
  %5054 = vmatprep.subr.mxu0 0.0
  %5055 = vmatpush1.msra.mxu0 0.0
  %5056 = vmatprep.subr.mxu0 0.0
  %5057 = vmatpush1.msra.mxu0 0.0
  %5058 = vmatprep.subr.mxu0 0.0
  %5059 = vmatpush1.msra.mxu0 0.0
  %5060 = vmatprep.mubr.f32.mxu0 0.0
  %5061 = vmatmul.mubr.f32.gmra.mrb[0].mxu0 %v4985
  %v5062 = vpop.f32.mrb[0].mxu0
  %v5063 = vadd.f32 %v4982, %v5062
  %v5064 = vpop.f32.mrb[0].mxu0
  %5065 = vmatprep.mubr.f32.mxu0 0.0
  %5066 = vmatmul.mubr.f32.gmra.mrb[0].mxu0 %v4988
  %v5067 = vpop.f32.mrb[0].mxu0
  %v5068 = vadd.f32 %v4982, %v5067
  %v5069 = vpop.f32.mrb[0].mxu0
  %5070 = vmatprep.mubr.f32.mxu0 0.0
  %5071 = vmatmul.mubr.f32.gmra.mrb[0].mxu0 %v4991
  %v5072 = vpop.f32.mrb[0].mxu0
  %v5073 = vadd.f32 %v4982, %v5072
  %v5074 = vpop.f32.mrb[0].mxu0
  %5075 = vmatprep.mubr.f32.mxu0 0.0
  %5076 = vmatmul.mubr.f32.gmra.mrb[0].mxu0 %v4994
  %v5077 = vpop.f32.mrb[0].mxu0
  %v5078 = vadd.f32 %v4982, %v5077
  %v5079 = vpop.f32.mrb[0].mxu0
  %5080 = vdwg.mxu0
  %5081 = vrot.lane.b32.xlu0 %v16, 8
  %v5082 = vpop.permute.xlu0 %5081
  %5083 = vrot.lane.b32.xlu0 %v17, 8
  %v5084 = vpop.permute.xlu0 %5083
  %5085 = vrot.lane.b32.xlu0 %v18, 8
  %v5086 = vpop.permute.xlu0 %5085
  %5087 = vrot.lane.b32.xlu0 %v19, 8
  %v5088 = vpop.permute.xlu0 %5087
  %v5093 = vmul.f32 %v16, %v5082
  %v5094 = vmul.f32 %v17, %v5084
  %v5095 = vmul.f32 %v18, %v5086
  %v5096 = vmul.f32 %v19, %v5088
  %v5097 = vsub.f32 1.0, %v16
  %v5098 = vsub.f32 1.0, %v17
  %v5099 = vsub.f32 1.0, %v18
  %v5100 = vsub.f32 1.0, %v19
  %5105 = vrot.lane.b32.xlu0 %v5063, 8
  %v5106 = vpop.permute.xlu0 %5105
  %5107 = vrot.lane.b32.xlu0 %v5068, 8
  %v5108 = vpop.permute.xlu0 %5107
  %5109 = vrot.lane.b32.xlu0 %v5073, 8
  %v5110 = vpop.permute.xlu0 %5109
  %5111 = vrot.lane.b32.xlu0 %v5078, 8
  %v5112 = vpop.permute.xlu0 %5111
  %v5117 = vmul.f32 %v5097, %v5106
  %v5118 = vmul.f32 %v5098, %v5108
  %v5119 = vmul.f32 %v5099, %v5110
  %v5120 = vmul.f32 %v5100, %v5112
  %v5121 = vadd.f32 %v5093, %v5117
  %v5122 = vadd.f32 %v5094, %v5118
  %v5123 = vadd.f32 %v5095, %v5119
  %v5124 = vadd.f32 %v5096, %v5120
  %v5125 = vld [vmem:[%s1 + $0x10] sm:$0xff]
  %v5126 = vld [vmem:[%s1 + $0x18] sm:$0xff]
  %5127 = vrot.lane.b32.xlu0 %v16, 120
  %v5128 = vpop.permute.xlu0 %5127
  %5129 = vrot.lane.b32.xlu0 %v17, 120
  %v5130 = vpop.permute.xlu0 %5129
  %5131 = vrot.lane.b32.xlu0 %v18, 120
  %v5132 = vpop.permute.xlu0 %5131
  %5133 = vrot.lane.b32.xlu0 %v19, 120
  %v5134 = vpop.permute.xlu0 %5133
  %vm5135 = vcmask 64512
  %v5136 = vsel %vm5135, %v5128, 0
  %v5138 = vsel %vm5135, %v5130, 0
  %v5140 = vsel %vm5135, %v5132, 0
  %v5142 = vsel %vm5135, %v5134, 0
  %5144 = vmatprep.subr.mxu0 0.0
  %5145 = vmatpush1.msra.mxu0 %v5126
  %5146 = vmatprep.subr.mxu0 0.0
  %5147 = vmatpush1.msra.mxu0 0.0
  %5148 = vmatprep.subr.mxu0 0.0
  %5149 = vmatpush1.msra.mxu0 0.0
  %5150 = vmatprep.subr.mxu0 0.0
  %5151 = vmatpush1.msra.mxu0 0.0
  %5152 = vmatprep.subr.mxu0 0.0
  %5153 = vmatpush1.msra.mxu0 0.0
  %5154 = vmatprep.subr.mxu0 0.0
  %5155 = vmatpush1.msra.mxu0 0.0
  %5156 = vmatprep.subr.mxu0 0.0
  %5157 = vmatpush1.msra.mxu0 0.0
  %5158 = vmatprep.subr.mxu0 0.0
  %5159 = vmatpush1.msra.mxu0 0.0
  %5160 = vmatprep.subr.mxu0 0.0
  %5161 = vmatpush1.msra.mxu0 0.0
  %5162 = vmatprep.subr.mxu0 0.0
  %5163 = vmatpush1.msra.mxu0 0.0
  %5164 = vmatprep.subr.mxu0 0.0
  %5165 = vmatpush1.msra.mxu0 0.0
  %5166 = vmatprep.subr.mxu0 0.0
  %5167 = vmatpush1.msra.mxu0 0.0
  %5168 = vmatprep.subr.mxu0 0.0
  %5169 = vmatpush1.msra.mxu0 0.0
  %5170 = vmatprep.subr.mxu0 0.0
  %5171 = vmatpush1.msra.mxu0 0.0
  %5172 = vmatprep.subr.mxu0 0.0
  %5173 = vmatpush1.msra.mxu0 0.0
  %5174 = vmatprep.subr.mxu0 0.0
  %5175 = vmatpush1.msra.mxu0 0.0
  %5176 = vmatprep.subr.mxu0 0.0
  %5177 = vmatpush1.msra.mxu0 0.0
  %5178 = vmatprep.subr.mxu0 0.0
  %5179 = vmatpush1.msra.mxu0 0.0
  %5180 = vmatprep.subr.mxu0 0.0
  %5181 = vmatpush1.msra.mxu0 0.0
  %5182 = vmatprep.subr.mxu0 0.0
  %5183 = vmatpush1.msra.mxu0 0.0
  %5184 = vmatprep.subr.mxu0 0.0
  %5185 = vmatpush1.msra.mxu0 0.0
  %5186 = vmatprep.subr.mxu0 0.0
  %5187 = vmatpush1.msra.mxu0 0.0
  %5188 = vmatprep.subr.mxu0 0.0
  %5189 = vmatpush1.msra.mxu0 0.0
  %5190 = vmatprep.subr.mxu0 0.0
  %5191 = vmatpush1.msra.mxu0 0.0
  %5192 = vmatprep.subr.mxu0 0.0
  %5193 = vmatpush1.msra.mxu0 0.0
  %5194 = vmatprep.subr.mxu0 0.0
  %5195 = vmatpush1.msra.mxu0 0.0
  %5196 = vmatprep.subr.mxu0 0.0
  %5197 = vmatpush1.msra.mxu0 0.0
  %5198 = vmatprep.subr.mxu0 0.0
  %5199 = vmatpush1.msra.mxu0 0.0
  %5200 = vmatprep.subr.mxu0 0.0
  %5201 = vmatpush1.msra.mxu0 0.0
  %5202 = vmatprep.subr.mxu0 0.0
  %5203 = vmatpush1.msra.mxu0 0.0
  %5204 = vmatprep.subr.mxu0 0.0
  %5205 = vmatpush1.msra.mxu0 0.0
  %5206 = vmatprep.subr.mxu0 0.0
  %5207 = vmatpush1.msra.mxu0 0.0
  %5208 = vmatprep.mubr.f32.mxu0 0.0
  %5209 = vmatmul.mubr.f32.gmra.mrb[0].mxu0 %v5136
  %v5210 = vpop.f32.mrb[0].mxu0
  %v5211 = vadd.f32 0.0, %v5210
  %v5212 = vpop.f32.mrb[0].mxu0
  %5213 = vmatprep.mubr.f32.mxu0 0.0
  %5214 = vmatmul.mubr.f32.gmra.mrb[0].mxu0 %v5138
  %v5215 = vpop.f32.mrb[0].mxu0
  %v5216 = vadd.f32 0.0, %v5215
  %v5217 = vpop.f32.mrb[0].mxu0
  %5218 = vmatprep.mubr.f32.mxu0 0.0
  %5219 = vmatmul.mubr.f32.gmra.mrb[0].mxu0 %v5140
  %v5220 = vpop.f32.mrb[0].mxu0
  %v5221 = vadd.f32 0.0, %v5220
  %v5222 = vpop.f32.mrb[0].mxu0
  %5223 = vmatprep.mubr.f32.mxu0 0.0
  %5224 = vmatmul.mubr.f32.gmra.mrb[0].mxu0 %v5142
  %v5225 = vpop.f32.mrb[0].mxu0
  %v5226 = vadd.f32 0.0, %v5225
  %v5227 = vpop.f32.mrb[0].mxu0
  %5228 = vdwg.mxu0
  %5233 = vrot.lane.b32.xlu0 %v5121, 120
  %v5234 = vpop.permute.xlu0 %5233
  %5235 = vrot.lane.b32.xlu0 %v5122, 120
  %v5236 = vpop.permute.xlu0 %5235
  %5237 = vrot.lane.b32.xlu0 %v5123, 120
  %v5238 = vpop.permute.xlu0 %5237
  %5239 = vrot.lane.b32.xlu0 %v5124, 120
  %v5240 = vpop.permute.xlu0 %5239
  %v5241 = vsel %vm5135, %v5234, 0
  %v5243 = vsel %vm5135, %v5236, 0
  %v5245 = vsel %vm5135, %v5238, 0
  %v5247 = vsel %vm5135, %v5240, 0
  %5249 = vmatprep.subr.mxu0 0.0
  %5250 = vmatpush1.msra.mxu0 %v5125
  %5251 = vmatprep.subr.mxu0 0.0
  %5252 = vmatpush1.msra.mxu0 0.0
  %5253 = vmatprep.subr.mxu0 0.0
  %5254 = vmatpush1.msra.mxu0 0.0
  %5255 = vmatprep.subr.mxu0 0.0
  %5256 = vmatpush1.msra.mxu0 0.0
  %5257 = vmatprep.subr.mxu0 0.0
  %5258 = vmatpush1.msra.mxu0 0.0
  %5259 = vmatprep.subr.mxu0 0.0
  %5260 = vmatpush1.msra.mxu0 0.0
  %5261 = vmatprep.subr.mxu0 0.0
  %5262 = vmatpush1.msra.mxu0 0.0
  %5263 = vmatprep.subr.mxu0 0.0
  %5264 = vmatpush1.msra.mxu0 0.0
  %5265 = vmatprep.subr.mxu0 0.0
  %5266 = vmatpush1.msra.mxu0 0.0
  %5267 = vmatprep.subr.mxu0 0.0
  %5268 = vmatpush1.msra.mxu0 0.0
  %5269 = vmatprep.subr.mxu0 0.0
  %5270 = vmatpush1.msra.mxu0 0.0
  %5271 = vmatprep.subr.mxu0 0.0
  %5272 = vmatpush1.msra.mxu0 0.0
  %5273 = vmatprep.subr.mxu0 0.0
  %5274 = vmatpush1.msra.mxu0 0.0
  %5275 = vmatprep.subr.mxu0 0.0
  %5276 = vmatpush1.msra.mxu0 0.0
  %5277 = vmatprep.subr.mxu0 0.0
  %5278 = vmatpush1.msra.mxu0 0.0
  %5279 = vmatprep.subr.mxu0 0.0
  %5280 = vmatpush1.msra.mxu0 0.0
  %5281 = vmatprep.subr.mxu0 0.0
  %5282 = vmatpush1.msra.mxu0 0.0
  %5283 = vmatprep.subr.mxu0 0.0
  %5284 = vmatpush1.msra.mxu0 0.0
  %5285 = vmatprep.subr.mxu0 0.0
  %5286 = vmatpush1.msra.mxu0 0.0
  %5287 = vmatprep.subr.mxu0 0.0
  %5288 = vmatpush1.msra.mxu0 0.0
  %5289 = vmatprep.subr.mxu0 0.0
  %5290 = vmatpush1.msra.mxu0 0.0
  %5291 = vmatprep.subr.mxu0 0.0
  %5292 = vmatpush1.msra.mxu0 0.0
  %5293 = vmatprep.subr.mxu0 0.0
  %5294 = vmatpush1.msra.mxu0 0.0
  %5295 = vmatprep.subr.mxu0 0.0
  %5296 = vmatpush1.msra.mxu0 0.0
  %5297 = vmatprep.subr.mxu0 0.0
  %5298 = vmatpush1.msra.mxu0 0.0
  %5299 = vmatprep.subr.mxu0 0.0
  %5300 = vmatpush1.msra.mxu0 0.0
  %5301 = vmatprep.subr.mxu0 0.0
  %5302 = vmatpush1.msra.mxu0 0.0
  %5303 = vmatprep.subr.mxu0 0.0
  %5304 = vmatpush1.msra.mxu0 0.0
  %5305 = vmatprep.subr.mxu0 0.0
  %5306 = vmatpush1.msra.mxu0 0.0
  %5307 = vmatprep.subr.mxu0 0.0
  %5308 = vmatpush1.msra.mxu0 0.0
  %5309 = vmatprep.subr.mxu0 0.0
  %5310 = vmatpush1.msra.mxu0 0.0
  %5311 = vmatprep.subr.mxu0 0.0
  %5312 = vmatpush1.msra.mxu0 0.0
  %5313 = vmatprep.mubr.f32.mxu0 0.0
  %5314 = vmatmul.mubr.f32.gmra.mrb[0].mxu0 %v5241
  %v5315 = vpop.f32.mrb[0].mxu0
  %v5316 = vadd.f32 %v5211, %v5315
  %v5317 = vpop.f32.mrb[0].mxu0
  %5318 = vmatprep.mubr.f32.mxu0 0.0
  %5319 = vmatmul.mubr.f32.gmra.mrb[0].mxu0 %v5243
  %v5320 = vpop.f32.mrb[0].mxu0
  %v5321 = vadd.f32 %v5216, %v5320
  %v5322 = vpop.f32.mrb[0].mxu0
  %5323 = vmatprep.mubr.f32.mxu0 0.0
  %5324 = vmatmul.mubr.f32.gmra.mrb[0].mxu0 %v5245
  %v5325 = vpop.f32.mrb[0].mxu0
  %v5326 = vadd.f32 %v5221, %v5325
  %v5327 = vpop.f32.mrb[0].mxu0
  %5328 = vmatprep.mubr.f32.mxu0 0.0
  %5329 = vmatmul.mubr.f32.gmra.mrb[0].mxu0 %v5247
  %v5330 = vpop.f32.mrb[0].mxu0
  %v5331 = vadd.f32 %v5226, %v5330
  %v5332 = vpop.f32.mrb[0].mxu0
  %5333 = vdwg.mxu0
  %5336 = vrot.lane.b32.xlu0 %v5125, 96
  %v5337 = vpop.permute.xlu0 %5336
  %5338 = vrot.lane.b32.xlu0 %v5126, 96
  %v5339 = vpop.permute.xlu0 %5338
  %v5342 = vadd.f32 %v5316, %v5337
  %v5343 = vadd.f32 %v5321, %v5339
  %v5344 = vadd.f32 %v5326, %v5337
  %v5345 = vadd.f32 %v5331, %v5339
  %v5346 = vld [vmem:[%s2 + $0x210] sm:$0xff]
  %v5347 = vld [vmem:[%s2 + $0x218] sm:$0xff]
  %v5348 = vld [vmem:[%s2 + $0x220] sm:$0xff]
  %v5349 = vld [vmem:[%s2 + $0x228] sm:$0xff]
  %v5350 = vld [vmem:[%s2 + $0x230] sm:$0xff]
  %v5351 = vld [vmem:[%s2 + $0x238] sm:$0xff]
  %v5352 = vld [vmem:[%s2 + $0x240] sm:$0xff]
  %v5353 = vld [vmem:[%s2 + $0x248] sm:$0xff]
  %v5354 = vld [vmem:[%s2 + $0x250] sm:$0xff]
  %v5355 = vld [vmem:[%s2 + $0x258] sm:$0xff]
  %v5356 = vld [vmem:[%s2 + $0x260] sm:$0xff]
  %v5357 = vld [vmem:[%s2 + $0x268] sm:$0xff]
  %v5358 = vld [vmem:[%s2 + $0x270] sm:$0xff]
  %v5359 = vld [vmem:[%s2 + $0x278] sm:$0xff]
  %v5360 = vld [vmem:[%s2 + $0x280] sm:$0xff]
  %v5361 = vld [vmem:[%s2 + $0x288] sm:$0xff]
  %v5362 = vld [vmem:[%s2 + $0x290] sm:$0xff]
  %v5363 = vld [vmem:[%s2 + $0x298] sm:$0xff]
  %v5364 = vld [vmem:[%s2 + $0x2a0] sm:$0xff]
  %v5365 = vld [vmem:[%s2 + $0x2a8] sm:$0xff]
  %v5366 = vld [vmem:[%s2 + $0x2b0] sm:$0xff]
  %v5367 = vld [vmem:[%s2 + $0x2b8] sm:$0xff]
  %v5368 = vld [vmem:[%s2 + $0x2c0] sm:$0xff]
  %v5369 = vld [vmem:[%s2 + $0x2c8] sm:$0xff]
  %v5370 = vld [vmem:[%s2 + $0x2d0] sm:$0xff]
  %v5371 = vld [vmem:[%s2 + $0x2d8] sm:$0xff]
  %v5372 = vld [vmem:[%s2 + $0x2e0] sm:$0xff]
  %v5373 = vld [vmem:[%s2 + $0x2e8] sm:$0xff]
  %v5374 = vld [vmem:[%s2 + $0x2f0] sm:$0xff]
  %v5375 = vld [vmem:[%s2 + $0x2f8] sm:$0xff]
  %v5376 = vld [vmem:[%s2 + $0x300] sm:$0xff]
  %v5377 = vld [vmem:[%s2 + $0x308] sm:$0xff]
  %v5378 = vld [vmem:[%s2 + $0x310] sm:$0x1]
  %v5379 = vld [vmem:[%s2 + $0x311] sm:$0x1]
  %v5380 = vld [vmem:[%s2 + $0x312] sm:$0x1]
  %v5381 = vld [vmem:[%s2 + $0x313] sm:$0x1]
  %v5382 = vsel %vm175, %v5342, 0.0
  %5383 = vadd.xlane.f32.xlu0 %v5382
  %v5384 = vpop.xlane.xlu0 %5383
  %v5385 = vsel %vm175, %v5343, 0.0
  %5386 = vadd.xlane.f32.xlu0 %v5385
  %v5387 = vpop.xlane.xlu0 %5386
  %v5388 = vsel %vm175, %v5344, 0.0
  %5389 = vadd.xlane.f32.xlu0 %v5388
  %v5390 = vpop.xlane.xlu0 %5389
  %v5391 = vsel %vm175, %v5345, 0.0
  %5392 = vadd.xlane.f32.xlu0 %v5391
  %v5393 = vpop.xlane.xlu0 %5392
  %v5394 = vmul.f32 %v5384, %v188
  %v5395 = vmul.f32 %v5387, %v188
  %v5396 = vmul.f32 %v5390, %v188
  %v5397 = vmul.f32 %v5393, %v188
  %v5398 = vsub.f32 %v5342, %v5394
  %v5399 = vsub.f32 %v5343, %v5395
  %v5400 = vsub.f32 %v5344, %v5396
  %v5401 = vsub.f32 %v5345, %v5397
  %v5402 = vmul.f32 %v5398, %v5398
  %v5403 = vmul.f32 %v5399, %v5399
  %v5404 = vmul.f32 %v5400, %v5400
  %v5405 = vmul.f32 %v5401, %v5401
  %v5406 = vsel %vm175, %v5402, 0.0
  %5407 = vadd.xlane.f32.xlu0 %v5406
  %v5408 = vpop.xlane.xlu0 %5407
  %v5409 = vsel %vm175, %v5403, 0.0
  %5410 = vadd.xlane.f32.xlu0 %v5409
  %v5411 = vpop.xlane.xlu0 %5410
  %v5412 = vsel %vm175, %v5404, 0.0
  %5413 = vadd.xlane.f32.xlu0 %v5412
  %v5414 = vpop.xlane.xlu0 %5413
  %v5415 = vsel %vm175, %v5405, 0.0
  %5416 = vadd.xlane.f32.xlu0 %v5415
  %v5417 = vpop.xlane.xlu0 %5416
  %v5418 = vmul.f32 %v5408, %v188
  %v5419 = vmul.f32 %v5411, %v188
  %v5420 = vmul.f32 %v5414, %v188
  %v5421 = vmul.f32 %v5417, %v188
  %v5422 = vadd.f32 %v5418, 1e-05
  %v5423 = vadd.f32 %v5419, 1e-05
  %v5424 = vadd.f32 %v5420, 1e-05
  %v5425 = vadd.f32 %v5421, 1e-05
  %v5426 = vrsqrt.pop %v5422
  %v5427 = vrsqrt.pop %v5423
  %v5428 = vrsqrt.pop %v5424
  %v5429 = vrsqrt.pop %v5425
  %v5430 = vmul.f32 %v5398, %v5426
  %v5431 = vmul.f32 %v5399, %v5427
  %v5432 = vmul.f32 %v5400, %v5428
  %v5433 = vmul.f32 %v5401, %v5429
  %v5434 = vlaneseq
  %v5435 = vshrl.u32 %v5434, 7
  %v5436 = vsub.s32 0, %v5435
  %v5437 = vrot.slane %v5378, %v5436
  %v5438 = vmul.f32 %v5430, %v5437
  %v5439 = vmul.f32 %v5431, %v5437
  %v5440 = vmul.f32 %v5432, %v5437
  %v5441 = vmul.f32 %v5433, %v5437
  %5443 = vrot.lane.b32.xlu0 %v5437, 96
  %v5444 = vpop.permute.xlu0 %5443
  %v5446 = vadd.f32 %v5438, %v5444
  %v5447 = vadd.f32 %v5439, %v5444
  %v5448 = vadd.f32 %v5440, %v5444
  %v5449 = vadd.f32 %v5441, %v5444
  %v5451 = vsel %vm175, %v5446, 0
  %v5454 = vsel %vm175, %v5447, 0
  %v5457 = vsel %vm175, %v5448, 0
  %v5460 = vsel %vm175, %v5449, 0
  %5462 = vmatprep.subr.mxu0 0.0
  %5463 = vmatpush1.msra.mxu0 %v5346
  %5464 = vmatprep.subr.mxu0 0.0
  %5465 = vmatpush1.msra.mxu0 %v5347
  %5466 = vmatprep.subr.mxu0 0.0
  %5467 = vmatpush1.msra.mxu0 %v5348
  %5468 = vmatprep.subr.mxu0 0.0
  %5469 = vmatpush1.msra.mxu0 %v5349
  %5470 = vmatprep.subr.mxu0 0.0
  %5471 = vmatpush1.msra.mxu0 0.0
  %5472 = vmatprep.subr.mxu0 0.0
  %5473 = vmatpush1.msra.mxu0 0.0
  %5474 = vmatprep.subr.mxu0 0.0
  %5475 = vmatpush1.msra.mxu0 0.0
  %5476 = vmatprep.subr.mxu0 0.0
  %5477 = vmatpush1.msra.mxu0 0.0
  %5478 = vmatprep.subr.mxu0 0.0
  %5479 = vmatpush1.msra.mxu0 0.0
  %5480 = vmatprep.subr.mxu0 0.0
  %5481 = vmatpush1.msra.mxu0 0.0
  %5482 = vmatprep.subr.mxu0 0.0
  %5483 = vmatpush1.msra.mxu0 0.0
  %5484 = vmatprep.subr.mxu0 0.0
  %5485 = vmatpush1.msra.mxu0 0.0
  %5486 = vmatprep.subr.mxu0 0.0
  %5487 = vmatpush1.msra.mxu0 0.0
  %5488 = vmatprep.subr.mxu0 0.0
  %5489 = vmatpush1.msra.mxu0 0.0
  %5490 = vmatprep.subr.mxu0 0.0
  %5491 = vmatpush1.msra.mxu0 0.0
  %5492 = vmatprep.subr.mxu0 0.0
  %5493 = vmatpush1.msra.mxu0 0.0
  %5494 = vmatprep.subr.mxu0 0.0
  %5495 = vmatpush1.msra.mxu0 0.0
  %5496 = vmatprep.subr.mxu0 0.0
  %5497 = vmatpush1.msra.mxu0 0.0
  %5498 = vmatprep.subr.mxu0 0.0
  %5499 = vmatpush1.msra.mxu0 0.0
  %5500 = vmatprep.subr.mxu0 0.0
  %5501 = vmatpush1.msra.mxu0 0.0
  %5502 = vmatprep.subr.mxu0 0.0
  %5503 = vmatpush1.msra.mxu0 0.0
  %5504 = vmatprep.subr.mxu0 0.0
  %5505 = vmatpush1.msra.mxu0 0.0
  %5506 = vmatprep.subr.mxu0 0.0
  %5507 = vmatpush1.msra.mxu0 0.0
  %5508 = vmatprep.subr.mxu0 0.0
  %5509 = vmatpush1.msra.mxu0 0.0
  %5510 = vmatprep.subr.mxu0 0.0
  %5511 = vmatpush1.msra.mxu0 0.0
  %5512 = vmatprep.subr.mxu0 0.0
  %5513 = vmatpush1.msra.mxu0 0.0
  %5514 = vmatprep.subr.mxu0 0.0
  %5515 = vmatpush1.msra.mxu0 0.0
  %5516 = vmatprep.subr.mxu0 0.0
  %5517 = vmatpush1.msra.mxu0 0.0
  %5518 = vmatprep.subr.mxu0 0.0
  %5519 = vmatpush1.msra.mxu0 0.0
  %5520 = vmatprep.subr.mxu0 0.0
  %5521 = vmatpush1.msra.mxu0 0.0
  %5522 = vmatprep.subr.mxu0 0.0
  %5523 = vmatpush1.msra.mxu0 0.0
  %5524 = vmatprep.subr.mxu0 0.0
  %5525 = vmatpush1.msra.mxu0 0.0
  %5526 = vmatprep.mubr.f32.mxu0 0.0
  %5527 = vmatmul.mubr.f32.gmra.mrb[0].mxu0 %v5451
  %v5528 = vpop.f32.mrb[0].mxu0
  %v5529 = vadd.f32 0.0, %v5528
  %v5530 = vpop.f32.mrb[0].mxu0
  %5531 = vmatprep.mubr.f32.mxu0 0.0
  %5532 = vmatmul.mubr.f32.gmra.mrb[0].mxu0 %v5454
  %v5533 = vpop.f32.mrb[0].mxu0
  %v5534 = vadd.f32 0.0, %v5533
  %v5535 = vpop.f32.mrb[0].mxu0
  %5536 = vmatprep.mubr.f32.mxu0 0.0
  %5537 = vmatmul.mubr.f32.gmra.mrb[0].mxu0 %v5457
  %v5538 = vpop.f32.mrb[0].mxu0
  %v5539 = vadd.f32 0.0, %v5538
  %v5540 = vpop.f32.mrb[0].mxu0
  %5541 = vmatprep.mubr.f32.mxu0 0.0
  %5542 = vmatmul.mubr.f32.gmra.mrb[0].mxu0 %v5460
  %v5543 = vpop.f32.mrb[0].mxu0
  %v5544 = vadd.f32 0.0, %v5543
  %v5545 = vpop.f32.mrb[0].mxu0
  %5546 = vdwg.mxu0
  %5547 = vmatprep.subr.mxu0 0.0
  %5548 = vmatpush1.msra.mxu0 %v5350
  %5549 = vmatprep.subr.mxu0 0.0
  %5550 = vmatpush1.msra.mxu0 %v5351
  %5551 = vmatprep.subr.mxu0 0.0
  %5552 = vmatpush1.msra.mxu0 %v5352
  %5553 = vmatprep.subr.mxu0 0.0
  %5554 = vmatpush1.msra.mxu0 %v5353
  %5555 = vmatprep.subr.mxu0 0.0
  %5556 = vmatpush1.msra.mxu0 0.0
  %5557 = vmatprep.subr.mxu0 0.0
  %5558 = vmatpush1.msra.mxu0 0.0
  %5559 = vmatprep.subr.mxu0 0.0
  %5560 = vmatpush1.msra.mxu0 0.0
  %5561 = vmatprep.subr.mxu0 0.0
  %5562 = vmatpush1.msra.mxu0 0.0
  %5563 = vmatprep.subr.mxu0 0.0
  %5564 = vmatpush1.msra.mxu0 0.0
  %5565 = vmatprep.subr.mxu0 0.0
  %5566 = vmatpush1.msra.mxu0 0.0
  %5567 = vmatprep.subr.mxu0 0.0
  %5568 = vmatpush1.msra.mxu0 0.0
  %5569 = vmatprep.subr.mxu0 0.0
  %5570 = vmatpush1.msra.mxu0 0.0
  %5571 = vmatprep.subr.mxu0 0.0
  %5572 = vmatpush1.msra.mxu0 0.0
  %5573 = vmatprep.subr.mxu0 0.0
  %5574 = vmatpush1.msra.mxu0 0.0
  %5575 = vmatprep.subr.mxu0 0.0
  %5576 = vmatpush1.msra.mxu0 0.0
  %5577 = vmatprep.subr.mxu0 0.0
  %5578 = vmatpush1.msra.mxu0 0.0
  %5579 = vmatprep.subr.mxu0 0.0
  %5580 = vmatpush1.msra.mxu0 0.0
  %5581 = vmatprep.subr.mxu0 0.0
  %5582 = vmatpush1.msra.mxu0 0.0
  %5583 = vmatprep.subr.mxu0 0.0
  %5584 = vmatpush1.msra.mxu0 0.0
  %5585 = vmatprep.subr.mxu0 0.0
  %5586 = vmatpush1.msra.mxu0 0.0
  %5587 = vmatprep.subr.mxu0 0.0
  %5588 = vmatpush1.msra.mxu0 0.0
  %5589 = vmatprep.subr.mxu0 0.0
  %5590 = vmatpush1.msra.mxu0 0.0
  %5591 = vmatprep.subr.mxu0 0.0
  %5592 = vmatpush1.msra.mxu0 0.0
  %5593 = vmatprep.subr.mxu0 0.0
  %5594 = vmatpush1.msra.mxu0 0.0
  %5595 = vmatprep.subr.mxu0 0.0
  %5596 = vmatpush1.msra.mxu0 0.0
  %5597 = vmatprep.subr.mxu0 0.0
  %5598 = vmatpush1.msra.mxu0 0.0
  %5599 = vmatprep.subr.mxu0 0.0
  %5600 = vmatpush1.msra.mxu0 0.0
  %5601 = vmatprep.subr.mxu0 0.0
  %5602 = vmatpush1.msra.mxu0 0.0
  %5603 = vmatprep.subr.mxu0 0.0
  %5604 = vmatpush1.msra.mxu0 0.0
  %5605 = vmatprep.subr.mxu0 0.0
  %5606 = vmatpush1.msra.mxu0 0.0
  %5607 = vmatprep.subr.mxu0 0.0
  %5608 = vmatpush1.msra.mxu0 0.0
  %5609 = vmatprep.subr.mxu0 0.0
  %5610 = vmatpush1.msra.mxu0 0.0
  %5611 = vmatprep.mubr.f32.mxu0 0.0
  %5612 = vmatmul.mubr.f32.gmra.mrb[0].mxu0 %v5451
  %v5613 = vpop.f32.mrb[0].mxu0
  %v5614 = vadd.f32 0.0, %v5613
  %v5615 = vpop.f32.mrb[0].mxu0
  %5616 = vmatprep.mubr.f32.mxu0 0.0
  %5617 = vmatmul.mubr.f32.gmra.mrb[0].mxu0 %v5454
  %v5618 = vpop.f32.mrb[0].mxu0
  %v5619 = vadd.f32 0.0, %v5618
  %v5620 = vpop.f32.mrb[0].mxu0
  %5621 = vmatprep.mubr.f32.mxu0 0.0
  %5622 = vmatmul.mubr.f32.gmra.mrb[0].mxu0 %v5457
  %v5623 = vpop.f32.mrb[0].mxu0
  %v5624 = vadd.f32 0.0, %v5623
  %v5625 = vpop.f32.mrb[0].mxu0
  %5626 = vmatprep.mubr.f32.mxu0 0.0
  %5627 = vmatmul.mubr.f32.gmra.mrb[0].mxu0 %v5460
  %v5628 = vpop.f32.mrb[0].mxu0
  %v5629 = vadd.f32 0.0, %v5628
  %v5630 = vpop.f32.mrb[0].mxu0
  %5631 = vdwg.mxu0
  %5632 = vmatprep.subr.mxu0 0.0
  %5633 = vmatpush1.msra.mxu0 %v5354
  %5634 = vmatprep.subr.mxu0 0.0
  %5635 = vmatpush1.msra.mxu0 %v5355
  %5636 = vmatprep.subr.mxu0 0.0
  %5637 = vmatpush1.msra.mxu0 %v5356
  %5638 = vmatprep.subr.mxu0 0.0
  %5639 = vmatpush1.msra.mxu0 %v5357
  %5640 = vmatprep.subr.mxu0 0.0
  %5641 = vmatpush1.msra.mxu0 0.0
  %5642 = vmatprep.subr.mxu0 0.0
  %5643 = vmatpush1.msra.mxu0 0.0
  %5644 = vmatprep.subr.mxu0 0.0
  %5645 = vmatpush1.msra.mxu0 0.0
  %5646 = vmatprep.subr.mxu0 0.0
  %5647 = vmatpush1.msra.mxu0 0.0
  %5648 = vmatprep.subr.mxu0 0.0
  %5649 = vmatpush1.msra.mxu0 0.0
  %5650 = vmatprep.subr.mxu0 0.0
  %5651 = vmatpush1.msra.mxu0 0.0
  %5652 = vmatprep.subr.mxu0 0.0
  %5653 = vmatpush1.msra.mxu0 0.0
  %5654 = vmatprep.subr.mxu0 0.0
  %5655 = vmatpush1.msra.mxu0 0.0
  %5656 = vmatprep.subr.mxu0 0.0
  %5657 = vmatpush1.msra.mxu0 0.0
  %5658 = vmatprep.subr.mxu0 0.0
  %5659 = vmatpush1.msra.mxu0 0.0
  %5660 = vmatprep.subr.mxu0 0.0
  %5661 = vmatpush1.msra.mxu0 0.0
  %5662 = vmatprep.subr.mxu0 0.0
  %5663 = vmatpush1.msra.mxu0 0.0
  %5664 = vmatprep.subr.mxu0 0.0
  %5665 = vmatpush1.msra.mxu0 0.0
  %5666 = vmatprep.subr.mxu0 0.0
  %5667 = vmatpush1.msra.mxu0 0.0
  %5668 = vmatprep.subr.mxu0 0.0
  %5669 = vmatpush1.msra.mxu0 0.0
  %5670 = vmatprep.subr.mxu0 0.0
  %5671 = vmatpush1.msra.mxu0 0.0
  %5672 = vmatprep.subr.mxu0 0.0
  %5673 = vmatpush1.msra.mxu0 0.0
  %5674 = vmatprep.subr.mxu0 0.0
  %5675 = vmatpush1.msra.mxu0 0.0
  %5676 = vmatprep.subr.mxu0 0.0
  %5677 = vmatpush1.msra.mxu0 0.0
  %5678 = vmatprep.subr.mxu0 0.0
  %5679 = vmatpush1.msra.mxu0 0.0
  %5680 = vmatprep.subr.mxu0 0.0
  %5681 = vmatpush1.msra.mxu0 0.0
  %5682 = vmatprep.subr.mxu0 0.0
  %5683 = vmatpush1.msra.mxu0 0.0
  %5684 = vmatprep.subr.mxu0 0.0
  %5685 = vmatpush1.msra.mxu0 0.0
  %5686 = vmatprep.subr.mxu0 0.0
  %5687 = vmatpush1.msra.mxu0 0.0
  %5688 = vmatprep.subr.mxu0 0.0
  %5689 = vmatpush1.msra.mxu0 0.0
  %5690 = vmatprep.subr.mxu0 0.0
  %5691 = vmatpush1.msra.mxu0 0.0
  %5692 = vmatprep.subr.mxu0 0.0
  %5693 = vmatpush1.msra.mxu0 0.0
  %5694 = vmatprep.subr.mxu0 0.0
  %5695 = vmatpush1.msra.mxu0 0.0
  %5696 = vmatprep.mubr.f32.mxu0 0.0
  %5697 = vmatmul.mubr.f32.gmra.mrb[0].mxu0 %v5451
  %v5698 = vpop.f32.mrb[0].mxu0
  %v5699 = vadd.f32 0.0, %v5698
  %v5700 = vpop.f32.mrb[0].mxu0
  %5701 = vmatprep.mubr.f32.mxu0 0.0
  %5702 = vmatmul.mubr.f32.gmra.mrb[0].mxu0 %v5454
  %v5703 = vpop.f32.mrb[0].mxu0
  %v5704 = vadd.f32 0.0, %v5703
  %v5705 = vpop.f32.mrb[0].mxu0
  %5706 = vmatprep.mubr.f32.mxu0 0.0
  %5707 = vmatmul.mubr.f32.gmra.mrb[0].mxu0 %v5457
  %v5708 = vpop.f32.mrb[0].mxu0
  %v5709 = vadd.f32 0.0, %v5708
  %v5710 = vpop.f32.mrb[0].mxu0
  %5711 = vmatprep.mubr.f32.mxu0 0.0
  %5712 = vmatmul.mubr.f32.gmra.mrb[0].mxu0 %v5460
  %v5713 = vpop.f32.mrb[0].mxu0
  %v5714 = vadd.f32 0.0, %v5713
  %v5715 = vpop.f32.mrb[0].mxu0
  %5716 = vdwg.mxu0
  %v5718 = vsel %vm22, %v5529, 0
  %v5721 = vsel %vm22, %v5534, 0
  %v5724 = vsel %vm22, %v5614, 0
  %v5727 = vsel %vm22, %v5619, 0
  %5729 = vmatprep.subr.mxu0 0.0
  %5730 = vmatpush1.xpose.msra.mxu0 %v5724
  %5731 = vmatprep.subr.mxu0 0.0
  %5732 = vmatpush1.xpose.msra.mxu0 %v5727
  %5733 = vmatprep.subr.mxu0 0.0
  %5734 = vmatpush1.xpose.msra.mxu0 0.0
  %5735 = vmatprep.subr.mxu0 0.0
  %5736 = vmatpush1.xpose.msra.mxu0 0.0
  %5737 = vmatprep.subr.mxu0 0.0
  %5738 = vmatpush1.xpose.msra.mxu0 0.0
  %5739 = vmatprep.subr.mxu0 0.0
  %5740 = vmatpush1.xpose.msra.mxu0 0.0
  %5741 = vmatprep.subr.mxu0 0.0
  %5742 = vmatpush1.xpose.msra.mxu0 0.0
  %5743 = vmatprep.subr.mxu0 0.0
  %5744 = vmatpush1.xpose.msra.mxu0 0.0
  %5745 = vmatprep.subr.mxu0 0.0
  %5746 = vmatpush1.xpose.msra.mxu0 0.0
  %5747 = vmatprep.subr.mxu0 0.0
  %5748 = vmatpush1.xpose.msra.mxu0 0.0
  %5749 = vmatprep.subr.mxu0 0.0
  %5750 = vmatpush1.xpose.msra.mxu0 0.0
  %5751 = vmatprep.subr.mxu0 0.0
  %5752 = vmatpush1.xpose.msra.mxu0 0.0
  %5753 = vmatprep.subr.mxu0 0.0
  %5754 = vmatpush1.xpose.msra.mxu0 0.0
  %5755 = vmatprep.subr.mxu0 0.0
  %5756 = vmatpush1.xpose.msra.mxu0 0.0
  %5757 = vmatprep.subr.mxu0 0.0
  %5758 = vmatpush1.xpose.msra.mxu0 0.0
  %5759 = vmatprep.subr.mxu0 0.0
  %5760 = vmatpush1.xpose.msra.mxu0 0.0
  %5761 = vmatprep.subr.mxu0 0.0
  %5762 = vmatpush1.xpose.msra.mxu0 0.0
  %5763 = vmatprep.subr.mxu0 0.0
  %5764 = vmatpush1.xpose.msra.mxu0 0.0
  %5765 = vmatprep.subr.mxu0 0.0
  %5766 = vmatpush1.xpose.msra.mxu0 0.0
  %5767 = vmatprep.subr.mxu0 0.0
  %5768 = vmatpush1.xpose.msra.mxu0 0.0
  %5769 = vmatprep.subr.mxu0 0.0
  %5770 = vmatpush1.xpose.msra.mxu0 0.0
  %5771 = vmatprep.subr.mxu0 0.0
  %5772 = vmatpush1.xpose.msra.mxu0 0.0
  %5773 = vmatprep.subr.mxu0 0.0
  %5774 = vmatpush1.xpose.msra.mxu0 0.0
  %5775 = vmatprep.subr.mxu0 0.0
  %5776 = vmatpush1.xpose.msra.mxu0 0.0
  %5777 = vmatprep.subr.mxu0 0.0
  %5778 = vmatpush1.xpose.msra.mxu0 0.0
  %5779 = vmatprep.subr.mxu0 0.0
  %5780 = vmatpush1.xpose.msra.mxu0 0.0
  %5781 = vmatprep.subr.mxu0 0.0
  %5782 = vmatpush1.xpose.msra.mxu0 0.0
  %5783 = vmatprep.subr.mxu0 0.0
  %5784 = vmatpush1.xpose.msra.mxu0 0.0
  %5785 = vmatprep.subr.mxu0 0.0
  %5786 = vmatpush1.xpose.msra.mxu0 0.0
  %5787 = vmatprep.subr.mxu0 0.0
  %5788 = vmatpush1.xpose.msra.mxu0 0.0
  %5789 = vmatprep.subr.mxu0 0.0
  %5790 = vmatpush1.xpose.msra.mxu0 0.0
  %5791 = vmatprep.subr.mxu0 0.0
  %5792 = vmatpush1.xpose.msra.mxu0 0.0
  %5793 = vmatprep.mubr.f32.mxu0 0.0
  %5794 = vmatmul.mubr.f32.gmra.mrb[0].mxu0 %v5718
  %v5795 = vpop.f32.mrb[0].mxu0
  %v5796 = vadd.f32 0.0, %v5795
  %v5797 = vpop.f32.mrb[0].mxu0
  %5798 = vmatprep.mubr.f32.mxu0 0.0
  %5799 = vmatmul.mubr.f32.gmra.mrb[0].mxu0 %v5721
  %v5800 = vpop.f32.mrb[0].mxu0
  %v5801 = vadd.f32 0.0, %v5800
  %v5802 = vpop.f32.mrb[0].mxu0
  %5803 = vdwg.mxu0
  %v5805 = vsel %vm22, %v5539, 0
  %v5808 = vsel %vm22, %v5544, 0
  %v5811 = vsel %vm22, %v5624, 0
  %v5814 = vsel %vm22, %v5629, 0
  %5816 = vmatprep.subr.mxu0 0.0
  %5817 = vmatpush1.xpose.msra.mxu0 %v5811
  %5818 = vmatprep.subr.mxu0 0.0
  %5819 = vmatpush1.xpose.msra.mxu0 %v5814
  %5820 = vmatprep.subr.mxu0 0.0
  %5821 = vmatpush1.xpose.msra.mxu0 0.0
  %5822 = vmatprep.subr.mxu0 0.0
  %5823 = vmatpush1.xpose.msra.mxu0 0.0
  %5824 = vmatprep.subr.mxu0 0.0
  %5825 = vmatpush1.xpose.msra.mxu0 0.0
  %5826 = vmatprep.subr.mxu0 0.0
  %5827 = vmatpush1.xpose.msra.mxu0 0.0
  %5828 = vmatprep.subr.mxu0 0.0
  %5829 = vmatpush1.xpose.msra.mxu0 0.0
  %5830 = vmatprep.subr.mxu0 0.0
  %5831 = vmatpush1.xpose.msra.mxu0 0.0
  %5832 = vmatprep.subr.mxu0 0.0
  %5833 = vmatpush1.xpose.msra.mxu0 0.0
  %5834 = vmatprep.subr.mxu0 0.0
  %5835 = vmatpush1.xpose.msra.mxu0 0.0
  %5836 = vmatprep.subr.mxu0 0.0
  %5837 = vmatpush1.xpose.msra.mxu0 0.0
  %5838 = vmatprep.subr.mxu0 0.0
  %5839 = vmatpush1.xpose.msra.mxu0 0.0
  %5840 = vmatprep.subr.mxu0 0.0
  %5841 = vmatpush1.xpose.msra.mxu0 0.0
  %5842 = vmatprep.subr.mxu0 0.0
  %5843 = vmatpush1.xpose.msra.mxu0 0.0
  %5844 = vmatprep.subr.mxu0 0.0
  %5845 = vmatpush1.xpose.msra.mxu0 0.0
  %5846 = vmatprep.subr.mxu0 0.0
  %5847 = vmatpush1.xpose.msra.mxu0 0.0
  %5848 = vmatprep.subr.mxu0 0.0
  %5849 = vmatpush1.xpose.msra.mxu0 0.0
  %5850 = vmatprep.subr.mxu0 0.0
  %5851 = vmatpush1.xpose.msra.mxu0 0.0
  %5852 = vmatprep.subr.mxu0 0.0
  %5853 = vmatpush1.xpose.msra.mxu0 0.0
  %5854 = vmatprep.subr.mxu0 0.0
  %5855 = vmatpush1.xpose.msra.mxu0 0.0
  %5856 = vmatprep.subr.mxu0 0.0
  %5857 = vmatpush1.xpose.msra.mxu0 0.0
  %5858 = vmatprep.subr.mxu0 0.0
  %5859 = vmatpush1.xpose.msra.mxu0 0.0
  %5860 = vmatprep.subr.mxu0 0.0
  %5861 = vmatpush1.xpose.msra.mxu0 0.0
  %5862 = vmatprep.subr.mxu0 0.0
  %5863 = vmatpush1.xpose.msra.mxu0 0.0
  %5864 = vmatprep.subr.mxu0 0.0
  %5865 = vmatpush1.xpose.msra.mxu0 0.0
  %5866 = vmatprep.subr.mxu0 0.0
  %5867 = vmatpush1.xpose.msra.mxu0 0.0
  %5868 = vmatprep.subr.mxu0 0.0
  %5869 = vmatpush1.xpose.msra.mxu0 0.0
  %5870 = vmatprep.subr.mxu0 0.0
  %5871 = vmatpush1.xpose.msra.mxu0 0.0
  %5872 = vmatprep.subr.mxu0 0.0
  %5873 = vmatpush1.xpose.msra.mxu0 0.0
  %5874 = vmatprep.subr.mxu0 0.0
  %5875 = vmatpush1.xpose.msra.mxu0 0.0
  %5876 = vmatprep.subr.mxu0 0.0
  %5877 = vmatpush1.xpose.msra.mxu0 0.0
  %5878 = vmatprep.subr.mxu0 0.0
  %5879 = vmatpush1.xpose.msra.mxu0 0.0
  %5880 = vmatprep.mubr.f32.mxu0 0.0
  %5881 = vmatmul.mubr.f32.gmra.mrb[0].mxu0 %v5805
  %v5882 = vpop.f32.mrb[0].mxu0
  %v5883 = vadd.f32 0.0, %v5882
  %v5884 = vpop.f32.mrb[0].mxu0
  %5885 = vmatprep.mubr.f32.mxu0 0.0
  %5886 = vmatmul.mubr.f32.gmra.mrb[0].mxu0 %v5808
  %v5887 = vpop.f32.mrb[0].mxu0
  %v5888 = vadd.f32 0.0, %v5887
  %v5889 = vpop.f32.mrb[0].mxu0
  %5890 = vdwg.mxu0
  %v5891 = vsel %vm137, -1e+09, %v5796
  %v5892 = vsel %vm138, -1e+09, %v5801
  %v5893 = vsel %vm137, -1e+09, %v5883
  %v5894 = vsel %vm138, -1e+09, %v5888
  %v5895 = vsel %vm22, %v5891, -inf
  %5896 = vmax.xlane.f32.xlu0 %v5895
  %v5897 = vpop.xlane.xlu0 %5896
  %v5898 = vsel %vm22, %v5892, -inf
  %5899 = vmax.xlane.f32.xlu0 %v5898
  %v5900 = vpop.xlane.xlu0 %5899
  %v5901 = vsel %vm22, %v5893, -inf
  %5902 = vmax.xlane.f32.xlu0 %v5901
  %v5903 = vpop.xlane.xlu0 %5902
  %v5904 = vsel %vm22, %v5894, -inf
  %5905 = vmax.xlane.f32.xlu0 %v5904
  %v5906 = vpop.xlane.xlu0 %5905
  %v5907 = vsub.f32 %v5891, %v5897
  %v5908 = vsub.f32 %v5892, %v5900
  %v5909 = vsub.f32 %v5893, %v5903
  %v5910 = vsub.f32 %v5894, %v5906
  %v5911 = vmul.f32 %v5907, 1.442695
  %v5912 = vpow.pop %v5911
  %v5913 = vmul.f32 %v5908, 1.442695
  %v5914 = vpow.pop %v5913
  %v5915 = vmul.f32 %v5909, 1.442695
  %v5916 = vpow.pop %v5915
  %v5917 = vmul.f32 %v5910, 1.442695
  %v5918 = vpow.pop %v5917
  %v5919 = vsel %vm22, %v5912, 0.0
  %5920 = vadd.xlane.f32.xlu0 %v5919
  %v5921 = vpop.xlane.xlu0 %5920
  %v5922 = vsel %vm22, %v5914, 0.0
  %5923 = vadd.xlane.f32.xlu0 %v5922
  %v5924 = vpop.xlane.xlu0 %5923
  %v5925 = vsel %vm22, %v5916, 0.0
  %5926 = vadd.xlane.f32.xlu0 %v5925
  %v5927 = vpop.xlane.xlu0 %5926
  %v5928 = vsel %vm22, %v5918, 0.0
  %5929 = vadd.xlane.f32.xlu0 %v5928
  %v5930 = vpop.xlane.xlu0 %5929
  %v5931 = vrcp.pop %v5921
  %v5932 = vrcp.pop %v5924
  %v5933 = vrcp.pop %v5927
  %v5934 = vrcp.pop %v5930
  %v5935 = vmul.f32 %v5912, %v5931
  %v5936 = vmul.f32 %v5914, %v5932
  %v5937 = vmul.f32 %v5916, %v5933
  %v5938 = vmul.f32 %v5918, %v5934
  %v5940 = vsel %vm22, %v5935, 0
  %v5943 = vsel %vm22, %v5936, 0
  %5945 = vmatprep.subr.mxu0 0.0
  %5946 = vmatpush1.msra.mxu0 %v5699
  %5947 = vmatprep.subr.mxu0 0.0
  %5948 = vmatpush1.msra.mxu0 %v5704
  %5949 = vmatprep.subr.mxu0 0.0
  %5950 = vmatpush1.msra.mxu0 0.0
  %5951 = vmatprep.subr.mxu0 0.0
  %5952 = vmatpush1.msra.mxu0 0.0
  %5953 = vmatprep.subr.mxu0 0.0
  %5954 = vmatpush1.msra.mxu0 0.0
  %5955 = vmatprep.subr.mxu0 0.0
  %5956 = vmatpush1.msra.mxu0 0.0
  %5957 = vmatprep.subr.mxu0 0.0
  %5958 = vmatpush1.msra.mxu0 0.0
  %5959 = vmatprep.subr.mxu0 0.0
  %5960 = vmatpush1.msra.mxu0 0.0
  %5961 = vmatprep.subr.mxu0 0.0
  %5962 = vmatpush1.msra.mxu0 0.0
  %5963 = vmatprep.subr.mxu0 0.0
  %5964 = vmatpush1.msra.mxu0 0.0
  %5965 = vmatprep.subr.mxu0 0.0
  %5966 = vmatpush1.msra.mxu0 0.0
  %5967 = vmatprep.subr.mxu0 0.0
  %5968 = vmatpush1.msra.mxu0 0.0
  %5969 = vmatprep.subr.mxu0 0.0
  %5970 = vmatpush1.msra.mxu0 0.0
  %5971 = vmatprep.subr.mxu0 0.0
  %5972 = vmatpush1.msra.mxu0 0.0
  %5973 = vmatprep.subr.mxu0 0.0
  %5974 = vmatpush1.msra.mxu0 0.0
  %5975 = vmatprep.subr.mxu0 0.0
  %5976 = vmatpush1.msra.mxu0 0.0
  %5977 = vmatprep.subr.mxu0 0.0
  %5978 = vmatpush1.msra.mxu0 0.0
  %5979 = vmatprep.subr.mxu0 0.0
  %5980 = vmatpush1.msra.mxu0 0.0
  %5981 = vmatprep.subr.mxu0 0.0
  %5982 = vmatpush1.msra.mxu0 0.0
  %5983 = vmatprep.subr.mxu0 0.0
  %5984 = vmatpush1.msra.mxu0 0.0
  %5985 = vmatprep.subr.mxu0 0.0
  %5986 = vmatpush1.msra.mxu0 0.0
  %5987 = vmatprep.subr.mxu0 0.0
  %5988 = vmatpush1.msra.mxu0 0.0
  %5989 = vmatprep.subr.mxu0 0.0
  %5990 = vmatpush1.msra.mxu0 0.0
  %5991 = vmatprep.subr.mxu0 0.0
  %5992 = vmatpush1.msra.mxu0 0.0
  %5993 = vmatprep.subr.mxu0 0.0
  %5994 = vmatpush1.msra.mxu0 0.0
  %5995 = vmatprep.subr.mxu0 0.0
  %5996 = vmatpush1.msra.mxu0 0.0
  %5997 = vmatprep.subr.mxu0 0.0
  %5998 = vmatpush1.msra.mxu0 0.0
  %5999 = vmatprep.subr.mxu0 0.0
  %6000 = vmatpush1.msra.mxu0 0.0
  %6001 = vmatprep.subr.mxu0 0.0
  %6002 = vmatpush1.msra.mxu0 0.0
  %6003 = vmatprep.subr.mxu0 0.0
  %6004 = vmatpush1.msra.mxu0 0.0
  %6005 = vmatprep.subr.mxu0 0.0
  %6006 = vmatpush1.msra.mxu0 0.0
  %6007 = vmatprep.subr.mxu0 0.0
  %6008 = vmatpush1.msra.mxu0 0.0
  %6009 = vmatprep.mubr.f32.mxu0 0.0
  %6010 = vmatmul.mubr.f32.gmra.mrb[0].mxu0 %v5940
  %v6011 = vpop.f32.mrb[0].mxu0
  %v6012 = vadd.f32 0.0, %v6011
  %v6013 = vpop.f32.mrb[0].mxu0
  %6014 = vmatprep.mubr.f32.mxu0 0.0
  %6015 = vmatmul.mubr.f32.gmra.mrb[0].mxu0 %v5943
  %v6016 = vpop.f32.mrb[0].mxu0
  %v6017 = vadd.f32 0.0, %v6016
  %v6018 = vpop.f32.mrb[0].mxu0
  %6019 = vdwg.mxu0
  %v6021 = vsel %vm22, %v5937, 0
  %v6024 = vsel %vm22, %v5938, 0
  %6026 = vmatprep.subr.mxu0 0.0
  %6027 = vmatpush1.msra.mxu0 %v5709
  %6028 = vmatprep.subr.mxu0 0.0
  %6029 = vmatpush1.msra.mxu0 %v5714
  %6030 = vmatprep.subr.mxu0 0.0
  %6031 = vmatpush1.msra.mxu0 0.0
  %6032 = vmatprep.subr.mxu0 0.0
  %6033 = vmatpush1.msra.mxu0 0.0
  %6034 = vmatprep.subr.mxu0 0.0
  %6035 = vmatpush1.msra.mxu0 0.0
  %6036 = vmatprep.subr.mxu0 0.0
  %6037 = vmatpush1.msra.mxu0 0.0
  %6038 = vmatprep.subr.mxu0 0.0
  %6039 = vmatpush1.msra.mxu0 0.0
  %6040 = vmatprep.subr.mxu0 0.0
  %6041 = vmatpush1.msra.mxu0 0.0
  %6042 = vmatprep.subr.mxu0 0.0
  %6043 = vmatpush1.msra.mxu0 0.0
  %6044 = vmatprep.subr.mxu0 0.0
  %6045 = vmatpush1.msra.mxu0 0.0
  %6046 = vmatprep.subr.mxu0 0.0
  %6047 = vmatpush1.msra.mxu0 0.0
  %6048 = vmatprep.subr.mxu0 0.0
  %6049 = vmatpush1.msra.mxu0 0.0
  %6050 = vmatprep.subr.mxu0 0.0
  %6051 = vmatpush1.msra.mxu0 0.0
  %6052 = vmatprep.subr.mxu0 0.0
  %6053 = vmatpush1.msra.mxu0 0.0
  %6054 = vmatprep.subr.mxu0 0.0
  %6055 = vmatpush1.msra.mxu0 0.0
  %6056 = vmatprep.subr.mxu0 0.0
  %6057 = vmatpush1.msra.mxu0 0.0
  %6058 = vmatprep.subr.mxu0 0.0
  %6059 = vmatpush1.msra.mxu0 0.0
  %6060 = vmatprep.subr.mxu0 0.0
  %6061 = vmatpush1.msra.mxu0 0.0
  %6062 = vmatprep.subr.mxu0 0.0
  %6063 = vmatpush1.msra.mxu0 0.0
  %6064 = vmatprep.subr.mxu0 0.0
  %6065 = vmatpush1.msra.mxu0 0.0
  %6066 = vmatprep.subr.mxu0 0.0
  %6067 = vmatpush1.msra.mxu0 0.0
  %6068 = vmatprep.subr.mxu0 0.0
  %6069 = vmatpush1.msra.mxu0 0.0
  %6070 = vmatprep.subr.mxu0 0.0
  %6071 = vmatpush1.msra.mxu0 0.0
  %6072 = vmatprep.subr.mxu0 0.0
  %6073 = vmatpush1.msra.mxu0 0.0
  %6074 = vmatprep.subr.mxu0 0.0
  %6075 = vmatpush1.msra.mxu0 0.0
  %6076 = vmatprep.subr.mxu0 0.0
  %6077 = vmatpush1.msra.mxu0 0.0
  %6078 = vmatprep.subr.mxu0 0.0
  %6079 = vmatpush1.msra.mxu0 0.0
  %6080 = vmatprep.subr.mxu0 0.0
  %6081 = vmatpush1.msra.mxu0 0.0
  %6082 = vmatprep.subr.mxu0 0.0
  %6083 = vmatpush1.msra.mxu0 0.0
  %6084 = vmatprep.subr.mxu0 0.0
  %6085 = vmatpush1.msra.mxu0 0.0
  %6086 = vmatprep.subr.mxu0 0.0
  %6087 = vmatpush1.msra.mxu0 0.0
  %6088 = vmatprep.subr.mxu0 0.0
  %6089 = vmatpush1.msra.mxu0 0.0
  %6090 = vmatprep.mubr.f32.mxu0 0.0
  %6091 = vmatmul.mubr.f32.gmra.mrb[0].mxu0 %v6021
  %v6092 = vpop.f32.mrb[0].mxu0
  %v6093 = vadd.f32 0.0, %v6092
  %v6094 = vpop.f32.mrb[0].mxu0
  %6095 = vmatprep.mubr.f32.mxu0 0.0
  %6096 = vmatmul.mubr.f32.gmra.mrb[0].mxu0 %v6024
  %v6097 = vpop.f32.mrb[0].mxu0
  %v6098 = vadd.f32 0.0, %v6097
  %v6099 = vpop.f32.mrb[0].mxu0
  %6100 = vdwg.mxu0
  %6101 = vrot.lane.b32.xlu0 %v5529, 112
  %v6102 = vpop.permute.xlu0 %6101
  %6103 = vrot.lane.b32.xlu0 %v5534, 112
  %v6104 = vpop.permute.xlu0 %6103
  %6105 = vrot.lane.b32.xlu0 %v5614, 112
  %v6106 = vpop.permute.xlu0 %6105
  %6107 = vrot.lane.b32.xlu0 %v5619, 112
  %v6108 = vpop.permute.xlu0 %6107
  %v6109 = vsel %vm22, %v6102, 0
  %v6111 = vsel %vm22, %v6104, 0
  %v6113 = vsel %vm22, %v6106, 0
  %v6115 = vsel %vm22, %v6108, 0
  %6117 = vmatprep.subr.mxu0 0.0
  %6118 = vmatpush1.xpose.msra.mxu0 %v6113
  %6119 = vmatprep.subr.mxu0 0.0
  %6120 = vmatpush1.xpose.msra.mxu0 %v6115
  %6121 = vmatprep.subr.mxu0 0.0
  %6122 = vmatpush1.xpose.msra.mxu0 0.0
  %6123 = vmatprep.subr.mxu0 0.0
  %6124 = vmatpush1.xpose.msra.mxu0 0.0
  %6125 = vmatprep.subr.mxu0 0.0
  %6126 = vmatpush1.xpose.msra.mxu0 0.0
  %6127 = vmatprep.subr.mxu0 0.0
  %6128 = vmatpush1.xpose.msra.mxu0 0.0
  %6129 = vmatprep.subr.mxu0 0.0
  %6130 = vmatpush1.xpose.msra.mxu0 0.0
  %6131 = vmatprep.subr.mxu0 0.0
  %6132 = vmatpush1.xpose.msra.mxu0 0.0
  %6133 = vmatprep.subr.mxu0 0.0
  %6134 = vmatpush1.xpose.msra.mxu0 0.0
  %6135 = vmatprep.subr.mxu0 0.0
  %6136 = vmatpush1.xpose.msra.mxu0 0.0
  %6137 = vmatprep.subr.mxu0 0.0
  %6138 = vmatpush1.xpose.msra.mxu0 0.0
  %6139 = vmatprep.subr.mxu0 0.0
  %6140 = vmatpush1.xpose.msra.mxu0 0.0
  %6141 = vmatprep.subr.mxu0 0.0
  %6142 = vmatpush1.xpose.msra.mxu0 0.0
  %6143 = vmatprep.subr.mxu0 0.0
  %6144 = vmatpush1.xpose.msra.mxu0 0.0
  %6145 = vmatprep.subr.mxu0 0.0
  %6146 = vmatpush1.xpose.msra.mxu0 0.0
  %6147 = vmatprep.subr.mxu0 0.0
  %6148 = vmatpush1.xpose.msra.mxu0 0.0
  %6149 = vmatprep.subr.mxu0 0.0
  %6150 = vmatpush1.xpose.msra.mxu0 0.0
  %6151 = vmatprep.subr.mxu0 0.0
  %6152 = vmatpush1.xpose.msra.mxu0 0.0
  %6153 = vmatprep.subr.mxu0 0.0
  %6154 = vmatpush1.xpose.msra.mxu0 0.0
  %6155 = vmatprep.subr.mxu0 0.0
  %6156 = vmatpush1.xpose.msra.mxu0 0.0
  %6157 = vmatprep.subr.mxu0 0.0
  %6158 = vmatpush1.xpose.msra.mxu0 0.0
  %6159 = vmatprep.subr.mxu0 0.0
  %6160 = vmatpush1.xpose.msra.mxu0 0.0
  %6161 = vmatprep.subr.mxu0 0.0
  %6162 = vmatpush1.xpose.msra.mxu0 0.0
  %6163 = vmatprep.subr.mxu0 0.0
  %6164 = vmatpush1.xpose.msra.mxu0 0.0
  %6165 = vmatprep.subr.mxu0 0.0
  %6166 = vmatpush1.xpose.msra.mxu0 0.0
  %6167 = vmatprep.subr.mxu0 0.0
  %6168 = vmatpush1.xpose.msra.mxu0 0.0
  %6169 = vmatprep.subr.mxu0 0.0
  %6170 = vmatpush1.xpose.msra.mxu0 0.0
  %6171 = vmatprep.subr.mxu0 0.0
  %6172 = vmatpush1.xpose.msra.mxu0 0.0
  %6173 = vmatprep.subr.mxu0 0.0
  %6174 = vmatpush1.xpose.msra.mxu0 0.0
  %6175 = vmatprep.subr.mxu0 0.0
  %6176 = vmatpush1.xpose.msra.mxu0 0.0
  %6177 = vmatprep.subr.mxu0 0.0
  %6178 = vmatpush1.xpose.msra.mxu0 0.0
  %6179 = vmatprep.subr.mxu0 0.0
  %6180 = vmatpush1.xpose.msra.mxu0 0.0
  %6181 = vmatprep.mubr.f32.mxu0 0.0
  %6182 = vmatmul.mubr.f32.gmra.mrb[0].mxu0 %v6109
  %v6183 = vpop.f32.mrb[0].mxu0
  %v6184 = vadd.f32 0.0, %v6183
  %v6185 = vpop.f32.mrb[0].mxu0
  %6186 = vmatprep.mubr.f32.mxu0 0.0
  %6187 = vmatmul.mubr.f32.gmra.mrb[0].mxu0 %v6111
  %v6188 = vpop.f32.mrb[0].mxu0
  %v6189 = vadd.f32 0.0, %v6188
  %v6190 = vpop.f32.mrb[0].mxu0
  %6191 = vdwg.mxu0
  %6192 = vrot.lane.b32.xlu0 %v5539, 112
  %v6193 = vpop.permute.xlu0 %6192
  %6194 = vrot.lane.b32.xlu0 %v5544, 112
  %v6195 = vpop.permute.xlu0 %6194
  %6196 = vrot.lane.b32.xlu0 %v5624, 112
  %v6197 = vpop.permute.xlu0 %6196
  %6198 = vrot.lane.b32.xlu0 %v5629, 112
  %v6199 = vpop.permute.xlu0 %6198
  %v6200 = vsel %vm22, %v6193, 0
  %v6202 = vsel %vm22, %v6195, 0
  %v6204 = vsel %vm22, %v6197, 0
  %v6206 = vsel %vm22, %v6199, 0
  %6208 = vmatprep.subr.mxu0 0.0
  %6209 = vmatpush1.xpose.msra.mxu0 %v6204
  %6210 = vmatprep.subr.mxu0 0.0
  %6211 = vmatpush1.xpose.msra.mxu0 %v6206
  %6212 = vmatprep.subr.mxu0 0.0
  %6213 = vmatpush1.xpose.msra.mxu0 0.0
  %6214 = vmatprep.subr.mxu0 0.0
  %6215 = vmatpush1.xpose.msra.mxu0 0.0
  %6216 = vmatprep.subr.mxu0 0.0
  %6217 = vmatpush1.xpose.msra.mxu0 0.0
  %6218 = vmatprep.subr.mxu0 0.0
  %6219 = vmatpush1.xpose.msra.mxu0 0.0
  %6220 = vmatprep.subr.mxu0 0.0
  %6221 = vmatpush1.xpose.msra.mxu0 0.0
  %6222 = vmatprep.subr.mxu0 0.0
  %6223 = vmatpush1.xpose.msra.mxu0 0.0
  %6224 = vmatprep.subr.mxu0 0.0
  %6225 = vmatpush1.xpose.msra.mxu0 0.0
  %6226 = vmatprep.subr.mxu0 0.0
  %6227 = vmatpush1.xpose.msra.mxu0 0.0
  %6228 = vmatprep.subr.mxu0 0.0
  %6229 = vmatpush1.xpose.msra.mxu0 0.0
  %6230 = vmatprep.subr.mxu0 0.0
  %6231 = vmatpush1.xpose.msra.mxu0 0.0
  %6232 = vmatprep.subr.mxu0 0.0
  %6233 = vmatpush1.xpose.msra.mxu0 0.0
  %6234 = vmatprep.subr.mxu0 0.0
  %6235 = vmatpush1.xpose.msra.mxu0 0.0
  %6236 = vmatprep.subr.mxu0 0.0
  %6237 = vmatpush1.xpose.msra.mxu0 0.0
  %6238 = vmatprep.subr.mxu0 0.0
  %6239 = vmatpush1.xpose.msra.mxu0 0.0
  %6240 = vmatprep.subr.mxu0 0.0
  %6241 = vmatpush1.xpose.msra.mxu0 0.0
  %6242 = vmatprep.subr.mxu0 0.0
  %6243 = vmatpush1.xpose.msra.mxu0 0.0
  %6244 = vmatprep.subr.mxu0 0.0
  %6245 = vmatpush1.xpose.msra.mxu0 0.0
  %6246 = vmatprep.subr.mxu0 0.0
  %6247 = vmatpush1.xpose.msra.mxu0 0.0
  %6248 = vmatprep.subr.mxu0 0.0
  %6249 = vmatpush1.xpose.msra.mxu0 0.0
  %6250 = vmatprep.subr.mxu0 0.0
  %6251 = vmatpush1.xpose.msra.mxu0 0.0
  %6252 = vmatprep.subr.mxu0 0.0
  %6253 = vmatpush1.xpose.msra.mxu0 0.0
  %6254 = vmatprep.subr.mxu0 0.0
  %6255 = vmatpush1.xpose.msra.mxu0 0.0
  %6256 = vmatprep.subr.mxu0 0.0
  %6257 = vmatpush1.xpose.msra.mxu0 0.0
  %6258 = vmatprep.subr.mxu0 0.0
  %6259 = vmatpush1.xpose.msra.mxu0 0.0
  %6260 = vmatprep.subr.mxu0 0.0
  %6261 = vmatpush1.xpose.msra.mxu0 0.0
  %6262 = vmatprep.subr.mxu0 0.0
  %6263 = vmatpush1.xpose.msra.mxu0 0.0
  %6264 = vmatprep.subr.mxu0 0.0
  %6265 = vmatpush1.xpose.msra.mxu0 0.0
  %6266 = vmatprep.subr.mxu0 0.0
  %6267 = vmatpush1.xpose.msra.mxu0 0.0
  %6268 = vmatprep.subr.mxu0 0.0
  %6269 = vmatpush1.xpose.msra.mxu0 0.0
  %6270 = vmatprep.subr.mxu0 0.0
  %6271 = vmatpush1.xpose.msra.mxu0 0.0
  %6272 = vmatprep.mubr.f32.mxu0 0.0
  %6273 = vmatmul.mubr.f32.gmra.mrb[0].mxu0 %v6200
  %v6274 = vpop.f32.mrb[0].mxu0
  %v6275 = vadd.f32 0.0, %v6274
  %v6276 = vpop.f32.mrb[0].mxu0
  %6277 = vmatprep.mubr.f32.mxu0 0.0
  %6278 = vmatmul.mubr.f32.gmra.mrb[0].mxu0 %v6202
  %v6279 = vpop.f32.mrb[0].mxu0
  %v6280 = vadd.f32 0.0, %v6279
  %v6281 = vpop.f32.mrb[0].mxu0
  %6282 = vdwg.mxu0
  %v6283 = vsel %vm137, -1e+09, %v6184
  %v6284 = vsel %vm138, -1e+09, %v6189
  %v6285 = vsel %vm137, -1e+09, %v6275
  %v6286 = vsel %vm138, -1e+09, %v6280
  %v6287 = vsel %vm22, %v6283, -inf
  %6288 = vmax.xlane.f32.xlu0 %v6287
  %v6289 = vpop.xlane.xlu0 %6288
  %v6290 = vsel %vm22, %v6284, -inf
  %6291 = vmax.xlane.f32.xlu0 %v6290
  %v6292 = vpop.xlane.xlu0 %6291
  %v6293 = vsel %vm22, %v6285, -inf
  %6294 = vmax.xlane.f32.xlu0 %v6293
  %v6295 = vpop.xlane.xlu0 %6294
  %v6296 = vsel %vm22, %v6286, -inf
  %6297 = vmax.xlane.f32.xlu0 %v6296
  %v6298 = vpop.xlane.xlu0 %6297
  %v6299 = vsub.f32 %v6283, %v6289
  %v6300 = vsub.f32 %v6284, %v6292
  %v6301 = vsub.f32 %v6285, %v6295
  %v6302 = vsub.f32 %v6286, %v6298
  %v6303 = vmul.f32 %v6299, 1.442695
  %v6304 = vpow.pop %v6303
  %v6305 = vmul.f32 %v6300, 1.442695
  %v6306 = vpow.pop %v6305
  %v6307 = vmul.f32 %v6301, 1.442695
  %v6308 = vpow.pop %v6307
  %v6309 = vmul.f32 %v6302, 1.442695
  %v6310 = vpow.pop %v6309
  %v6311 = vsel %vm22, %v6304, 0.0
  %6312 = vadd.xlane.f32.xlu0 %v6311
  %v6313 = vpop.xlane.xlu0 %6312
  %v6314 = vsel %vm22, %v6306, 0.0
  %6315 = vadd.xlane.f32.xlu0 %v6314
  %v6316 = vpop.xlane.xlu0 %6315
  %v6317 = vsel %vm22, %v6308, 0.0
  %6318 = vadd.xlane.f32.xlu0 %v6317
  %v6319 = vpop.xlane.xlu0 %6318
  %v6320 = vsel %vm22, %v6310, 0.0
  %6321 = vadd.xlane.f32.xlu0 %v6320
  %v6322 = vpop.xlane.xlu0 %6321
  %v6323 = vrcp.pop %v6313
  %v6324 = vrcp.pop %v6316
  %v6325 = vrcp.pop %v6319
  %v6326 = vrcp.pop %v6322
  %v6327 = vmul.f32 %v6304, %v6323
  %v6328 = vmul.f32 %v6306, %v6324
  %v6329 = vmul.f32 %v6308, %v6325
  %v6330 = vmul.f32 %v6310, %v6326
  %6333 = vrot.lane.b32.xlu0 %v5699, 112
  %v6334 = vpop.permute.xlu0 %6333
  %6335 = vrot.lane.b32.xlu0 %v5704, 112
  %v6336 = vpop.permute.xlu0 %6335
  %v6340 = vsel %vm22, %v6327, 0
  %v6343 = vsel %vm22, %v6328, 0
  %6345 = vmatprep.subr.mxu0 0.0
  %6346 = vmatpush1.msra.mxu0 %v6334
  %6347 = vmatprep.subr.mxu0 0.0
  %6348 = vmatpush1.msra.mxu0 %v6336
  %6349 = vmatprep.subr.mxu0 0.0
  %6350 = vmatpush1.msra.mxu0 0.0
  %6351 = vmatprep.subr.mxu0 0.0
  %6352 = vmatpush1.msra.mxu0 0.0
  %6353 = vmatprep.subr.mxu0 0.0
  %6354 = vmatpush1.msra.mxu0 0.0
  %6355 = vmatprep.subr.mxu0 0.0
  %6356 = vmatpush1.msra.mxu0 0.0
  %6357 = vmatprep.subr.mxu0 0.0
  %6358 = vmatpush1.msra.mxu0 0.0
  %6359 = vmatprep.subr.mxu0 0.0
  %6360 = vmatpush1.msra.mxu0 0.0
  %6361 = vmatprep.subr.mxu0 0.0
  %6362 = vmatpush1.msra.mxu0 0.0
  %6363 = vmatprep.subr.mxu0 0.0
  %6364 = vmatpush1.msra.mxu0 0.0
  %6365 = vmatprep.subr.mxu0 0.0
  %6366 = vmatpush1.msra.mxu0 0.0
  %6367 = vmatprep.subr.mxu0 0.0
  %6368 = vmatpush1.msra.mxu0 0.0
  %6369 = vmatprep.subr.mxu0 0.0
  %6370 = vmatpush1.msra.mxu0 0.0
  %6371 = vmatprep.subr.mxu0 0.0
  %6372 = vmatpush1.msra.mxu0 0.0
  %6373 = vmatprep.subr.mxu0 0.0
  %6374 = vmatpush1.msra.mxu0 0.0
  %6375 = vmatprep.subr.mxu0 0.0
  %6376 = vmatpush1.msra.mxu0 0.0
  %6377 = vmatprep.subr.mxu0 0.0
  %6378 = vmatpush1.msra.mxu0 0.0
  %6379 = vmatprep.subr.mxu0 0.0
  %6380 = vmatpush1.msra.mxu0 0.0
  %6381 = vmatprep.subr.mxu0 0.0
  %6382 = vmatpush1.msra.mxu0 0.0
  %6383 = vmatprep.subr.mxu0 0.0
  %6384 = vmatpush1.msra.mxu0 0.0
  %6385 = vmatprep.subr.mxu0 0.0
  %6386 = vmatpush1.msra.mxu0 0.0
  %6387 = vmatprep.subr.mxu0 0.0
  %6388 = vmatpush1.msra.mxu0 0.0
  %6389 = vmatprep.subr.mxu0 0.0
  %6390 = vmatpush1.msra.mxu0 0.0
  %6391 = vmatprep.subr.mxu0 0.0
  %6392 = vmatpush1.msra.mxu0 0.0
  %6393 = vmatprep.subr.mxu0 0.0
  %6394 = vmatpush1.msra.mxu0 0.0
  %6395 = vmatprep.subr.mxu0 0.0
  %6396 = vmatpush1.msra.mxu0 0.0
  %6397 = vmatprep.subr.mxu0 0.0
  %6398 = vmatpush1.msra.mxu0 0.0
  %6399 = vmatprep.subr.mxu0 0.0
  %6400 = vmatpush1.msra.mxu0 0.0
  %6401 = vmatprep.subr.mxu0 0.0
  %6402 = vmatpush1.msra.mxu0 0.0
  %6403 = vmatprep.subr.mxu0 0.0
  %6404 = vmatpush1.msra.mxu0 0.0
  %6405 = vmatprep.subr.mxu0 0.0
  %6406 = vmatpush1.msra.mxu0 0.0
  %6407 = vmatprep.subr.mxu0 0.0
  %6408 = vmatpush1.msra.mxu0 0.0
  %6409 = vmatprep.mubr.f32.mxu0 0.0
  %6410 = vmatmul.mubr.f32.gmra.mrb[0].mxu0 %v6340
  %v6411 = vpop.f32.mrb[0].mxu0
  %v6412 = vadd.f32 0.0, %v6411
  %v6413 = vpop.f32.mrb[0].mxu0
  %6414 = vmatprep.mubr.f32.mxu0 0.0
  %6415 = vmatmul.mubr.f32.gmra.mrb[0].mxu0 %v6343
  %v6416 = vpop.f32.mrb[0].mxu0
  %v6417 = vadd.f32 0.0, %v6416
  %v6418 = vpop.f32.mrb[0].mxu0
  %6419 = vdwg.mxu0
  %6422 = vrot.lane.b32.xlu0 %v5709, 112
  %v6423 = vpop.permute.xlu0 %6422
  %6424 = vrot.lane.b32.xlu0 %v5714, 112
  %v6425 = vpop.permute.xlu0 %6424
  %v6429 = vsel %vm22, %v6329, 0
  %v6432 = vsel %vm22, %v6330, 0
  %6434 = vmatprep.subr.mxu0 0.0
  %6435 = vmatpush1.msra.mxu0 %v6423
  %6436 = vmatprep.subr.mxu0 0.0
  %6437 = vmatpush1.msra.mxu0 %v6425
  %6438 = vmatprep.subr.mxu0 0.0
  %6439 = vmatpush1.msra.mxu0 0.0
  %6440 = vmatprep.subr.mxu0 0.0
  %6441 = vmatpush1.msra.mxu0 0.0
  %6442 = vmatprep.subr.mxu0 0.0
  %6443 = vmatpush1.msra.mxu0 0.0
  %6444 = vmatprep.subr.mxu0 0.0
  %6445 = vmatpush1.msra.mxu0 0.0
  %6446 = vmatprep.subr.mxu0 0.0
  %6447 = vmatpush1.msra.mxu0 0.0
  %6448 = vmatprep.subr.mxu0 0.0
  %6449 = vmatpush1.msra.mxu0 0.0
  %6450 = vmatprep.subr.mxu0 0.0
  %6451 = vmatpush1.msra.mxu0 0.0
  %6452 = vmatprep.subr.mxu0 0.0
  %6453 = vmatpush1.msra.mxu0 0.0
  %6454 = vmatprep.subr.mxu0 0.0
  %6455 = vmatpush1.msra.mxu0 0.0
  %6456 = vmatprep.subr.mxu0 0.0
  %6457 = vmatpush1.msra.mxu0 0.0
  %6458 = vmatprep.subr.mxu0 0.0
  %6459 = vmatpush1.msra.mxu0 0.0
  %6460 = vmatprep.subr.mxu0 0.0
  %6461 = vmatpush1.msra.mxu0 0.0
  %6462 = vmatprep.subr.mxu0 0.0
  %6463 = vmatpush1.msra.mxu0 0.0
  %6464 = vmatprep.subr.mxu0 0.0
  %6465 = vmatpush1.msra.mxu0 0.0
  %6466 = vmatprep.subr.mxu0 0.0
  %6467 = vmatpush1.msra.mxu0 0.0
  %6468 = vmatprep.subr.mxu0 0.0
  %6469 = vmatpush1.msra.mxu0 0.0
  %6470 = vmatprep.subr.mxu0 0.0
  %6471 = vmatpush1.msra.mxu0 0.0
  %6472 = vmatprep.subr.mxu0 0.0
  %6473 = vmatpush1.msra.mxu0 0.0
  %6474 = vmatprep.subr.mxu0 0.0
  %6475 = vmatpush1.msra.mxu0 0.0
  %6476 = vmatprep.subr.mxu0 0.0
  %6477 = vmatpush1.msra.mxu0 0.0
  %6478 = vmatprep.subr.mxu0 0.0
  %6479 = vmatpush1.msra.mxu0 0.0
  %6480 = vmatprep.subr.mxu0 0.0
  %6481 = vmatpush1.msra.mxu0 0.0
  %6482 = vmatprep.subr.mxu0 0.0
  %6483 = vmatpush1.msra.mxu0 0.0
  %6484 = vmatprep.subr.mxu0 0.0
  %6485 = vmatpush1.msra.mxu0 0.0
  %6486 = vmatprep.subr.mxu0 0.0
  %6487 = vmatpush1.msra.mxu0 0.0
  %6488 = vmatprep.subr.mxu0 0.0
  %6489 = vmatpush1.msra.mxu0 0.0
  %6490 = vmatprep.subr.mxu0 0.0
  %6491 = vmatpush1.msra.mxu0 0.0
  %6492 = vmatprep.subr.mxu0 0.0
  %6493 = vmatpush1.msra.mxu0 0.0
  %6494 = vmatprep.subr.mxu0 0.0
  %6495 = vmatpush1.msra.mxu0 0.0
  %6496 = vmatprep.subr.mxu0 0.0
  %6497 = vmatpush1.msra.mxu0 0.0
  %6498 = vmatprep.mubr.f32.mxu0 0.0
  %6499 = vmatmul.mubr.f32.gmra.mrb[0].mxu0 %v6429
  %v6500 = vpop.f32.mrb[0].mxu0
  %v6501 = vadd.f32 0.0, %v6500
  %v6502 = vpop.f32.mrb[0].mxu0
  %6503 = vmatprep.mubr.f32.mxu0 0.0
  %6504 = vmatmul.mubr.f32.gmra.mrb[0].mxu0 %v6432
  %v6505 = vpop.f32.mrb[0].mxu0
  %v6506 = vadd.f32 0.0, %v6505
  %v6507 = vpop.f32.mrb[0].mxu0
  %6508 = vdwg.mxu0
  %6509 = vrot.lane.b32.xlu0 %v5529, 96
  %v6510 = vpop.permute.xlu0 %6509
  %6511 = vrot.lane.b32.xlu0 %v5534, 96
  %v6512 = vpop.permute.xlu0 %6511
  %6513 = vrot.lane.b32.xlu0 %v5614, 96
  %v6514 = vpop.permute.xlu0 %6513
  %6515 = vrot.lane.b32.xlu0 %v5619, 96
  %v6516 = vpop.permute.xlu0 %6515
  %v6517 = vsel %vm22, %v6510, 0
  %v6519 = vsel %vm22, %v6512, 0
  %v6521 = vsel %vm22, %v6514, 0
  %v6523 = vsel %vm22, %v6516, 0
  %6525 = vmatprep.subr.mxu0 0.0
  %6526 = vmatpush1.xpose.msra.mxu0 %v6521
  %6527 = vmatprep.subr.mxu0 0.0
  %6528 = vmatpush1.xpose.msra.mxu0 %v6523
  %6529 = vmatprep.subr.mxu0 0.0
  %6530 = vmatpush1.xpose.msra.mxu0 0.0
  %6531 = vmatprep.subr.mxu0 0.0
  %6532 = vmatpush1.xpose.msra.mxu0 0.0
  %6533 = vmatprep.subr.mxu0 0.0
  %6534 = vmatpush1.xpose.msra.mxu0 0.0
  %6535 = vmatprep.subr.mxu0 0.0
  %6536 = vmatpush1.xpose.msra.mxu0 0.0
  %6537 = vmatprep.subr.mxu0 0.0
  %6538 = vmatpush1.xpose.msra.mxu0 0.0
  %6539 = vmatprep.subr.mxu0 0.0
  %6540 = vmatpush1.xpose.msra.mxu0 0.0
  %6541 = vmatprep.subr.mxu0 0.0
  %6542 = vmatpush1.xpose.msra.mxu0 0.0
  %6543 = vmatprep.subr.mxu0 0.0
  %6544 = vmatpush1.xpose.msra.mxu0 0.0
  %6545 = vmatprep.subr.mxu0 0.0
  %6546 = vmatpush1.xpose.msra.mxu0 0.0
  %6547 = vmatprep.subr.mxu0 0.0
  %6548 = vmatpush1.xpose.msra.mxu0 0.0
  %6549 = vmatprep.subr.mxu0 0.0
  %6550 = vmatpush1.xpose.msra.mxu0 0.0
  %6551 = vmatprep.subr.mxu0 0.0
  %6552 = vmatpush1.xpose.msra.mxu0 0.0
  %6553 = vmatprep.subr.mxu0 0.0
  %6554 = vmatpush1.xpose.msra.mxu0 0.0
  %6555 = vmatprep.subr.mxu0 0.0
  %6556 = vmatpush1.xpose.msra.mxu0 0.0
  %6557 = vmatprep.subr.mxu0 0.0
  %6558 = vmatpush1.xpose.msra.mxu0 0.0
  %6559 = vmatprep.subr.mxu0 0.0
  %6560 = vmatpush1.xpose.msra.mxu0 0.0
  %6561 = vmatprep.subr.mxu0 0.0
  %6562 = vmatpush1.xpose.msra.mxu0 0.0
  %6563 = vmatprep.subr.mxu0 0.0
  %6564 = vmatpush1.xpose.msra.mxu0 0.0
  %6565 = vmatprep.subr.mxu0 0.0
  %6566 = vmatpush1.xpose.msra.mxu0 0.0
  %6567 = vmatprep.subr.mxu0 0.0
  %6568 = vmatpush1.xpose.msra.mxu0 0.0
  %6569 = vmatprep.subr.mxu0 0.0
  %6570 = vmatpush1.xpose.msra.mxu0 0.0
  %6571 = vmatprep.subr.mxu0 0.0
  %6572 = vmatpush1.xpose.msra.mxu0 0.0
  %6573 = vmatprep.subr.mxu0 0.0
  %6574 = vmatpush1.xpose.msra.mxu0 0.0
  %6575 = vmatprep.subr.mxu0 0.0
  %6576 = vmatpush1.xpose.msra.mxu0 0.0
  %6577 = vmatprep.subr.mxu0 0.0
  %6578 = vmatpush1.xpose.msra.mxu0 0.0
  %6579 = vmatprep.subr.mxu0 0.0
  %6580 = vmatpush1.xpose.msra.mxu0 0.0
  %6581 = vmatprep.subr.mxu0 0.0
  %6582 = vmatpush1.xpose.msra.mxu0 0.0
  %6583 = vmatprep.subr.mxu0 0.0
  %6584 = vmatpush1.xpose.msra.mxu0 0.0
  %6585 = vmatprep.subr.mxu0 0.0
  %6586 = vmatpush1.xpose.msra.mxu0 0.0
  %6587 = vmatprep.subr.mxu0 0.0
  %6588 = vmatpush1.xpose.msra.mxu0 0.0
  %6589 = vmatprep.mubr.f32.mxu0 0.0
  %6590 = vmatmul.mubr.f32.gmra.mrb[0].mxu0 %v6517
  %v6591 = vpop.f32.mrb[0].mxu0
  %v6592 = vadd.f32 0.0, %v6591
  %v6593 = vpop.f32.mrb[0].mxu0
  %6594 = vmatprep.mubr.f32.mxu0 0.0
  %6595 = vmatmul.mubr.f32.gmra.mrb[0].mxu0 %v6519
  %v6596 = vpop.f32.mrb[0].mxu0
  %v6597 = vadd.f32 0.0, %v6596
  %v6598 = vpop.f32.mrb[0].mxu0
  %6599 = vdwg.mxu0
  %6600 = vrot.lane.b32.xlu0 %v5539, 96
  %v6601 = vpop.permute.xlu0 %6600
  %6602 = vrot.lane.b32.xlu0 %v5544, 96
  %v6603 = vpop.permute.xlu0 %6602
  %6604 = vrot.lane.b32.xlu0 %v5624, 96
  %v6605 = vpop.permute.xlu0 %6604
  %6606 = vrot.lane.b32.xlu0 %v5629, 96
  %v6607 = vpop.permute.xlu0 %6606
  %v6608 = vsel %vm22, %v6601, 0
  %v6610 = vsel %vm22, %v6603, 0
  %v6612 = vsel %vm22, %v6605, 0
  %v6614 = vsel %vm22, %v6607, 0
  %6616 = vmatprep.subr.mxu0 0.0
  %6617 = vmatpush1.xpose.msra.mxu0 %v6612
  %6618 = vmatprep.subr.mxu0 0.0
  %6619 = vmatpush1.xpose.msra.mxu0 %v6614
  %6620 = vmatprep.subr.mxu0 0.0
  %6621 = vmatpush1.xpose.msra.mxu0 0.0
  %6622 = vmatprep.subr.mxu0 0.0
  %6623 = vmatpush1.xpose.msra.mxu0 0.0
  %6624 = vmatprep.subr.mxu0 0.0
  %6625 = vmatpush1.xpose.msra.mxu0 0.0
  %6626 = vmatprep.subr.mxu0 0.0
  %6627 = vmatpush1.xpose.msra.mxu0 0.0
  %6628 = vmatprep.subr.mxu0 0.0
  %6629 = vmatpush1.xpose.msra.mxu0 0.0
  %6630 = vmatprep.subr.mxu0 0.0
  %6631 = vmatpush1.xpose.msra.mxu0 0.0
  %6632 = vmatprep.subr.mxu0 0.0
  %6633 = vmatpush1.xpose.msra.mxu0 0.0
  %6634 = vmatprep.subr.mxu0 0.0
  %6635 = vmatpush1.xpose.msra.mxu0 0.0
  %6636 = vmatprep.subr.mxu0 0.0
  %6637 = vmatpush1.xpose.msra.mxu0 0.0
  %6638 = vmatprep.subr.mxu0 0.0
  %6639 = vmatpush1.xpose.msra.mxu0 0.0
  %6640 = vmatprep.subr.mxu0 0.0
  %6641 = vmatpush1.xpose.msra.mxu0 0.0
  %6642 = vmatprep.subr.mxu0 0.0
  %6643 = vmatpush1.xpose.msra.mxu0 0.0
  %6644 = vmatprep.subr.mxu0 0.0
  %6645 = vmatpush1.xpose.msra.mxu0 0.0
  %6646 = vmatprep.subr.mxu0 0.0
  %6647 = vmatpush1.xpose.msra.mxu0 0.0
  %6648 = vmatprep.subr.mxu0 0.0
  %6649 = vmatpush1.xpose.msra.mxu0 0.0
  %6650 = vmatprep.subr.mxu0 0.0
  %6651 = vmatpush1.xpose.msra.mxu0 0.0
  %6652 = vmatprep.subr.mxu0 0.0
  %6653 = vmatpush1.xpose.msra.mxu0 0.0
  %6654 = vmatprep.subr.mxu0 0.0
  %6655 = vmatpush1.xpose.msra.mxu0 0.0
  %6656 = vmatprep.subr.mxu0 0.0
  %6657 = vmatpush1.xpose.msra.mxu0 0.0
  %6658 = vmatprep.subr.mxu0 0.0
  %6659 = vmatpush1.xpose.msra.mxu0 0.0
  %6660 = vmatprep.subr.mxu0 0.0
  %6661 = vmatpush1.xpose.msra.mxu0 0.0
  %6662 = vmatprep.subr.mxu0 0.0
  %6663 = vmatpush1.xpose.msra.mxu0 0.0
  %6664 = vmatprep.subr.mxu0 0.0
  %6665 = vmatpush1.xpose.msra.mxu0 0.0
  %6666 = vmatprep.subr.mxu0 0.0
  %6667 = vmatpush1.xpose.msra.mxu0 0.0
  %6668 = vmatprep.subr.mxu0 0.0
  %6669 = vmatpush1.xpose.msra.mxu0 0.0
  %6670 = vmatprep.subr.mxu0 0.0
  %6671 = vmatpush1.xpose.msra.mxu0 0.0
  %6672 = vmatprep.subr.mxu0 0.0
  %6673 = vmatpush1.xpose.msra.mxu0 0.0
  %6674 = vmatprep.subr.mxu0 0.0
  %6675 = vmatpush1.xpose.msra.mxu0 0.0
  %6676 = vmatprep.subr.mxu0 0.0
  %6677 = vmatpush1.xpose.msra.mxu0 0.0
  %6678 = vmatprep.subr.mxu0 0.0
  %6679 = vmatpush1.xpose.msra.mxu0 0.0
  %6680 = vmatprep.mubr.f32.mxu0 0.0
  %6681 = vmatmul.mubr.f32.gmra.mrb[0].mxu0 %v6608
  %v6682 = vpop.f32.mrb[0].mxu0
  %v6683 = vadd.f32 0.0, %v6682
  %v6684 = vpop.f32.mrb[0].mxu0
  %6685 = vmatprep.mubr.f32.mxu0 0.0
  %6686 = vmatmul.mubr.f32.gmra.mrb[0].mxu0 %v6610
  %v6687 = vpop.f32.mrb[0].mxu0
  %v6688 = vadd.f32 0.0, %v6687
  %v6689 = vpop.f32.mrb[0].mxu0
  %6690 = vdwg.mxu0
  %v6691 = vsel %vm137, -1e+09, %v6592
  %v6692 = vsel %vm138, -1e+09, %v6597
  %v6693 = vsel %vm137, -1e+09, %v6683
  %v6694 = vsel %vm138, -1e+09, %v6688
  %v6695 = vsel %vm22, %v6691, -inf
  %6696 = vmax.xlane.f32.xlu0 %v6695
  %v6697 = vpop.xlane.xlu0 %6696
  %v6698 = vsel %vm22, %v6692, -inf
  %6699 = vmax.xlane.f32.xlu0 %v6698
  %v6700 = vpop.xlane.xlu0 %6699
  %v6701 = vsel %vm22, %v6693, -inf
  %6702 = vmax.xlane.f32.xlu0 %v6701
  %v6703 = vpop.xlane.xlu0 %6702
  %v6704 = vsel %vm22, %v6694, -inf
  %6705 = vmax.xlane.f32.xlu0 %v6704
  %v6706 = vpop.xlane.xlu0 %6705
  %v6707 = vsub.f32 %v6691, %v6697
  %v6708 = vsub.f32 %v6692, %v6700
  %v6709 = vsub.f32 %v6693, %v6703
  %v6710 = vsub.f32 %v6694, %v6706
  %v6711 = vmul.f32 %v6707, 1.442695
  %v6712 = vpow.pop %v6711
  %v6713 = vmul.f32 %v6708, 1.442695
  %v6714 = vpow.pop %v6713
  %v6715 = vmul.f32 %v6709, 1.442695
  %v6716 = vpow.pop %v6715
  %v6717 = vmul.f32 %v6710, 1.442695
  %v6718 = vpow.pop %v6717
  %v6719 = vsel %vm22, %v6712, 0.0
  %6720 = vadd.xlane.f32.xlu0 %v6719
  %v6721 = vpop.xlane.xlu0 %6720
  %v6722 = vsel %vm22, %v6714, 0.0
  %6723 = vadd.xlane.f32.xlu0 %v6722
  %v6724 = vpop.xlane.xlu0 %6723
  %v6725 = vsel %vm22, %v6716, 0.0
  %6726 = vadd.xlane.f32.xlu0 %v6725
  %v6727 = vpop.xlane.xlu0 %6726
  %v6728 = vsel %vm22, %v6718, 0.0
  %6729 = vadd.xlane.f32.xlu0 %v6728
  %v6730 = vpop.xlane.xlu0 %6729
  %v6731 = vrcp.pop %v6721
  %v6732 = vrcp.pop %v6724
  %v6733 = vrcp.pop %v6727
  %v6734 = vrcp.pop %v6730
  %v6735 = vmul.f32 %v6712, %v6731
  %v6736 = vmul.f32 %v6714, %v6732
  %v6737 = vmul.f32 %v6716, %v6733
  %v6738 = vmul.f32 %v6718, %v6734
  %6739 = vrot.lane.b32.xlu0 %v5699, 96
  %v6740 = vpop.permute.xlu0 %6739
  %6741 = vrot.lane.b32.xlu0 %v5704, 96
  %v6742 = vpop.permute.xlu0 %6741
  %v6746 = vsel %vm22, %v6735, 0
  %v6749 = vsel %vm22, %v6736, 0
  %6751 = vmatprep.subr.mxu0 0.0
  %6752 = vmatpush1.msra.mxu0 %v6740
  %6753 = vmatprep.subr.mxu0 0.0
  %6754 = vmatpush1.msra.mxu0 %v6742
  %6755 = vmatprep.subr.mxu0 0.0
  %6756 = vmatpush1.msra.mxu0 0.0
  %6757 = vmatprep.subr.mxu0 0.0
  %6758 = vmatpush1.msra.mxu0 0.0
  %6759 = vmatprep.subr.mxu0 0.0
  %6760 = vmatpush1.msra.mxu0 0.0
  %6761 = vmatprep.subr.mxu0 0.0
  %6762 = vmatpush1.msra.mxu0 0.0
  %6763 = vmatprep.subr.mxu0 0.0
  %6764 = vmatpush1.msra.mxu0 0.0
  %6765 = vmatprep.subr.mxu0 0.0
  %6766 = vmatpush1.msra.mxu0 0.0
  %6767 = vmatprep.subr.mxu0 0.0
  %6768 = vmatpush1.msra.mxu0 0.0
  %6769 = vmatprep.subr.mxu0 0.0
  %6770 = vmatpush1.msra.mxu0 0.0
  %6771 = vmatprep.subr.mxu0 0.0
  %6772 = vmatpush1.msra.mxu0 0.0
  %6773 = vmatprep.subr.mxu0 0.0
  %6774 = vmatpush1.msra.mxu0 0.0
  %6775 = vmatprep.subr.mxu0 0.0
  %6776 = vmatpush1.msra.mxu0 0.0
  %6777 = vmatprep.subr.mxu0 0.0
  %6778 = vmatpush1.msra.mxu0 0.0
  %6779 = vmatprep.subr.mxu0 0.0
  %6780 = vmatpush1.msra.mxu0 0.0
  %6781 = vmatprep.subr.mxu0 0.0
  %6782 = vmatpush1.msra.mxu0 0.0
  %6783 = vmatprep.subr.mxu0 0.0
  %6784 = vmatpush1.msra.mxu0 0.0
  %6785 = vmatprep.subr.mxu0 0.0
  %6786 = vmatpush1.msra.mxu0 0.0
  %6787 = vmatprep.subr.mxu0 0.0
  %6788 = vmatpush1.msra.mxu0 0.0
  %6789 = vmatprep.subr.mxu0 0.0
  %6790 = vmatpush1.msra.mxu0 0.0
  %6791 = vmatprep.subr.mxu0 0.0
  %6792 = vmatpush1.msra.mxu0 0.0
  %6793 = vmatprep.subr.mxu0 0.0
  %6794 = vmatpush1.msra.mxu0 0.0
  %6795 = vmatprep.subr.mxu0 0.0
  %6796 = vmatpush1.msra.mxu0 0.0
  %6797 = vmatprep.subr.mxu0 0.0
  %6798 = vmatpush1.msra.mxu0 0.0
  %6799 = vmatprep.subr.mxu0 0.0
  %6800 = vmatpush1.msra.mxu0 0.0
  %6801 = vmatprep.subr.mxu0 0.0
  %6802 = vmatpush1.msra.mxu0 0.0
  %6803 = vmatprep.subr.mxu0 0.0
  %6804 = vmatpush1.msra.mxu0 0.0
  %6805 = vmatprep.subr.mxu0 0.0
  %6806 = vmatpush1.msra.mxu0 0.0
  %6807 = vmatprep.subr.mxu0 0.0
  %6808 = vmatpush1.msra.mxu0 0.0
  %6809 = vmatprep.subr.mxu0 0.0
  %6810 = vmatpush1.msra.mxu0 0.0
  %6811 = vmatprep.subr.mxu0 0.0
  %6812 = vmatpush1.msra.mxu0 0.0
  %6813 = vmatprep.subr.mxu0 0.0
  %6814 = vmatpush1.msra.mxu0 0.0
  %6815 = vmatprep.mubr.f32.mxu0 0.0
  %6816 = vmatmul.mubr.f32.gmra.mrb[0].mxu0 %v6746
  %v6817 = vpop.f32.mrb[0].mxu0
  %v6818 = vadd.f32 0.0, %v6817
  %v6819 = vpop.f32.mrb[0].mxu0
  %6820 = vmatprep.mubr.f32.mxu0 0.0
  %6821 = vmatmul.mubr.f32.gmra.mrb[0].mxu0 %v6749
  %v6822 = vpop.f32.mrb[0].mxu0
  %v6823 = vadd.f32 0.0, %v6822
  %v6824 = vpop.f32.mrb[0].mxu0
  %6825 = vdwg.mxu0
  %6826 = vrot.lane.b32.xlu0 %v5709, 96
  %v6827 = vpop.permute.xlu0 %6826
  %6828 = vrot.lane.b32.xlu0 %v5714, 96
  %v6829 = vpop.permute.xlu0 %6828
  %v6833 = vsel %vm22, %v6737, 0
  %v6836 = vsel %vm22, %v6738, 0
  %6838 = vmatprep.subr.mxu0 0.0
  %6839 = vmatpush1.msra.mxu0 %v6827
  %6840 = vmatprep.subr.mxu0 0.0
  %6841 = vmatpush1.msra.mxu0 %v6829
  %6842 = vmatprep.subr.mxu0 0.0
  %6843 = vmatpush1.msra.mxu0 0.0
  %6844 = vmatprep.subr.mxu0 0.0
  %6845 = vmatpush1.msra.mxu0 0.0
  %6846 = vmatprep.subr.mxu0 0.0
  %6847 = vmatpush1.msra.mxu0 0.0
  %6848 = vmatprep.subr.mxu0 0.0
  %6849 = vmatpush1.msra.mxu0 0.0
  %6850 = vmatprep.subr.mxu0 0.0
  %6851 = vmatpush1.msra.mxu0 0.0
  %6852 = vmatprep.subr.mxu0 0.0
  %6853 = vmatpush1.msra.mxu0 0.0
  %6854 = vmatprep.subr.mxu0 0.0
  %6855 = vmatpush1.msra.mxu0 0.0
  %6856 = vmatprep.subr.mxu0 0.0
  %6857 = vmatpush1.msra.mxu0 0.0
  %6858 = vmatprep.subr.mxu0 0.0
  %6859 = vmatpush1.msra.mxu0 0.0
  %6860 = vmatprep.subr.mxu0 0.0
  %6861 = vmatpush1.msra.mxu0 0.0
  %6862 = vmatprep.subr.mxu0 0.0
  %6863 = vmatpush1.msra.mxu0 0.0
  %6864 = vmatprep.subr.mxu0 0.0
  %6865 = vmatpush1.msra.mxu0 0.0
  %6866 = vmatprep.subr.mxu0 0.0
  %6867 = vmatpush1.msra.mxu0 0.0
  %6868 = vmatprep.subr.mxu0 0.0
  %6869 = vmatpush1.msra.mxu0 0.0
  %6870 = vmatprep.subr.mxu0 0.0
  %6871 = vmatpush1.msra.mxu0 0.0
  %6872 = vmatprep.subr.mxu0 0.0
  %6873 = vmatpush1.msra.mxu0 0.0
  %6874 = vmatprep.subr.mxu0 0.0
  %6875 = vmatpush1.msra.mxu0 0.0
  %6876 = vmatprep.subr.mxu0 0.0
  %6877 = vmatpush1.msra.mxu0 0.0
  %6878 = vmatprep.subr.mxu0 0.0
  %6879 = vmatpush1.msra.mxu0 0.0
  %6880 = vmatprep.subr.mxu0 0.0
  %6881 = vmatpush1.msra.mxu0 0.0
  %6882 = vmatprep.subr.mxu0 0.0
  %6883 = vmatpush1.msra.mxu0 0.0
  %6884 = vmatprep.subr.mxu0 0.0
  %6885 = vmatpush1.msra.mxu0 0.0
  %6886 = vmatprep.subr.mxu0 0.0
  %6887 = vmatpush1.msra.mxu0 0.0
  %6888 = vmatprep.subr.mxu0 0.0
  %6889 = vmatpush1.msra.mxu0 0.0
  %6890 = vmatprep.subr.mxu0 0.0
  %6891 = vmatpush1.msra.mxu0 0.0
  %6892 = vmatprep.subr.mxu0 0.0
  %6893 = vmatpush1.msra.mxu0 0.0
  %6894 = vmatprep.subr.mxu0 0.0
  %6895 = vmatpush1.msra.mxu0 0.0
  %6896 = vmatprep.subr.mxu0 0.0
  %6897 = vmatpush1.msra.mxu0 0.0
  %6898 = vmatprep.subr.mxu0 0.0
  %6899 = vmatpush1.msra.mxu0 0.0
  %6900 = vmatprep.subr.mxu0 0.0
  %6901 = vmatpush1.msra.mxu0 0.0
  %6902 = vmatprep.mubr.f32.mxu0 0.0
  %6903 = vmatmul.mubr.f32.gmra.mrb[0].mxu0 %v6833
  %v6904 = vpop.f32.mrb[0].mxu0
  %v6905 = vadd.f32 0.0, %v6904
  %v6906 = vpop.f32.mrb[0].mxu0
  %6907 = vmatprep.mubr.f32.mxu0 0.0
  %6908 = vmatmul.mubr.f32.gmra.mrb[0].mxu0 %v6836
  %v6909 = vpop.f32.mrb[0].mxu0
  %v6910 = vadd.f32 0.0, %v6909
  %v6911 = vpop.f32.mrb[0].mxu0
  %6912 = vdwg.mxu0
  %6913 = vrot.lane.b32.xlu0 %v5529, 80
  %v6914 = vpop.permute.xlu0 %6913
  %6915 = vrot.lane.b32.xlu0 %v5534, 80
  %v6916 = vpop.permute.xlu0 %6915
  %6917 = vrot.lane.b32.xlu0 %v5614, 80
  %v6918 = vpop.permute.xlu0 %6917
  %6919 = vrot.lane.b32.xlu0 %v5619, 80
  %v6920 = vpop.permute.xlu0 %6919
  %v6921 = vsel %vm22, %v6914, 0
  %v6923 = vsel %vm22, %v6916, 0
  %v6925 = vsel %vm22, %v6918, 0
  %v6927 = vsel %vm22, %v6920, 0
  %6929 = vmatprep.subr.mxu0 0.0
  %6930 = vmatpush1.xpose.msra.mxu0 %v6925
  %6931 = vmatprep.subr.mxu0 0.0
  %6932 = vmatpush1.xpose.msra.mxu0 %v6927
  %6933 = vmatprep.subr.mxu0 0.0
  %6934 = vmatpush1.xpose.msra.mxu0 0.0
  %6935 = vmatprep.subr.mxu0 0.0
  %6936 = vmatpush1.xpose.msra.mxu0 0.0
  %6937 = vmatprep.subr.mxu0 0.0
  %6938 = vmatpush1.xpose.msra.mxu0 0.0
  %6939 = vmatprep.subr.mxu0 0.0
  %6940 = vmatpush1.xpose.msra.mxu0 0.0
  %6941 = vmatprep.subr.mxu0 0.0
  %6942 = vmatpush1.xpose.msra.mxu0 0.0
  %6943 = vmatprep.subr.mxu0 0.0
  %6944 = vmatpush1.xpose.msra.mxu0 0.0
  %6945 = vmatprep.subr.mxu0 0.0
  %6946 = vmatpush1.xpose.msra.mxu0 0.0
  %6947 = vmatprep.subr.mxu0 0.0
  %6948 = vmatpush1.xpose.msra.mxu0 0.0
  %6949 = vmatprep.subr.mxu0 0.0
  %6950 = vmatpush1.xpose.msra.mxu0 0.0
  %6951 = vmatprep.subr.mxu0 0.0
  %6952 = vmatpush1.xpose.msra.mxu0 0.0
  %6953 = vmatprep.subr.mxu0 0.0
  %6954 = vmatpush1.xpose.msra.mxu0 0.0
  %6955 = vmatprep.subr.mxu0 0.0
  %6956 = vmatpush1.xpose.msra.mxu0 0.0
  %6957 = vmatprep.subr.mxu0 0.0
  %6958 = vmatpush1.xpose.msra.mxu0 0.0
  %6959 = vmatprep.subr.mxu0 0.0
  %6960 = vmatpush1.xpose.msra.mxu0 0.0
  %6961 = vmatprep.subr.mxu0 0.0
  %6962 = vmatpush1.xpose.msra.mxu0 0.0
  %6963 = vmatprep.subr.mxu0 0.0
  %6964 = vmatpush1.xpose.msra.mxu0 0.0
  %6965 = vmatprep.subr.mxu0 0.0
  %6966 = vmatpush1.xpose.msra.mxu0 0.0
  %6967 = vmatprep.subr.mxu0 0.0
  %6968 = vmatpush1.xpose.msra.mxu0 0.0
  %6969 = vmatprep.subr.mxu0 0.0
  %6970 = vmatpush1.xpose.msra.mxu0 0.0
  %6971 = vmatprep.subr.mxu0 0.0
  %6972 = vmatpush1.xpose.msra.mxu0 0.0
  %6973 = vmatprep.subr.mxu0 0.0
  %6974 = vmatpush1.xpose.msra.mxu0 0.0
  %6975 = vmatprep.subr.mxu0 0.0
  %6976 = vmatpush1.xpose.msra.mxu0 0.0
  %6977 = vmatprep.subr.mxu0 0.0
  %6978 = vmatpush1.xpose.msra.mxu0 0.0
  %6979 = vmatprep.subr.mxu0 0.0
  %6980 = vmatpush1.xpose.msra.mxu0 0.0
  %6981 = vmatprep.subr.mxu0 0.0
  %6982 = vmatpush1.xpose.msra.mxu0 0.0
  %6983 = vmatprep.subr.mxu0 0.0
  %6984 = vmatpush1.xpose.msra.mxu0 0.0
  %6985 = vmatprep.subr.mxu0 0.0
  %6986 = vmatpush1.xpose.msra.mxu0 0.0
  %6987 = vmatprep.subr.mxu0 0.0
  %6988 = vmatpush1.xpose.msra.mxu0 0.0
  %6989 = vmatprep.subr.mxu0 0.0
  %6990 = vmatpush1.xpose.msra.mxu0 0.0
  %6991 = vmatprep.subr.mxu0 0.0
  %6992 = vmatpush1.xpose.msra.mxu0 0.0
  %6993 = vmatprep.mubr.f32.mxu0 0.0
  %6994 = vmatmul.mubr.f32.gmra.mrb[0].mxu0 %v6921
  %v6995 = vpop.f32.mrb[0].mxu0
  %v6996 = vadd.f32 0.0, %v6995
  %v6997 = vpop.f32.mrb[0].mxu0
  %6998 = vmatprep.mubr.f32.mxu0 0.0
  %6999 = vmatmul.mubr.f32.gmra.mrb[0].mxu0 %v6923
  %v7000 = vpop.f32.mrb[0].mxu0
  %v7001 = vadd.f32 0.0, %v7000
  %v7002 = vpop.f32.mrb[0].mxu0
  %7003 = vdwg.mxu0
  %7004 = vrot.lane.b32.xlu0 %v5539, 80
  %v7005 = vpop.permute.xlu0 %7004
  %7006 = vrot.lane.b32.xlu0 %v5544, 80
  %v7007 = vpop.permute.xlu0 %7006
  %7008 = vrot.lane.b32.xlu0 %v5624, 80
  %v7009 = vpop.permute.xlu0 %7008
  %7010 = vrot.lane.b32.xlu0 %v5629, 80
  %v7011 = vpop.permute.xlu0 %7010
  %v7012 = vsel %vm22, %v7005, 0
  %v7014 = vsel %vm22, %v7007, 0
  %v7016 = vsel %vm22, %v7009, 0
  %v7018 = vsel %vm22, %v7011, 0
  %7020 = vmatprep.subr.mxu0 0.0
  %7021 = vmatpush1.xpose.msra.mxu0 %v7016
  %7022 = vmatprep.subr.mxu0 0.0
  %7023 = vmatpush1.xpose.msra.mxu0 %v7018
  %7024 = vmatprep.subr.mxu0 0.0
  %7025 = vmatpush1.xpose.msra.mxu0 0.0
  %7026 = vmatprep.subr.mxu0 0.0
  %7027 = vmatpush1.xpose.msra.mxu0 0.0
  %7028 = vmatprep.subr.mxu0 0.0
  %7029 = vmatpush1.xpose.msra.mxu0 0.0
  %7030 = vmatprep.subr.mxu0 0.0
  %7031 = vmatpush1.xpose.msra.mxu0 0.0
  %7032 = vmatprep.subr.mxu0 0.0
  %7033 = vmatpush1.xpose.msra.mxu0 0.0
  %7034 = vmatprep.subr.mxu0 0.0
  %7035 = vmatpush1.xpose.msra.mxu0 0.0
  %7036 = vmatprep.subr.mxu0 0.0
  %7037 = vmatpush1.xpose.msra.mxu0 0.0
  %7038 = vmatprep.subr.mxu0 0.0
  %7039 = vmatpush1.xpose.msra.mxu0 0.0
  %7040 = vmatprep.subr.mxu0 0.0
  %7041 = vmatpush1.xpose.msra.mxu0 0.0
  %7042 = vmatprep.subr.mxu0 0.0
  %7043 = vmatpush1.xpose.msra.mxu0 0.0
  %7044 = vmatprep.subr.mxu0 0.0
  %7045 = vmatpush1.xpose.msra.mxu0 0.0
  %7046 = vmatprep.subr.mxu0 0.0
  %7047 = vmatpush1.xpose.msra.mxu0 0.0
  %7048 = vmatprep.subr.mxu0 0.0
  %7049 = vmatpush1.xpose.msra.mxu0 0.0
  %7050 = vmatprep.subr.mxu0 0.0
  %7051 = vmatpush1.xpose.msra.mxu0 0.0
  %7052 = vmatprep.subr.mxu0 0.0
  %7053 = vmatpush1.xpose.msra.mxu0 0.0
  %7054 = vmatprep.subr.mxu0 0.0
  %7055 = vmatpush1.xpose.msra.mxu0 0.0
  %7056 = vmatprep.subr.mxu0 0.0
  %7057 = vmatpush1.xpose.msra.mxu0 0.0
  %7058 = vmatprep.subr.mxu0 0.0
  %7059 = vmatpush1.xpose.msra.mxu0 0.0
  %7060 = vmatprep.subr.mxu0 0.0
  %7061 = vmatpush1.xpose.msra.mxu0 0.0
  %7062 = vmatprep.subr.mxu0 0.0
  %7063 = vmatpush1.xpose.msra.mxu0 0.0
  %7064 = vmatprep.subr.mxu0 0.0
  %7065 = vmatpush1.xpose.msra.mxu0 0.0
  %7066 = vmatprep.subr.mxu0 0.0
  %7067 = vmatpush1.xpose.msra.mxu0 0.0
  %7068 = vmatprep.subr.mxu0 0.0
  %7069 = vmatpush1.xpose.msra.mxu0 0.0
  %7070 = vmatprep.subr.mxu0 0.0
  %7071 = vmatpush1.xpose.msra.mxu0 0.0
  %7072 = vmatprep.subr.mxu0 0.0
  %7073 = vmatpush1.xpose.msra.mxu0 0.0
  %7074 = vmatprep.subr.mxu0 0.0
  %7075 = vmatpush1.xpose.msra.mxu0 0.0
  %7076 = vmatprep.subr.mxu0 0.0
  %7077 = vmatpush1.xpose.msra.mxu0 0.0
  %7078 = vmatprep.subr.mxu0 0.0
  %7079 = vmatpush1.xpose.msra.mxu0 0.0
  %7080 = vmatprep.subr.mxu0 0.0
  %7081 = vmatpush1.xpose.msra.mxu0 0.0
  %7082 = vmatprep.subr.mxu0 0.0
  %7083 = vmatpush1.xpose.msra.mxu0 0.0
  %7084 = vmatprep.mubr.f32.mxu0 0.0
  %7085 = vmatmul.mubr.f32.gmra.mrb[0].mxu0 %v7012
  %v7086 = vpop.f32.mrb[0].mxu0
  %v7087 = vadd.f32 0.0, %v7086
  %v7088 = vpop.f32.mrb[0].mxu0
  %7089 = vmatprep.mubr.f32.mxu0 0.0
  %7090 = vmatmul.mubr.f32.gmra.mrb[0].mxu0 %v7014
  %v7091 = vpop.f32.mrb[0].mxu0
  %v7092 = vadd.f32 0.0, %v7091
  %v7093 = vpop.f32.mrb[0].mxu0
  %7094 = vdwg.mxu0
  %v7095 = vsel %vm137, -1e+09, %v6996
  %v7096 = vsel %vm138, -1e+09, %v7001
  %v7097 = vsel %vm137, -1e+09, %v7087
  %v7098 = vsel %vm138, -1e+09, %v7092
  %v7099 = vsel %vm22, %v7095, -inf
  %7100 = vmax.xlane.f32.xlu0 %v7099
  %v7101 = vpop.xlane.xlu0 %7100
  %v7102 = vsel %vm22, %v7096, -inf
  %7103 = vmax.xlane.f32.xlu0 %v7102
  %v7104 = vpop.xlane.xlu0 %7103
  %v7105 = vsel %vm22, %v7097, -inf
  %7106 = vmax.xlane.f32.xlu0 %v7105
  %v7107 = vpop.xlane.xlu0 %7106
  %v7108 = vsel %vm22, %v7098, -inf
  %7109 = vmax.xlane.f32.xlu0 %v7108
  %v7110 = vpop.xlane.xlu0 %7109
  %v7111 = vsub.f32 %v7095, %v7101
  %v7112 = vsub.f32 %v7096, %v7104
  %v7113 = vsub.f32 %v7097, %v7107
  %v7114 = vsub.f32 %v7098, %v7110
  %v7115 = vmul.f32 %v7111, 1.442695
  %v7116 = vpow.pop %v7115
  %v7117 = vmul.f32 %v7112, 1.442695
  %v7118 = vpow.pop %v7117
  %v7119 = vmul.f32 %v7113, 1.442695
  %v7120 = vpow.pop %v7119
  %v7121 = vmul.f32 %v7114, 1.442695
  %v7122 = vpow.pop %v7121
  %v7123 = vsel %vm22, %v7116, 0.0
  %7124 = vadd.xlane.f32.xlu0 %v7123
  %v7125 = vpop.xlane.xlu0 %7124
  %v7126 = vsel %vm22, %v7118, 0.0
  %7127 = vadd.xlane.f32.xlu0 %v7126
  %v7128 = vpop.xlane.xlu0 %7127
  %v7129 = vsel %vm22, %v7120, 0.0
  %7130 = vadd.xlane.f32.xlu0 %v7129
  %v7131 = vpop.xlane.xlu0 %7130
  %v7132 = vsel %vm22, %v7122, 0.0
  %7133 = vadd.xlane.f32.xlu0 %v7132
  %v7134 = vpop.xlane.xlu0 %7133
  %v7135 = vrcp.pop %v7125
  %v7136 = vrcp.pop %v7128
  %v7137 = vrcp.pop %v7131
  %v7138 = vrcp.pop %v7134
  %v7139 = vmul.f32 %v7116, %v7135
  %v7140 = vmul.f32 %v7118, %v7136
  %v7141 = vmul.f32 %v7120, %v7137
  %v7142 = vmul.f32 %v7122, %v7138
  %7143 = vrot.lane.b32.xlu0 %v5699, 80
  %v7144 = vpop.permute.xlu0 %7143
  %7145 = vrot.lane.b32.xlu0 %v5704, 80
  %v7146 = vpop.permute.xlu0 %7145
  %v7150 = vsel %vm22, %v7139, 0
  %v7153 = vsel %vm22, %v7140, 0
  %7155 = vmatprep.subr.mxu0 0.0
  %7156 = vmatpush1.msra.mxu0 %v7144
  %7157 = vmatprep.subr.mxu0 0.0
  %7158 = vmatpush1.msra.mxu0 %v7146
  %7159 = vmatprep.subr.mxu0 0.0
  %7160 = vmatpush1.msra.mxu0 0.0
  %7161 = vmatprep.subr.mxu0 0.0
  %7162 = vmatpush1.msra.mxu0 0.0
  %7163 = vmatprep.subr.mxu0 0.0
  %7164 = vmatpush1.msra.mxu0 0.0
  %7165 = vmatprep.subr.mxu0 0.0
  %7166 = vmatpush1.msra.mxu0 0.0
  %7167 = vmatprep.subr.mxu0 0.0
  %7168 = vmatpush1.msra.mxu0 0.0
  %7169 = vmatprep.subr.mxu0 0.0
  %7170 = vmatpush1.msra.mxu0 0.0
  %7171 = vmatprep.subr.mxu0 0.0
  %7172 = vmatpush1.msra.mxu0 0.0
  %7173 = vmatprep.subr.mxu0 0.0
  %7174 = vmatpush1.msra.mxu0 0.0
  %7175 = vmatprep.subr.mxu0 0.0
  %7176 = vmatpush1.msra.mxu0 0.0
  %7177 = vmatprep.subr.mxu0 0.0
  %7178 = vmatpush1.msra.mxu0 0.0
  %7179 = vmatprep.subr.mxu0 0.0
  %7180 = vmatpush1.msra.mxu0 0.0
  %7181 = vmatprep.subr.mxu0 0.0
  %7182 = vmatpush1.msra.mxu0 0.0
  %7183 = vmatprep.subr.mxu0 0.0
  %7184 = vmatpush1.msra.mxu0 0.0
  %7185 = vmatprep.subr.mxu0 0.0
  %7186 = vmatpush1.msra.mxu0 0.0
  %7187 = vmatprep.subr.mxu0 0.0
  %7188 = vmatpush1.msra.mxu0 0.0
  %7189 = vmatprep.subr.mxu0 0.0
  %7190 = vmatpush1.msra.mxu0 0.0
  %7191 = vmatprep.subr.mxu0 0.0
  %7192 = vmatpush1.msra.mxu0 0.0
  %7193 = vmatprep.subr.mxu0 0.0
  %7194 = vmatpush1.msra.mxu0 0.0
  %7195 = vmatprep.subr.mxu0 0.0
  %7196 = vmatpush1.msra.mxu0 0.0
  %7197 = vmatprep.subr.mxu0 0.0
  %7198 = vmatpush1.msra.mxu0 0.0
  %7199 = vmatprep.subr.mxu0 0.0
  %7200 = vmatpush1.msra.mxu0 0.0
  %7201 = vmatprep.subr.mxu0 0.0
  %7202 = vmatpush1.msra.mxu0 0.0
  %7203 = vmatprep.subr.mxu0 0.0
  %7204 = vmatpush1.msra.mxu0 0.0
  %7205 = vmatprep.subr.mxu0 0.0
  %7206 = vmatpush1.msra.mxu0 0.0
  %7207 = vmatprep.subr.mxu0 0.0
  %7208 = vmatpush1.msra.mxu0 0.0
  %7209 = vmatprep.subr.mxu0 0.0
  %7210 = vmatpush1.msra.mxu0 0.0
  %7211 = vmatprep.subr.mxu0 0.0
  %7212 = vmatpush1.msra.mxu0 0.0
  %7213 = vmatprep.subr.mxu0 0.0
  %7214 = vmatpush1.msra.mxu0 0.0
  %7215 = vmatprep.subr.mxu0 0.0
  %7216 = vmatpush1.msra.mxu0 0.0
  %7217 = vmatprep.subr.mxu0 0.0
  %7218 = vmatpush1.msra.mxu0 0.0
  %7219 = vmatprep.mubr.f32.mxu0 0.0
  %7220 = vmatmul.mubr.f32.gmra.mrb[0].mxu0 %v7150
  %v7221 = vpop.f32.mrb[0].mxu0
  %v7222 = vadd.f32 0.0, %v7221
  %v7223 = vpop.f32.mrb[0].mxu0
  %7224 = vmatprep.mubr.f32.mxu0 0.0
  %7225 = vmatmul.mubr.f32.gmra.mrb[0].mxu0 %v7153
  %v7226 = vpop.f32.mrb[0].mxu0
  %v7227 = vadd.f32 0.0, %v7226
  %v7228 = vpop.f32.mrb[0].mxu0
  %7229 = vdwg.mxu0
  %7230 = vrot.lane.b32.xlu0 %v5709, 80
  %v7231 = vpop.permute.xlu0 %7230
  %7232 = vrot.lane.b32.xlu0 %v5714, 80
  %v7233 = vpop.permute.xlu0 %7232
  %v7237 = vsel %vm22, %v7141, 0
  %v7240 = vsel %vm22, %v7142, 0
  %7242 = vmatprep.subr.mxu0 0.0
  %7243 = vmatpush1.msra.mxu0 %v7231
  %7244 = vmatprep.subr.mxu0 0.0
  %7245 = vmatpush1.msra.mxu0 %v7233
  %7246 = vmatprep.subr.mxu0 0.0
  %7247 = vmatpush1.msra.mxu0 0.0
  %7248 = vmatprep.subr.mxu0 0.0
  %7249 = vmatpush1.msra.mxu0 0.0
  %7250 = vmatprep.subr.mxu0 0.0
  %7251 = vmatpush1.msra.mxu0 0.0
  %7252 = vmatprep.subr.mxu0 0.0
  %7253 = vmatpush1.msra.mxu0 0.0
  %7254 = vmatprep.subr.mxu0 0.0
  %7255 = vmatpush1.msra.mxu0 0.0
  %7256 = vmatprep.subr.mxu0 0.0
  %7257 = vmatpush1.msra.mxu0 0.0
  %7258 = vmatprep.subr.mxu0 0.0
  %7259 = vmatpush1.msra.mxu0 0.0
  %7260 = vmatprep.subr.mxu0 0.0
  %7261 = vmatpush1.msra.mxu0 0.0
  %7262 = vmatprep.subr.mxu0 0.0
  %7263 = vmatpush1.msra.mxu0 0.0
  %7264 = vmatprep.subr.mxu0 0.0
  %7265 = vmatpush1.msra.mxu0 0.0
  %7266 = vmatprep.subr.mxu0 0.0
  %7267 = vmatpush1.msra.mxu0 0.0
  %7268 = vmatprep.subr.mxu0 0.0
  %7269 = vmatpush1.msra.mxu0 0.0
  %7270 = vmatprep.subr.mxu0 0.0
  %7271 = vmatpush1.msra.mxu0 0.0
  %7272 = vmatprep.subr.mxu0 0.0
  %7273 = vmatpush1.msra.mxu0 0.0
  %7274 = vmatprep.subr.mxu0 0.0
  %7275 = vmatpush1.msra.mxu0 0.0
  %7276 = vmatprep.subr.mxu0 0.0
  %7277 = vmatpush1.msra.mxu0 0.0
  %7278 = vmatprep.subr.mxu0 0.0
  %7279 = vmatpush1.msra.mxu0 0.0
  %7280 = vmatprep.subr.mxu0 0.0
  %7281 = vmatpush1.msra.mxu0 0.0
  %7282 = vmatprep.subr.mxu0 0.0
  %7283 = vmatpush1.msra.mxu0 0.0
  %7284 = vmatprep.subr.mxu0 0.0
  %7285 = vmatpush1.msra.mxu0 0.0
  %7286 = vmatprep.subr.mxu0 0.0
  %7287 = vmatpush1.msra.mxu0 0.0
  %7288 = vmatprep.subr.mxu0 0.0
  %7289 = vmatpush1.msra.mxu0 0.0
  %7290 = vmatprep.subr.mxu0 0.0
  %7291 = vmatpush1.msra.mxu0 0.0
  %7292 = vmatprep.subr.mxu0 0.0
  %7293 = vmatpush1.msra.mxu0 0.0
  %7294 = vmatprep.subr.mxu0 0.0
  %7295 = vmatpush1.msra.mxu0 0.0
  %7296 = vmatprep.subr.mxu0 0.0
  %7297 = vmatpush1.msra.mxu0 0.0
  %7298 = vmatprep.subr.mxu0 0.0
  %7299 = vmatpush1.msra.mxu0 0.0
  %7300 = vmatprep.subr.mxu0 0.0
  %7301 = vmatpush1.msra.mxu0 0.0
  %7302 = vmatprep.subr.mxu0 0.0
  %7303 = vmatpush1.msra.mxu0 0.0
  %7304 = vmatprep.subr.mxu0 0.0
  %7305 = vmatpush1.msra.mxu0 0.0
  %7306 = vmatprep.mubr.f32.mxu0 0.0
  %7307 = vmatmul.mubr.f32.gmra.mrb[0].mxu0 %v7237
  %v7308 = vpop.f32.mrb[0].mxu0
  %v7309 = vadd.f32 0.0, %v7308
  %v7310 = vpop.f32.mrb[0].mxu0
  %7311 = vmatprep.mubr.f32.mxu0 0.0
  %7312 = vmatmul.mubr.f32.gmra.mrb[0].mxu0 %v7240
  %v7313 = vpop.f32.mrb[0].mxu0
  %v7314 = vadd.f32 0.0, %v7313
  %v7315 = vpop.f32.mrb[0].mxu0
  %7316 = vdwg.mxu0
  %7321 = vrot.lane.b32.xlu0 %v6412, 16
  %v7322 = vpop.permute.xlu0 %7321
  %7323 = vrot.lane.b32.xlu0 %v6417, 16
  %v7324 = vpop.permute.xlu0 %7323
  %7325 = vrot.lane.b32.xlu0 %v6501, 16
  %v7326 = vpop.permute.xlu0 %7325
  %7327 = vrot.lane.b32.xlu0 %v6506, 16
  %v7328 = vpop.permute.xlu0 %7327
  %7337 = vrot.lane.b32.xlu0 %v6818, 32
  %v7338 = vpop.permute.xlu0 %7337
  %7339 = vrot.lane.b32.xlu0 %v6823, 32
  %v7340 = vpop.permute.xlu0 %7339
  %7341 = vrot.lane.b32.xlu0 %v6905, 32
  %v7342 = vpop.permute.xlu0 %7341
  %7343 = vrot.lane.b32.xlu0 %v6910, 32
  %v7344 = vpop.permute.xlu0 %7343
  %7353 = vrot.lane.b32.xlu0 %v7222, 48
  %v7354 = vpop.permute.xlu0 %7353
  %7355 = vrot.lane.b32.xlu0 %v7227, 48
  %v7356 = vpop.permute.xlu0 %7355
  %7357 = vrot.lane.b32.xlu0 %v7309, 48
  %v7358 = vpop.permute.xlu0 %7357
  %7359 = vrot.lane.b32.xlu0 %v7314, 48
  %v7360 = vpop.permute.xlu0 %7359
  %v7365 = vsel %vm22, %v6012, %v7322
  %v7366 = vsel %vm22, %v6017, %v7324
  %v7367 = vsel %vm22, %v6093, %v7326
  %v7368 = vsel %vm22, %v6098, %v7328
  %v7369 = vsel %vm175, %v7365, %v7338
  %v7370 = vsel %vm175, %v7366, %v7340
  %v7371 = vsel %vm175, %v7367, %v7342
  %v7372 = vsel %vm175, %v7368, %v7344
  %v7373 = vsel %vm2168, %v7369, %v7354
  %v7374 = vsel %vm2168, %v7370, %v7356
  %v7375 = vsel %vm2168, %v7371, %v7358
  %v7376 = vsel %vm2168, %v7372, %v7360
  %v7378 = vsel %vm2173, %v7373, 0
  %v7381 = vsel %vm2173, %v7374, 0
  %v7384 = vsel %vm2173, %v7375, 0
  %v7387 = vsel %vm2173, %v7376, 0
  %7389 = vmatprep.subr.mxu0 0.0
  %7390 = vmatpush1.msra.mxu0 %v5358
  %7391 = vmatprep.subr.mxu0 0.0
  %7392 = vmatpush1.msra.mxu0 %v5359
  %7393 = vmatprep.subr.mxu0 0.0
  %7394 = vmatpush1.msra.mxu0 %v5360
  %7395 = vmatprep.subr.mxu0 0.0
  %7396 = vmatpush1.msra.mxu0 %v5361
  %7397 = vmatprep.subr.mxu0 0.0
  %7398 = vmatpush1.msra.mxu0 %v5362
  %7399 = vmatprep.subr.mxu0 0.0
  %7400 = vmatpush1.msra.mxu0 %v5363
  %7401 = vmatprep.subr.mxu0 0.0
  %7402 = vmatpush1.msra.mxu0 %v5364
  %7403 = vmatprep.subr.mxu0 0.0
  %7404 = vmatpush1.msra.mxu0 %v5365
  %7405 = vmatprep.subr.mxu0 0.0
  %7406 = vmatpush1.msra.mxu0 0.0
  %7407 = vmatprep.subr.mxu0 0.0
  %7408 = vmatpush1.msra.mxu0 0.0
  %7409 = vmatprep.subr.mxu0 0.0
  %7410 = vmatpush1.msra.mxu0 0.0
  %7411 = vmatprep.subr.mxu0 0.0
  %7412 = vmatpush1.msra.mxu0 0.0
  %7413 = vmatprep.subr.mxu0 0.0
  %7414 = vmatpush1.msra.mxu0 0.0
  %7415 = vmatprep.subr.mxu0 0.0
  %7416 = vmatpush1.msra.mxu0 0.0
  %7417 = vmatprep.subr.mxu0 0.0
  %7418 = vmatpush1.msra.mxu0 0.0
  %7419 = vmatprep.subr.mxu0 0.0
  %7420 = vmatpush1.msra.mxu0 0.0
  %7421 = vmatprep.subr.mxu0 0.0
  %7422 = vmatpush1.msra.mxu0 0.0
  %7423 = vmatprep.subr.mxu0 0.0
  %7424 = vmatpush1.msra.mxu0 0.0
  %7425 = vmatprep.subr.mxu0 0.0
  %7426 = vmatpush1.msra.mxu0 0.0
  %7427 = vmatprep.subr.mxu0 0.0
  %7428 = vmatpush1.msra.mxu0 0.0
  %7429 = vmatprep.subr.mxu0 0.0
  %7430 = vmatpush1.msra.mxu0 0.0
  %7431 = vmatprep.subr.mxu0 0.0
  %7432 = vmatpush1.msra.mxu0 0.0
  %7433 = vmatprep.subr.mxu0 0.0
  %7434 = vmatpush1.msra.mxu0 0.0
  %7435 = vmatprep.subr.mxu0 0.0
  %7436 = vmatpush1.msra.mxu0 0.0
  %7437 = vmatprep.subr.mxu0 0.0
  %7438 = vmatpush1.msra.mxu0 0.0
  %7439 = vmatprep.subr.mxu0 0.0
  %7440 = vmatpush1.msra.mxu0 0.0
  %7441 = vmatprep.subr.mxu0 0.0
  %7442 = vmatpush1.msra.mxu0 0.0
  %7443 = vmatprep.subr.mxu0 0.0
  %7444 = vmatpush1.msra.mxu0 0.0
  %7445 = vmatprep.subr.mxu0 0.0
  %7446 = vmatpush1.msra.mxu0 0.0
  %7447 = vmatprep.subr.mxu0 0.0
  %7448 = vmatpush1.msra.mxu0 0.0
  %7449 = vmatprep.subr.mxu0 0.0
  %7450 = vmatpush1.msra.mxu0 0.0
  %7451 = vmatprep.subr.mxu0 0.0
  %7452 = vmatpush1.msra.mxu0 0.0
  %7453 = vmatprep.mubr.f32.mxu0 0.0
  %7454 = vmatmul.mubr.f32.gmra.mrb[0].mxu0 %v7378
  %v7455 = vpop.f32.mrb[0].mxu0
  %v7456 = vadd.f32 0.0, %v7455
  %v7457 = vpop.f32.mrb[0].mxu0
  %7458 = vmatprep.mubr.f32.mxu0 0.0
  %7459 = vmatmul.mubr.f32.gmra.mrb[0].mxu0 %v7381
  %v7460 = vpop.f32.mrb[0].mxu0
  %v7461 = vadd.f32 0.0, %v7460
  %v7462 = vpop.f32.mrb[0].mxu0
  %7463 = vmatprep.mubr.f32.mxu0 0.0
  %7464 = vmatmul.mubr.f32.gmra.mrb[0].mxu0 %v7384
  %v7465 = vpop.f32.mrb[0].mxu0
  %v7466 = vadd.f32 0.0, %v7465
  %v7467 = vpop.f32.mrb[0].mxu0
  %7468 = vmatprep.mubr.f32.mxu0 0.0
  %7469 = vmatmul.mubr.f32.gmra.mrb[0].mxu0 %v7387
  %v7470 = vpop.f32.mrb[0].mxu0
  %v7471 = vadd.f32 0.0, %v7470
  %v7472 = vpop.f32.mrb[0].mxu0
  %7473 = vdwg.mxu0
  %v7474 = vadd.f32 %v5342, %v7456
  %v7475 = vadd.f32 %v5343, %v7461
  %v7476 = vadd.f32 %v5344, %v7466
  %v7477 = vadd.f32 %v5345, %v7471
  %v7478 = vsel %vm175, %v7474, 0.0
  %7479 = vadd.xlane.f32.xlu0 %v7478
  %v7480 = vpop.xlane.xlu0 %7479
  %v7481 = vsel %vm175, %v7475, 0.0
  %7482 = vadd.xlane.f32.xlu0 %v7481
  %v7483 = vpop.xlane.xlu0 %7482
  %v7484 = vsel %vm175, %v7476, 0.0
  %7485 = vadd.xlane.f32.xlu0 %v7484
  %v7486 = vpop.xlane.xlu0 %7485
  %v7487 = vsel %vm175, %v7477, 0.0
  %7488 = vadd.xlane.f32.xlu0 %v7487
  %v7489 = vpop.xlane.xlu0 %7488
  %v7490 = vmul.f32 %v7480, %v188
  %v7491 = vmul.f32 %v7483, %v188
  %v7492 = vmul.f32 %v7486, %v188
  %v7493 = vmul.f32 %v7489, %v188
  %v7494 = vsub.f32 %v7474, %v7490
  %v7495 = vsub.f32 %v7475, %v7491
  %v7496 = vsub.f32 %v7476, %v7492
  %v7497 = vsub.f32 %v7477, %v7493
  %v7498 = vmul.f32 %v7494, %v7494
  %v7499 = vmul.f32 %v7495, %v7495
  %v7500 = vmul.f32 %v7496, %v7496
  %v7501 = vmul.f32 %v7497, %v7497
  %v7502 = vsel %vm175, %v7498, 0.0
  %7503 = vadd.xlane.f32.xlu0 %v7502
  %v7504 = vpop.xlane.xlu0 %7503
  %v7505 = vsel %vm175, %v7499, 0.0
  %7506 = vadd.xlane.f32.xlu0 %v7505
  %v7507 = vpop.xlane.xlu0 %7506
  %v7508 = vsel %vm175, %v7500, 0.0
  %7509 = vadd.xlane.f32.xlu0 %v7508
  %v7510 = vpop.xlane.xlu0 %7509
  %v7511 = vsel %vm175, %v7501, 0.0
  %7512 = vadd.xlane.f32.xlu0 %v7511
  %v7513 = vpop.xlane.xlu0 %7512
  %v7514 = vmul.f32 %v7504, %v188
  %v7515 = vmul.f32 %v7507, %v188
  %v7516 = vmul.f32 %v7510, %v188
  %v7517 = vmul.f32 %v7513, %v188
  %v7518 = vadd.f32 %v7514, 1e-06
  %v7519 = vadd.f32 %v7515, 1e-06
  %v7520 = vadd.f32 %v7516, 1e-06
  %v7521 = vadd.f32 %v7517, 1e-06
  %v7522 = vrsqrt.pop %v7518
  %v7523 = vrsqrt.pop %v7519
  %v7524 = vrsqrt.pop %v7520
  %v7525 = vrsqrt.pop %v7521
  %v7526 = vmul.f32 %v7494, %v7522
  %v7527 = vmul.f32 %v7495, %v7523
  %v7528 = vmul.f32 %v7496, %v7524
  %v7529 = vmul.f32 %v7497, %v7525
  %v7530 = vlaneseq
  %v7531 = vshrl.u32 %v7530, 7
  %v7532 = vsub.s32 0, %v7531
  %v7533 = vrot.slane %v5380, %v7532
  %7535 = vrot.lane.b32.xlu0 %v7533, 96
  %v7536 = vpop.permute.xlu0 %7535
  %v7538 = vmul.f32 %v7526, %v7536
  %v7539 = vmul.f32 %v7527, %v7536
  %v7540 = vmul.f32 %v7528, %v7536
  %v7541 = vmul.f32 %v7529, %v7536
  %v7542 = vlaneseq
  %v7543 = vshrl.u32 %v7542, 7
  %v7544 = vsub.s32 0, %v7543
  %v7545 = vrot.slane %v5381, %v7544
  %v7546 = vadd.f32 %v7538, %v7545
  %v7547 = vadd.f32 %v7539, %v7545
  %v7548 = vadd.f32 %v7540, %v7545
  %v7549 = vadd.f32 %v7541, %v7545
  %v7550 = vlaneseq
  %v7551 = vshrl.u32 %v7550, 7
  %v7552 = vsub.s32 0, %v7551
  %v7553 = vrot.slane %v5379, %v7552
  %v7555 = vsel %vm175, %v7546, 0
  %v7558 = vsel %vm175, %v7547, 0
  %v7561 = vsel %vm175, %v7548, 0
  %v7564 = vsel %vm175, %v7549, 0
  %7566 = vmatprep.subr.mxu0 0.0
  %7567 = vmatpush1.msra.mxu0 %v5366
  %7568 = vmatprep.subr.mxu0 0.0
  %7569 = vmatpush1.msra.mxu0 %v5367
  %7570 = vmatprep.subr.mxu0 0.0
  %7571 = vmatpush1.msra.mxu0 %v5368
  %7572 = vmatprep.subr.mxu0 0.0
  %7573 = vmatpush1.msra.mxu0 %v5369
  %7574 = vmatprep.subr.mxu0 0.0
  %7575 = vmatpush1.msra.mxu0 0.0
  %7576 = vmatprep.subr.mxu0 0.0
  %7577 = vmatpush1.msra.mxu0 0.0
  %7578 = vmatprep.subr.mxu0 0.0
  %7579 = vmatpush1.msra.mxu0 0.0
  %7580 = vmatprep.subr.mxu0 0.0
  %7581 = vmatpush1.msra.mxu0 0.0
  %7582 = vmatprep.subr.mxu0 0.0
  %7583 = vmatpush1.msra.mxu0 0.0
  %7584 = vmatprep.subr.mxu0 0.0
  %7585 = vmatpush1.msra.mxu0 0.0
  %7586 = vmatprep.subr.mxu0 0.0
  %7587 = vmatpush1.msra.mxu0 0.0
  %7588 = vmatprep.subr.mxu0 0.0
  %7589 = vmatpush1.msra.mxu0 0.0
  %7590 = vmatprep.subr.mxu0 0.0
  %7591 = vmatpush1.msra.mxu0 0.0
  %7592 = vmatprep.subr.mxu0 0.0
  %7593 = vmatpush1.msra.mxu0 0.0
  %7594 = vmatprep.subr.mxu0 0.0
  %7595 = vmatpush1.msra.mxu0 0.0
  %7596 = vmatprep.subr.mxu0 0.0
  %7597 = vmatpush1.msra.mxu0 0.0
  %7598 = vmatprep.subr.mxu0 0.0
  %7599 = vmatpush1.msra.mxu0 0.0
  %7600 = vmatprep.subr.mxu0 0.0
  %7601 = vmatpush1.msra.mxu0 0.0
  %7602 = vmatprep.subr.mxu0 0.0
  %7603 = vmatpush1.msra.mxu0 0.0
  %7604 = vmatprep.subr.mxu0 0.0
  %7605 = vmatpush1.msra.mxu0 0.0
  %7606 = vmatprep.subr.mxu0 0.0
  %7607 = vmatpush1.msra.mxu0 0.0
  %7608 = vmatprep.subr.mxu0 0.0
  %7609 = vmatpush1.msra.mxu0 0.0
  %7610 = vmatprep.subr.mxu0 0.0
  %7611 = vmatpush1.msra.mxu0 0.0
  %7612 = vmatprep.subr.mxu0 0.0
  %7613 = vmatpush1.msra.mxu0 0.0
  %7614 = vmatprep.subr.mxu0 0.0
  %7615 = vmatpush1.msra.mxu0 0.0
  %7616 = vmatprep.subr.mxu0 0.0
  %7617 = vmatpush1.msra.mxu0 0.0
  %7618 = vmatprep.subr.mxu0 0.0
  %7619 = vmatpush1.msra.mxu0 0.0
  %7620 = vmatprep.subr.mxu0 0.0
  %7621 = vmatpush1.msra.mxu0 0.0
  %7622 = vmatprep.subr.mxu0 0.0
  %7623 = vmatpush1.msra.mxu0 0.0
  %7624 = vmatprep.subr.mxu0 0.0
  %7625 = vmatpush1.msra.mxu0 0.0
  %7626 = vmatprep.subr.mxu0 0.0
  %7627 = vmatpush1.msra.mxu0 0.0
  %7628 = vmatprep.subr.mxu0 0.0
  %7629 = vmatpush1.msra.mxu0 0.0
  %7630 = vmatprep.mubr.f32.mxu0 0.0
  %7631 = vmatmul.mubr.f32.gmra.mrb[0].mxu0 %v7555
  %v7632 = vpop.f32.mrb[0].mxu0
  %v7633 = vadd.f32 %v7553, %v7632
  %v7634 = vpop.f32.mrb[0].mxu0
  %7635 = vmatprep.mubr.f32.mxu0 0.0
  %7636 = vmatmul.mubr.f32.gmra.mrb[0].mxu0 %v7558
  %v7637 = vpop.f32.mrb[0].mxu0
  %v7638 = vadd.f32 %v7553, %v7637
  %v7639 = vpop.f32.mrb[0].mxu0
  %7640 = vmatprep.mubr.f32.mxu0 0.0
  %7641 = vmatmul.mubr.f32.gmra.mrb[0].mxu0 %v7561
  %v7642 = vpop.f32.mrb[0].mxu0
  %v7643 = vadd.f32 %v7553, %v7642
  %v7644 = vpop.f32.mrb[0].mxu0
  %7645 = vmatprep.mubr.f32.mxu0 0.0
  %7646 = vmatmul.mubr.f32.gmra.mrb[0].mxu0 %v7564
  %v7647 = vpop.f32.mrb[0].mxu0
  %v7648 = vadd.f32 %v7553, %v7647
  %v7649 = vpop.f32.mrb[0].mxu0
  %7650 = vdwg.mxu0
  %v7651 = vmax.f32 %v7633, 0.0
  %v7652 = vmax.f32 %v7638, 0.0
  %v7653 = vmax.f32 %v7643, 0.0
  %v7654 = vmax.f32 %v7648, 0.0
  %v7656 = vsel %vm2173, %v7651, 0
  %v7659 = vsel %vm2173, %v7652, 0
  %v7662 = vsel %vm2173, %v7653, 0
  %v7665 = vsel %vm2173, %v7654, 0
  %7667 = vmatprep.subr.mxu0 0.0
  %7668 = vmatpush1.msra.mxu0 %v5370
  %7669 = vmatprep.subr.mxu0 0.0
  %7670 = vmatpush1.msra.mxu0 %v5371
  %7671 = vmatprep.subr.mxu0 0.0
  %7672 = vmatpush1.msra.mxu0 %v5372
  %7673 = vmatprep.subr.mxu0 0.0
  %7674 = vmatpush1.msra.mxu0 %v5373
  %7675 = vmatprep.subr.mxu0 0.0
  %7676 = vmatpush1.msra.mxu0 %v5374
  %7677 = vmatprep.subr.mxu0 0.0
  %7678 = vmatpush1.msra.mxu0 %v5375
  %7679 = vmatprep.subr.mxu0 0.0
  %7680 = vmatpush1.msra.mxu0 %v5376
  %7681 = vmatprep.subr.mxu0 0.0
  %7682 = vmatpush1.msra.mxu0 %v5377
  %7683 = vmatprep.subr.mxu0 0.0
  %7684 = vmatpush1.msra.mxu0 0.0
  %7685 = vmatprep.subr.mxu0 0.0
  %7686 = vmatpush1.msra.mxu0 0.0
  %7687 = vmatprep.subr.mxu0 0.0
  %7688 = vmatpush1.msra.mxu0 0.0
  %7689 = vmatprep.subr.mxu0 0.0
  %7690 = vmatpush1.msra.mxu0 0.0
  %7691 = vmatprep.subr.mxu0 0.0
  %7692 = vmatpush1.msra.mxu0 0.0
  %7693 = vmatprep.subr.mxu0 0.0
  %7694 = vmatpush1.msra.mxu0 0.0
  %7695 = vmatprep.subr.mxu0 0.0
  %7696 = vmatpush1.msra.mxu0 0.0
  %7697 = vmatprep.subr.mxu0 0.0
  %7698 = vmatpush1.msra.mxu0 0.0
  %7699 = vmatprep.subr.mxu0 0.0
  %7700 = vmatpush1.msra.mxu0 0.0
  %7701 = vmatprep.subr.mxu0 0.0
  %7702 = vmatpush1.msra.mxu0 0.0
  %7703 = vmatprep.subr.mxu0 0.0
  %7704 = vmatpush1.msra.mxu0 0.0
  %7705 = vmatprep.subr.mxu0 0.0
  %7706 = vmatpush1.msra.mxu0 0.0
  %7707 = vmatprep.subr.mxu0 0.0
  %7708 = vmatpush1.msra.mxu0 0.0
  %7709 = vmatprep.subr.mxu0 0.0
  %7710 = vmatpush1.msra.mxu0 0.0
  %7711 = vmatprep.subr.mxu0 0.0
  %7712 = vmatpush1.msra.mxu0 0.0
  %7713 = vmatprep.subr.mxu0 0.0
  %7714 = vmatpush1.msra.mxu0 0.0
  %7715 = vmatprep.subr.mxu0 0.0
  %7716 = vmatpush1.msra.mxu0 0.0
  %7717 = vmatprep.subr.mxu0 0.0
  %7718 = vmatpush1.msra.mxu0 0.0
  %7719 = vmatprep.subr.mxu0 0.0
  %7720 = vmatpush1.msra.mxu0 0.0
  %7721 = vmatprep.subr.mxu0 0.0
  %7722 = vmatpush1.msra.mxu0 0.0
  %7723 = vmatprep.subr.mxu0 0.0
  %7724 = vmatpush1.msra.mxu0 0.0
  %7725 = vmatprep.subr.mxu0 0.0
  %7726 = vmatpush1.msra.mxu0 0.0
  %7727 = vmatprep.subr.mxu0 0.0
  %7728 = vmatpush1.msra.mxu0 0.0
  %7729 = vmatprep.subr.mxu0 0.0
  %7730 = vmatpush1.msra.mxu0 0.0
  %7731 = vmatprep.mubr.f32.mxu0 0.0
  %7732 = vmatmul.mubr.f32.gmra.mrb[0].mxu0 %v7656
  %v7733 = vpop.f32.mrb[0].mxu0
  %v7734 = vadd.f32 0.0, %v7733
  %v7735 = vpop.f32.mrb[0].mxu0
  %7736 = vmatprep.mubr.f32.mxu0 0.0
  %7737 = vmatmul.mubr.f32.gmra.mrb[0].mxu0 %v7659
  %v7738 = vpop.f32.mrb[0].mxu0
  %v7739 = vadd.f32 0.0, %v7738
  %v7740 = vpop.f32.mrb[0].mxu0
  %7741 = vmatprep.mubr.f32.mxu0 0.0
  %7742 = vmatmul.mubr.f32.gmra.mrb[0].mxu0 %v7662
  %v7743 = vpop.f32.mrb[0].mxu0
  %v7744 = vadd.f32 0.0, %v7743
  %v7745 = vpop.f32.mrb[0].mxu0
  %7746 = vmatprep.mubr.f32.mxu0 0.0
  %7747 = vmatmul.mubr.f32.gmra.mrb[0].mxu0 %v7665
  %v7748 = vpop.f32.mrb[0].mxu0
  %v7749 = vadd.f32 0.0, %v7748
  %v7750 = vpop.f32.mrb[0].mxu0
  %7751 = vdwg.mxu0
  %v7752 = vadd.f32 %v7474, %v7734
  %v7753 = vadd.f32 %v7475, %v7739
  %v7754 = vadd.f32 %v7476, %v7744
  %v7755 = vadd.f32 %v7477, %v7749
  %v7756 = vadd.f32 %v7752, %v7533
  %v7757 = vadd.f32 %v7753, %v7533
  %v7758 = vadd.f32 %v7754, %v7533
  %v7759 = vadd.f32 %v7755, %v7533
  %v7760 = vld [vmem:[%s2 + $0x318] sm:$0xff]
  %v7761 = vld [vmem:[%s2 + $0x320] sm:$0xff]
  %v7762 = vld [vmem:[%s2 + $0x328] sm:$0xff]
  %v7763 = vld [vmem:[%s2 + $0x330] sm:$0xff]
  %v7764 = vld [vmem:[%s2 + $0x338] sm:$0xff]
  %v7765 = vld [vmem:[%s2 + $0x340] sm:$0xff]
  %v7766 = vld [vmem:[%s2 + $0x348] sm:$0xff]
  %v7767 = vld [vmem:[%s2 + $0x350] sm:$0xff]
  %v7768 = vld [vmem:[%s2 + $0x358] sm:$0xff]
  %v7769 = vld [vmem:[%s2 + $0x360] sm:$0xff]
  %v7770 = vld [vmem:[%s2 + $0x368] sm:$0xff]
  %v7771 = vld [vmem:[%s2 + $0x370] sm:$0xff]
  %v7772 = vld [vmem:[%s2 + $0x378] sm:$0xff]
  %v7773 = vld [vmem:[%s2 + $0x380] sm:$0xff]
  %v7774 = vld [vmem:[%s2 + $0x388] sm:$0xff]
  %v7775 = vld [vmem:[%s2 + $0x390] sm:$0xff]
  %v7776 = vld [vmem:[%s2 + $0x398] sm:$0xff]
  %v7777 = vld [vmem:[%s2 + $0x3a0] sm:$0xff]
  %v7778 = vld [vmem:[%s2 + $0x3a8] sm:$0xff]
  %v7779 = vld [vmem:[%s2 + $0x3b0] sm:$0xff]
  %v7780 = vld [vmem:[%s2 + $0x3b8] sm:$0xff]
  %v7781 = vld [vmem:[%s2 + $0x3c0] sm:$0xff]
  %v7782 = vld [vmem:[%s2 + $0x3c8] sm:$0xff]
  %v7783 = vld [vmem:[%s2 + $0x3d0] sm:$0xff]
  %v7784 = vld [vmem:[%s2 + $0x3d8] sm:$0xff]
  %v7785 = vld [vmem:[%s2 + $0x3e0] sm:$0xff]
  %v7786 = vld [vmem:[%s2 + $0x3e8] sm:$0xff]
  %v7787 = vld [vmem:[%s2 + $0x3f0] sm:$0xff]
  %v7788 = vld [vmem:[%s2 + $0x3f8] sm:$0xff]
  %v7789 = vld [vmem:[%s2 + $0x400] sm:$0xff]
  %v7790 = vld [vmem:[%s2 + $0x408] sm:$0xff]
  %v7791 = vld [vmem:[%s2 + $0x410] sm:$0xff]
  %v7792 = vld [vmem:[%s2 + $0x418] sm:$0x1]
  %v7793 = vld [vmem:[%s2 + $0x419] sm:$0x1]
  %v7794 = vld [vmem:[%s2 + $0x41a] sm:$0x1]
  %v7795 = vld [vmem:[%s2 + $0x41b] sm:$0x1]
  %v7796 = vsel %vm175, %v7756, 0.0
  %7797 = vadd.xlane.f32.xlu0 %v7796
  %v7798 = vpop.xlane.xlu0 %7797
  %v7799 = vsel %vm175, %v7757, 0.0
  %7800 = vadd.xlane.f32.xlu0 %v7799
  %v7801 = vpop.xlane.xlu0 %7800
  %v7802 = vsel %vm175, %v7758, 0.0
  %7803 = vadd.xlane.f32.xlu0 %v7802
  %v7804 = vpop.xlane.xlu0 %7803
  %v7805 = vsel %vm175, %v7759, 0.0
  %7806 = vadd.xlane.f32.xlu0 %v7805
  %v7807 = vpop.xlane.xlu0 %7806
  %v7808 = vmul.f32 %v7798, %v188
  %v7809 = vmul.f32 %v7801, %v188
  %v7810 = vmul.f32 %v7804, %v188
  %v7811 = vmul.f32 %v7807, %v188
  %v7812 = vsub.f32 %v7756, %v7808
  %v7813 = vsub.f32 %v7757, %v7809
  %v7814 = vsub.f32 %v7758, %v7810
  %v7815 = vsub.f32 %v7759, %v7811
  %v7816 = vmul.f32 %v7812, %v7812
  %v7817 = vmul.f32 %v7813, %v7813
  %v7818 = vmul.f32 %v7814, %v7814
  %v7819 = vmul.f32 %v7815, %v7815
  %v7820 = vsel %vm175, %v7816, 0.0
  %7821 = vadd.xlane.f32.xlu0 %v7820
  %v7822 = vpop.xlane.xlu0 %7821
  %v7823 = vsel %vm175, %v7817, 0.0
  %7824 = vadd.xlane.f32.xlu0 %v7823
  %v7825 = vpop.xlane.xlu0 %7824
  %v7826 = vsel %vm175, %v7818, 0.0
  %7827 = vadd.xlane.f32.xlu0 %v7826
  %v7828 = vpop.xlane.xlu0 %7827
  %v7829 = vsel %vm175, %v7819, 0.0
  %7830 = vadd.xlane.f32.xlu0 %v7829
  %v7831 = vpop.xlane.xlu0 %7830
  %v7832 = vmul.f32 %v7822, %v188
  %v7833 = vmul.f32 %v7825, %v188
  %v7834 = vmul.f32 %v7828, %v188
  %v7835 = vmul.f32 %v7831, %v188
  %v7836 = vadd.f32 %v7832, 1e-05
  %v7837 = vadd.f32 %v7833, 1e-05
  %v7838 = vadd.f32 %v7834, 1e-05
  %v7839 = vadd.f32 %v7835, 1e-05
  %v7840 = vrsqrt.pop %v7836
  %v7841 = vrsqrt.pop %v7837
  %v7842 = vrsqrt.pop %v7838
  %v7843 = vrsqrt.pop %v7839
  %v7844 = vmul.f32 %v7812, %v7840
  %v7845 = vmul.f32 %v7813, %v7841
  %v7846 = vmul.f32 %v7814, %v7842
  %v7847 = vmul.f32 %v7815, %v7843
  %v7848 = vlaneseq
  %v7849 = vshrl.u32 %v7848, 7
  %v7850 = vsub.s32 0, %v7849
  %v7851 = vrot.slane %v7792, %v7850
  %v7852 = vmul.f32 %v7844, %v7851
  %v7853 = vmul.f32 %v7845, %v7851
  %v7854 = vmul.f32 %v7846, %v7851
  %v7855 = vmul.f32 %v7847, %v7851
  %7857 = vrot.lane.b32.xlu0 %v7851, 96
  %v7858 = vpop.permute.xlu0 %7857
  %v7860 = vadd.f32 %v7852, %v7858
  %v7861 = vadd.f32 %v7853, %v7858
  %v7862 = vadd.f32 %v7854, %v7858
  %v7863 = vadd.f32 %v7855, %v7858
  %v7865 = vsel %vm175, %v7860, 0
  %v7868 = vsel %vm175, %v7861, 0
  %v7871 = vsel %vm175, %v7862, 0
  %v7874 = vsel %vm175, %v7863, 0
  %7876 = vmatprep.subr.mxu0 0.0
  %7877 = vmatpush1.msra.mxu0 %v7760
  %7878 = vmatprep.subr.mxu0 0.0
  %7879 = vmatpush1.msra.mxu0 %v7761
  %7880 = vmatprep.subr.mxu0 0.0
  %7881 = vmatpush1.msra.mxu0 %v7762
  %7882 = vmatprep.subr.mxu0 0.0
  %7883 = vmatpush1.msra.mxu0 %v7763
  %7884 = vmatprep.subr.mxu0 0.0
  %7885 = vmatpush1.msra.mxu0 0.0
  %7886 = vmatprep.subr.mxu0 0.0
  %7887 = vmatpush1.msra.mxu0 0.0
  %7888 = vmatprep.subr.mxu0 0.0
  %7889 = vmatpush1.msra.mxu0 0.0
  %7890 = vmatprep.subr.mxu0 0.0
  %7891 = vmatpush1.msra.mxu0 0.0
  %7892 = vmatprep.subr.mxu0 0.0
  %7893 = vmatpush1.msra.mxu0 0.0
  %7894 = vmatprep.subr.mxu0 0.0
  %7895 = vmatpush1.msra.mxu0 0.0
  %7896 = vmatprep.subr.mxu0 0.0
  %7897 = vmatpush1.msra.mxu0 0.0
  %7898 = vmatprep.subr.mxu0 0.0
  %7899 = vmatpush1.msra.mxu0 0.0
  %7900 = vmatprep.subr.mxu0 0.0
  %7901 = vmatpush1.msra.mxu0 0.0
  %7902 = vmatprep.subr.mxu0 0.0
  %7903 = vmatpush1.msra.mxu0 0.0
  %7904 = vmatprep.subr.mxu0 0.0
  %7905 = vmatpush1.msra.mxu0 0.0
  %7906 = vmatprep.subr.mxu0 0.0
  %7907 = vmatpush1.msra.mxu0 0.0
  %7908 = vmatprep.subr.mxu0 0.0
  %7909 = vmatpush1.msra.mxu0 0.0
  %7910 = vmatprep.subr.mxu0 0.0
  %7911 = vmatpush1.msra.mxu0 0.0
  %7912 = vmatprep.subr.mxu0 0.0
  %7913 = vmatpush1.msra.mxu0 0.0
  %7914 = vmatprep.subr.mxu0 0.0
  %7915 = vmatpush1.msra.mxu0 0.0
  %7916 = vmatprep.subr.mxu0 0.0
  %7917 = vmatpush1.msra.mxu0 0.0
  %7918 = vmatprep.subr.mxu0 0.0
  %7919 = vmatpush1.msra.mxu0 0.0
  %7920 = vmatprep.subr.mxu0 0.0
  %7921 = vmatpush1.msra.mxu0 0.0
  %7922 = vmatprep.subr.mxu0 0.0
  %7923 = vmatpush1.msra.mxu0 0.0
  %7924 = vmatprep.subr.mxu0 0.0
  %7925 = vmatpush1.msra.mxu0 0.0
  %7926 = vmatprep.subr.mxu0 0.0
  %7927 = vmatpush1.msra.mxu0 0.0
  %7928 = vmatprep.subr.mxu0 0.0
  %7929 = vmatpush1.msra.mxu0 0.0
  %7930 = vmatprep.subr.mxu0 0.0
  %7931 = vmatpush1.msra.mxu0 0.0
  %7932 = vmatprep.subr.mxu0 0.0
  %7933 = vmatpush1.msra.mxu0 0.0
  %7934 = vmatprep.subr.mxu0 0.0
  %7935 = vmatpush1.msra.mxu0 0.0
  %7936 = vmatprep.subr.mxu0 0.0
  %7937 = vmatpush1.msra.mxu0 0.0
  %7938 = vmatprep.subr.mxu0 0.0
  %7939 = vmatpush1.msra.mxu0 0.0
  %7940 = vmatprep.mubr.f32.mxu0 0.0
  %7941 = vmatmul.mubr.f32.gmra.mrb[0].mxu0 %v7865
  %v7942 = vpop.f32.mrb[0].mxu0
  %v7943 = vadd.f32 0.0, %v7942
  %v7944 = vpop.f32.mrb[0].mxu0
  %7945 = vmatprep.mubr.f32.mxu0 0.0
  %7946 = vmatmul.mubr.f32.gmra.mrb[0].mxu0 %v7868
  %v7947 = vpop.f32.mrb[0].mxu0
  %v7948 = vadd.f32 0.0, %v7947
  %v7949 = vpop.f32.mrb[0].mxu0
  %7950 = vmatprep.mubr.f32.mxu0 0.0
  %7951 = vmatmul.mubr.f32.gmra.mrb[0].mxu0 %v7871
  %v7952 = vpop.f32.mrb[0].mxu0
  %v7953 = vadd.f32 0.0, %v7952
  %v7954 = vpop.f32.mrb[0].mxu0
  %7955 = vmatprep.mubr.f32.mxu0 0.0
  %7956 = vmatmul.mubr.f32.gmra.mrb[0].mxu0 %v7874
  %v7957 = vpop.f32.mrb[0].mxu0
  %v7958 = vadd.f32 0.0, %v7957
  %v7959 = vpop.f32.mrb[0].mxu0
  %7960 = vdwg.mxu0
  %7961 = vmatprep.subr.mxu0 0.0
  %7962 = vmatpush1.msra.mxu0 %v7764
  %7963 = vmatprep.subr.mxu0 0.0
  %7964 = vmatpush1.msra.mxu0 %v7765
  %7965 = vmatprep.subr.mxu0 0.0
  %7966 = vmatpush1.msra.mxu0 %v7766
  %7967 = vmatprep.subr.mxu0 0.0
  %7968 = vmatpush1.msra.mxu0 %v7767
  %7969 = vmatprep.subr.mxu0 0.0
  %7970 = vmatpush1.msra.mxu0 0.0
  %7971 = vmatprep.subr.mxu0 0.0
  %7972 = vmatpush1.msra.mxu0 0.0
  %7973 = vmatprep.subr.mxu0 0.0
  %7974 = vmatpush1.msra.mxu0 0.0
  %7975 = vmatprep.subr.mxu0 0.0
  %7976 = vmatpush1.msra.mxu0 0.0
  %7977 = vmatprep.subr.mxu0 0.0
  %7978 = vmatpush1.msra.mxu0 0.0
  %7979 = vmatprep.subr.mxu0 0.0
  %7980 = vmatpush1.msra.mxu0 0.0
  %7981 = vmatprep.subr.mxu0 0.0
  %7982 = vmatpush1.msra.mxu0 0.0
  %7983 = vmatprep.subr.mxu0 0.0
  %7984 = vmatpush1.msra.mxu0 0.0
  %7985 = vmatprep.subr.mxu0 0.0
  %7986 = vmatpush1.msra.mxu0 0.0
  %7987 = vmatprep.subr.mxu0 0.0
  %7988 = vmatpush1.msra.mxu0 0.0
  %7989 = vmatprep.subr.mxu0 0.0
  %7990 = vmatpush1.msra.mxu0 0.0
  %7991 = vmatprep.subr.mxu0 0.0
  %7992 = vmatpush1.msra.mxu0 0.0
  %7993 = vmatprep.subr.mxu0 0.0
  %7994 = vmatpush1.msra.mxu0 0.0
  %7995 = vmatprep.subr.mxu0 0.0
  %7996 = vmatpush1.msra.mxu0 0.0
  %7997 = vmatprep.subr.mxu0 0.0
  %7998 = vmatpush1.msra.mxu0 0.0
  %7999 = vmatprep.subr.mxu0 0.0
  %8000 = vmatpush1.msra.mxu0 0.0
  %8001 = vmatprep.subr.mxu0 0.0
  %8002 = vmatpush1.msra.mxu0 0.0
  %8003 = vmatprep.subr.mxu0 0.0
  %8004 = vmatpush1.msra.mxu0 0.0
  %8005 = vmatprep.subr.mxu0 0.0
  %8006 = vmatpush1.msra.mxu0 0.0
  %8007 = vmatprep.subr.mxu0 0.0
  %8008 = vmatpush1.msra.mxu0 0.0
  %8009 = vmatprep.subr.mxu0 0.0
  %8010 = vmatpush1.msra.mxu0 0.0
  %8011 = vmatprep.subr.mxu0 0.0
  %8012 = vmatpush1.msra.mxu0 0.0
  %8013 = vmatprep.subr.mxu0 0.0
  %8014 = vmatpush1.msra.mxu0 0.0
  %8015 = vmatprep.subr.mxu0 0.0
  %8016 = vmatpush1.msra.mxu0 0.0
  %8017 = vmatprep.subr.mxu0 0.0
  %8018 = vmatpush1.msra.mxu0 0.0
  %8019 = vmatprep.subr.mxu0 0.0
  %8020 = vmatpush1.msra.mxu0 0.0
  %8021 = vmatprep.subr.mxu0 0.0
  %8022 = vmatpush1.msra.mxu0 0.0
  %8023 = vmatprep.subr.mxu0 0.0
  %8024 = vmatpush1.msra.mxu0 0.0
  %8025 = vmatprep.mubr.f32.mxu0 0.0
  %8026 = vmatmul.mubr.f32.gmra.mrb[0].mxu0 %v7865
  %v8027 = vpop.f32.mrb[0].mxu0
  %v8028 = vadd.f32 0.0, %v8027
  %v8029 = vpop.f32.mrb[0].mxu0
  %8030 = vmatprep.mubr.f32.mxu0 0.0
  %8031 = vmatmul.mubr.f32.gmra.mrb[0].mxu0 %v7868
  %v8032 = vpop.f32.mrb[0].mxu0
  %v8033 = vadd.f32 0.0, %v8032
  %v8034 = vpop.f32.mrb[0].mxu0
  %8035 = vmatprep.mubr.f32.mxu0 0.0
  %8036 = vmatmul.mubr.f32.gmra.mrb[0].mxu0 %v7871
  %v8037 = vpop.f32.mrb[0].mxu0
  %v8038 = vadd.f32 0.0, %v8037
  %v8039 = vpop.f32.mrb[0].mxu0
  %8040 = vmatprep.mubr.f32.mxu0 0.0
  %8041 = vmatmul.mubr.f32.gmra.mrb[0].mxu0 %v7874
  %v8042 = vpop.f32.mrb[0].mxu0
  %v8043 = vadd.f32 0.0, %v8042
  %v8044 = vpop.f32.mrb[0].mxu0
  %8045 = vdwg.mxu0
  %8046 = vmatprep.subr.mxu0 0.0
  %8047 = vmatpush1.msra.mxu0 %v7768
  %8048 = vmatprep.subr.mxu0 0.0
  %8049 = vmatpush1.msra.mxu0 %v7769
  %8050 = vmatprep.subr.mxu0 0.0
  %8051 = vmatpush1.msra.mxu0 %v7770
  %8052 = vmatprep.subr.mxu0 0.0
  %8053 = vmatpush1.msra.mxu0 %v7771
  %8054 = vmatprep.subr.mxu0 0.0
  %8055 = vmatpush1.msra.mxu0 0.0
  %8056 = vmatprep.subr.mxu0 0.0
  %8057 = vmatpush1.msra.mxu0 0.0
  %8058 = vmatprep.subr.mxu0 0.0
  %8059 = vmatpush1.msra.mxu0 0.0
  %8060 = vmatprep.subr.mxu0 0.0
  %8061 = vmatpush1.msra.mxu0 0.0
  %8062 = vmatprep.subr.mxu0 0.0
  %8063 = vmatpush1.msra.mxu0 0.0
  %8064 = vmatprep.subr.mxu0 0.0
  %8065 = vmatpush1.msra.mxu0 0.0
  %8066 = vmatprep.subr.mxu0 0.0
  %8067 = vmatpush1.msra.mxu0 0.0
  %8068 = vmatprep.subr.mxu0 0.0
  %8069 = vmatpush1.msra.mxu0 0.0
  %8070 = vmatprep.subr.mxu0 0.0
  %8071 = vmatpush1.msra.mxu0 0.0
  %8072 = vmatprep.subr.mxu0 0.0
  %8073 = vmatpush1.msra.mxu0 0.0
  %8074 = vmatprep.subr.mxu0 0.0
  %8075 = vmatpush1.msra.mxu0 0.0
  %8076 = vmatprep.subr.mxu0 0.0
  %8077 = vmatpush1.msra.mxu0 0.0
  %8078 = vmatprep.subr.mxu0 0.0
  %8079 = vmatpush1.msra.mxu0 0.0
  %8080 = vmatprep.subr.mxu0 0.0
  %8081 = vmatpush1.msra.mxu0 0.0
  %8082 = vmatprep.subr.mxu0 0.0
  %8083 = vmatpush1.msra.mxu0 0.0
  %8084 = vmatprep.subr.mxu0 0.0
  %8085 = vmatpush1.msra.mxu0 0.0
  %8086 = vmatprep.subr.mxu0 0.0
  %8087 = vmatpush1.msra.mxu0 0.0
  %8088 = vmatprep.subr.mxu0 0.0
  %8089 = vmatpush1.msra.mxu0 0.0
  %8090 = vmatprep.subr.mxu0 0.0
  %8091 = vmatpush1.msra.mxu0 0.0
  %8092 = vmatprep.subr.mxu0 0.0
  %8093 = vmatpush1.msra.mxu0 0.0
  %8094 = vmatprep.subr.mxu0 0.0
  %8095 = vmatpush1.msra.mxu0 0.0
  %8096 = vmatprep.subr.mxu0 0.0
  %8097 = vmatpush1.msra.mxu0 0.0
  %8098 = vmatprep.subr.mxu0 0.0
  %8099 = vmatpush1.msra.mxu0 0.0
  %8100 = vmatprep.subr.mxu0 0.0
  %8101 = vmatpush1.msra.mxu0 0.0
  %8102 = vmatprep.subr.mxu0 0.0
  %8103 = vmatpush1.msra.mxu0 0.0
  %8104 = vmatprep.subr.mxu0 0.0
  %8105 = vmatpush1.msra.mxu0 0.0
  %8106 = vmatprep.subr.mxu0 0.0
  %8107 = vmatpush1.msra.mxu0 0.0
  %8108 = vmatprep.subr.mxu0 0.0
  %8109 = vmatpush1.msra.mxu0 0.0
  %8110 = vmatprep.mubr.f32.mxu0 0.0
  %8111 = vmatmul.mubr.f32.gmra.mrb[0].mxu0 %v7865
  %v8112 = vpop.f32.mrb[0].mxu0
  %v8113 = vadd.f32 0.0, %v8112
  %v8114 = vpop.f32.mrb[0].mxu0
  %8115 = vmatprep.mubr.f32.mxu0 0.0
  %8116 = vmatmul.mubr.f32.gmra.mrb[0].mxu0 %v7868
  %v8117 = vpop.f32.mrb[0].mxu0
  %v8118 = vadd.f32 0.0, %v8117
  %v8119 = vpop.f32.mrb[0].mxu0
  %8120 = vmatprep.mubr.f32.mxu0 0.0
  %8121 = vmatmul.mubr.f32.gmra.mrb[0].mxu0 %v7871
  %v8122 = vpop.f32.mrb[0].mxu0
  %v8123 = vadd.f32 0.0, %v8122
  %v8124 = vpop.f32.mrb[0].mxu0
  %8125 = vmatprep.mubr.f32.mxu0 0.0
  %8126 = vmatmul.mubr.f32.gmra.mrb[0].mxu0 %v7874
  %v8127 = vpop.f32.mrb[0].mxu0
  %v8128 = vadd.f32 0.0, %v8127
  %v8129 = vpop.f32.mrb[0].mxu0
  %8130 = vdwg.mxu0
  %v8132 = vsel %vm22, %v7943, 0
  %v8135 = vsel %vm22, %v7948, 0
  %v8138 = vsel %vm22, %v8028, 0
  %v8141 = vsel %vm22, %v8033, 0
  %8143 = vmatprep.subr.mxu0 0.0
  %8144 = vmatpush1.xpose.msra.mxu0 %v8138
  %8145 = vmatprep.subr.mxu0 0.0
  %8146 = vmatpush1.xpose.msra.mxu0 %v8141
  %8147 = vmatprep.subr.mxu0 0.0
  %8148 = vmatpush1.xpose.msra.mxu0 0.0
  %8149 = vmatprep.subr.mxu0 0.0
  %8150 = vmatpush1.xpose.msra.mxu0 0.0
  %8151 = vmatprep.subr.mxu0 0.0
  %8152 = vmatpush1.xpose.msra.mxu0 0.0
  %8153 = vmatprep.subr.mxu0 0.0
  %8154 = vmatpush1.xpose.msra.mxu0 0.0
  %8155 = vmatprep.subr.mxu0 0.0
  %8156 = vmatpush1.xpose.msra.mxu0 0.0
  %8157 = vmatprep.subr.mxu0 0.0
  %8158 = vmatpush1.xpose.msra.mxu0 0.0
  %8159 = vmatprep.subr.mxu0 0.0
  %8160 = vmatpush1.xpose.msra.mxu0 0.0
  %8161 = vmatprep.subr.mxu0 0.0
  %8162 = vmatpush1.xpose.msra.mxu0 0.0
  %8163 = vmatprep.subr.mxu0 0.0
  %8164 = vmatpush1.xpose.msra.mxu0 0.0
  %8165 = vmatprep.subr.mxu0 0.0
  %8166 = vmatpush1.xpose.msra.mxu0 0.0
  %8167 = vmatprep.subr.mxu0 0.0
  %8168 = vmatpush1.xpose.msra.mxu0 0.0
  %8169 = vmatprep.subr.mxu0 0.0
  %8170 = vmatpush1.xpose.msra.mxu0 0.0
  %8171 = vmatprep.subr.mxu0 0.0
  %8172 = vmatpush1.xpose.msra.mxu0 0.0
  %8173 = vmatprep.subr.mxu0 0.0
  %8174 = vmatpush1.xpose.msra.mxu0 0.0
  %8175 = vmatprep.subr.mxu0 0.0
  %8176 = vmatpush1.xpose.msra.mxu0 0.0
  %8177 = vmatprep.subr.mxu0 0.0
  %8178 = vmatpush1.xpose.msra.mxu0 0.0
  %8179 = vmatprep.subr.mxu0 0.0
  %8180 = vmatpush1.xpose.msra.mxu0 0.0
  %8181 = vmatprep.subr.mxu0 0.0
  %8182 = vmatpush1.xpose.msra.mxu0 0.0
  %8183 = vmatprep.subr.mxu0 0.0
  %8184 = vmatpush1.xpose.msra.mxu0 0.0
  %8185 = vmatprep.subr.mxu0 0.0
  %8186 = vmatpush1.xpose.msra.mxu0 0.0
  %8187 = vmatprep.subr.mxu0 0.0
  %8188 = vmatpush1.xpose.msra.mxu0 0.0
  %8189 = vmatprep.subr.mxu0 0.0
  %8190 = vmatpush1.xpose.msra.mxu0 0.0
  %8191 = vmatprep.subr.mxu0 0.0
  %8192 = vmatpush1.xpose.msra.mxu0 0.0
  %8193 = vmatprep.subr.mxu0 0.0
  %8194 = vmatpush1.xpose.msra.mxu0 0.0
  %8195 = vmatprep.subr.mxu0 0.0
  %8196 = vmatpush1.xpose.msra.mxu0 0.0
  %8197 = vmatprep.subr.mxu0 0.0
  %8198 = vmatpush1.xpose.msra.mxu0 0.0
  %8199 = vmatprep.subr.mxu0 0.0
  %8200 = vmatpush1.xpose.msra.mxu0 0.0
  %8201 = vmatprep.subr.mxu0 0.0
  %8202 = vmatpush1.xpose.msra.mxu0 0.0
  %8203 = vmatprep.subr.mxu0 0.0
  %8204 = vmatpush1.xpose.msra.mxu0 0.0
  %8205 = vmatprep.subr.mxu0 0.0
  %8206 = vmatpush1.xpose.msra.mxu0 0.0
  %8207 = vmatprep.mubr.f32.mxu0 0.0
  %8208 = vmatmul.mubr.f32.gmra.mrb[0].mxu0 %v8132
  %v8209 = vpop.f32.mrb[0].mxu0
  %v8210 = vadd.f32 0.0, %v8209
  %v8211 = vpop.f32.mrb[0].mxu0
  %8212 = vmatprep.mubr.f32.mxu0 0.0
  %8213 = vmatmul.mubr.f32.gmra.mrb[0].mxu0 %v8135
  %v8214 = vpop.f32.mrb[0].mxu0
  %v8215 = vadd.f32 0.0, %v8214
  %v8216 = vpop.f32.mrb[0].mxu0
  %8217 = vdwg.mxu0
  %v8219 = vsel %vm22, %v7953, 0
  %v8222 = vsel %vm22, %v7958, 0
  %v8225 = vsel %vm22, %v8038, 0
  %v8228 = vsel %vm22, %v8043, 0
  %8230 = vmatprep.subr.mxu0 0.0
  %8231 = vmatpush1.xpose.msra.mxu0 %v8225
  %8232 = vmatprep.subr.mxu0 0.0
  %8233 = vmatpush1.xpose.msra.mxu0 %v8228
  %8234 = vmatprep.subr.mxu0 0.0
  %8235 = vmatpush1.xpose.msra.mxu0 0.0
  %8236 = vmatprep.subr.mxu0 0.0
  %8237 = vmatpush1.xpose.msra.mxu0 0.0
  %8238 = vmatprep.subr.mxu0 0.0
  %8239 = vmatpush1.xpose.msra.mxu0 0.0
  %8240 = vmatprep.subr.mxu0 0.0
  %8241 = vmatpush1.xpose.msra.mxu0 0.0
  %8242 = vmatprep.subr.mxu0 0.0
  %8243 = vmatpush1.xpose.msra.mxu0 0.0
  %8244 = vmatprep.subr.mxu0 0.0
  %8245 = vmatpush1.xpose.msra.mxu0 0.0
  %8246 = vmatprep.subr.mxu0 0.0
  %8247 = vmatpush1.xpose.msra.mxu0 0.0
  %8248 = vmatprep.subr.mxu0 0.0
  %8249 = vmatpush1.xpose.msra.mxu0 0.0
  %8250 = vmatprep.subr.mxu0 0.0
  %8251 = vmatpush1.xpose.msra.mxu0 0.0
  %8252 = vmatprep.subr.mxu0 0.0
  %8253 = vmatpush1.xpose.msra.mxu0 0.0
  %8254 = vmatprep.subr.mxu0 0.0
  %8255 = vmatpush1.xpose.msra.mxu0 0.0
  %8256 = vmatprep.subr.mxu0 0.0
  %8257 = vmatpush1.xpose.msra.mxu0 0.0
  %8258 = vmatprep.subr.mxu0 0.0
  %8259 = vmatpush1.xpose.msra.mxu0 0.0
  %8260 = vmatprep.subr.mxu0 0.0
  %8261 = vmatpush1.xpose.msra.mxu0 0.0
  %8262 = vmatprep.subr.mxu0 0.0
  %8263 = vmatpush1.xpose.msra.mxu0 0.0
  %8264 = vmatprep.subr.mxu0 0.0
  %8265 = vmatpush1.xpose.msra.mxu0 0.0
  %8266 = vmatprep.subr.mxu0 0.0
  %8267 = vmatpush1.xpose.msra.mxu0 0.0
  %8268 = vmatprep.subr.mxu0 0.0
  %8269 = vmatpush1.xpose.msra.mxu0 0.0
  %8270 = vmatprep.subr.mxu0 0.0
  %8271 = vmatpush1.xpose.msra.mxu0 0.0
  %8272 = vmatprep.subr.mxu0 0.0
  %8273 = vmatpush1.xpose.msra.mxu0 0.0
  %8274 = vmatprep.subr.mxu0 0.0
  %8275 = vmatpush1.xpose.msra.mxu0 0.0
  %8276 = vmatprep.subr.mxu0 0.0
  %8277 = vmatpush1.xpose.msra.mxu0 0.0
  %8278 = vmatprep.subr.mxu0 0.0
  %8279 = vmatpush1.xpose.msra.mxu0 0.0
  %8280 = vmatprep.subr.mxu0 0.0
  %8281 = vmatpush1.xpose.msra.mxu0 0.0
  %8282 = vmatprep.subr.mxu0 0.0
  %8283 = vmatpush1.xpose.msra.mxu0 0.0
  %8284 = vmatprep.subr.mxu0 0.0
  %8285 = vmatpush1.xpose.msra.mxu0 0.0
  %8286 = vmatprep.subr.mxu0 0.0
  %8287 = vmatpush1.xpose.msra.mxu0 0.0
  %8288 = vmatprep.subr.mxu0 0.0
  %8289 = vmatpush1.xpose.msra.mxu0 0.0
  %8290 = vmatprep.subr.mxu0 0.0
  %8291 = vmatpush1.xpose.msra.mxu0 0.0
  %8292 = vmatprep.subr.mxu0 0.0
  %8293 = vmatpush1.xpose.msra.mxu0 0.0
  %8294 = vmatprep.mubr.f32.mxu0 0.0
  %8295 = vmatmul.mubr.f32.gmra.mrb[0].mxu0 %v8219
  %v8296 = vpop.f32.mrb[0].mxu0
  %v8297 = vadd.f32 0.0, %v8296
  %v8298 = vpop.f32.mrb[0].mxu0
  %8299 = vmatprep.mubr.f32.mxu0 0.0
  %8300 = vmatmul.mubr.f32.gmra.mrb[0].mxu0 %v8222
  %v8301 = vpop.f32.mrb[0].mxu0
  %v8302 = vadd.f32 0.0, %v8301
  %v8303 = vpop.f32.mrb[0].mxu0
  %8304 = vdwg.mxu0
  %v8305 = vsel %vm137, -1e+09, %v8210
  %v8306 = vsel %vm138, -1e+09, %v8215
  %v8307 = vsel %vm137, -1e+09, %v8297
  %v8308 = vsel %vm138, -1e+09, %v8302
  %v8309 = vsel %vm22, %v8305, -inf
  %8310 = vmax.xlane.f32.xlu0 %v8309
  %v8311 = vpop.xlane.xlu0 %8310
  %v8312 = vsel %vm22, %v8306, -inf
  %8313 = vmax.xlane.f32.xlu0 %v8312
  %v8314 = vpop.xlane.xlu0 %8313
  %v8315 = vsel %vm22, %v8307, -inf
  %8316 = vmax.xlane.f32.xlu0 %v8315
  %v8317 = vpop.xlane.xlu0 %8316
  %v8318 = vsel %vm22, %v8308, -inf
  %8319 = vmax.xlane.f32.xlu0 %v8318
  %v8320 = vpop.xlane.xlu0 %8319
  %v8321 = vsub.f32 %v8305, %v8311
  %v8322 = vsub.f32 %v8306, %v8314
  %v8323 = vsub.f32 %v8307, %v8317
  %v8324 = vsub.f32 %v8308, %v8320
  %v8325 = vmul.f32 %v8321, 1.442695
  %v8326 = vpow.pop %v8325
  %v8327 = vmul.f32 %v8322, 1.442695
  %v8328 = vpow.pop %v8327
  %v8329 = vmul.f32 %v8323, 1.442695
  %v8330 = vpow.pop %v8329
  %v8331 = vmul.f32 %v8324, 1.442695
  %v8332 = vpow.pop %v8331
  %v8333 = vsel %vm22, %v8326, 0.0
  %8334 = vadd.xlane.f32.xlu0 %v8333
  %v8335 = vpop.xlane.xlu0 %8334
  %v8336 = vsel %vm22, %v8328, 0.0
  %8337 = vadd.xlane.f32.xlu0 %v8336
  %v8338 = vpop.xlane.xlu0 %8337
  %v8339 = vsel %vm22, %v8330, 0.0
  %8340 = vadd.xlane.f32.xlu0 %v8339
  %v8341 = vpop.xlane.xlu0 %8340
  %v8342 = vsel %vm22, %v8332, 0.0
  %8343 = vadd.xlane.f32.xlu0 %v8342
  %v8344 = vpop.xlane.xlu0 %8343
  %v8345 = vrcp.pop %v8335
  %v8346 = vrcp.pop %v8338
  %v8347 = vrcp.pop %v8341
  %v8348 = vrcp.pop %v8344
  %v8349 = vmul.f32 %v8326, %v8345
  %v8350 = vmul.f32 %v8328, %v8346
  %v8351 = vmul.f32 %v8330, %v8347
  %v8352 = vmul.f32 %v8332, %v8348
  %v8353 = vadd.f32 %v8349, 0.0
  %v8354 = vadd.f32 %v8350, 0.0
  %v8355 = vadd.f32 %v8351, 0.0
  %v8356 = vadd.f32 %v8352, 0.0
  %v8358 = vsel %vm22, %v8349, 0
  %v8361 = vsel %vm22, %v8350, 0
  %8363 = vmatprep.subr.mxu0 0.0
  %8364 = vmatpush1.msra.mxu0 %v8113
  %8365 = vmatprep.subr.mxu0 0.0
  %8366 = vmatpush1.msra.mxu0 %v8118
  %8367 = vmatprep.subr.mxu0 0.0
  %8368 = vmatpush1.msra.mxu0 0.0
  %8369 = vmatprep.subr.mxu0 0.0
  %8370 = vmatpush1.msra.mxu0 0.0
  %8371 = vmatprep.subr.mxu0 0.0
  %8372 = vmatpush1.msra.mxu0 0.0
  %8373 = vmatprep.subr.mxu0 0.0
  %8374 = vmatpush1.msra.mxu0 0.0
  %8375 = vmatprep.subr.mxu0 0.0
  %8376 = vmatpush1.msra.mxu0 0.0
  %8377 = vmatprep.subr.mxu0 0.0
  %8378 = vmatpush1.msra.mxu0 0.0
  %8379 = vmatprep.subr.mxu0 0.0
  %8380 = vmatpush1.msra.mxu0 0.0
  %8381 = vmatprep.subr.mxu0 0.0
  %8382 = vmatpush1.msra.mxu0 0.0
  %8383 = vmatprep.subr.mxu0 0.0
  %8384 = vmatpush1.msra.mxu0 0.0
  %8385 = vmatprep.subr.mxu0 0.0
  %8386 = vmatpush1.msra.mxu0 0.0
  %8387 = vmatprep.subr.mxu0 0.0
  %8388 = vmatpush1.msra.mxu0 0.0
  %8389 = vmatprep.subr.mxu0 0.0
  %8390 = vmatpush1.msra.mxu0 0.0
  %8391 = vmatprep.subr.mxu0 0.0
  %8392 = vmatpush1.msra.mxu0 0.0
  %8393 = vmatprep.subr.mxu0 0.0
  %8394 = vmatpush1.msra.mxu0 0.0
  %8395 = vmatprep.subr.mxu0 0.0
  %8396 = vmatpush1.msra.mxu0 0.0
  %8397 = vmatprep.subr.mxu0 0.0
  %8398 = vmatpush1.msra.mxu0 0.0
  %8399 = vmatprep.subr.mxu0 0.0
  %8400 = vmatpush1.msra.mxu0 0.0
  %8401 = vmatprep.subr.mxu0 0.0
  %8402 = vmatpush1.msra.mxu0 0.0
  %8403 = vmatprep.subr.mxu0 0.0
  %8404 = vmatpush1.msra.mxu0 0.0
  %8405 = vmatprep.subr.mxu0 0.0
  %8406 = vmatpush1.msra.mxu0 0.0
  %8407 = vmatprep.subr.mxu0 0.0
  %8408 = vmatpush1.msra.mxu0 0.0
  %8409 = vmatprep.subr.mxu0 0.0
  %8410 = vmatpush1.msra.mxu0 0.0
  %8411 = vmatprep.subr.mxu0 0.0
  %8412 = vmatpush1.msra.mxu0 0.0
  %8413 = vmatprep.subr.mxu0 0.0
  %8414 = vmatpush1.msra.mxu0 0.0
  %8415 = vmatprep.subr.mxu0 0.0
  %8416 = vmatpush1.msra.mxu0 0.0
  %8417 = vmatprep.subr.mxu0 0.0
  %8418 = vmatpush1.msra.mxu0 0.0
  %8419 = vmatprep.subr.mxu0 0.0
  %8420 = vmatpush1.msra.mxu0 0.0
  %8421 = vmatprep.subr.mxu0 0.0
  %8422 = vmatpush1.msra.mxu0 0.0
  %8423 = vmatprep.subr.mxu0 0.0
  %8424 = vmatpush1.msra.mxu0 0.0
  %8425 = vmatprep.subr.mxu0 0.0
  %8426 = vmatpush1.msra.mxu0 0.0
  %8427 = vmatprep.mubr.f32.mxu0 0.0
  %8428 = vmatmul.mubr.f32.gmra.mrb[0].mxu0 %v8358
  %v8429 = vpop.f32.mrb[0].mxu0
  %v8430 = vadd.f32 0.0, %v8429
  %v8431 = vpop.f32.mrb[0].mxu0
  %8432 = vmatprep.mubr.f32.mxu0 0.0
  %8433 = vmatmul.mubr.f32.gmra.mrb[0].mxu0 %v8361
  %v8434 = vpop.f32.mrb[0].mxu0
  %v8435 = vadd.f32 0.0, %v8434
  %v8436 = vpop.f32.mrb[0].mxu0
  %8437 = vdwg.mxu0
  %v8439 = vsel %vm22, %v8351, 0
  %v8442 = vsel %vm22, %v8352, 0
  %8444 = vmatprep.subr.mxu0 0.0
  %8445 = vmatpush1.msra.mxu0 %v8123
  %8446 = vmatprep.subr.mxu0 0.0
  %8447 = vmatpush1.msra.mxu0 %v8128
  %8448 = vmatprep.subr.mxu0 0.0
  %8449 = vmatpush1.msra.mxu0 0.0
  %8450 = vmatprep.subr.mxu0 0.0
  %8451 = vmatpush1.msra.mxu0 0.0
  %8452 = vmatprep.subr.mxu0 0.0
  %8453 = vmatpush1.msra.mxu0 0.0
  %8454 = vmatprep.subr.mxu0 0.0
  %8455 = vmatpush1.msra.mxu0 0.0
  %8456 = vmatprep.subr.mxu0 0.0
  %8457 = vmatpush1.msra.mxu0 0.0
  %8458 = vmatprep.subr.mxu0 0.0
  %8459 = vmatpush1.msra.mxu0 0.0
  %8460 = vmatprep.subr.mxu0 0.0
  %8461 = vmatpush1.msra.mxu0 0.0
  %8462 = vmatprep.subr.mxu0 0.0
  %8463 = vmatpush1.msra.mxu0 0.0
  %8464 = vmatprep.subr.mxu0 0.0
  %8465 = vmatpush1.msra.mxu0 0.0
  %8466 = vmatprep.subr.mxu0 0.0
  %8467 = vmatpush1.msra.mxu0 0.0
  %8468 = vmatprep.subr.mxu0 0.0
  %8469 = vmatpush1.msra.mxu0 0.0
  %8470 = vmatprep.subr.mxu0 0.0
  %8471 = vmatpush1.msra.mxu0 0.0
  %8472 = vmatprep.subr.mxu0 0.0
  %8473 = vmatpush1.msra.mxu0 0.0
  %8474 = vmatprep.subr.mxu0 0.0
  %8475 = vmatpush1.msra.mxu0 0.0
  %8476 = vmatprep.subr.mxu0 0.0
  %8477 = vmatpush1.msra.mxu0 0.0
  %8478 = vmatprep.subr.mxu0 0.0
  %8479 = vmatpush1.msra.mxu0 0.0
  %8480 = vmatprep.subr.mxu0 0.0
  %8481 = vmatpush1.msra.mxu0 0.0
  %8482 = vmatprep.subr.mxu0 0.0
  %8483 = vmatpush1.msra.mxu0 0.0
  %8484 = vmatprep.subr.mxu0 0.0
  %8485 = vmatpush1.msra.mxu0 0.0
  %8486 = vmatprep.subr.mxu0 0.0
  %8487 = vmatpush1.msra.mxu0 0.0
  %8488 = vmatprep.subr.mxu0 0.0
  %8489 = vmatpush1.msra.mxu0 0.0
  %8490 = vmatprep.subr.mxu0 0.0
  %8491 = vmatpush1.msra.mxu0 0.0
  %8492 = vmatprep.subr.mxu0 0.0
  %8493 = vmatpush1.msra.mxu0 0.0
  %8494 = vmatprep.subr.mxu0 0.0
  %8495 = vmatpush1.msra.mxu0 0.0
  %8496 = vmatprep.subr.mxu0 0.0
  %8497 = vmatpush1.msra.mxu0 0.0
  %8498 = vmatprep.subr.mxu0 0.0
  %8499 = vmatpush1.msra.mxu0 0.0
  %8500 = vmatprep.subr.mxu0 0.0
  %8501 = vmatpush1.msra.mxu0 0.0
  %8502 = vmatprep.subr.mxu0 0.0
  %8503 = vmatpush1.msra.mxu0 0.0
  %8504 = vmatprep.subr.mxu0 0.0
  %8505 = vmatpush1.msra.mxu0 0.0
  %8506 = vmatprep.subr.mxu0 0.0
  %8507 = vmatpush1.msra.mxu0 0.0
  %8508 = vmatprep.mubr.f32.mxu0 0.0
  %8509 = vmatmul.mubr.f32.gmra.mrb[0].mxu0 %v8439
  %v8510 = vpop.f32.mrb[0].mxu0
  %v8511 = vadd.f32 0.0, %v8510
  %v8512 = vpop.f32.mrb[0].mxu0
  %8513 = vmatprep.mubr.f32.mxu0 0.0
  %8514 = vmatmul.mubr.f32.gmra.mrb[0].mxu0 %v8442
  %v8515 = vpop.f32.mrb[0].mxu0
  %v8516 = vadd.f32 0.0, %v8515
  %v8517 = vpop.f32.mrb[0].mxu0
  %8518 = vdwg.mxu0
  %8519 = vrot.lane.b32.xlu0 %v7943, 112
  %v8520 = vpop.permute.xlu0 %8519
  %8521 = vrot.lane.b32.xlu0 %v7948, 112
  %v8522 = vpop.permute.xlu0 %8521
  %8523 = vrot.lane.b32.xlu0 %v8028, 112
  %v8524 = vpop.permute.xlu0 %8523
  %8525 = vrot.lane.b32.xlu0 %v8033, 112
  %v8526 = vpop.permute.xlu0 %8525
  %v8527 = vsel %vm22, %v8520, 0
  %v8529 = vsel %vm22, %v8522, 0
  %v8531 = vsel %vm22, %v8524, 0
  %v8533 = vsel %vm22, %v8526, 0
  %8535 = vmatprep.subr.mxu0 0.0
  %8536 = vmatpush1.xpose.msra.mxu0 %v8531
  %8537 = vmatprep.subr.mxu0 0.0
  %8538 = vmatpush1.xpose.msra.mxu0 %v8533
  %8539 = vmatprep.subr.mxu0 0.0
  %8540 = vmatpush1.xpose.msra.mxu0 0.0
  %8541 = vmatprep.subr.mxu0 0.0
  %8542 = vmatpush1.xpose.msra.mxu0 0.0
  %8543 = vmatprep.subr.mxu0 0.0
  %8544 = vmatpush1.xpose.msra.mxu0 0.0
  %8545 = vmatprep.subr.mxu0 0.0
  %8546 = vmatpush1.xpose.msra.mxu0 0.0
  %8547 = vmatprep.subr.mxu0 0.0
  %8548 = vmatpush1.xpose.msra.mxu0 0.0
  %8549 = vmatprep.subr.mxu0 0.0
  %8550 = vmatpush1.xpose.msra.mxu0 0.0
  %8551 = vmatprep.subr.mxu0 0.0
  %8552 = vmatpush1.xpose.msra.mxu0 0.0
  %8553 = vmatprep.subr.mxu0 0.0
  %8554 = vmatpush1.xpose.msra.mxu0 0.0
  %8555 = vmatprep.subr.mxu0 0.0
  %8556 = vmatpush1.xpose.msra.mxu0 0.0
  %8557 = vmatprep.subr.mxu0 0.0
  %8558 = vmatpush1.xpose.msra.mxu0 0.0
  %8559 = vmatprep.subr.mxu0 0.0
  %8560 = vmatpush1.xpose.msra.mxu0 0.0
  %8561 = vmatprep.subr.mxu0 0.0
  %8562 = vmatpush1.xpose.msra.mxu0 0.0
  %8563 = vmatprep.subr.mxu0 0.0
  %8564 = vmatpush1.xpose.msra.mxu0 0.0
  %8565 = vmatprep.subr.mxu0 0.0
  %8566 = vmatpush1.xpose.msra.mxu0 0.0
  %8567 = vmatprep.subr.mxu0 0.0
  %8568 = vmatpush1.xpose.msra.mxu0 0.0
  %8569 = vmatprep.subr.mxu0 0.0
  %8570 = vmatpush1.xpose.msra.mxu0 0.0
  %8571 = vmatprep.subr.mxu0 0.0
  %8572 = vmatpush1.xpose.msra.mxu0 0.0
  %8573 = vmatprep.subr.mxu0 0.0
  %8574 = vmatpush1.xpose.msra.mxu0 0.0
  %8575 = vmatprep.subr.mxu0 0.0
  %8576 = vmatpush1.xpose.msra.mxu0 0.0
  %8577 = vmatprep.subr.mxu0 0.0
  %8578 = vmatpush1.xpose.msra.mxu0 0.0
  %8579 = vmatprep.subr.mxu0 0.0
  %8580 = vmatpush1.xpose.msra.mxu0 0.0
  %8581 = vmatprep.subr.mxu0 0.0
  %8582 = vmatpush1.xpose.msra.mxu0 0.0
  %8583 = vmatprep.subr.mxu0 0.0
  %8584 = vmatpush1.xpose.msra.mxu0 0.0
  %8585 = vmatprep.subr.mxu0 0.0
  %8586 = vmatpush1.xpose.msra.mxu0 0.0
  %8587 = vmatprep.subr.mxu0 0.0
  %8588 = vmatpush1.xpose.msra.mxu0 0.0
  %8589 = vmatprep.subr.mxu0 0.0
  %8590 = vmatpush1.xpose.msra.mxu0 0.0
  %8591 = vmatprep.subr.mxu0 0.0
  %8592 = vmatpush1.xpose.msra.mxu0 0.0
  %8593 = vmatprep.subr.mxu0 0.0
  %8594 = vmatpush1.xpose.msra.mxu0 0.0
  %8595 = vmatprep.subr.mxu0 0.0
  %8596 = vmatpush1.xpose.msra.mxu0 0.0
  %8597 = vmatprep.subr.mxu0 0.0
  %8598 = vmatpush1.xpose.msra.mxu0 0.0
  %8599 = vmatprep.mubr.f32.mxu0 0.0
  %8600 = vmatmul.mubr.f32.gmra.mrb[0].mxu0 %v8527
  %v8601 = vpop.f32.mrb[0].mxu0
  %v8602 = vadd.f32 0.0, %v8601
  %v8603 = vpop.f32.mrb[0].mxu0
  %8604 = vmatprep.mubr.f32.mxu0 0.0
  %8605 = vmatmul.mubr.f32.gmra.mrb[0].mxu0 %v8529
  %v8606 = vpop.f32.mrb[0].mxu0
  %v8607 = vadd.f32 0.0, %v8606
  %v8608 = vpop.f32.mrb[0].mxu0
  %8609 = vdwg.mxu0
  %8610 = vrot.lane.b32.xlu0 %v7953, 112
  %v8611 = vpop.permute.xlu0 %8610
  %8612 = vrot.lane.b32.xlu0 %v7958, 112
  %v8613 = vpop.permute.xlu0 %8612
  %8614 = vrot.lane.b32.xlu0 %v8038, 112
  %v8615 = vpop.permute.xlu0 %8614
  %8616 = vrot.lane.b32.xlu0 %v8043, 112
  %v8617 = vpop.permute.xlu0 %8616
  %v8618 = vsel %vm22, %v8611, 0
  %v8620 = vsel %vm22, %v8613, 0
  %v8622 = vsel %vm22, %v8615, 0
  %v8624 = vsel %vm22, %v8617, 0
  %8626 = vmatprep.subr.mxu0 0.0
  %8627 = vmatpush1.xpose.msra.mxu0 %v8622
  %8628 = vmatprep.subr.mxu0 0.0
  %8629 = vmatpush1.xpose.msra.mxu0 %v8624
  %8630 = vmatprep.subr.mxu0 0.0
  %8631 = vmatpush1.xpose.msra.mxu0 0.0
  %8632 = vmatprep.subr.mxu0 0.0
  %8633 = vmatpush1.xpose.msra.mxu0 0.0
  %8634 = vmatprep.subr.mxu0 0.0
  %8635 = vmatpush1.xpose.msra.mxu0 0.0
  %8636 = vmatprep.subr.mxu0 0.0
  %8637 = vmatpush1.xpose.msra.mxu0 0.0
  %8638 = vmatprep.subr.mxu0 0.0
  %8639 = vmatpush1.xpose.msra.mxu0 0.0
  %8640 = vmatprep.subr.mxu0 0.0
  %8641 = vmatpush1.xpose.msra.mxu0 0.0
  %8642 = vmatprep.subr.mxu0 0.0
  %8643 = vmatpush1.xpose.msra.mxu0 0.0
  %8644 = vmatprep.subr.mxu0 0.0
  %8645 = vmatpush1.xpose.msra.mxu0 0.0
  %8646 = vmatprep.subr.mxu0 0.0
  %8647 = vmatpush1.xpose.msra.mxu0 0.0
  %8648 = vmatprep.subr.mxu0 0.0
  %8649 = vmatpush1.xpose.msra.mxu0 0.0
  %8650 = vmatprep.subr.mxu0 0.0
  %8651 = vmatpush1.xpose.msra.mxu0 0.0
  %8652 = vmatprep.subr.mxu0 0.0
  %8653 = vmatpush1.xpose.msra.mxu0 0.0
  %8654 = vmatprep.subr.mxu0 0.0
  %8655 = vmatpush1.xpose.msra.mxu0 0.0
  %8656 = vmatprep.subr.mxu0 0.0
  %8657 = vmatpush1.xpose.msra.mxu0 0.0
  %8658 = vmatprep.subr.mxu0 0.0
  %8659 = vmatpush1.xpose.msra.mxu0 0.0
  %8660 = vmatprep.subr.mxu0 0.0
  %8661 = vmatpush1.xpose.msra.mxu0 0.0
  %8662 = vmatprep.subr.mxu0 0.0
  %8663 = vmatpush1.xpose.msra.mxu0 0.0
  %8664 = vmatprep.subr.mxu0 0.0
  %8665 = vmatpush1.xpose.msra.mxu0 0.0
  %8666 = vmatprep.subr.mxu0 0.0
  %8667 = vmatpush1.xpose.msra.mxu0 0.0
  %8668 = vmatprep.subr.mxu0 0.0
  %8669 = vmatpush1.xpose.msra.mxu0 0.0
  %8670 = vmatprep.subr.mxu0 0.0
  %8671 = vmatpush1.xpose.msra.mxu0 0.0
  %8672 = vmatprep.subr.mxu0 0.0
  %8673 = vmatpush1.xpose.msra.mxu0 0.0
  %8674 = vmatprep.subr.mxu0 0.0
  %8675 = vmatpush1.xpose.msra.mxu0 0.0
  %8676 = vmatprep.subr.mxu0 0.0
  %8677 = vmatpush1.xpose.msra.mxu0 0.0
  %8678 = vmatprep.subr.mxu0 0.0
  %8679 = vmatpush1.xpose.msra.mxu0 0.0
  %8680 = vmatprep.subr.mxu0 0.0
  %8681 = vmatpush1.xpose.msra.mxu0 0.0
  %8682 = vmatprep.subr.mxu0 0.0
  %8683 = vmatpush1.xpose.msra.mxu0 0.0
  %8684 = vmatprep.subr.mxu0 0.0
  %8685 = vmatpush1.xpose.msra.mxu0 0.0
  %8686 = vmatprep.subr.mxu0 0.0
  %8687 = vmatpush1.xpose.msra.mxu0 0.0
  %8688 = vmatprep.subr.mxu0 0.0
  %8689 = vmatpush1.xpose.msra.mxu0 0.0
  %8690 = vmatprep.mubr.f32.mxu0 0.0
  %8691 = vmatmul.mubr.f32.gmra.mrb[0].mxu0 %v8618
  %v8692 = vpop.f32.mrb[0].mxu0
  %v8693 = vadd.f32 0.0, %v8692
  %v8694 = vpop.f32.mrb[0].mxu0
  %8695 = vmatprep.mubr.f32.mxu0 0.0
  %8696 = vmatmul.mubr.f32.gmra.mrb[0].mxu0 %v8620
  %v8697 = vpop.f32.mrb[0].mxu0
  %v8698 = vadd.f32 0.0, %v8697
  %v8699 = vpop.f32.mrb[0].mxu0
  %8700 = vdwg.mxu0
  %v8701 = vsel %vm137, -1e+09, %v8602
  %v8702 = vsel %vm138, -1e+09, %v8607
  %v8703 = vsel %vm137, -1e+09, %v8693
  %v8704 = vsel %vm138, -1e+09, %v8698
  %v8705 = vsel %vm22, %v8701, -inf
  %8706 = vmax.xlane.f32.xlu0 %v8705
  %v8707 = vpop.xlane.xlu0 %8706
  %v8708 = vsel %vm22, %v8702, -inf
  %8709 = vmax.xlane.f32.xlu0 %v8708
  %v8710 = vpop.xlane.xlu0 %8709
  %v8711 = vsel %vm22, %v8703, -inf
  %8712 = vmax.xlane.f32.xlu0 %v8711
  %v8713 = vpop.xlane.xlu0 %8712
  %v8714 = vsel %vm22, %v8704, -inf
  %8715 = vmax.xlane.f32.xlu0 %v8714
  %v8716 = vpop.xlane.xlu0 %8715
  %v8717 = vsub.f32 %v8701, %v8707
  %v8718 = vsub.f32 %v8702, %v8710
  %v8719 = vsub.f32 %v8703, %v8713
  %v8720 = vsub.f32 %v8704, %v8716
  %v8721 = vmul.f32 %v8717, 1.442695
  %v8722 = vpow.pop %v8721
  %v8723 = vmul.f32 %v8718, 1.442695
  %v8724 = vpow.pop %v8723
  %v8725 = vmul.f32 %v8719, 1.442695
  %v8726 = vpow.pop %v8725
  %v8727 = vmul.f32 %v8720, 1.442695
  %v8728 = vpow.pop %v8727
  %v8729 = vsel %vm22, %v8722, 0.0
  %8730 = vadd.xlane.f32.xlu0 %v8729
  %v8731 = vpop.xlane.xlu0 %8730
  %v8732 = vsel %vm22, %v8724, 0.0
  %8733 = vadd.xlane.f32.xlu0 %v8732
  %v8734 = vpop.xlane.xlu0 %8733
  %v8735 = vsel %vm22, %v8726, 0.0
  %8736 = vadd.xlane.f32.xlu0 %v8735
  %v8737 = vpop.xlane.xlu0 %8736
  %v8738 = vsel %vm22, %v8728, 0.0
  %8739 = vadd.xlane.f32.xlu0 %v8738
  %v8740 = vpop.xlane.xlu0 %8739
  %v8741 = vrcp.pop %v8731
  %v8742 = vrcp.pop %v8734
  %v8743 = vrcp.pop %v8737
  %v8744 = vrcp.pop %v8740
  %v8745 = vmul.f32 %v8722, %v8741
  %v8746 = vmul.f32 %v8724, %v8742
  %v8747 = vmul.f32 %v8726, %v8743
  %v8748 = vmul.f32 %v8728, %v8744
  %v8749 = vadd.f32 %v8353, %v8745
  %v8750 = vadd.f32 %v8354, %v8746
  %v8751 = vadd.f32 %v8355, %v8747
  %v8752 = vadd.f32 %v8356, %v8748
  %8755 = vrot.lane.b32.xlu0 %v8113, 112
  %v8756 = vpop.permute.xlu0 %8755
  %8757 = vrot.lane.b32.xlu0 %v8118, 112
  %v8758 = vpop.permute.xlu0 %8757
  %v8762 = vsel %vm22, %v8745, 0
  %v8765 = vsel %vm22, %v8746, 0
  %8767 = vmatprep.subr.mxu0 0.0
  %8768 = vmatpush1.msra.mxu0 %v8756
  %8769 = vmatprep.subr.mxu0 0.0
  %8770 = vmatpush1.msra.mxu0 %v8758
  %8771 = vmatprep.subr.mxu0 0.0
  %8772 = vmatpush1.msra.mxu0 0.0
  %8773 = vmatprep.subr.mxu0 0.0
  %8774 = vmatpush1.msra.mxu0 0.0
  %8775 = vmatprep.subr.mxu0 0.0
  %8776 = vmatpush1.msra.mxu0 0.0
  %8777 = vmatprep.subr.mxu0 0.0
  %8778 = vmatpush1.msra.mxu0 0.0
  %8779 = vmatprep.subr.mxu0 0.0
  %8780 = vmatpush1.msra.mxu0 0.0
  %8781 = vmatprep.subr.mxu0 0.0
  %8782 = vmatpush1.msra.mxu0 0.0
  %8783 = vmatprep.subr.mxu0 0.0
  %8784 = vmatpush1.msra.mxu0 0.0
  %8785 = vmatprep.subr.mxu0 0.0
  %8786 = vmatpush1.msra.mxu0 0.0
  %8787 = vmatprep.subr.mxu0 0.0
  %8788 = vmatpush1.msra.mxu0 0.0
  %8789 = vmatprep.subr.mxu0 0.0
  %8790 = vmatpush1.msra.mxu0 0.0
  %8791 = vmatprep.subr.mxu0 0.0
  %8792 = vmatpush1.msra.mxu0 0.0
  %8793 = vmatprep.subr.mxu0 0.0
  %8794 = vmatpush1.msra.mxu0 0.0
  %8795 = vmatprep.subr.mxu0 0.0
  %8796 = vmatpush1.msra.mxu0 0.0
  %8797 = vmatprep.subr.mxu0 0.0
  %8798 = vmatpush1.msra.mxu0 0.0
  %8799 = vmatprep.subr.mxu0 0.0
  %8800 = vmatpush1.msra.mxu0 0.0
  %8801 = vmatprep.subr.mxu0 0.0
  %8802 = vmatpush1.msra.mxu0 0.0
  %8803 = vmatprep.subr.mxu0 0.0
  %8804 = vmatpush1.msra.mxu0 0.0
  %8805 = vmatprep.subr.mxu0 0.0
  %8806 = vmatpush1.msra.mxu0 0.0
  %8807 = vmatprep.subr.mxu0 0.0
  %8808 = vmatpush1.msra.mxu0 0.0
  %8809 = vmatprep.subr.mxu0 0.0
  %8810 = vmatpush1.msra.mxu0 0.0
  %8811 = vmatprep.subr.mxu0 0.0
  %8812 = vmatpush1.msra.mxu0 0.0
  %8813 = vmatprep.subr.mxu0 0.0
  %8814 = vmatpush1.msra.mxu0 0.0
  %8815 = vmatprep.subr.mxu0 0.0
  %8816 = vmatpush1.msra.mxu0 0.0
  %8817 = vmatprep.subr.mxu0 0.0
  %8818 = vmatpush1.msra.mxu0 0.0
  %8819 = vmatprep.subr.mxu0 0.0
  %8820 = vmatpush1.msra.mxu0 0.0
  %8821 = vmatprep.subr.mxu0 0.0
  %8822 = vmatpush1.msra.mxu0 0.0
  %8823 = vmatprep.subr.mxu0 0.0
  %8824 = vmatpush1.msra.mxu0 0.0
  %8825 = vmatprep.subr.mxu0 0.0
  %8826 = vmatpush1.msra.mxu0 0.0
  %8827 = vmatprep.subr.mxu0 0.0
  %8828 = vmatpush1.msra.mxu0 0.0
  %8829 = vmatprep.subr.mxu0 0.0
  %8830 = vmatpush1.msra.mxu0 0.0
  %8831 = vmatprep.mubr.f32.mxu0 0.0
  %8832 = vmatmul.mubr.f32.gmra.mrb[0].mxu0 %v8762
  %v8833 = vpop.f32.mrb[0].mxu0
  %v8834 = vadd.f32 0.0, %v8833
  %v8835 = vpop.f32.mrb[0].mxu0
  %8836 = vmatprep.mubr.f32.mxu0 0.0
  %8837 = vmatmul.mubr.f32.gmra.mrb[0].mxu0 %v8765
  %v8838 = vpop.f32.mrb[0].mxu0
  %v8839 = vadd.f32 0.0, %v8838
  %v8840 = vpop.f32.mrb[0].mxu0
  %8841 = vdwg.mxu0
  %8844 = vrot.lane.b32.xlu0 %v8123, 112
  %v8845 = vpop.permute.xlu0 %8844
  %8846 = vrot.lane.b32.xlu0 %v8128, 112
  %v8847 = vpop.permute.xlu0 %8846
  %v8851 = vsel %vm22, %v8747, 0
  %v8854 = vsel %vm22, %v8748, 0
  %8856 = vmatprep.subr.mxu0 0.0
  %8857 = vmatpush1.msra.mxu0 %v8845
  %8858 = vmatprep.subr.mxu0 0.0
  %8859 = vmatpush1.msra.mxu0 %v8847
  %8860 = vmatprep.subr.mxu0 0.0
  %8861 = vmatpush1.msra.mxu0 0.0
  %8862 = vmatprep.subr.mxu0 0.0
  %8863 = vmatpush1.msra.mxu0 0.0
  %8864 = vmatprep.subr.mxu0 0.0
  %8865 = vmatpush1.msra.mxu0 0.0
  %8866 = vmatprep.subr.mxu0 0.0
  %8867 = vmatpush1.msra.mxu0 0.0
  %8868 = vmatprep.subr.mxu0 0.0
  %8869 = vmatpush1.msra.mxu0 0.0
  %8870 = vmatprep.subr.mxu0 0.0
  %8871 = vmatpush1.msra.mxu0 0.0
  %8872 = vmatprep.subr.mxu0 0.0
  %8873 = vmatpush1.msra.mxu0 0.0
  %8874 = vmatprep.subr.mxu0 0.0
  %8875 = vmatpush1.msra.mxu0 0.0
  %8876 = vmatprep.subr.mxu0 0.0
  %8877 = vmatpush1.msra.mxu0 0.0
  %8878 = vmatprep.subr.mxu0 0.0
  %8879 = vmatpush1.msra.mxu0 0.0
  %8880 = vmatprep.subr.mxu0 0.0
  %8881 = vmatpush1.msra.mxu0 0.0
  %8882 = vmatprep.subr.mxu0 0.0
  %8883 = vmatpush1.msra.mxu0 0.0
  %8884 = vmatprep.subr.mxu0 0.0
  %8885 = vmatpush1.msra.mxu0 0.0
  %8886 = vmatprep.subr.mxu0 0.0
  %8887 = vmatpush1.msra.mxu0 0.0
  %8888 = vmatprep.subr.mxu0 0.0
  %8889 = vmatpush1.msra.mxu0 0.0
  %8890 = vmatprep.subr.mxu0 0.0
  %8891 = vmatpush1.msra.mxu0 0.0
  %8892 = vmatprep.subr.mxu0 0.0
  %8893 = vmatpush1.msra.mxu0 0.0
  %8894 = vmatprep.subr.mxu0 0.0
  %8895 = vmatpush1.msra.mxu0 0.0
  %8896 = vmatprep.subr.mxu0 0.0
  %8897 = vmatpush1.msra.mxu0 0.0
  %8898 = vmatprep.subr.mxu0 0.0
  %8899 = vmatpush1.msra.mxu0 0.0
  %8900 = vmatprep.subr.mxu0 0.0
  %8901 = vmatpush1.msra.mxu0 0.0
  %8902 = vmatprep.subr.mxu0 0.0
  %8903 = vmatpush1.msra.mxu0 0.0
  %8904 = vmatprep.subr.mxu0 0.0
  %8905 = vmatpush1.msra.mxu0 0.0
  %8906 = vmatprep.subr.mxu0 0.0
  %8907 = vmatpush1.msra.mxu0 0.0
  %8908 = vmatprep.subr.mxu0 0.0
  %8909 = vmatpush1.msra.mxu0 0.0
  %8910 = vmatprep.subr.mxu0 0.0
  %8911 = vmatpush1.msra.mxu0 0.0
  %8912 = vmatprep.subr.mxu0 0.0
  %8913 = vmatpush1.msra.mxu0 0.0
  %8914 = vmatprep.subr.mxu0 0.0
  %8915 = vmatpush1.msra.mxu0 0.0
  %8916 = vmatprep.subr.mxu0 0.0
  %8917 = vmatpush1.msra.mxu0 0.0
  %8918 = vmatprep.subr.mxu0 0.0
  %8919 = vmatpush1.msra.mxu0 0.0
  %8920 = vmatprep.mubr.f32.mxu0 0.0
  %8921 = vmatmul.mubr.f32.gmra.mrb[0].mxu0 %v8851
  %v8922 = vpop.f32.mrb[0].mxu0
  %v8923 = vadd.f32 0.0, %v8922
  %v8924 = vpop.f32.mrb[0].mxu0
  %8925 = vmatprep.mubr.f32.mxu0 0.0
  %8926 = vmatmul.mubr.f32.gmra.mrb[0].mxu0 %v8854
  %v8927 = vpop.f32.mrb[0].mxu0
  %v8928 = vadd.f32 0.0, %v8927
  %v8929 = vpop.f32.mrb[0].mxu0
  %8930 = vdwg.mxu0
  %8931 = vrot.lane.b32.xlu0 %v7943, 96
  %v8932 = vpop.permute.xlu0 %8931
  %8933 = vrot.lane.b32.xlu0 %v7948, 96
  %v8934 = vpop.permute.xlu0 %8933
  %8935 = vrot.lane.b32.xlu0 %v8028, 96
  %v8936 = vpop.permute.xlu0 %8935
  %8937 = vrot.lane.b32.xlu0 %v8033, 96
  %v8938 = vpop.permute.xlu0 %8937
  %v8939 = vsel %vm22, %v8932, 0
  %v8941 = vsel %vm22, %v8934, 0
  %v8943 = vsel %vm22, %v8936, 0
  %v8945 = vsel %vm22, %v8938, 0
  %8947 = vmatprep.subr.mxu0 0.0
  %8948 = vmatpush1.xpose.msra.mxu0 %v8943
  %8949 = vmatprep.subr.mxu0 0.0
  %8950 = vmatpush1.xpose.msra.mxu0 %v8945
  %8951 = vmatprep.subr.mxu0 0.0
  %8952 = vmatpush1.xpose.msra.mxu0 0.0
  %8953 = vmatprep.subr.mxu0 0.0
  %8954 = vmatpush1.xpose.msra.mxu0 0.0
  %8955 = vmatprep.subr.mxu0 0.0
  %8956 = vmatpush1.xpose.msra.mxu0 0.0
  %8957 = vmatprep.subr.mxu0 0.0
  %8958 = vmatpush1.xpose.msra.mxu0 0.0
  %8959 = vmatprep.subr.mxu0 0.0
  %8960 = vmatpush1.xpose.msra.mxu0 0.0
  %8961 = vmatprep.subr.mxu0 0.0
  %8962 = vmatpush1.xpose.msra.mxu0 0.0
  %8963 = vmatprep.subr.mxu0 0.0
  %8964 = vmatpush1.xpose.msra.mxu0 0.0
  %8965 = vmatprep.subr.mxu0 0.0
  %8966 = vmatpush1.xpose.msra.mxu0 0.0
  %8967 = vmatprep.subr.mxu0 0.0
  %8968 = vmatpush1.xpose.msra.mxu0 0.0
  %8969 = vmatprep.subr.mxu0 0.0
  %8970 = vmatpush1.xpose.msra.mxu0 0.0
  %8971 = vmatprep.subr.mxu0 0.0
  %8972 = vmatpush1.xpose.msra.mxu0 0.0
  %8973 = vmatprep.subr.mxu0 0.0
  %8974 = vmatpush1.xpose.msra.mxu0 0.0
  %8975 = vmatprep.subr.mxu0 0.0
  %8976 = vmatpush1.xpose.msra.mxu0 0.0
  %8977 = vmatprep.subr.mxu0 0.0
  %8978 = vmatpush1.xpose.msra.mxu0 0.0
  %8979 = vmatprep.subr.mxu0 0.0
  %8980 = vmatpush1.xpose.msra.mxu0 0.0
  %8981 = vmatprep.subr.mxu0 0.0
  %8982 = vmatpush1.xpose.msra.mxu0 0.0
  %8983 = vmatprep.subr.mxu0 0.0
  %8984 = vmatpush1.xpose.msra.mxu0 0.0
  %8985 = vmatprep.subr.mxu0 0.0
  %8986 = vmatpush1.xpose.msra.mxu0 0.0
  %8987 = vmatprep.subr.mxu0 0.0
  %8988 = vmatpush1.xpose.msra.mxu0 0.0
  %8989 = vmatprep.subr.mxu0 0.0
  %8990 = vmatpush1.xpose.msra.mxu0 0.0
  %8991 = vmatprep.subr.mxu0 0.0
  %8992 = vmatpush1.xpose.msra.mxu0 0.0
  %8993 = vmatprep.subr.mxu0 0.0
  %8994 = vmatpush1.xpose.msra.mxu0 0.0
  %8995 = vmatprep.subr.mxu0 0.0
  %8996 = vmatpush1.xpose.msra.mxu0 0.0
  %8997 = vmatprep.subr.mxu0 0.0
  %8998 = vmatpush1.xpose.msra.mxu0 0.0
  %8999 = vmatprep.subr.mxu0 0.0
  %9000 = vmatpush1.xpose.msra.mxu0 0.0
  %9001 = vmatprep.subr.mxu0 0.0
  %9002 = vmatpush1.xpose.msra.mxu0 0.0
  %9003 = vmatprep.subr.mxu0 0.0
  %9004 = vmatpush1.xpose.msra.mxu0 0.0
  %9005 = vmatprep.subr.mxu0 0.0
  %9006 = vmatpush1.xpose.msra.mxu0 0.0
  %9007 = vmatprep.subr.mxu0 0.0
  %9008 = vmatpush1.xpose.msra.mxu0 0.0
  %9009 = vmatprep.subr.mxu0 0.0
  %9010 = vmatpush1.xpose.msra.mxu0 0.0
  %9011 = vmatprep.mubr.f32.mxu0 0.0
  %9012 = vmatmul.mubr.f32.gmra.mrb[0].mxu0 %v8939
  %v9013 = vpop.f32.mrb[0].mxu0
  %v9014 = vadd.f32 0.0, %v9013
  %v9015 = vpop.f32.mrb[0].mxu0
  %9016 = vmatprep.mubr.f32.mxu0 0.0
  %9017 = vmatmul.mubr.f32.gmra.mrb[0].mxu0 %v8941
  %v9018 = vpop.f32.mrb[0].mxu0
  %v9019 = vadd.f32 0.0, %v9018
  %v9020 = vpop.f32.mrb[0].mxu0
  %9021 = vdwg.mxu0
  %9022 = vrot.lane.b32.xlu0 %v7953, 96
  %v9023 = vpop.permute.xlu0 %9022
  %9024 = vrot.lane.b32.xlu0 %v7958, 96
  %v9025 = vpop.permute.xlu0 %9024
  %9026 = vrot.lane.b32.xlu0 %v8038, 96
  %v9027 = vpop.permute.xlu0 %9026
  %9028 = vrot.lane.b32.xlu0 %v8043, 96
  %v9029 = vpop.permute.xlu0 %9028
  %v9030 = vsel %vm22, %v9023, 0
  %v9032 = vsel %vm22, %v9025, 0
  %v9034 = vsel %vm22, %v9027, 0
  %v9036 = vsel %vm22, %v9029, 0
  %9038 = vmatprep.subr.mxu0 0.0
  %9039 = vmatpush1.xpose.msra.mxu0 %v9034
  %9040 = vmatprep.subr.mxu0 0.0
  %9041 = vmatpush1.xpose.msra.mxu0 %v9036
  %9042 = vmatprep.subr.mxu0 0.0
  %9043 = vmatpush1.xpose.msra.mxu0 0.0
  %9044 = vmatprep.subr.mxu0 0.0
  %9045 = vmatpush1.xpose.msra.mxu0 0.0
  %9046 = vmatprep.subr.mxu0 0.0
  %9047 = vmatpush1.xpose.msra.mxu0 0.0
  %9048 = vmatprep.subr.mxu0 0.0
  %9049 = vmatpush1.xpose.msra.mxu0 0.0
  %9050 = vmatprep.subr.mxu0 0.0
  %9051 = vmatpush1.xpose.msra.mxu0 0.0
  %9052 = vmatprep.subr.mxu0 0.0
  %9053 = vmatpush1.xpose.msra.mxu0 0.0
  %9054 = vmatprep.subr.mxu0 0.0
  %9055 = vmatpush1.xpose.msra.mxu0 0.0
  %9056 = vmatprep.subr.mxu0 0.0
  %9057 = vmatpush1.xpose.msra.mxu0 0.0
  %9058 = vmatprep.subr.mxu0 0.0
  %9059 = vmatpush1.xpose.msra.mxu0 0.0
  %9060 = vmatprep.subr.mxu0 0.0
  %9061 = vmatpush1.xpose.msra.mxu0 0.0
  %9062 = vmatprep.subr.mxu0 0.0
  %9063 = vmatpush1.xpose.msra.mxu0 0.0
  %9064 = vmatprep.subr.mxu0 0.0
  %9065 = vmatpush1.xpose.msra.mxu0 0.0
  %9066 = vmatprep.subr.mxu0 0.0
  %9067 = vmatpush1.xpose.msra.mxu0 0.0
  %9068 = vmatprep.subr.mxu0 0.0
  %9069 = vmatpush1.xpose.msra.mxu0 0.0
  %9070 = vmatprep.subr.mxu0 0.0
  %9071 = vmatpush1.xpose.msra.mxu0 0.0
  %9072 = vmatprep.subr.mxu0 0.0
  %9073 = vmatpush1.xpose.msra.mxu0 0.0
  %9074 = vmatprep.subr.mxu0 0.0
  %9075 = vmatpush1.xpose.msra.mxu0 0.0
  %9076 = vmatprep.subr.mxu0 0.0
  %9077 = vmatpush1.xpose.msra.mxu0 0.0
  %9078 = vmatprep.subr.mxu0 0.0
  %9079 = vmatpush1.xpose.msra.mxu0 0.0
  %9080 = vmatprep.subr.mxu0 0.0
  %9081 = vmatpush1.xpose.msra.mxu0 0.0
  %9082 = vmatprep.subr.mxu0 0.0
  %9083 = vmatpush1.xpose.msra.mxu0 0.0
  %9084 = vmatprep.subr.mxu0 0.0
  %9085 = vmatpush1.xpose.msra.mxu0 0.0
  %9086 = vmatprep.subr.mxu0 0.0
  %9087 = vmatpush1.xpose.msra.mxu0 0.0
  %9088 = vmatprep.subr.mxu0 0.0
  %9089 = vmatpush1.xpose.msra.mxu0 0.0
  %9090 = vmatprep.subr.mxu0 0.0
  %9091 = vmatpush1.xpose.msra.mxu0 0.0
  %9092 = vmatprep.subr.mxu0 0.0
  %9093 = vmatpush1.xpose.msra.mxu0 0.0
  %9094 = vmatprep.subr.mxu0 0.0
  %9095 = vmatpush1.xpose.msra.mxu0 0.0
  %9096 = vmatprep.subr.mxu0 0.0
  %9097 = vmatpush1.xpose.msra.mxu0 0.0
  %9098 = vmatprep.subr.mxu0 0.0
  %9099 = vmatpush1.xpose.msra.mxu0 0.0
  %9100 = vmatprep.subr.mxu0 0.0
  %9101 = vmatpush1.xpose.msra.mxu0 0.0
  %9102 = vmatprep.mubr.f32.mxu0 0.0
  %9103 = vmatmul.mubr.f32.gmra.mrb[0].mxu0 %v9030
  %v9104 = vpop.f32.mrb[0].mxu0
  %v9105 = vadd.f32 0.0, %v9104
  %v9106 = vpop.f32.mrb[0].mxu0
  %9107 = vmatprep.mubr.f32.mxu0 0.0
  %9108 = vmatmul.mubr.f32.gmra.mrb[0].mxu0 %v9032
  %v9109 = vpop.f32.mrb[0].mxu0
  %v9110 = vadd.f32 0.0, %v9109
  %v9111 = vpop.f32.mrb[0].mxu0
  %9112 = vdwg.mxu0
  %v9113 = vsel %vm137, -1e+09, %v9014
  %v9114 = vsel %vm138, -1e+09, %v9019
  %v9115 = vsel %vm137, -1e+09, %v9105
  %v9116 = vsel %vm138, -1e+09, %v9110
  %v9117 = vsel %vm22, %v9113, -inf
  %9118 = vmax.xlane.f32.xlu0 %v9117
  %v9119 = vpop.xlane.xlu0 %9118
  %v9120 = vsel %vm22, %v9114, -inf
  %9121 = vmax.xlane.f32.xlu0 %v9120
  %v9122 = vpop.xlane.xlu0 %9121
  %v9123 = vsel %vm22, %v9115, -inf
  %9124 = vmax.xlane.f32.xlu0 %v9123
  %v9125 = vpop.xlane.xlu0 %9124
  %v9126 = vsel %vm22, %v9116, -inf
  %9127 = vmax.xlane.f32.xlu0 %v9126
  %v9128 = vpop.xlane.xlu0 %9127
  %v9129 = vsub.f32 %v9113, %v9119
  %v9130 = vsub.f32 %v9114, %v9122
  %v9131 = vsub.f32 %v9115, %v9125
  %v9132 = vsub.f32 %v9116, %v9128
  %v9133 = vmul.f32 %v9129, 1.442695
  %v9134 = vpow.pop %v9133
  %v9135 = vmul.f32 %v9130, 1.442695
  %v9136 = vpow.pop %v9135
  %v9137 = vmul.f32 %v9131, 1.442695
  %v9138 = vpow.pop %v9137
  %v9139 = vmul.f32 %v9132, 1.442695
  %v9140 = vpow.pop %v9139
  %v9141 = vsel %vm22, %v9134, 0.0
  %9142 = vadd.xlane.f32.xlu0 %v9141
  %v9143 = vpop.xlane.xlu0 %9142
  %v9144 = vsel %vm22, %v9136, 0.0
  %9145 = vadd.xlane.f32.xlu0 %v9144
  %v9146 = vpop.xlane.xlu0 %9145
  %v9147 = vsel %vm22, %v9138, 0.0
  %9148 = vadd.xlane.f32.xlu0 %v9147
  %v9149 = vpop.xlane.xlu0 %9148
  %v9150 = vsel %vm22, %v9140, 0.0
  %9151 = vadd.xlane.f32.xlu0 %v9150
  %v9152 = vpop.xlane.xlu0 %9151
  %v9153 = vrcp.pop %v9143
  %v9154 = vrcp.pop %v9146
  %v9155 = vrcp.pop %v9149
  %v9156 = vrcp.pop %v9152
  %v9157 = vmul.f32 %v9134, %v9153
  %v9158 = vmul.f32 %v9136, %v9154
  %v9159 = vmul.f32 %v9138, %v9155
  %v9160 = vmul.f32 %v9140, %v9156
  %v9161 = vadd.f32 %v8749, %v9157
  %v9162 = vadd.f32 %v8750, %v9158
  %v9163 = vadd.f32 %v8751, %v9159
  %v9164 = vadd.f32 %v8752, %v9160
  %9165 = vrot.lane.b32.xlu0 %v8113, 96
  %v9166 = vpop.permute.xlu0 %9165
  %9167 = vrot.lane.b32.xlu0 %v8118, 96
  %v9168 = vpop.permute.xlu0 %9167
  %v9172 = vsel %vm22, %v9157, 0
  %v9175 = vsel %vm22, %v9158, 0
  %9177 = vmatprep.subr.mxu0 0.0
  %9178 = vmatpush1.msra.mxu0 %v9166
  %9179 = vmatprep.subr.mxu0 0.0
  %9180 = vmatpush1.msra.mxu0 %v9168
  %9181 = vmatprep.subr.mxu0 0.0
  %9182 = vmatpush1.msra.mxu0 0.0
  %9183 = vmatprep.subr.mxu0 0.0
  %9184 = vmatpush1.msra.mxu0 0.0
  %9185 = vmatprep.subr.mxu0 0.0
  %9186 = vmatpush1.msra.mxu0 0.0
  %9187 = vmatprep.subr.mxu0 0.0
  %9188 = vmatpush1.msra.mxu0 0.0
  %9189 = vmatprep.subr.mxu0 0.0
  %9190 = vmatpush1.msra.mxu0 0.0
  %9191 = vmatprep.subr.mxu0 0.0
  %9192 = vmatpush1.msra.mxu0 0.0
  %9193 = vmatprep.subr.mxu0 0.0
  %9194 = vmatpush1.msra.mxu0 0.0
  %9195 = vmatprep.subr.mxu0 0.0
  %9196 = vmatpush1.msra.mxu0 0.0
  %9197 = vmatprep.subr.mxu0 0.0
  %9198 = vmatpush1.msra.mxu0 0.0
  %9199 = vmatprep.subr.mxu0 0.0
  %9200 = vmatpush1.msra.mxu0 0.0
  %9201 = vmatprep.subr.mxu0 0.0
  %9202 = vmatpush1.msra.mxu0 0.0
  %9203 = vmatprep.subr.mxu0 0.0
  %9204 = vmatpush1.msra.mxu0 0.0
  %9205 = vmatprep.subr.mxu0 0.0
  %9206 = vmatpush1.msra.mxu0 0.0
  %9207 = vmatprep.subr.mxu0 0.0
  %9208 = vmatpush1.msra.mxu0 0.0
  %9209 = vmatprep.subr.mxu0 0.0
  %9210 = vmatpush1.msra.mxu0 0.0
  %9211 = vmatprep.subr.mxu0 0.0
  %9212 = vmatpush1.msra.mxu0 0.0
  %9213 = vmatprep.subr.mxu0 0.0
  %9214 = vmatpush1.msra.mxu0 0.0
  %9215 = vmatprep.subr.mxu0 0.0
  %9216 = vmatpush1.msra.mxu0 0.0
  %9217 = vmatprep.subr.mxu0 0.0
  %9218 = vmatpush1.msra.mxu0 0.0
  %9219 = vmatprep.subr.mxu0 0.0
  %9220 = vmatpush1.msra.mxu0 0.0
  %9221 = vmatprep.subr.mxu0 0.0
  %9222 = vmatpush1.msra.mxu0 0.0
  %9223 = vmatprep.subr.mxu0 0.0
  %9224 = vmatpush1.msra.mxu0 0.0
  %9225 = vmatprep.subr.mxu0 0.0
  %9226 = vmatpush1.msra.mxu0 0.0
  %9227 = vmatprep.subr.mxu0 0.0
  %9228 = vmatpush1.msra.mxu0 0.0
  %9229 = vmatprep.subr.mxu0 0.0
  %9230 = vmatpush1.msra.mxu0 0.0
  %9231 = vmatprep.subr.mxu0 0.0
  %9232 = vmatpush1.msra.mxu0 0.0
  %9233 = vmatprep.subr.mxu0 0.0
  %9234 = vmatpush1.msra.mxu0 0.0
  %9235 = vmatprep.subr.mxu0 0.0
  %9236 = vmatpush1.msra.mxu0 0.0
  %9237 = vmatprep.subr.mxu0 0.0
  %9238 = vmatpush1.msra.mxu0 0.0
  %9239 = vmatprep.subr.mxu0 0.0
  %9240 = vmatpush1.msra.mxu0 0.0
  %9241 = vmatprep.mubr.f32.mxu0 0.0
  %9242 = vmatmul.mubr.f32.gmra.mrb[0].mxu0 %v9172
  %v9243 = vpop.f32.mrb[0].mxu0
  %v9244 = vadd.f32 0.0, %v9243
  %v9245 = vpop.f32.mrb[0].mxu0
  %9246 = vmatprep.mubr.f32.mxu0 0.0
  %9247 = vmatmul.mubr.f32.gmra.mrb[0].mxu0 %v9175
  %v9248 = vpop.f32.mrb[0].mxu0
  %v9249 = vadd.f32 0.0, %v9248
  %v9250 = vpop.f32.mrb[0].mxu0
  %9251 = vdwg.mxu0
  %9252 = vrot.lane.b32.xlu0 %v8123, 96
  %v9253 = vpop.permute.xlu0 %9252
  %9254 = vrot.lane.b32.xlu0 %v8128, 96
  %v9255 = vpop.permute.xlu0 %9254
  %v9259 = vsel %vm22, %v9159, 0
  %v9262 = vsel %vm22, %v9160, 0
  %9264 = vmatprep.subr.mxu0 0.0
  %9265 = vmatpush1.msra.mxu0 %v9253
  %9266 = vmatprep.subr.mxu0 0.0
  %9267 = vmatpush1.msra.mxu0 %v9255
  %9268 = vmatprep.subr.mxu0 0.0
  %9269 = vmatpush1.msra.mxu0 0.0
  %9270 = vmatprep.subr.mxu0 0.0
  %9271 = vmatpush1.msra.mxu0 0.0
  %9272 = vmatprep.subr.mxu0 0.0
  %9273 = vmatpush1.msra.mxu0 0.0
  %9274 = vmatprep.subr.mxu0 0.0
  %9275 = vmatpush1.msra.mxu0 0.0
  %9276 = vmatprep.subr.mxu0 0.0
  %9277 = vmatpush1.msra.mxu0 0.0
  %9278 = vmatprep.subr.mxu0 0.0
  %9279 = vmatpush1.msra.mxu0 0.0
  %9280 = vmatprep.subr.mxu0 0.0
  %9281 = vmatpush1.msra.mxu0 0.0
  %9282 = vmatprep.subr.mxu0 0.0
  %9283 = vmatpush1.msra.mxu0 0.0
  %9284 = vmatprep.subr.mxu0 0.0
  %9285 = vmatpush1.msra.mxu0 0.0
  %9286 = vmatprep.subr.mxu0 0.0
  %9287 = vmatpush1.msra.mxu0 0.0
  %9288 = vmatprep.subr.mxu0 0.0
  %9289 = vmatpush1.msra.mxu0 0.0
  %9290 = vmatprep.subr.mxu0 0.0
  %9291 = vmatpush1.msra.mxu0 0.0
  %9292 = vmatprep.subr.mxu0 0.0
  %9293 = vmatpush1.msra.mxu0 0.0
  %9294 = vmatprep.subr.mxu0 0.0
  %9295 = vmatpush1.msra.mxu0 0.0
  %9296 = vmatprep.subr.mxu0 0.0
  %9297 = vmatpush1.msra.mxu0 0.0
  %9298 = vmatprep.subr.mxu0 0.0
  %9299 = vmatpush1.msra.mxu0 0.0
  %9300 = vmatprep.subr.mxu0 0.0
  %9301 = vmatpush1.msra.mxu0 0.0
  %9302 = vmatprep.subr.mxu0 0.0
  %9303 = vmatpush1.msra.mxu0 0.0
  %9304 = vmatprep.subr.mxu0 0.0
  %9305 = vmatpush1.msra.mxu0 0.0
  %9306 = vmatprep.subr.mxu0 0.0
  %9307 = vmatpush1.msra.mxu0 0.0
  %9308 = vmatprep.subr.mxu0 0.0
  %9309 = vmatpush1.msra.mxu0 0.0
  %9310 = vmatprep.subr.mxu0 0.0
  %9311 = vmatpush1.msra.mxu0 0.0
  %9312 = vmatprep.subr.mxu0 0.0
  %9313 = vmatpush1.msra.mxu0 0.0
  %9314 = vmatprep.subr.mxu0 0.0
  %9315 = vmatpush1.msra.mxu0 0.0
  %9316 = vmatprep.subr.mxu0 0.0
  %9317 = vmatpush1.msra.mxu0 0.0
  %9318 = vmatprep.subr.mxu0 0.0
  %9319 = vmatpush1.msra.mxu0 0.0
  %9320 = vmatprep.subr.mxu0 0.0
  %9321 = vmatpush1.msra.mxu0 0.0
  %9322 = vmatprep.subr.mxu0 0.0
  %9323 = vmatpush1.msra.mxu0 0.0
  %9324 = vmatprep.subr.mxu0 0.0
  %9325 = vmatpush1.msra.mxu0 0.0
  %9326 = vmatprep.subr.mxu0 0.0
  %9327 = vmatpush1.msra.mxu0 0.0
  %9328 = vmatprep.mubr.f32.mxu0 0.0
  %9329 = vmatmul.mubr.f32.gmra.mrb[0].mxu0 %v9259
  %v9330 = vpop.f32.mrb[0].mxu0
  %v9331 = vadd.f32 0.0, %v9330
  %v9332 = vpop.f32.mrb[0].mxu0
  %9333 = vmatprep.mubr.f32.mxu0 0.0
  %9334 = vmatmul.mubr.f32.gmra.mrb[0].mxu0 %v9262
  %v9335 = vpop.f32.mrb[0].mxu0
  %v9336 = vadd.f32 0.0, %v9335
  %v9337 = vpop.f32.mrb[0].mxu0
  %9338 = vdwg.mxu0
  %9339 = vrot.lane.b32.xlu0 %v7943, 80
  %v9340 = vpop.permute.xlu0 %9339
  %9341 = vrot.lane.b32.xlu0 %v7948, 80
  %v9342 = vpop.permute.xlu0 %9341
  %9343 = vrot.lane.b32.xlu0 %v8028, 80
  %v9344 = vpop.permute.xlu0 %9343
  %9345 = vrot.lane.b32.xlu0 %v8033, 80
  %v9346 = vpop.permute.xlu0 %9345
  %v9347 = vsel %vm22, %v9340, 0
  %v9349 = vsel %vm22, %v9342, 0
  %v9351 = vsel %vm22, %v9344, 0
  %v9353 = vsel %vm22, %v9346, 0
  %9355 = vmatprep.subr.mxu0 0.0
  %9356 = vmatpush1.xpose.msra.mxu0 %v9351
  %9357 = vmatprep.subr.mxu0 0.0
  %9358 = vmatpush1.xpose.msra.mxu0 %v9353
  %9359 = vmatprep.subr.mxu0 0.0
  %9360 = vmatpush1.xpose.msra.mxu0 0.0
  %9361 = vmatprep.subr.mxu0 0.0
  %9362 = vmatpush1.xpose.msra.mxu0 0.0
  %9363 = vmatprep.subr.mxu0 0.0
  %9364 = vmatpush1.xpose.msra.mxu0 0.0
  %9365 = vmatprep.subr.mxu0 0.0
  %9366 = vmatpush1.xpose.msra.mxu0 0.0
  %9367 = vmatprep.subr.mxu0 0.0
  %9368 = vmatpush1.xpose.msra.mxu0 0.0
  %9369 = vmatprep.subr.mxu0 0.0
  %9370 = vmatpush1.xpose.msra.mxu0 0.0
  %9371 = vmatprep.subr.mxu0 0.0
  %9372 = vmatpush1.xpose.msra.mxu0 0.0
  %9373 = vmatprep.subr.mxu0 0.0
  %9374 = vmatpush1.xpose.msra.mxu0 0.0
  %9375 = vmatprep.subr.mxu0 0.0
  %9376 = vmatpush1.xpose.msra.mxu0 0.0
  %9377 = vmatprep.subr.mxu0 0.0
  %9378 = vmatpush1.xpose.msra.mxu0 0.0
  %9379 = vmatprep.subr.mxu0 0.0
  %9380 = vmatpush1.xpose.msra.mxu0 0.0
  %9381 = vmatprep.subr.mxu0 0.0
  %9382 = vmatpush1.xpose.msra.mxu0 0.0
  %9383 = vmatprep.subr.mxu0 0.0
  %9384 = vmatpush1.xpose.msra.mxu0 0.0
  %9385 = vmatprep.subr.mxu0 0.0
  %9386 = vmatpush1.xpose.msra.mxu0 0.0
  %9387 = vmatprep.subr.mxu0 0.0
  %9388 = vmatpush1.xpose.msra.mxu0 0.0
  %9389 = vmatprep.subr.mxu0 0.0
  %9390 = vmatpush1.xpose.msra.mxu0 0.0
  %9391 = vmatprep.subr.mxu0 0.0
  %9392 = vmatpush1.xpose.msra.mxu0 0.0
  %9393 = vmatprep.subr.mxu0 0.0
  %9394 = vmatpush1.xpose.msra.mxu0 0.0
  %9395 = vmatprep.subr.mxu0 0.0
  %9396 = vmatpush1.xpose.msra.mxu0 0.0
  %9397 = vmatprep.subr.mxu0 0.0
  %9398 = vmatpush1.xpose.msra.mxu0 0.0
  %9399 = vmatprep.subr.mxu0 0.0
  %9400 = vmatpush1.xpose.msra.mxu0 0.0
  %9401 = vmatprep.subr.mxu0 0.0
  %9402 = vmatpush1.xpose.msra.mxu0 0.0
  %9403 = vmatprep.subr.mxu0 0.0
  %9404 = vmatpush1.xpose.msra.mxu0 0.0
  %9405 = vmatprep.subr.mxu0 0.0
  %9406 = vmatpush1.xpose.msra.mxu0 0.0
  %9407 = vmatprep.subr.mxu0 0.0
  %9408 = vmatpush1.xpose.msra.mxu0 0.0
  %9409 = vmatprep.subr.mxu0 0.0
  %9410 = vmatpush1.xpose.msra.mxu0 0.0
  %9411 = vmatprep.subr.mxu0 0.0
  %9412 = vmatpush1.xpose.msra.mxu0 0.0
  %9413 = vmatprep.subr.mxu0 0.0
  %9414 = vmatpush1.xpose.msra.mxu0 0.0
  %9415 = vmatprep.subr.mxu0 0.0
  %9416 = vmatpush1.xpose.msra.mxu0 0.0
  %9417 = vmatprep.subr.mxu0 0.0
  %9418 = vmatpush1.xpose.msra.mxu0 0.0
  %9419 = vmatprep.mubr.f32.mxu0 0.0
  %9420 = vmatmul.mubr.f32.gmra.mrb[0].mxu0 %v9347
  %v9421 = vpop.f32.mrb[0].mxu0
  %v9422 = vadd.f32 0.0, %v9421
  %v9423 = vpop.f32.mrb[0].mxu0
  %9424 = vmatprep.mubr.f32.mxu0 0.0
  %9425 = vmatmul.mubr.f32.gmra.mrb[0].mxu0 %v9349
  %v9426 = vpop.f32.mrb[0].mxu0
  %v9427 = vadd.f32 0.0, %v9426
  %v9428 = vpop.f32.mrb[0].mxu0
  %9429 = vdwg.mxu0
  %9430 = vrot.lane.b32.xlu0 %v7953, 80
  %v9431 = vpop.permute.xlu0 %9430
  %9432 = vrot.lane.b32.xlu0 %v7958, 80
  %v9433 = vpop.permute.xlu0 %9432
  %9434 = vrot.lane.b32.xlu0 %v8038, 80
  %v9435 = vpop.permute.xlu0 %9434
  %9436 = vrot.lane.b32.xlu0 %v8043, 80
  %v9437 = vpop.permute.xlu0 %9436
  %v9438 = vsel %vm22, %v9431, 0
  %v9440 = vsel %vm22, %v9433, 0
  %v9442 = vsel %vm22, %v9435, 0
  %v9444 = vsel %vm22, %v9437, 0
  %9446 = vmatprep.subr.mxu0 0.0
  %9447 = vmatpush1.xpose.msra.mxu0 %v9442
  %9448 = vmatprep.subr.mxu0 0.0
  %9449 = vmatpush1.xpose.msra.mxu0 %v9444
  %9450 = vmatprep.subr.mxu0 0.0
  %9451 = vmatpush1.xpose.msra.mxu0 0.0
  %9452 = vmatprep.subr.mxu0 0.0
  %9453 = vmatpush1.xpose.msra.mxu0 0.0
  %9454 = vmatprep.subr.mxu0 0.0
  %9455 = vmatpush1.xpose.msra.mxu0 0.0
  %9456 = vmatprep.subr.mxu0 0.0
  %9457 = vmatpush1.xpose.msra.mxu0 0.0
  %9458 = vmatprep.subr.mxu0 0.0
  %9459 = vmatpush1.xpose.msra.mxu0 0.0
  %9460 = vmatprep.subr.mxu0 0.0
  %9461 = vmatpush1.xpose.msra.mxu0 0.0
  %9462 = vmatprep.subr.mxu0 0.0
  %9463 = vmatpush1.xpose.msra.mxu0 0.0
  %9464 = vmatprep.subr.mxu0 0.0
  %9465 = vmatpush1.xpose.msra.mxu0 0.0
  %9466 = vmatprep.subr.mxu0 0.0
  %9467 = vmatpush1.xpose.msra.mxu0 0.0
  %9468 = vmatprep.subr.mxu0 0.0
  %9469 = vmatpush1.xpose.msra.mxu0 0.0
  %9470 = vmatprep.subr.mxu0 0.0
  %9471 = vmatpush1.xpose.msra.mxu0 0.0
  %9472 = vmatprep.subr.mxu0 0.0
  %9473 = vmatpush1.xpose.msra.mxu0 0.0
  %9474 = vmatprep.subr.mxu0 0.0
  %9475 = vmatpush1.xpose.msra.mxu0 0.0
  %9476 = vmatprep.subr.mxu0 0.0
  %9477 = vmatpush1.xpose.msra.mxu0 0.0
  %9478 = vmatprep.subr.mxu0 0.0
  %9479 = vmatpush1.xpose.msra.mxu0 0.0
  %9480 = vmatprep.subr.mxu0 0.0
  %9481 = vmatpush1.xpose.msra.mxu0 0.0
  %9482 = vmatprep.subr.mxu0 0.0
  %9483 = vmatpush1.xpose.msra.mxu0 0.0
  %9484 = vmatprep.subr.mxu0 0.0
  %9485 = vmatpush1.xpose.msra.mxu0 0.0
  %9486 = vmatprep.subr.mxu0 0.0
  %9487 = vmatpush1.xpose.msra.mxu0 0.0
  %9488 = vmatprep.subr.mxu0 0.0
  %9489 = vmatpush1.xpose.msra.mxu0 0.0
  %9490 = vmatprep.subr.mxu0 0.0
  %9491 = vmatpush1.xpose.msra.mxu0 0.0
  %9492 = vmatprep.subr.mxu0 0.0
  %9493 = vmatpush1.xpose.msra.mxu0 0.0
  %9494 = vmatprep.subr.mxu0 0.0
  %9495 = vmatpush1.xpose.msra.mxu0 0.0
  %9496 = vmatprep.subr.mxu0 0.0
  %9497 = vmatpush1.xpose.msra.mxu0 0.0
  %9498 = vmatprep.subr.mxu0 0.0
  %9499 = vmatpush1.xpose.msra.mxu0 0.0
  %9500 = vmatprep.subr.mxu0 0.0
  %9501 = vmatpush1.xpose.msra.mxu0 0.0
  %9502 = vmatprep.subr.mxu0 0.0
  %9503 = vmatpush1.xpose.msra.mxu0 0.0
  %9504 = vmatprep.subr.mxu0 0.0
  %9505 = vmatpush1.xpose.msra.mxu0 0.0
  %9506 = vmatprep.subr.mxu0 0.0
  %9507 = vmatpush1.xpose.msra.mxu0 0.0
  %9508 = vmatprep.subr.mxu0 0.0
  %9509 = vmatpush1.xpose.msra.mxu0 0.0
  %9510 = vmatprep.mubr.f32.mxu0 0.0
  %9511 = vmatmul.mubr.f32.gmra.mrb[0].mxu0 %v9438
  %v9512 = vpop.f32.mrb[0].mxu0
  %v9513 = vadd.f32 0.0, %v9512
  %v9514 = vpop.f32.mrb[0].mxu0
  %9515 = vmatprep.mubr.f32.mxu0 0.0
  %9516 = vmatmul.mubr.f32.gmra.mrb[0].mxu0 %v9440
  %v9517 = vpop.f32.mrb[0].mxu0
  %v9518 = vadd.f32 0.0, %v9517
  %v9519 = vpop.f32.mrb[0].mxu0
  %9520 = vdwg.mxu0
  %v9521 = vsel %vm137, -1e+09, %v9422
  %v9522 = vsel %vm138, -1e+09, %v9427
  %v9523 = vsel %vm137, -1e+09, %v9513
  %v9524 = vsel %vm138, -1e+09, %v9518
  %v9525 = vsel %vm22, %v9521, -inf
  %9526 = vmax.xlane.f32.xlu0 %v9525
  %v9527 = vpop.xlane.xlu0 %9526
  %v9528 = vsel %vm22, %v9522, -inf
  %9529 = vmax.xlane.f32.xlu0 %v9528
  %v9530 = vpop.xlane.xlu0 %9529
  %v9531 = vsel %vm22, %v9523, -inf
  %9532 = vmax.xlane.f32.xlu0 %v9531
  %v9533 = vpop.xlane.xlu0 %9532
  %v9534 = vsel %vm22, %v9524, -inf
  %9535 = vmax.xlane.f32.xlu0 %v9534
  %v9536 = vpop.xlane.xlu0 %9535
  %v9537 = vsub.f32 %v9521, %v9527
  %v9538 = vsub.f32 %v9522, %v9530
  %v9539 = vsub.f32 %v9523, %v9533
  %v9540 = vsub.f32 %v9524, %v9536
  %v9541 = vmul.f32 %v9537, 1.442695
  %v9542 = vpow.pop %v9541
  %v9543 = vmul.f32 %v9538, 1.442695
  %v9544 = vpow.pop %v9543
  %v9545 = vmul.f32 %v9539, 1.442695
  %v9546 = vpow.pop %v9545
  %v9547 = vmul.f32 %v9540, 1.442695
  %v9548 = vpow.pop %v9547
  %v9549 = vsel %vm22, %v9542, 0.0
  %9550 = vadd.xlane.f32.xlu0 %v9549
  %v9551 = vpop.xlane.xlu0 %9550
  %v9552 = vsel %vm22, %v9544, 0.0
  %9553 = vadd.xlane.f32.xlu0 %v9552
  %v9554 = vpop.xlane.xlu0 %9553
  %v9555 = vsel %vm22, %v9546, 0.0
  %9556 = vadd.xlane.f32.xlu0 %v9555
  %v9557 = vpop.xlane.xlu0 %9556
  %v9558 = vsel %vm22, %v9548, 0.0
  %9559 = vadd.xlane.f32.xlu0 %v9558
  %v9560 = vpop.xlane.xlu0 %9559
  %v9561 = vrcp.pop %v9551
  %v9562 = vrcp.pop %v9554
  %v9563 = vrcp.pop %v9557
  %v9564 = vrcp.pop %v9560
  %v9565 = vmul.f32 %v9542, %v9561
  %v9566 = vmul.f32 %v9544, %v9562
  %v9567 = vmul.f32 %v9546, %v9563
  %v9568 = vmul.f32 %v9548, %v9564
  %v9569 = vadd.f32 %v9161, %v9565
  %v9570 = vadd.f32 %v9162, %v9566
  %v9571 = vadd.f32 %v9163, %v9567
  %v9572 = vadd.f32 %v9164, %v9568
  %9573 = vrot.lane.b32.xlu0 %v8113, 80
  %v9574 = vpop.permute.xlu0 %9573
  %9575 = vrot.lane.b32.xlu0 %v8118, 80
  %v9576 = vpop.permute.xlu0 %9575
  %v9580 = vsel %vm22, %v9565, 0
  %v9583 = vsel %vm22, %v9566, 0
  %9585 = vmatprep.subr.mxu0 0.0
  %9586 = vmatpush1.msra.mxu0 %v9574
  %9587 = vmatprep.subr.mxu0 0.0
  %9588 = vmatpush1.msra.mxu0 %v9576
  %9589 = vmatprep.subr.mxu0 0.0
  %9590 = vmatpush1.msra.mxu0 0.0
  %9591 = vmatprep.subr.mxu0 0.0
  %9592 = vmatpush1.msra.mxu0 0.0
  %9593 = vmatprep.subr.mxu0 0.0
  %9594 = vmatpush1.msra.mxu0 0.0
  %9595 = vmatprep.subr.mxu0 0.0
  %9596 = vmatpush1.msra.mxu0 0.0
  %9597 = vmatprep.subr.mxu0 0.0
  %9598 = vmatpush1.msra.mxu0 0.0
  %9599 = vmatprep.subr.mxu0 0.0
  %9600 = vmatpush1.msra.mxu0 0.0
  %9601 = vmatprep.subr.mxu0 0.0
  %9602 = vmatpush1.msra.mxu0 0.0
  %9603 = vmatprep.subr.mxu0 0.0
  %9604 = vmatpush1.msra.mxu0 0.0
  %9605 = vmatprep.subr.mxu0 0.0
  %9606 = vmatpush1.msra.mxu0 0.0
  %9607 = vmatprep.subr.mxu0 0.0
  %9608 = vmatpush1.msra.mxu0 0.0
  %9609 = vmatprep.subr.mxu0 0.0
  %9610 = vmatpush1.msra.mxu0 0.0
  %9611 = vmatprep.subr.mxu0 0.0
  %9612 = vmatpush1.msra.mxu0 0.0
  %9613 = vmatprep.subr.mxu0 0.0
  %9614 = vmatpush1.msra.mxu0 0.0
  %9615 = vmatprep.subr.mxu0 0.0
  %9616 = vmatpush1.msra.mxu0 0.0
  %9617 = vmatprep.subr.mxu0 0.0
  %9618 = vmatpush1.msra.mxu0 0.0
  %9619 = vmatprep.subr.mxu0 0.0
  %9620 = vmatpush1.msra.mxu0 0.0
  %9621 = vmatprep.subr.mxu0 0.0
  %9622 = vmatpush1.msra.mxu0 0.0
  %9623 = vmatprep.subr.mxu0 0.0
  %9624 = vmatpush1.msra.mxu0 0.0
  %9625 = vmatprep.subr.mxu0 0.0
  %9626 = vmatpush1.msra.mxu0 0.0
  %9627 = vmatprep.subr.mxu0 0.0
  %9628 = vmatpush1.msra.mxu0 0.0
  %9629 = vmatprep.subr.mxu0 0.0
  %9630 = vmatpush1.msra.mxu0 0.0
  %9631 = vmatprep.subr.mxu0 0.0
  %9632 = vmatpush1.msra.mxu0 0.0
  %9633 = vmatprep.subr.mxu0 0.0
  %9634 = vmatpush1.msra.mxu0 0.0
  %9635 = vmatprep.subr.mxu0 0.0
  %9636 = vmatpush1.msra.mxu0 0.0
  %9637 = vmatprep.subr.mxu0 0.0
  %9638 = vmatpush1.msra.mxu0 0.0
  %9639 = vmatprep.subr.mxu0 0.0
  %9640 = vmatpush1.msra.mxu0 0.0
  %9641 = vmatprep.subr.mxu0 0.0
  %9642 = vmatpush1.msra.mxu0 0.0
  %9643 = vmatprep.subr.mxu0 0.0
  %9644 = vmatpush1.msra.mxu0 0.0
  %9645 = vmatprep.subr.mxu0 0.0
  %9646 = vmatpush1.msra.mxu0 0.0
  %9647 = vmatprep.subr.mxu0 0.0
  %9648 = vmatpush1.msra.mxu0 0.0
  %9649 = vmatprep.mubr.f32.mxu0 0.0
  %9650 = vmatmul.mubr.f32.gmra.mrb[0].mxu0 %v9580
  %v9651 = vpop.f32.mrb[0].mxu0
  %v9652 = vadd.f32 0.0, %v9651
  %v9653 = vpop.f32.mrb[0].mxu0
  %9654 = vmatprep.mubr.f32.mxu0 0.0
  %9655 = vmatmul.mubr.f32.gmra.mrb[0].mxu0 %v9583
  %v9656 = vpop.f32.mrb[0].mxu0
  %v9657 = vadd.f32 0.0, %v9656
  %v9658 = vpop.f32.mrb[0].mxu0
  %9659 = vdwg.mxu0
  %9660 = vrot.lane.b32.xlu0 %v8123, 80
  %v9661 = vpop.permute.xlu0 %9660
  %9662 = vrot.lane.b32.xlu0 %v8128, 80
  %v9663 = vpop.permute.xlu0 %9662
  %v9667 = vsel %vm22, %v9567, 0
  %v9670 = vsel %vm22, %v9568, 0
  %9672 = vmatprep.subr.mxu0 0.0
  %9673 = vmatpush1.msra.mxu0 %v9661
  %9674 = vmatprep.subr.mxu0 0.0
  %9675 = vmatpush1.msra.mxu0 %v9663
  %9676 = vmatprep.subr.mxu0 0.0
  %9677 = vmatpush1.msra.mxu0 0.0
  %9678 = vmatprep.subr.mxu0 0.0
  %9679 = vmatpush1.msra.mxu0 0.0
  %9680 = vmatprep.subr.mxu0 0.0
  %9681 = vmatpush1.msra.mxu0 0.0
  %9682 = vmatprep.subr.mxu0 0.0
  %9683 = vmatpush1.msra.mxu0 0.0
  %9684 = vmatprep.subr.mxu0 0.0
  %9685 = vmatpush1.msra.mxu0 0.0
  %9686 = vmatprep.subr.mxu0 0.0
  %9687 = vmatpush1.msra.mxu0 0.0
  %9688 = vmatprep.subr.mxu0 0.0
  %9689 = vmatpush1.msra.mxu0 0.0
  %9690 = vmatprep.subr.mxu0 0.0
  %9691 = vmatpush1.msra.mxu0 0.0
  %9692 = vmatprep.subr.mxu0 0.0
  %9693 = vmatpush1.msra.mxu0 0.0
  %9694 = vmatprep.subr.mxu0 0.0
  %9695 = vmatpush1.msra.mxu0 0.0
  %9696 = vmatprep.subr.mxu0 0.0
  %9697 = vmatpush1.msra.mxu0 0.0
  %9698 = vmatprep.subr.mxu0 0.0
  %9699 = vmatpush1.msra.mxu0 0.0
  %9700 = vmatprep.subr.mxu0 0.0
  %9701 = vmatpush1.msra.mxu0 0.0
  %9702 = vmatprep.subr.mxu0 0.0
  %9703 = vmatpush1.msra.mxu0 0.0
  %9704 = vmatprep.subr.mxu0 0.0
  %9705 = vmatpush1.msra.mxu0 0.0
  %9706 = vmatprep.subr.mxu0 0.0
  %9707 = vmatpush1.msra.mxu0 0.0
  %9708 = vmatprep.subr.mxu0 0.0
  %9709 = vmatpush1.msra.mxu0 0.0
  %9710 = vmatprep.subr.mxu0 0.0
  %9711 = vmatpush1.msra.mxu0 0.0
  %9712 = vmatprep.subr.mxu0 0.0
  %9713 = vmatpush1.msra.mxu0 0.0
  %9714 = vmatprep.subr.mxu0 0.0
  %9715 = vmatpush1.msra.mxu0 0.0
  %9716 = vmatprep.subr.mxu0 0.0
  %9717 = vmatpush1.msra.mxu0 0.0
  %9718 = vmatprep.subr.mxu0 0.0
  %9719 = vmatpush1.msra.mxu0 0.0
  %9720 = vmatprep.subr.mxu0 0.0
  %9721 = vmatpush1.msra.mxu0 0.0
  %9722 = vmatprep.subr.mxu0 0.0
  %9723 = vmatpush1.msra.mxu0 0.0
  %9724 = vmatprep.subr.mxu0 0.0
  %9725 = vmatpush1.msra.mxu0 0.0
  %9726 = vmatprep.subr.mxu0 0.0
  %9727 = vmatpush1.msra.mxu0 0.0
  %9728 = vmatprep.subr.mxu0 0.0
  %9729 = vmatpush1.msra.mxu0 0.0
  %9730 = vmatprep.subr.mxu0 0.0
  %9731 = vmatpush1.msra.mxu0 0.0
  %9732 = vmatprep.subr.mxu0 0.0
  %9733 = vmatpush1.msra.mxu0 0.0
  %9734 = vmatprep.subr.mxu0 0.0
  %9735 = vmatpush1.msra.mxu0 0.0
  %9736 = vmatprep.mubr.f32.mxu0 0.0
  %9737 = vmatmul.mubr.f32.gmra.mrb[0].mxu0 %v9667
  %v9738 = vpop.f32.mrb[0].mxu0
  %v9739 = vadd.f32 0.0, %v9738
  %v9740 = vpop.f32.mrb[0].mxu0
  %9741 = vmatprep.mubr.f32.mxu0 0.0
  %9742 = vmatmul.mubr.f32.gmra.mrb[0].mxu0 %v9670
  %v9743 = vpop.f32.mrb[0].mxu0
  %v9744 = vadd.f32 0.0, %v9743
  %v9745 = vpop.f32.mrb[0].mxu0
  %9746 = vdwg.mxu0
  %9751 = vrot.lane.b32.xlu0 %v8834, 16
  %v9752 = vpop.permute.xlu0 %9751
  %9753 = vrot.lane.b32.xlu0 %v8839, 16
  %v9754 = vpop.permute.xlu0 %9753
  %9755 = vrot.lane.b32.xlu0 %v8923, 16
  %v9756 = vpop.permute.xlu0 %9755
  %9757 = vrot.lane.b32.xlu0 %v8928, 16
  %v9758 = vpop.permute.xlu0 %9757
  %9767 = vrot.lane.b32.xlu0 %v9244, 32
  %v9768 = vpop.permute.xlu0 %9767
  %9769 = vrot.lane.b32.xlu0 %v9249, 32
  %v9770 = vpop.permute.xlu0 %9769
  %9771 = vrot.lane.b32.xlu0 %v9331, 32
  %v9772 = vpop.permute.xlu0 %9771
  %9773 = vrot.lane.b32.xlu0 %v9336, 32
  %v9774 = vpop.permute.xlu0 %9773
  %9783 = vrot.lane.b32.xlu0 %v9652, 48
  %v9784 = vpop.permute.xlu0 %9783
  %9785 = vrot.lane.b32.xlu0 %v9657, 48
  %v9786 = vpop.permute.xlu0 %9785
  %9787 = vrot.lane.b32.xlu0 %v9739, 48
  %v9788 = vpop.permute.xlu0 %9787
  %9789 = vrot.lane.b32.xlu0 %v9744, 48
  %v9790 = vpop.permute.xlu0 %9789
  %v9795 = vsel %vm22, %v8430, %v9752
  %v9796 = vsel %vm22, %v8435, %v9754
  %v9797 = vsel %vm22, %v8511, %v9756
  %v9798 = vsel %vm22, %v8516, %v9758
  %v9799 = vsel %vm175, %v9795, %v9768
  %v9800 = vsel %vm175, %v9796, %v9770
  %v9801 = vsel %vm175, %v9797, %v9772
  %v9802 = vsel %vm175, %v9798, %v9774
  %v9803 = vsel %vm2168, %v9799, %v9784
  %v9804 = vsel %vm2168, %v9800, %v9786
  %v9805 = vsel %vm2168, %v9801, %v9788
  %v9806 = vsel %vm2168, %v9802, %v9790
  %v9808 = vsel %vm2173, %v9803, 0
  %v9811 = vsel %vm2173, %v9804, 0
  %v9814 = vsel %vm2173, %v9805, 0
  %v9817 = vsel %vm2173, %v9806, 0
  %9819 = vmatprep.subr.mxu0 0.0
  %9820 = vmatpush1.msra.mxu0 %v7772
  %9821 = vmatprep.subr.mxu0 0.0
  %9822 = vmatpush1.msra.mxu0 %v7773
  %9823 = vmatprep.subr.mxu0 0.0
  %9824 = vmatpush1.msra.mxu0 %v7774
  %9825 = vmatprep.subr.mxu0 0.0
  %9826 = vmatpush1.msra.mxu0 %v7775
  %9827 = vmatprep.subr.mxu0 0.0
  %9828 = vmatpush1.msra.mxu0 %v7776
  %9829 = vmatprep.subr.mxu0 0.0
  %9830 = vmatpush1.msra.mxu0 %v7777
  %9831 = vmatprep.subr.mxu0 0.0
  %9832 = vmatpush1.msra.mxu0 %v7778
  %9833 = vmatprep.subr.mxu0 0.0
  %9834 = vmatpush1.msra.mxu0 %v7779
  %9835 = vmatprep.subr.mxu0 0.0
  %9836 = vmatpush1.msra.mxu0 0.0
  %9837 = vmatprep.subr.mxu0 0.0
  %9838 = vmatpush1.msra.mxu0 0.0
  %9839 = vmatprep.subr.mxu0 0.0
  %9840 = vmatpush1.msra.mxu0 0.0
  %9841 = vmatprep.subr.mxu0 0.0
  %9842 = vmatpush1.msra.mxu0 0.0
  %9843 = vmatprep.subr.mxu0 0.0
  %9844 = vmatpush1.msra.mxu0 0.0
  %9845 = vmatprep.subr.mxu0 0.0
  %9846 = vmatpush1.msra.mxu0 0.0
  %9847 = vmatprep.subr.mxu0 0.0
  %9848 = vmatpush1.msra.mxu0 0.0
  %9849 = vmatprep.subr.mxu0 0.0
  %9850 = vmatpush1.msra.mxu0 0.0
  %9851 = vmatprep.subr.mxu0 0.0
  %9852 = vmatpush1.msra.mxu0 0.0
  %9853 = vmatprep.subr.mxu0 0.0
  %9854 = vmatpush1.msra.mxu0 0.0
  %9855 = vmatprep.subr.mxu0 0.0
  %9856 = vmatpush1.msra.mxu0 0.0
  %9857 = vmatprep.subr.mxu0 0.0
  %9858 = vmatpush1.msra.mxu0 0.0
  %9859 = vmatprep.subr.mxu0 0.0
  %9860 = vmatpush1.msra.mxu0 0.0
  %9861 = vmatprep.subr.mxu0 0.0
  %9862 = vmatpush1.msra.mxu0 0.0
  %9863 = vmatprep.subr.mxu0 0.0
  %9864 = vmatpush1.msra.mxu0 0.0
  %9865 = vmatprep.subr.mxu0 0.0
  %9866 = vmatpush1.msra.mxu0 0.0
  %9867 = vmatprep.subr.mxu0 0.0
  %9868 = vmatpush1.msra.mxu0 0.0
  %9869 = vmatprep.subr.mxu0 0.0
  %9870 = vmatpush1.msra.mxu0 0.0
  %9871 = vmatprep.subr.mxu0 0.0
  %9872 = vmatpush1.msra.mxu0 0.0
  %9873 = vmatprep.subr.mxu0 0.0
  %9874 = vmatpush1.msra.mxu0 0.0
  %9875 = vmatprep.subr.mxu0 0.0
  %9876 = vmatpush1.msra.mxu0 0.0
  %9877 = vmatprep.subr.mxu0 0.0
  %9878 = vmatpush1.msra.mxu0 0.0
  %9879 = vmatprep.subr.mxu0 0.0
  %9880 = vmatpush1.msra.mxu0 0.0
  %9881 = vmatprep.subr.mxu0 0.0
  %9882 = vmatpush1.msra.mxu0 0.0
  %9883 = vmatprep.mubr.f32.mxu0 0.0
  %9884 = vmatmul.mubr.f32.gmra.mrb[0].mxu0 %v9808
  %v9885 = vpop.f32.mrb[0].mxu0
  %v9886 = vadd.f32 0.0, %v9885
  %v9887 = vpop.f32.mrb[0].mxu0
  %9888 = vmatprep.mubr.f32.mxu0 0.0
  %9889 = vmatmul.mubr.f32.gmra.mrb[0].mxu0 %v9811
  %v9890 = vpop.f32.mrb[0].mxu0
  %v9891 = vadd.f32 0.0, %v9890
  %v9892 = vpop.f32.mrb[0].mxu0
  %9893 = vmatprep.mubr.f32.mxu0 0.0
  %9894 = vmatmul.mubr.f32.gmra.mrb[0].mxu0 %v9814
  %v9895 = vpop.f32.mrb[0].mxu0
  %v9896 = vadd.f32 0.0, %v9895
  %v9897 = vpop.f32.mrb[0].mxu0
  %9898 = vmatprep.mubr.f32.mxu0 0.0
  %9899 = vmatmul.mubr.f32.gmra.mrb[0].mxu0 %v9817
  %v9900 = vpop.f32.mrb[0].mxu0
  %v9901 = vadd.f32 0.0, %v9900
  %v9902 = vpop.f32.mrb[0].mxu0
  %9903 = vdwg.mxu0
  %v9904 = vadd.f32 %v7756, %v9886
  %v9905 = vadd.f32 %v7757, %v9891
  %v9906 = vadd.f32 %v7758, %v9896
  %v9907 = vadd.f32 %v7759, %v9901
  %v9908 = vsel %vm175, %v9904, 0.0
  %9909 = vadd.xlane.f32.xlu0 %v9908
  %v9910 = vpop.xlane.xlu0 %9909
  %v9911 = vsel %vm175, %v9905, 0.0
  %9912 = vadd.xlane.f32.xlu0 %v9911
  %v9913 = vpop.xlane.xlu0 %9912
  %v9914 = vsel %vm175, %v9906, 0.0
  %9915 = vadd.xlane.f32.xlu0 %v9914
  %v9916 = vpop.xlane.xlu0 %9915
  %v9917 = vsel %vm175, %v9907, 0.0
  %9918 = vadd.xlane.f32.xlu0 %v9917
  %v9919 = vpop.xlane.xlu0 %9918
  %v9920 = vmul.f32 %v9910, %v188
  %v9921 = vmul.f32 %v9913, %v188
  %v9922 = vmul.f32 %v9916, %v188
  %v9923 = vmul.f32 %v9919, %v188
  %v9924 = vsub.f32 %v9904, %v9920
  %v9925 = vsub.f32 %v9905, %v9921
  %v9926 = vsub.f32 %v9906, %v9922
  %v9927 = vsub.f32 %v9907, %v9923
  %v9928 = vmul.f32 %v9924, %v9924
  %v9929 = vmul.f32 %v9925, %v9925
  %v9930 = vmul.f32 %v9926, %v9926
  %v9931 = vmul.f32 %v9927, %v9927
  %v9932 = vsel %vm175, %v9928, 0.0
  %9933 = vadd.xlane.f32.xlu0 %v9932
  %v9934 = vpop.xlane.xlu0 %9933
  %v9935 = vsel %vm175, %v9929, 0.0
  %9936 = vadd.xlane.f32.xlu0 %v9935
  %v9937 = vpop.xlane.xlu0 %9936
  %v9938 = vsel %vm175, %v9930, 0.0
  %9939 = vadd.xlane.f32.xlu0 %v9938
  %v9940 = vpop.xlane.xlu0 %9939
  %v9941 = vsel %vm175, %v9931, 0.0
  %9942 = vadd.xlane.f32.xlu0 %v9941
  %v9943 = vpop.xlane.xlu0 %9942
  %v9944 = vmul.f32 %v9934, %v188
  %v9945 = vmul.f32 %v9937, %v188
  %v9946 = vmul.f32 %v9940, %v188
  %v9947 = vmul.f32 %v9943, %v188
  %v9948 = vadd.f32 %v9944, 1e-06
  %v9949 = vadd.f32 %v9945, 1e-06
  %v9950 = vadd.f32 %v9946, 1e-06
  %v9951 = vadd.f32 %v9947, 1e-06
  %v9952 = vrsqrt.pop %v9948
  %v9953 = vrsqrt.pop %v9949
  %v9954 = vrsqrt.pop %v9950
  %v9955 = vrsqrt.pop %v9951
  %v9956 = vmul.f32 %v9924, %v9952
  %v9957 = vmul.f32 %v9925, %v9953
  %v9958 = vmul.f32 %v9926, %v9954
  %v9959 = vmul.f32 %v9927, %v9955
  %v9960 = vlaneseq
  %v9961 = vshrl.u32 %v9960, 7
  %v9962 = vsub.s32 0, %v9961
  %v9963 = vrot.slane %v7794, %v9962
  %9965 = vrot.lane.b32.xlu0 %v9963, 96
  %v9966 = vpop.permute.xlu0 %9965
  %v9968 = vmul.f32 %v9956, %v9966
  %v9969 = vmul.f32 %v9957, %v9966
  %v9970 = vmul.f32 %v9958, %v9966
  %v9971 = vmul.f32 %v9959, %v9966
  %v9972 = vlaneseq
  %v9973 = vshrl.u32 %v9972, 7
  %v9974 = vsub.s32 0, %v9973
  %v9975 = vrot.slane %v7795, %v9974
  %v9976 = vadd.f32 %v9968, %v9975
  %v9977 = vadd.f32 %v9969, %v9975
  %v9978 = vadd.f32 %v9970, %v9975
  %v9979 = vadd.f32 %v9971, %v9975
  %v9980 = vlaneseq
  %v9981 = vshrl.u32 %v9980, 7
  %v9982 = vsub.s32 0, %v9981
  %v9983 = vrot.slane %v7793, %v9982
  %v9985 = vsel %vm175, %v9976, 0
  %v9988 = vsel %vm175, %v9977, 0
  %v9991 = vsel %vm175, %v9978, 0
  %v9994 = vsel %vm175, %v9979, 0
  %9996 = vmatprep.subr.mxu0 0.0
  %9997 = vmatpush1.msra.mxu0 %v7780
  %9998 = vmatprep.subr.mxu0 0.0
  %9999 = vmatpush1.msra.mxu0 %v7781
  %10000 = vmatprep.subr.mxu0 0.0
  %10001 = vmatpush1.msra.mxu0 %v7782
  %10002 = vmatprep.subr.mxu0 0.0
  %10003 = vmatpush1.msra.mxu0 %v7783
  %10004 = vmatprep.subr.mxu0 0.0
  %10005 = vmatpush1.msra.mxu0 0.0
  %10006 = vmatprep.subr.mxu0 0.0
  %10007 = vmatpush1.msra.mxu0 0.0
  %10008 = vmatprep.subr.mxu0 0.0
  %10009 = vmatpush1.msra.mxu0 0.0
  %10010 = vmatprep.subr.mxu0 0.0
  %10011 = vmatpush1.msra.mxu0 0.0
  %10012 = vmatprep.subr.mxu0 0.0
  %10013 = vmatpush1.msra.mxu0 0.0
  %10014 = vmatprep.subr.mxu0 0.0
  %10015 = vmatpush1.msra.mxu0 0.0
  %10016 = vmatprep.subr.mxu0 0.0
  %10017 = vmatpush1.msra.mxu0 0.0
  %10018 = vmatprep.subr.mxu0 0.0
  %10019 = vmatpush1.msra.mxu0 0.0
  %10020 = vmatprep.subr.mxu0 0.0
  %10021 = vmatpush1.msra.mxu0 0.0
  %10022 = vmatprep.subr.mxu0 0.0
  %10023 = vmatpush1.msra.mxu0 0.0
  %10024 = vmatprep.subr.mxu0 0.0
  %10025 = vmatpush1.msra.mxu0 0.0
  %10026 = vmatprep.subr.mxu0 0.0
  %10027 = vmatpush1.msra.mxu0 0.0
  %10028 = vmatprep.subr.mxu0 0.0
  %10029 = vmatpush1.msra.mxu0 0.0
  %10030 = vmatprep.subr.mxu0 0.0
  %10031 = vmatpush1.msra.mxu0 0.0
  %10032 = vmatprep.subr.mxu0 0.0
  %10033 = vmatpush1.msra.mxu0 0.0
  %10034 = vmatprep.subr.mxu0 0.0
  %10035 = vmatpush1.msra.mxu0 0.0
  %10036 = vmatprep.subr.mxu0 0.0
  %10037 = vmatpush1.msra.mxu0 0.0
  %10038 = vmatprep.subr.mxu0 0.0
  %10039 = vmatpush1.msra.mxu0 0.0
  %10040 = vmatprep.subr.mxu0 0.0
  %10041 = vmatpush1.msra.mxu0 0.0
  %10042 = vmatprep.subr.mxu0 0.0
  %10043 = vmatpush1.msra.mxu0 0.0
  %10044 = vmatprep.subr.mxu0 0.0
  %10045 = vmatpush1.msra.mxu0 0.0
  %10046 = vmatprep.subr.mxu0 0.0
  %10047 = vmatpush1.msra.mxu0 0.0
  %10048 = vmatprep.subr.mxu0 0.0
  %10049 = vmatpush1.msra.mxu0 0.0
  %10050 = vmatprep.subr.mxu0 0.0
  %10051 = vmatpush1.msra.mxu0 0.0
  %10052 = vmatprep.subr.mxu0 0.0
  %10053 = vmatpush1.msra.mxu0 0.0
  %10054 = vmatprep.subr.mxu0 0.0
  %10055 = vmatpush1.msra.mxu0 0.0
  %10056 = vmatprep.subr.mxu0 0.0
  %10057 = vmatpush1.msra.mxu0 0.0
  %10058 = vmatprep.subr.mxu0 0.0
  %10059 = vmatpush1.msra.mxu0 0.0
  %10060 = vmatprep.mubr.f32.mxu0 0.0
  %10061 = vmatmul.mubr.f32.gmra.mrb[0].mxu0 %v9985
  %v10062 = vpop.f32.mrb[0].mxu0
  %v10063 = vadd.f32 %v9983, %v10062
  %v10064 = vpop.f32.mrb[0].mxu0
  %10065 = vmatprep.mubr.f32.mxu0 0.0
  %10066 = vmatmul.mubr.f32.gmra.mrb[0].mxu0 %v9988
  %v10067 = vpop.f32.mrb[0].mxu0
  %v10068 = vadd.f32 %v9983, %v10067
  %v10069 = vpop.f32.mrb[0].mxu0
  %10070 = vmatprep.mubr.f32.mxu0 0.0
  %10071 = vmatmul.mubr.f32.gmra.mrb[0].mxu0 %v9991
  %v10072 = vpop.f32.mrb[0].mxu0
  %v10073 = vadd.f32 %v9983, %v10072
  %v10074 = vpop.f32.mrb[0].mxu0
  %10075 = vmatprep.mubr.f32.mxu0 0.0
  %10076 = vmatmul.mubr.f32.gmra.mrb[0].mxu0 %v9994
  %v10077 = vpop.f32.mrb[0].mxu0
  %v10078 = vadd.f32 %v9983, %v10077
  %v10079 = vpop.f32.mrb[0].mxu0
  %10080 = vdwg.mxu0
  %v10081 = vmax.f32 %v10063, 0.0
  %v10082 = vmax.f32 %v10068, 0.0
  %v10083 = vmax.f32 %v10073, 0.0
  %v10084 = vmax.f32 %v10078, 0.0
  %v10086 = vsel %vm2173, %v10081, 0
  %v10089 = vsel %vm2173, %v10082, 0
  %v10092 = vsel %vm2173, %v10083, 0
  %v10095 = vsel %vm2173, %v10084, 0
  %10097 = vmatprep.subr.mxu0 0.0
  %10098 = vmatpush1.msra.mxu0 %v7784
  %10099 = vmatprep.subr.mxu0 0.0
  %10100 = vmatpush1.msra.mxu0 %v7785
  %10101 = vmatprep.subr.mxu0 0.0
  %10102 = vmatpush1.msra.mxu0 %v7786
  %10103 = vmatprep.subr.mxu0 0.0
  %10104 = vmatpush1.msra.mxu0 %v7787
  %10105 = vmatprep.subr.mxu0 0.0
  %10106 = vmatpush1.msra.mxu0 %v7788
  %10107 = vmatprep.subr.mxu0 0.0
  %10108 = vmatpush1.msra.mxu0 %v7789
  %10109 = vmatprep.subr.mxu0 0.0
  %10110 = vmatpush1.msra.mxu0 %v7790
  %10111 = vmatprep.subr.mxu0 0.0
  %10112 = vmatpush1.msra.mxu0 %v7791
  %10113 = vmatprep.subr.mxu0 0.0
  %10114 = vmatpush1.msra.mxu0 0.0
  %10115 = vmatprep.subr.mxu0 0.0
  %10116 = vmatpush1.msra.mxu0 0.0
  %10117 = vmatprep.subr.mxu0 0.0
  %10118 = vmatpush1.msra.mxu0 0.0
  %10119 = vmatprep.subr.mxu0 0.0
  %10120 = vmatpush1.msra.mxu0 0.0
  %10121 = vmatprep.subr.mxu0 0.0
  %10122 = vmatpush1.msra.mxu0 0.0
  %10123 = vmatprep.subr.mxu0 0.0
  %10124 = vmatpush1.msra.mxu0 0.0
  %10125 = vmatprep.subr.mxu0 0.0
  %10126 = vmatpush1.msra.mxu0 0.0
  %10127 = vmatprep.subr.mxu0 0.0
  %10128 = vmatpush1.msra.mxu0 0.0
  %10129 = vmatprep.subr.mxu0 0.0
  %10130 = vmatpush1.msra.mxu0 0.0
  %10131 = vmatprep.subr.mxu0 0.0
  %10132 = vmatpush1.msra.mxu0 0.0
  %10133 = vmatprep.subr.mxu0 0.0
  %10134 = vmatpush1.msra.mxu0 0.0
  %10135 = vmatprep.subr.mxu0 0.0
  %10136 = vmatpush1.msra.mxu0 0.0
  %10137 = vmatprep.subr.mxu0 0.0
  %10138 = vmatpush1.msra.mxu0 0.0
  %10139 = vmatprep.subr.mxu0 0.0
  %10140 = vmatpush1.msra.mxu0 0.0
  %10141 = vmatprep.subr.mxu0 0.0
  %10142 = vmatpush1.msra.mxu0 0.0
  %10143 = vmatprep.subr.mxu0 0.0
  %10144 = vmatpush1.msra.mxu0 0.0
  %10145 = vmatprep.subr.mxu0 0.0
  %10146 = vmatpush1.msra.mxu0 0.0
  %10147 = vmatprep.subr.mxu0 0.0
  %10148 = vmatpush1.msra.mxu0 0.0
  %10149 = vmatprep.subr.mxu0 0.0
  %10150 = vmatpush1.msra.mxu0 0.0
  %10151 = vmatprep.subr.mxu0 0.0
  %10152 = vmatpush1.msra.mxu0 0.0
  %10153 = vmatprep.subr.mxu0 0.0
  %10154 = vmatpush1.msra.mxu0 0.0
  %10155 = vmatprep.subr.mxu0 0.0
  %10156 = vmatpush1.msra.mxu0 0.0
  %10157 = vmatprep.subr.mxu0 0.0
  %10158 = vmatpush1.msra.mxu0 0.0
  %10159 = vmatprep.subr.mxu0 0.0
  %10160 = vmatpush1.msra.mxu0 0.0
  %10161 = vmatprep.mubr.f32.mxu0 0.0
  %10162 = vmatmul.mubr.f32.gmra.mrb[0].mxu0 %v10086
  %v10163 = vpop.f32.mrb[0].mxu0
  %v10164 = vadd.f32 0.0, %v10163
  %v10165 = vpop.f32.mrb[0].mxu0
  %10166 = vmatprep.mubr.f32.mxu0 0.0
  %10167 = vmatmul.mubr.f32.gmra.mrb[0].mxu0 %v10089
  %v10168 = vpop.f32.mrb[0].mxu0
  %v10169 = vadd.f32 0.0, %v10168
  %v10170 = vpop.f32.mrb[0].mxu0
  %10171 = vmatprep.mubr.f32.mxu0 0.0
  %10172 = vmatmul.mubr.f32.gmra.mrb[0].mxu0 %v10092
  %v10173 = vpop.f32.mrb[0].mxu0
  %v10174 = vadd.f32 0.0, %v10173
  %v10175 = vpop.f32.mrb[0].mxu0
  %10176 = vmatprep.mubr.f32.mxu0 0.0
  %10177 = vmatmul.mubr.f32.gmra.mrb[0].mxu0 %v10095
  %v10178 = vpop.f32.mrb[0].mxu0
  %v10179 = vadd.f32 0.0, %v10178
  %v10180 = vpop.f32.mrb[0].mxu0
  %10181 = vdwg.mxu0
  %v10182 = vadd.f32 %v9904, %v10164
  %v10183 = vadd.f32 %v9905, %v10169
  %v10184 = vadd.f32 %v9906, %v10174
  %v10185 = vadd.f32 %v9907, %v10179
  %v10186 = vadd.f32 %v10182, %v9963
  %v10187 = vadd.f32 %v10183, %v9963
  %v10188 = vadd.f32 %v10184, %v9963
  %v10189 = vadd.f32 %v10185, %v9963
  %v10190 = vmul.f32 %v9569, 0.25
  %v10191 = vmul.f32 %v9570, 0.25
  %v10192 = vmul.f32 %v9571, 0.25
  %v10193 = vmul.f32 %v9572, 0.25
  %v10194 = vld [vmem:[%s1 + $0x20] sm:$0xff]
  %v10195 = vld [vmem:[%s1 + $0x28] sm:$0xff]
  %v10196 = vld [vmem:[%s1 + $0x30] sm:$0xff]
  %v10197 = vld [vmem:[%s1 + $0x38] sm:$0xff]
  %v10198 = vld [vmem:[%s1 + $0x30] sm:$0x1]
  %v10199 = vlaneseq
  %v10200 = vshrl.u32 %v10199, 7
  %v10201 = vsub.s32 0, %v10200
  %v10202 = vrot.slane %v10198, %v10201
  %10207 = vrot.lane.b32.xlu0 %v10194, 120
  %v10208 = vpop.permute.xlu0 %10207
  %10209 = vrot.lane.b32.xlu0 %v10195, 120
  %v10210 = vpop.permute.xlu0 %10209
  %10211 = vrot.lane.b32.xlu0 %v10196, 120
  %v10212 = vpop.permute.xlu0 %10211
  %10213 = vrot.lane.b32.xlu0 %v10197, 120
  %v10214 = vpop.permute.xlu0 %10213
  %10220 = vrot.lane.b32.xlu0 %v10202, 88
  %v10221 = vpop.permute.xlu0 %10220
  %v10224 = vsel %vm175, %v10186, 0
  %v10227 = vsel %vm175, %v10187, 0
  %v10230 = vsel %vm175, %v10188, 0
  %v10233 = vsel %vm175, %v10189, 0
  %10235 = vmatprep.subr.mxu0 0.0
  %10236 = vmatpush1.msra.mxu0 %v10208
  %10237 = vmatprep.subr.mxu0 0.0
  %10238 = vmatpush1.msra.mxu0 %v10210
  %10239 = vmatprep.subr.mxu0 0.0
  %10240 = vmatpush1.msra.mxu0 %v10212
  %10241 = vmatprep.subr.mxu0 0.0
  %10242 = vmatpush1.msra.mxu0 %v10214
  %10243 = vmatprep.subr.mxu0 0.0
  %10244 = vmatpush1.msra.mxu0 0.0
  %10245 = vmatprep.subr.mxu0 0.0
  %10246 = vmatpush1.msra.mxu0 0.0
  %10247 = vmatprep.subr.mxu0 0.0
  %10248 = vmatpush1.msra.mxu0 0.0
  %10249 = vmatprep.subr.mxu0 0.0
  %10250 = vmatpush1.msra.mxu0 0.0
  %10251 = vmatprep.subr.mxu0 0.0
  %10252 = vmatpush1.msra.mxu0 0.0
  %10253 = vmatprep.subr.mxu0 0.0
  %10254 = vmatpush1.msra.mxu0 0.0
  %10255 = vmatprep.subr.mxu0 0.0
  %10256 = vmatpush1.msra.mxu0 0.0
  %10257 = vmatprep.subr.mxu0 0.0
  %10258 = vmatpush1.msra.mxu0 0.0
  %10259 = vmatprep.subr.mxu0 0.0
  %10260 = vmatpush1.msra.mxu0 0.0
  %10261 = vmatprep.subr.mxu0 0.0
  %10262 = vmatpush1.msra.mxu0 0.0
  %10263 = vmatprep.subr.mxu0 0.0
  %10264 = vmatpush1.msra.mxu0 0.0
  %10265 = vmatprep.subr.mxu0 0.0
  %10266 = vmatpush1.msra.mxu0 0.0
  %10267 = vmatprep.subr.mxu0 0.0
  %10268 = vmatpush1.msra.mxu0 0.0
  %10269 = vmatprep.subr.mxu0 0.0
  %10270 = vmatpush1.msra.mxu0 0.0
  %10271 = vmatprep.subr.mxu0 0.0
  %10272 = vmatpush1.msra.mxu0 0.0
  %10273 = vmatprep.subr.mxu0 0.0
  %10274 = vmatpush1.msra.mxu0 0.0
  %10275 = vmatprep.subr.mxu0 0.0
  %10276 = vmatpush1.msra.mxu0 0.0
  %10277 = vmatprep.subr.mxu0 0.0
  %10278 = vmatpush1.msra.mxu0 0.0
  %10279 = vmatprep.subr.mxu0 0.0
  %10280 = vmatpush1.msra.mxu0 0.0
  %10281 = vmatprep.subr.mxu0 0.0
  %10282 = vmatpush1.msra.mxu0 0.0
  %10283 = vmatprep.subr.mxu0 0.0
  %10284 = vmatpush1.msra.mxu0 0.0
  %10285 = vmatprep.subr.mxu0 0.0
  %10286 = vmatpush1.msra.mxu0 0.0
  %10287 = vmatprep.subr.mxu0 0.0
  %10288 = vmatpush1.msra.mxu0 0.0
  %10289 = vmatprep.subr.mxu0 0.0
  %10290 = vmatpush1.msra.mxu0 0.0
  %10291 = vmatprep.subr.mxu0 0.0
  %10292 = vmatpush1.msra.mxu0 0.0
  %10293 = vmatprep.subr.mxu0 0.0
  %10294 = vmatpush1.msra.mxu0 0.0
  %10295 = vmatprep.subr.mxu0 0.0
  %10296 = vmatpush1.msra.mxu0 0.0
  %10297 = vmatprep.subr.mxu0 0.0
  %10298 = vmatpush1.msra.mxu0 0.0
  %10299 = vmatprep.mubr.f32.mxu0 0.0
  %10300 = vmatmul.mubr.f32.gmra.mrb[0].mxu0 %v10224
  %v10301 = vpop.f32.mrb[0].mxu0
  %v10302 = vadd.f32 %v10221, %v10301
  %v10303 = vpop.f32.mrb[0].mxu0
  %10304 = vmatprep.mubr.f32.mxu0 0.0
  %10305 = vmatmul.mubr.f32.gmra.mrb[0].mxu0 %v10227
  %v10306 = vpop.f32.mrb[0].mxu0
  %v10307 = vadd.f32 %v10221, %v10306
  %v10308 = vpop.f32.mrb[0].mxu0
  %10309 = vmatprep.mubr.f32.mxu0 0.0
  %10310 = vmatmul.mubr.f32.gmra.mrb[0].mxu0 %v10230
  %v10311 = vpop.f32.mrb[0].mxu0
  %v10312 = vadd.f32 %v10221, %v10311
  %v10313 = vpop.f32.mrb[0].mxu0
  %10314 = vmatprep.mubr.f32.mxu0 0.0
  %10315 = vmatmul.mubr.f32.gmra.mrb[0].mxu0 %v10233
  %v10316 = vpop.f32.mrb[0].mxu0
  %v10317 = vadd.f32 %v10221, %v10316
  %v10318 = vpop.f32.mrb[0].mxu0
  %10319 = vdwg.mxu0
  %v10320 = vmax.f32 %v10302, 0.0
  %v10321 = vmax.f32 %v10307, 0.0
  %v10322 = vmax.f32 %v10312, 0.0
  %v10323 = vmax.f32 %v10317, 0.0
  %10324 = vrot.lane.b32.xlu0 %v10194, 104
  %v10325 = vpop.permute.xlu0 %10324
  %10327 = vrot.lane.b32.xlu0 %v10202, 80
  %v10328 = vpop.permute.xlu0 %10327
  %v10331 = vsel %vm5135, %v10320, 0
  %v10334 = vsel %vm5135, %v10321, 0
  %v10337 = vsel %vm5135, %v10322, 0
  %v10340 = vsel %vm5135, %v10323, 0
  %10342 = vmatprep.subr.mxu0 0.0
  %10343 = vmatpush1.msra.mxu0 %v10325
  %10344 = vmatprep.subr.mxu0 0.0
  %10345 = vmatpush1.msra.mxu0 0.0
  %10346 = vmatprep.subr.mxu0 0.0
  %10347 = vmatpush1.msra.mxu0 0.0
  %10348 = vmatprep.subr.mxu0 0.0
  %10349 = vmatpush1.msra.mxu0 0.0
  %10350 = vmatprep.subr.mxu0 0.0
  %10351 = vmatpush1.msra.mxu0 0.0
  %10352 = vmatprep.subr.mxu0 0.0
  %10353 = vmatpush1.msra.mxu0 0.0
  %10354 = vmatprep.subr.mxu0 0.0
  %10355 = vmatpush1.msra.mxu0 0.0
  %10356 = vmatprep.subr.mxu0 0.0
  %10357 = vmatpush1.msra.mxu0 0.0
  %10358 = vmatprep.subr.mxu0 0.0
  %10359 = vmatpush1.msra.mxu0 0.0
  %10360 = vmatprep.subr.mxu0 0.0
  %10361 = vmatpush1.msra.mxu0 0.0
  %10362 = vmatprep.subr.mxu0 0.0
  %10363 = vmatpush1.msra.mxu0 0.0
  %10364 = vmatprep.subr.mxu0 0.0
  %10365 = vmatpush1.msra.mxu0 0.0
  %10366 = vmatprep.subr.mxu0 0.0
  %10367 = vmatpush1.msra.mxu0 0.0
  %10368 = vmatprep.subr.mxu0 0.0
  %10369 = vmatpush1.msra.mxu0 0.0
  %10370 = vmatprep.subr.mxu0 0.0
  %10371 = vmatpush1.msra.mxu0 0.0
  %10372 = vmatprep.subr.mxu0 0.0
  %10373 = vmatpush1.msra.mxu0 0.0
  %10374 = vmatprep.subr.mxu0 0.0
  %10375 = vmatpush1.msra.mxu0 0.0
  %10376 = vmatprep.subr.mxu0 0.0
  %10377 = vmatpush1.msra.mxu0 0.0
  %10378 = vmatprep.subr.mxu0 0.0
  %10379 = vmatpush1.msra.mxu0 0.0
  %10380 = vmatprep.subr.mxu0 0.0
  %10381 = vmatpush1.msra.mxu0 0.0
  %10382 = vmatprep.subr.mxu0 0.0
  %10383 = vmatpush1.msra.mxu0 0.0
  %10384 = vmatprep.subr.mxu0 0.0
  %10385 = vmatpush1.msra.mxu0 0.0
  %10386 = vmatprep.subr.mxu0 0.0
  %10387 = vmatpush1.msra.mxu0 0.0
  %10388 = vmatprep.subr.mxu0 0.0
  %10389 = vmatpush1.msra.mxu0 0.0
  %10390 = vmatprep.subr.mxu0 0.0
  %10391 = vmatpush1.msra.mxu0 0.0
  %10392 = vmatprep.subr.mxu0 0.0
  %10393 = vmatpush1.msra.mxu0 0.0
  %10394 = vmatprep.subr.mxu0 0.0
  %10395 = vmatpush1.msra.mxu0 0.0
  %10396 = vmatprep.subr.mxu0 0.0
  %10397 = vmatpush1.msra.mxu0 0.0
  %10398 = vmatprep.subr.mxu0 0.0
  %10399 = vmatpush1.msra.mxu0 0.0
  %10400 = vmatprep.subr.mxu0 0.0
  %10401 = vmatpush1.msra.mxu0 0.0
  %10402 = vmatprep.subr.mxu0 0.0
  %10403 = vmatpush1.msra.mxu0 0.0
  %10404 = vmatprep.subr.mxu0 0.0
  %10405 = vmatpush1.msra.mxu0 0.0
  %10406 = vmatprep.mubr.f32.mxu0 0.0
  %10407 = vmatmul.mubr.f32.gmra.mrb[0].mxu0 %v10331
  %v10408 = vpop.f32.mrb[0].mxu0
  %v10409 = vadd.f32 %v10328, %v10408
  %v10410 = vpop.f32.mrb[0].mxu0
  %10411 = vmatprep.mubr.f32.mxu0 0.0
  %10412 = vmatmul.mubr.f32.gmra.mrb[0].mxu0 %v10334
  %v10413 = vpop.f32.mrb[0].mxu0
  %v10414 = vadd.f32 %v10328, %v10413
  %v10415 = vpop.f32.mrb[0].mxu0
  %10416 = vmatprep.mubr.f32.mxu0 0.0
  %10417 = vmatmul.mubr.f32.gmra.mrb[0].mxu0 %v10337
  %v10418 = vpop.f32.mrb[0].mxu0
  %v10419 = vadd.f32 %v10328, %v10418
  %v10420 = vpop.f32.mrb[0].mxu0
  %10421 = vmatprep.mubr.f32.mxu0 0.0
  %10422 = vmatmul.mubr.f32.gmra.mrb[0].mxu0 %v10340
  %v10423 = vpop.f32.mrb[0].mxu0
  %v10424 = vadd.f32 %v10328, %v10423
  %v10425 = vpop.f32.mrb[0].mxu0
  %10426 = vdwg.mxu0
  %v10427 = vld [vmem:[%s1 + $0x20] sm:$0xff]
  %v10428 = vld [vmem:[%s1 + $0x28] sm:$0xff]
  %10431 = vrot.lane.b32.xlu0 %v10427, 112
  %v10432 = vpop.permute.xlu0 %10431
  %10433 = vrot.lane.b32.xlu0 %v10428, 112
  %v10434 = vpop.permute.xlu0 %10433
  %v10438 = vsel %vm22, %v10190, 0
  %v10441 = vsel %vm22, %v10191, 0
  %v10444 = vsel %vm22, %v10192, 0
  %v10447 = vsel %vm22, %v10193, 0
  %10449 = vmatprep.subr.mxu0 0.0
  %10450 = vmatpush1.msra.mxu0 %v10432
  %10451 = vmatprep.subr.mxu0 0.0
  %10452 = vmatpush1.msra.mxu0 %v10434
  %10453 = vmatprep.subr.mxu0 0.0
  %10454 = vmatpush1.msra.mxu0 0.0
  %10455 = vmatprep.subr.mxu0 0.0
  %10456 = vmatpush1.msra.mxu0 0.0
  %10457 = vmatprep.subr.mxu0 0.0
  %10458 = vmatpush1.msra.mxu0 0.0
  %10459 = vmatprep.subr.mxu0 0.0
  %10460 = vmatpush1.msra.mxu0 0.0
  %10461 = vmatprep.subr.mxu0 0.0
  %10462 = vmatpush1.msra.mxu0 0.0
  %10463 = vmatprep.subr.mxu0 0.0
  %10464 = vmatpush1.msra.mxu0 0.0
  %10465 = vmatprep.subr.mxu0 0.0
  %10466 = vmatpush1.msra.mxu0 0.0
  %10467 = vmatprep.subr.mxu0 0.0
  %10468 = vmatpush1.msra.mxu0 0.0
  %10469 = vmatprep.subr.mxu0 0.0
  %10470 = vmatpush1.msra.mxu0 0.0
  %10471 = vmatprep.subr.mxu0 0.0
  %10472 = vmatpush1.msra.mxu0 0.0
  %10473 = vmatprep.subr.mxu0 0.0
  %10474 = vmatpush1.msra.mxu0 0.0
  %10475 = vmatprep.subr.mxu0 0.0
  %10476 = vmatpush1.msra.mxu0 0.0
  %10477 = vmatprep.subr.mxu0 0.0
  %10478 = vmatpush1.msra.mxu0 0.0
  %10479 = vmatprep.subr.mxu0 0.0
  %10480 = vmatpush1.msra.mxu0 0.0
  %10481 = vmatprep.subr.mxu0 0.0
  %10482 = vmatpush1.msra.mxu0 0.0
  %10483 = vmatprep.subr.mxu0 0.0
  %10484 = vmatpush1.msra.mxu0 0.0
  %10485 = vmatprep.subr.mxu0 0.0
  %10486 = vmatpush1.msra.mxu0 0.0
  %10487 = vmatprep.subr.mxu0 0.0
  %10488 = vmatpush1.msra.mxu0 0.0
  %10489 = vmatprep.subr.mxu0 0.0
  %10490 = vmatpush1.msra.mxu0 0.0
  %10491 = vmatprep.subr.mxu0 0.0
  %10492 = vmatpush1.msra.mxu0 0.0
  %10493 = vmatprep.subr.mxu0 0.0
  %10494 = vmatpush1.msra.mxu0 0.0
  %10495 = vmatprep.subr.mxu0 0.0
  %10496 = vmatpush1.msra.mxu0 0.0
  %10497 = vmatprep.subr.mxu0 0.0
  %10498 = vmatpush1.msra.mxu0 0.0
  %10499 = vmatprep.subr.mxu0 0.0
  %10500 = vmatpush1.msra.mxu0 0.0
  %10501 = vmatprep.subr.mxu0 0.0
  %10502 = vmatpush1.msra.mxu0 0.0
  %10503 = vmatprep.subr.mxu0 0.0
  %10504 = vmatpush1.msra.mxu0 0.0
  %10505 = vmatprep.subr.mxu0 0.0
  %10506 = vmatpush1.msra.mxu0 0.0
  %10507 = vmatprep.subr.mxu0 0.0
  %10508 = vmatpush1.msra.mxu0 0.0
  %10509 = vmatprep.subr.mxu0 0.0
  %10510 = vmatpush1.msra.mxu0 0.0
  %10511 = vmatprep.subr.mxu0 0.0
  %10512 = vmatpush1.msra.mxu0 0.0
  %10513 = vmatprep.mubr.f32.mxu0 0.0
  %10514 = vmatmul.mubr.f32.gmra.mrb[0].mxu0 %v10438
  %v10515 = vpop.f32.mrb[0].mxu0
  %v10516 = vadd.f32 0.0, %v10515
  %v10517 = vpop.f32.mrb[0].mxu0
  %10518 = vmatprep.mubr.f32.mxu0 0.0
  %10519 = vmatmul.mubr.f32.gmra.mrb[0].mxu0 %v10441
  %v10520 = vpop.f32.mrb[0].mxu0
  %v10521 = vadd.f32 0.0, %v10520
  %v10522 = vpop.f32.mrb[0].mxu0
  %10523 = vmatprep.mubr.f32.mxu0 0.0
  %10524 = vmatmul.mubr.f32.gmra.mrb[0].mxu0 %v10444
  %v10525 = vpop.f32.mrb[0].mxu0
  %v10526 = vadd.f32 0.0, %v10525
  %v10527 = vpop.f32.mrb[0].mxu0
  %10528 = vmatprep.mubr.f32.mxu0 0.0
  %10529 = vmatmul.mubr.f32.gmra.mrb[0].mxu0 %v10447
  %v10530 = vpop.f32.mrb[0].mxu0
  %v10531 = vadd.f32 0.0, %v10530
  %v10532 = vpop.f32.mrb[0].mxu0
  %10533 = vdwg.mxu0
  %10534 = vrot.lane.b32.xlu0 %v10428, 104
  %v10535 = vpop.permute.xlu0 %10534
  %10537 = vmatprep.subr.mxu0 0.0
  %10538 = vmatpush1.msra.mxu0 %v10535
  %10539 = vmatprep.subr.mxu0 0.0
  %10540 = vmatpush1.msra.mxu0 0.0
  %10541 = vmatprep.subr.mxu0 0.0
  %10542 = vmatpush1.msra.mxu0 0.0
  %10543 = vmatprep.subr.mxu0 0.0
  %10544 = vmatpush1.msra.mxu0 0.0
  %10545 = vmatprep.subr.mxu0 0.0
  %10546 = vmatpush1.msra.mxu0 0.0
  %10547 = vmatprep.subr.mxu0 0.0
  %10548 = vmatpush1.msra.mxu0 0.0
  %10549 = vmatprep.subr.mxu0 0.0
  %10550 = vmatpush1.msra.mxu0 0.0
  %10551 = vmatprep.subr.mxu0 0.0
  %10552 = vmatpush1.msra.mxu0 0.0
  %10553 = vmatprep.subr.mxu0 0.0
  %10554 = vmatpush1.msra.mxu0 0.0
  %10555 = vmatprep.subr.mxu0 0.0
  %10556 = vmatpush1.msra.mxu0 0.0
  %10557 = vmatprep.subr.mxu0 0.0
  %10558 = vmatpush1.msra.mxu0 0.0
  %10559 = vmatprep.subr.mxu0 0.0
  %10560 = vmatpush1.msra.mxu0 0.0
  %10561 = vmatprep.subr.mxu0 0.0
  %10562 = vmatpush1.msra.mxu0 0.0
  %10563 = vmatprep.subr.mxu0 0.0
  %10564 = vmatpush1.msra.mxu0 0.0
  %10565 = vmatprep.subr.mxu0 0.0
  %10566 = vmatpush1.msra.mxu0 0.0
  %10567 = vmatprep.subr.mxu0 0.0
  %10568 = vmatpush1.msra.mxu0 0.0
  %10569 = vmatprep.subr.mxu0 0.0
  %10570 = vmatpush1.msra.mxu0 0.0
  %10571 = vmatprep.subr.mxu0 0.0
  %10572 = vmatpush1.msra.mxu0 0.0
  %10573 = vmatprep.subr.mxu0 0.0
  %10574 = vmatpush1.msra.mxu0 0.0
  %10575 = vmatprep.subr.mxu0 0.0
  %10576 = vmatpush1.msra.mxu0 0.0
  %10577 = vmatprep.subr.mxu0 0.0
  %10578 = vmatpush1.msra.mxu0 0.0
  %10579 = vmatprep.subr.mxu0 0.0
  %10580 = vmatpush1.msra.mxu0 0.0
  %10581 = vmatprep.subr.mxu0 0.0
  %10582 = vmatpush1.msra.mxu0 0.0
  %10583 = vmatprep.subr.mxu0 0.0
  %10584 = vmatpush1.msra.mxu0 0.0
  %10585 = vmatprep.subr.mxu0 0.0
  %10586 = vmatpush1.msra.mxu0 0.0
  %10587 = vmatprep.subr.mxu0 0.0
  %10588 = vmatpush1.msra.mxu0 0.0
  %10589 = vmatprep.subr.mxu0 0.0
  %10590 = vmatpush1.msra.mxu0 0.0
  %10591 = vmatprep.subr.mxu0 0.0
  %10592 = vmatpush1.msra.mxu0 0.0
  %10593 = vmatprep.subr.mxu0 0.0
  %10594 = vmatpush1.msra.mxu0 0.0
  %10595 = vmatprep.subr.mxu0 0.0
  %10596 = vmatpush1.msra.mxu0 0.0
  %10597 = vmatprep.subr.mxu0 0.0
  %10598 = vmatpush1.msra.mxu0 0.0
  %10599 = vmatprep.subr.mxu0 0.0
  %10600 = vmatpush1.msra.mxu0 0.0
  %10601 = vmatprep.mubr.f32.mxu0 0.0
  %10602 = vmatmul.mubr.f32.gmra.mrb[0].mxu0 %v5136
  %v10603 = vpop.f32.mrb[0].mxu0
  %v10604 = vadd.f32 %v10516, %v10603
  %v10605 = vpop.f32.mrb[0].mxu0
  %10606 = vmatprep.mubr.f32.mxu0 0.0
  %10607 = vmatmul.mubr.f32.gmra.mrb[0].mxu0 %v5138
  %v10608 = vpop.f32.mrb[0].mxu0
  %v10609 = vadd.f32 %v10521, %v10608
  %v10610 = vpop.f32.mrb[0].mxu0
  %10611 = vmatprep.mubr.f32.mxu0 0.0
  %10612 = vmatmul.mubr.f32.gmra.mrb[0].mxu0 %v5140
  %v10613 = vpop.f32.mrb[0].mxu0
  %v10614 = vadd.f32 %v10526, %v10613
  %v10615 = vpop.f32.mrb[0].mxu0
  %10616 = vmatprep.mubr.f32.mxu0 0.0
  %10617 = vmatmul.mubr.f32.gmra.mrb[0].mxu0 %v5142
  %v10618 = vpop.f32.mrb[0].mxu0
  %v10619 = vadd.f32 %v10531, %v10618
  %v10620 = vpop.f32.mrb[0].mxu0
  %10621 = vdwg.mxu0
  %10622 = vrot.lane.b32.xlu0 %v10202, 72
  %v10623 = vpop.permute.xlu0 %10622
  %v10625 = vadd.f32 %v10604, %v10623
  %v10626 = vadd.f32 %v10609, %v10623
  %v10627 = vadd.f32 %v10614, %v10623
  %v10628 = vadd.f32 %v10619, %v10623
  %v10629 = vxor.u32 %v10625, 2147483648
  %v10630 = vxor.u32 %v10626, 2147483648
  %v10631 = vxor.u32 %v10627, 2147483648
  %v10632 = vxor.u32 %v10628, 2147483648
  %v10633 = vmul.f32 %v10629, 1.442695
  %v10634 = vpow.pop %v10633
  %v10635 = vmul.f32 %v10630, 1.442695
  %v10636 = vpow.pop %v10635
  %v10637 = vmul.f32 %v10631, 1.442695
  %v10638 = vpow.pop %v10637
  %v10639 = vmul.f32 %v10632, 1.442695
  %v10640 = vpow.pop %v10639
  %v10641 = vadd.f32 %v10634, 1.0
  %v10642 = vadd.f32 %v10636, 1.0
  %v10643 = vadd.f32 %v10638, 1.0
  %v10644 = vadd.f32 %v10640, 1.0
  %v10645 = vrcp.pop %v10641
  %v10646 = vmul.f32 1.0, %v10645
  %v10647 = vrcp.pop %v10642
  %v10648 = vmul.f32 1.0, %v10647
  %v10649 = vrcp.pop %v10643
  %v10650 = vmul.f32 1.0, %v10649
  %v10651 = vrcp.pop %v10644
  %v10652 = vmul.f32 1.0, %v10651
  %v10653 = vsub.f32 1.0, %v10646
  %v10654 = vsub.f32 1.0, %v10648
  %v10655 = vsub.f32 1.0, %v10650
  %v10656 = vsub.f32 1.0, %v10652
  %v10657 = vmul.f32 %v10653, %v10409
  %v10658 = vmul.f32 %v10654, %v10414
  %v10659 = vmul.f32 %v10655, %v10419
  %v10660 = vmul.f32 %v10656, %v10424
  %v10661 = vmul.f32 %v10646, %v5063
  %v10662 = vmul.f32 %v10648, %v5068
  %v10663 = vmul.f32 %v10650, %v5073
  %v10664 = vmul.f32 %v10652, %v5078
  %v10665 = vadd.f32 %v10657, %v10661
  %v10666 = vadd.f32 %v10658, %v10662
  %v10667 = vadd.f32 %v10659, %v10663
  %v10668 = vadd.f32 %v10660, %v10664
  %10673 = vrot.lane.b32.xlu0 %v10665, 8
  %v10674 = vpop.permute.xlu0 %10673
  %10675 = vrot.lane.b32.xlu0 %v10666, 8
  %v10676 = vpop.permute.xlu0 %10675
  %10677 = vrot.lane.b32.xlu0 %v10667, 8
  %v10678 = vpop.permute.xlu0 %10677
  %10679 = vrot.lane.b32.xlu0 %v10668, 8
  %v10680 = vpop.permute.xlu0 %10679
  %v10685 = vmul.f32 %v5097, %v10674
  %v10686 = vmul.f32 %v5098, %v10676
  %v10687 = vmul.f32 %v5099, %v10678
  %v10688 = vmul.f32 %v5100, %v10680
  %v10689 = vadd.f32 %v5093, %v10685
  %v10690 = vadd.f32 %v5094, %v10686
  %v10691 = vadd.f32 %v5095, %v10687
  %v10692 = vadd.f32 %v5096, %v10688
  %10697 = vrot.lane.b32.xlu0 %v10689, 120
  %v10698 = vpop.permute.xlu0 %10697
  %10699 = vrot.lane.b32.xlu0 %v10690, 120
  %v10700 = vpop.permute.xlu0 %10699
  %10701 = vrot.lane.b32.xlu0 %v10691, 120
  %v10702 = vpop.permute.xlu0 %10701
  %10703 = vrot.lane.b32.xlu0 %v10692, 120
  %v10704 = vpop.permute.xlu0 %10703
  %10709 = vst.msk [vmem:[%s3] sm:$0xff] %vm5135, %v10698
  %10710 = vst.msk [vmem:[%s3 + $0x8] sm:$0xff] %vm5135, %v10700
  %10711 = vst.msk [vmem:[%s3 + $0x10] sm:$0xff] %vm5135, %v10702
  %10712 = vst.msk [vmem:[%s3 + $0x18] sm:$0xff] %vm5135, %v10704
  %v10717 = vsel %vm5135, %v5128, 0.0
  %v10718 = vsel %vm5135, %v5130, 0.0
  %v10719 = vadd.f32 %v10717, %v10718
  %v10720 = vsel %vm5135, %v5132, 0.0
  %v10721 = vadd.f32 %v10719, %v10720
  %v10722 = vsel %vm5135, %v5134, 0.0
  %v10723 = vadd.f32 %v10721, %v10722
  %10724 = vadd.xlane.f32.xlu0 %v10723
  %v10725 = vpop.xlane.xlu0 %10724
  %v10726 = vrot.slane %v10725, 4
  %v10727 = vadd.f32 %v10725, %v10726
  %v10728 = vrot.slane %v10727, 2
  %v10729 = vadd.f32 %v10727, %v10728
  %v10730 = vrot.slane %v10729, 1
  %v10731 = vadd.f32 %v10729, %v10730
  %s10732 = vtos %v10731
  %s10733 = sadd.f32 %s10732, 1e-09
  %v10734 = vsub.f32 %v5063, %v16
  %v10735 = vsub.f32 %v5068, %v17
  %v10736 = vsub.f32 %v5073, %v18
  %v10737 = vsub.f32 %v5078, %v19
  %v10738 = vand.u32 2147483647, %v10734
  %v10739 = vand.u32 2147483647, %v10735
  %v10740 = vand.u32 2147483647, %v10736
  %v10741 = vand.u32 2147483647, %v10737
  %v10742 = vmul.f32 %v10738, %v5128
  %v10743 = vmul.f32 %v10739, %v5130
  %v10744 = vmul.f32 %v10740, %v5132
  %v10745 = vmul.f32 %v10741, %v5134
  %v10746 = vsel %vm5135, %v10742, 0.0
  %v10747 = vsel %vm5135, %v10743, 0.0
  %v10748 = vadd.f32 %v10746, %v10747
  %v10749 = vsel %vm5135, %v10744, 0.0
  %v10750 = vadd.f32 %v10748, %v10749
  %v10751 = vsel %vm5135, %v10745, 0.0
  %v10752 = vadd.f32 %v10750, %v10751
  %10753 = vadd.xlane.f32.xlu0 %v10752
  %v10754 = vpop.xlane.xlu0 %10753
  %v10755 = vrot.slane %v10754, 4
  %v10756 = vadd.f32 %v10754, %v10755
  %v10757 = vrot.slane %v10756, 2
  %v10758 = vadd.f32 %v10756, %v10757
  %v10759 = vrot.slane %v10758, 1
  %v10760 = vadd.f32 %v10758, %v10759
  %s10761 = vtos %v10760
  %v10762 = vstv %s10733
  %v10763 = vrcp.pop %v10762
  %s10764 = vtos %v10763
  %s10765 = smul.f32 %s10761, %s10764
  %v10766 = vsub.f32 %v10409, %v16
  %v10767 = vsub.f32 %v10414, %v17
  %v10768 = vsub.f32 %v10419, %v18
  %v10769 = vsub.f32 %v10424, %v19
  %v10770 = vand.u32 2147483647, %v10766
  %v10771 = vand.u32 2147483647, %v10767
  %v10772 = vand.u32 2147483647, %v10768
  %v10773 = vand.u32 2147483647, %v10769
  %v10774 = vmul.f32 %v10770, %v5128
  %v10775 = vmul.f32 %v10771, %v5130
  %v10776 = vmul.f32 %v10772, %v5132
  %v10777 = vmul.f32 %v10773, %v5134
  %v10778 = vsel %vm5135, %v10774, 0.0
  %v10779 = vsel %vm5135, %v10775, 0.0
  %v10780 = vadd.f32 %v10778, %v10779
  %v10781 = vsel %vm5135, %v10776, 0.0
  %v10782 = vadd.f32 %v10780, %v10781
  %v10783 = vsel %vm5135, %v10777, 0.0
  %v10784 = vadd.f32 %v10782, %v10783
  %10785 = vadd.xlane.f32.xlu0 %v10784
  %v10786 = vpop.xlane.xlu0 %10785
  %v10787 = vrot.slane %v10786, 4
  %v10788 = vadd.f32 %v10786, %v10787
  %v10789 = vrot.slane %v10788, 2
  %v10790 = vadd.f32 %v10788, %v10789
  %v10791 = vrot.slane %v10790, 1
  %v10792 = vadd.f32 %v10790, %v10791
  %s10793 = vtos %v10792
  %v10794 = vstv %s10733
  %v10795 = vrcp.pop %v10794
  %s10796 = vtos %v10795
  %s10797 = smul.f32 %s10793, %s10796
  %v10798 = vsub.f32 %v10665, %v16
  %v10799 = vsub.f32 %v10666, %v17
  %v10800 = vsub.f32 %v10667, %v18
  %v10801 = vsub.f32 %v10668, %v19
  %v10802 = vand.u32 2147483647, %v10798
  %v10803 = vand.u32 2147483647, %v10799
  %v10804 = vand.u32 2147483647, %v10800
  %v10805 = vand.u32 2147483647, %v10801
  %v10806 = vmul.f32 %v10802, %v5128
  %v10807 = vmul.f32 %v10803, %v5130
  %v10808 = vmul.f32 %v10804, %v5132
  %v10809 = vmul.f32 %v10805, %v5134
  %v10810 = vsel %vm5135, %v10806, 0.0
  %v10811 = vsel %vm5135, %v10807, 0.0
  %v10812 = vadd.f32 %v10810, %v10811
  %v10813 = vsel %vm5135, %v10808, 0.0
  %v10814 = vadd.f32 %v10812, %v10813
  %v10815 = vsel %vm5135, %v10809, 0.0
  %v10816 = vadd.f32 %v10814, %v10815
  %10817 = vadd.xlane.f32.xlu0 %v10816
  %v10818 = vpop.xlane.xlu0 %10817
  %v10819 = vrot.slane %v10818, 4
  %v10820 = vadd.f32 %v10818, %v10819
  %v10821 = vrot.slane %v10820, 2
  %v10822 = vadd.f32 %v10820, %v10821
  %v10823 = vrot.slane %v10822, 1
  %v10824 = vadd.f32 %v10822, %v10823
  %s10825 = vtos %v10824
  %v10826 = vstv %s10733
  %v10827 = vrcp.pop %v10826
  %s10828 = vtos %v10827
  %s10829 = smul.f32 %s10825, %s10828
  %10830 = vrot.lane.b32.xlu0 %v16, 112
  %v10831 = vpop.permute.xlu0 %10830
  %10832 = vrot.lane.b32.xlu0 %v17, 112
  %v10833 = vpop.permute.xlu0 %10832
  %10834 = vrot.lane.b32.xlu0 %v18, 112
  %v10835 = vpop.permute.xlu0 %10834
  %10836 = vrot.lane.b32.xlu0 %v19, 112
  %v10837 = vpop.permute.xlu0 %10836
  %v10842 = vsub.f32 %v10665, %v10831
  %v10843 = vsub.f32 %v10666, %v10833
  %v10844 = vsub.f32 %v10667, %v10835
  %v10845 = vsub.f32 %v10668, %v10837
  %v10846 = vand.u32 2147483647, %v10842
  %v10847 = vand.u32 2147483647, %v10843
  %v10848 = vand.u32 2147483647, %v10844
  %v10849 = vand.u32 2147483647, %v10845
  %10850 = vrot.lane.b32.xlu0 %v16, 104
  %v10851 = vpop.permute.xlu0 %10850
  %10852 = vrot.lane.b32.xlu0 %v17, 104
  %v10853 = vpop.permute.xlu0 %10852
  %10854 = vrot.lane.b32.xlu0 %v18, 104
  %v10855 = vpop.permute.xlu0 %10854
  %10856 = vrot.lane.b32.xlu0 %v19, 104
  %v10857 = vpop.permute.xlu0 %10856
  %v10862 = vmul.f32 %v10846, %v10851
  %v10863 = vmul.f32 %v10847, %v10853
  %v10864 = vmul.f32 %v10848, %v10855
  %v10865 = vmul.f32 %v10849, %v10857
  %v10866 = vsel %vm5135, %v10862, 0.0
  %v10867 = vsel %vm5135, %v10863, 0.0
  %v10868 = vadd.f32 %v10866, %v10867
  %v10869 = vsel %vm5135, %v10864, 0.0
  %v10870 = vadd.f32 %v10868, %v10869
  %v10871 = vsel %vm5135, %v10865, 0.0
  %v10872 = vadd.f32 %v10870, %v10871
  %10873 = vadd.xlane.f32.xlu0 %v10872
  %v10874 = vpop.xlane.xlu0 %10873
  %v10875 = vrot.slane %v10874, 4
  %v10876 = vadd.f32 %v10874, %v10875
  %v10877 = vrot.slane %v10876, 2
  %v10878 = vadd.f32 %v10876, %v10877
  %v10879 = vrot.slane %v10878, 1
  %v10880 = vadd.f32 %v10878, %v10879
  %s10881 = vtos %v10880
  %v10882 = vsel %vm5135, %v10851, 0.0
  %v10883 = vsel %vm5135, %v10853, 0.0
  %v10884 = vadd.f32 %v10882, %v10883
  %v10885 = vsel %vm5135, %v10855, 0.0
  %v10886 = vadd.f32 %v10884, %v10885
  %v10887 = vsel %vm5135, %v10857, 0.0
  %v10888 = vadd.f32 %v10886, %v10887
  %10889 = vadd.xlane.f32.xlu0 %v10888
  %v10890 = vpop.xlane.xlu0 %10889
  %v10891 = vrot.slane %v10890, 4
  %v10892 = vadd.f32 %v10890, %v10891
  %v10893 = vrot.slane %v10892, 2
  %v10894 = vadd.f32 %v10892, %v10893
  %v10895 = vrot.slane %v10894, 1
  %v10896 = vadd.f32 %v10894, %v10895
  %s10897 = vtos %v10896
  %s10898 = sadd.f32 %s10897, 1e-09
  %v10899 = vstv %s10898
  %v10900 = vrcp.pop %v10899
  %s10901 = vtos %v10900
  %s10902 = smul.f32 %s10881, %s10901
  %v10903 = vstv %s10765
  %v10904 = vstv %s10797
  %v10905 = vstv %s10829
  %v10906 = vstv %s10902
  %vm10907 = vcmask 7168
  %v10908 = vsel %vm10907, %v10903, %v10904
  %vm10909 = vcmask 15360
  %v10910 = vsel %vm10909, %v10908, %v10905
  %vm10911 = vcmask 23552
  %v10912 = vsel %vm10911, %v10910, %v10906
  %vm10913 = vcmask 24576
  %10914 = vst.msk [vmem:[%s4] sm:$0x1] %vm10913, %v10912
  // Predicated region
  $region14: #{saits_forward.1} parent=0 // pred_check
    _
  $region15: #{saits_forward.1} parent=0 // pred_check_branch
    %10916 = sbr.rel (0) target = $region17
  $region16: #{saits_forward.1} parent=0 // pred_region
    _
  $region17: #{saits_forward.1} parent=0 // pred_fallthru
    _
  // Predicated region
  $region18: #{saits_forward.1} parent=0 // pred_check
    _
  $region19: #{saits_forward.1} parent=0 // pred_check_branch
    %10918 = sbr.rel (0) target = $region21
  $region20: #{saits_forward.1} parent=0 // pred_region
    _
  $region21: #{saits_forward.1} parent=0 // pred_fallthru
    _
  // Predicated region
  $region22: #{saits_forward.1} parent=0 // pred_check
    _
  $region23: #{saits_forward.1} parent=0 // pred_check_branch
    %10920 = sbr.rel (0) target = $region25
  $region24: #{saits_forward.1} parent=0 // pred_region
    _
  $region25: #{saits_forward.1} parent=0 // pred_fallthru
    _
  // Predicated region
  $region26: #{saits_forward.1} parent=0 // pred_check
    _
  $region27: #{saits_forward.1} parent=0 // pred_check_branch
    %10922 = sbr.rel (0) target = $region29
  $region28: #{saits_forward.1} parent=0 // pred_region
    _
  $region29: #{saits_forward.1} parent=0 // pred_fallthru
    _

</llo_original>
